<compile_context>
chip_gen: v7x
topology: tpu7x:2x2x1
jax: 0.10.0
libtpu: 0.0.40
codegen_flags: <defaults>
</compile_context>

<pallas_src>
import jax
import jax.numpy as jnp
from jax.experimental import pallas as pl
from jax.experimental.pallas import tpu as pltpu


# ---------------------------------------------------------------------------
# Pallas kernels
# ---------------------------------------------------------------------------
def _mm_leaky_kernel(a_ref, w_ref, o_ref, acc_ref):
    """grid = (M_tiles, K_tiles).  out[i] = LeakyReLU_0.2( A[i,:] @ W )."""
    @pl.when(pl.program_id(1) == 0)
    def _():
        acc_ref[...] = jnp.zeros_like(acc_ref)

    acc_ref[...] += jnp.dot(a_ref[...], w_ref[...],
                            preferred_element_type=jnp.float32)

    @pl.when(pl.program_id(1) == pl.num_programs(1) - 1)
    def _():
        x = acc_ref[...]
        o_ref[...] = jnp.where(x >= 0, x, 0.2 * x).astype(o_ref.dtype)


def _mm_bn_leaky_kernel(a_ref, w_ref, g_ref, b_ref, o_ref, acc_ref):
    """grid = (K_tiles,).  Full-M conv output stays resident in the f32
    accumulator; at the last K step apply training-mode BatchNorm (batch
    statistics over M = N*H*W, biased var, eps=1e-5) + LeakyReLU(0.2)."""
    k = pl.program_id(0)

    @pl.when(k == 0)
    def _():
        acc_ref[...] = jnp.zeros_like(acc_ref)

    acc_ref[...] += jnp.dot(a_ref[...], w_ref[...],
                            preferred_element_type=jnp.float32)

    @pl.when(k == pl.num_programs(0) - 1)
    def _():
        x = acc_ref[...]
        mean = jnp.mean(x, axis=0, keepdims=True)
        d = x - mean
        var = jnp.mean(d * d, axis=0, keepdims=True)
        y = d * jax.lax.rsqrt(var + 1e-5) * g_ref[...] + b_ref[...]
        o_ref[...] = jnp.where(y >= 0, y, 0.2 * y).astype(o_ref.dtype)


def _head_sigmoid_kernel(x_ref, w_ref, o_ref):
    """Final conv (C_out=1) as a per-row dot product + sigmoid.
    x: [R, K] bf16, w: [1, K] bf16 -> o: [R, 1] f32."""
    x = x_ref[...].astype(jnp.float32)
    w = w_ref[...].astype(jnp.float32)
    s = jnp.sum(x * w, axis=-1, keepdims=True)     # XLU lane reduction
    o_ref[...] = jax.nn.sigmoid(s)                 # EUP


# ---------------------------------------------------------------------------
# Tiling / VMEM helpers (trace-time Python)
# ---------------------------------------------------------------------------
def _largest_tile(dim, cap, multiple):
    """Largest t <= cap with dim % t == 0 and t % multiple == 0; else dim."""
    if dim <= cap:
        return dim
    for t in range(cap, 0, -1):
        if dim % t == 0 and t % multiple == 0:
            return t
    return dim


def _vmem_limit_bytes(*tile_bytes):
    # 2x for double-buffered pipelining + headroom; capped well under v7x's
    # 64 MiB physical VMEM per TensorCore.
    need = 2 * sum(tile_bytes) + (4 << 20)
    return int(min(max(need, 16 << 20), 48 << 20))


# ---------------------------------------------------------------------------
# Pallas wrappers
# ---------------------------------------------------------------------------
def conv_leaky(a, w):
    """a: [M, K] bf16, w: [K, Cout] bf16 -> LeakyReLU(A @ W) as [M, Cout] bf16."""
    M, K = a.shape
    Kw, Cout = w.shape
    assert K == Kw
    tm = _largest_tile(M, 512, 8)
    tk = K if K <= 512 else _largest_tile(K, 512, 128)
    grid = (M // tm, K // tk)
    limit = _vmem_limit_bytes(tm * tk * 2, tk * Cout * 2,
                              tm * Cout * 2, tm * Cout * 4)
    return pl.pallas_call(
        _mm_leaky_kernel,
        out_shape=jax.ShapeDtypeStruct((M, Cout), jnp.bfloat16),
        grid=grid,
        in_specs=[
            pl.BlockSpec((tm, tk), lambda i, k: (i, k)),
            pl.BlockSpec((tk, Cout), lambda i, k: (k, 0)),
        ],
        out_specs=pl.BlockSpec((tm, Cout), lambda i, k: (i, 0)),
        scratch_shapes=[pltpu.VMEM((tm, Cout), jnp.float32)],
        compiler_params=pltpu.CompilerParams(
            dimension_semantics=("parallel", "arbitrary"),
            vmem_limit_bytes=limit,
        ),
    )(a, w)


def conv_bn_leaky(a, w, gamma, beta):
    """a: [M, K] bf16, w: [K, Cout] bf16, gamma/beta: [1, Cout] f32.
    Fused Conv -> BatchNorm(train) -> LeakyReLU(0.2), output [M, Cout] bf16."""
    M, K = a.shape
    Kw, Cout = w.shape
    assert K == Kw
    tk = K if K <= 512 else _largest_tile(K, 512, 128)
    grid = (K // tk,)
    limit = _vmem_limit_bytes(M * tk * 2, tk * Cout * 2, 2 * Cout * 4,
                              M * Cout * 2, M * Cout * 4)
    return pl.pallas_call(
        _mm_bn_leaky_kernel,
        out_shape=jax.ShapeDtypeStruct((M, Cout), jnp.bfloat16),
        grid=grid,
        in_specs=[
            pl.BlockSpec((M, tk), lambda k: (0, k)),
            pl.BlockSpec((tk, Cout), lambda k: (k, 0)),
            pl.BlockSpec((1, Cout), lambda k: (0, 0)),
            pl.BlockSpec((1, Cout), lambda k: (0, 0)),
        ],
        out_specs=pl.BlockSpec((M, Cout), lambda k: (0, 0)),
        scratch_shapes=[pltpu.VMEM((M, Cout), jnp.float32)],
        compiler_params=pltpu.CompilerParams(
            dimension_semantics=("arbitrary",),
            vmem_limit_bytes=limit,
        ),
    )(a, w, gamma, beta)


def head_sigmoid(x, w):
    """x: [R, K] bf16, w: [1, K] bf16 -> sigmoid(x . w) as [R, 1] f32."""
    R, K = x.shape
    return pl.pallas_call(
        _head_sigmoid_kernel,
        out_shape=jax.ShapeDtypeStruct((R, 1), jnp.float32),
        compiler_params=pltpu.CompilerParams(
            vmem_limit_bytes=_vmem_limit_bytes(R * K * 2, K * 2, R * 4),
        ),
    )(x, w)


# ---------------------------------------------------------------------------
# Plain-JAX glue: im2col from NHWC (no transposes), stays in bf16
# ---------------------------------------------------------------------------
def im2col_nhwc(x, k, stride, pad):
    """x: [N, H, W, C] -> A: [N*Ho*Wo, k*k*C] with column order (ki, kj, c),
    matching the (kh, kw, Cin, Cout)-flattened weight layout."""
    N, H, W, C = x.shape
    if pad:
        x = jnp.pad(x, ((0, 0), (pad, pad), (pad, pad), (0, 0)))
    Ho = (H + 2 * pad - k) // stride + 1
    Wo = (W + 2 * pad - k) // stride + 1
    cols = []
    for ki in range(k):
        for kj in range(k):
            cols.append(
                x[:, ki:ki + stride * (Ho - 1) + 1:stride,
                     kj:kj + stride * (Wo - 1) + 1:stride, :]
            )
    p = jnp.stack(cols, axis=3)                        # (N, Ho, Wo, k*k, C)
    return p.reshape(N * Ho * Wo, k * k * C), Ho, Wo


# ---------------------------------------------------------------------------
# Parameters (pre-arranged into matmul layout, bf16) and forward pass
# ---------------------------------------------------------------------------
def init_params(key, inp_size=3):
    ks = jax.random.split(key, 5)
    std = 0.02  # DCGAN-style init, deterministic from key

    def conv_w(k, cout, cin):
        w = jax.random.normal(k, (cout, cin, 4, 4), jnp.float32) * std
        # OIHW -> (kh, kw, Cin, Cout) -> [kh*kw*Cin, Cout]; matches im2col cols.
        return jnp.transpose(w, (2, 3, 1, 0)).reshape(16 * cin, cout).astype(jnp.bfloat16)

    return {
        "w1": conv_w(ks[0], 64, inp_size),
        "w2": conv_w(ks[1], 128, 64),
        "w3": conv_w(ks[2], 256, 128),
        "w4": conv_w(ks[3], 512, 256),
        "w5": conv_w(ks[4], 1, 512).T,                 # head: [1, 8192]
        "g2": jnp.ones((1, 128), jnp.float32), "b2": jnp.zeros((1, 128), jnp.float32),
        "g3": jnp.ones((1, 256), jnp.float32), "b3": jnp.zeros((1, 256), jnp.float32),
        "g4": jnp.ones((1, 512), jnp.float32), "b4": jnp.zeros((1, 512), jnp.float32),
    }


def discriminator_forward(params, x_nchw):
    N = x_nchw.shape[0]
    # NCHW -> NHWC exactly once; bf16 activations end-to-end.
    h = jnp.transpose(x_nchw, (0, 2, 3, 1)).astype(jnp.bfloat16)

    # Conv(3->64, k4 s2 p1) + LeakyReLU(0.2)          (fused)
    a, Ho, Wo = im2col_nhwc(h, 4, 2, 1)
    h = conv_leaky(a, params["w1"]).reshape(N, Ho, Wo, 64)

    # Conv + BatchNorm + LeakyReLU, all fused, for layers 2-4
    for idx, cout in ((2, 128), (3, 256), (4, 512)):
        a, Ho, Wo = im2col_nhwc(h, 4, 2, 1)
        h = conv_bn_leaky(a, params[f"w{idx}"],
                          params[f"g{idx}"], params[f"b{idx}"])
        h = h.reshape(N, Ho, Wo, cout)

    # Conv(512->1, k4 s1 p0) + Sigmoid  (per-row dot-product reduction kernel)
    a, Ho, Wo = im2col_nhwc(h, 4, 1, 0)                # [N*Ho*Wo, 8192]
    out = head_sigmoid(a, params["w5"])                # [N*Ho*Wo, 1]

    # output.view(-1, 1).squeeze(1)
    return out.reshape(-1)


# ---------------------------------------------------------------------------
if __name__ == "__main__":
    key = jax.random.PRNGKey(0)
    pkey, xkey = jax.random.split(key)

    params = init_params(pkey, inp_size=3)
    # Smallest input for which the final 4x4 valid conv yields 1x1: 64x64.
    x = jax.random.normal(xkey, (2, 3, 64, 64), jnp.float32)

    fwd = jax.jit(discriminator_forward)
    out = jax.block_until_ready(fwd(params, x))
    assert out.shape == (2,)
    print("KERNEL_OK")
</pallas_src>

<mosaic_0001>
module attributes {stable_mosaic.version = 11 : i64} {
  func.func @_mm_leaky_kernel(%arg0: i32, %arg1: i32, %arg2: memref<512x48xbf16, #tpu.memory_space<vmem>>, %arg3: memref<48x64xbf16, #tpu.memory_space<vmem>>, %arg4: memref<512x64xbf16, #tpu.memory_space<vmem>>, %arg5: memref<512x64xf32, #tpu.memory_space<vmem>>) attributes {dimension_semantics = [#tpu.dimension_semantics<parallel>, #tpu.dimension_semantics<arbitrary>], iteration_bounds = array<i64: 4, 1>, scalar_prefetch = 0 : i64, scratch_operands = 1 : i64, tpu.core_type = #tpu.core_type<tc>, window_params = [{transform_indices = @transform_0, window_bounds = array<i64: 512, 48>}, {transform_indices = @transform_1, window_bounds = array<i64: 48, 64>}, {transform_indices = @transform_2, window_bounds = array<i64: 512, 64>}]} {
    %c0_i32 = arith.constant 0 : i32
    %0 = arith.cmpi eq, %arg1, %c0_i32 : i32
    %1 = arith.extui %0 : i1 to i32
    %c0_i32_0 = arith.constant 0 : i32
    %2 = arith.cmpi ne, %1, %c0_i32_0 : i32
    scf.if %2 {
      %cst_10 = arith.constant 0.000000e+00 : f32
      %12 = vector.broadcast %cst_10 : f32 to vector<512x64xf32>
      %c0_11 = arith.constant 0 : index
      %c0_12 = arith.constant 0 : index
      %13 = vector.load %arg5[%c0_11, %c0_12] : memref<512x64xf32, #tpu.memory_space<vmem>>, vector<512x64xf32>
      tpu.vector_store %arg5[%c0_11, %c0_12], %12 {strides = array<i32>} : memref<512x64xf32, #tpu.memory_space<vmem>>, vector<512x64xf32>,
    } else {
    }
    %c0 = arith.constant 0 : index
    %c0_1 = arith.constant 0 : index
    %3 = vector.load %arg5[%c0, %c0_1] : memref<512x64xf32, #tpu.memory_space<vmem>>, vector<512x64xf32>
    %c0_2 = arith.constant 0 : index
    %c0_3 = arith.constant 0 : index
    %4 = vector.load %arg2[%c0_2, %c0_3] : memref<512x48xbf16, #tpu.memory_space<vmem>>, vector<512x48xbf16>
    %c0_4 = arith.constant 0 : index
    %c0_5 = arith.constant 0 : index
    %5 = vector.load %arg3[%c0_4, %c0_5] : memref<48x64xbf16, #tpu.memory_space<vmem>>, vector<48x64xbf16>
    %cst = arith.constant dense<0.000000e+00> : vector<512x64xf32>
    %6 = tpu.matmul %4, %5, %cst {dimension_numbers = #tpu.dot_dimension_numbers<[1], [0], [0], [1], [0, 0, 1, 1], [], []>} : vector<512x48xbf16>, vector<48x64xbf16>, vector<512x64xf32> -> vector<512x64xf32>
    %7 = arith.addf %3, %6 : vector<512x64xf32>
    %c0_6 = arith.constant 0 : index
    %c0_7 = arith.constant 0 : index
    %8 = vector.load %arg5[%c0_6, %c0_7] : memref<512x64xf32, #tpu.memory_space<vmem>>, vector<512x64xf32>
    tpu.vector_store %arg5[%c0_6, %c0_7], %7 {strides = array<i32>} : memref<512x64xf32, #tpu.memory_space<vmem>>, vector<512x64xf32>,
    %c0_i32_8 = arith.constant 0 : i32
    %9 = arith.cmpi eq, %arg1, %c0_i32_8 : i32
    %10 = arith.extui %9 : i1 to i32
    %c0_i32_9 = arith.constant 0 : i32
    %11 = arith.cmpi ne, %10, %c0_i32_9 : i32
    scf.if %11 {
      %c0_10 = arith.constant 0 : index
      %c0_11 = arith.constant 0 : index
      %12 = vector.load %arg5[%c0_10, %c0_11] : memref<512x64xf32, #tpu.memory_space<vmem>>, vector<512x64xf32>
      %cst_12 = arith.constant 0.000000e+00 : f32
      %13 = vector.broadcast %cst_12 : f32 to vector<512x64xf32>
      %14 = arith.cmpf oge, %12, %13 : vector<512x64xf32>
      %cst_13 = arith.constant 2.000000e-01 : f32
      %15 = vector.broadcast %cst_13 : f32 to vector<512x64xf32>
      %16 = arith.mulf %15, %12 : vector<512x64xf32>
      %17 = arith.select %14, %12, %16 : vector<512x64xi1>, vector<512x64xf32>
      %18 = arith.truncf %17 : vector<512x64xf32> to vector<512x64xbf16>
      %c0_14 = arith.constant 0 : index
      %c0_15 = arith.constant 0 : index
      %19 = vector.load %arg4[%c0_14, %c0_15] : memref<512x64xbf16, #tpu.memory_space<vmem>>, vector<512x64xbf16>
      tpu.vector_store %arg4[%c0_14, %c0_15], %18 {strides = array<i32>} : memref<512x64xbf16, #tpu.memory_space<vmem>>, vector<512x64xbf16>,
    } else {
    }
    return
  }
  func.func @transform_0(%arg0: i32, %arg1: i32) -> (i32, i32) {
    %c0_i32 = arith.constant 0 : i32
    return %arg0, %arg1 : i32, i32
  }
  func.func @transform_1(%arg0: i32, %arg1: i32) -> (i32, i32) {
    %c0_i32 = arith.constant 0 : i32
    %c0_i32_0 = arith.constant 0 : i32
    return %arg1, %c0_i32 : i32, i32
  }
  func.func @transform_2(%arg0: i32, %arg1: i32) -> (i32, i32) {
    %c0_i32 = arith.constant 0 : i32
    %c0_i32_0 = arith.constant 0 : i32
    return %arg0, %c0_i32 : i32, i32
  }
}

module attributes {stable_mosaic.version = 11 : i64} {
  func.func @_mm_bn_leaky_kernel(%arg0: i32, %arg1: memref<512x512xbf16, #tpu.memory_space<vmem>>, %arg2: memref<512x128xbf16, #tpu.memory_space<vmem>>, %arg3: memref<1x128xf32, #tpu.memory_space<vmem>>, %arg4: memref<1x128xf32, #tpu.memory_space<vmem>>, %arg5: memref<512x128xbf16, #tpu.memory_space<vmem>>, %arg6: memref<512x128xf32, #tpu.memory_space<vmem>>) attributes {dimension_semantics = [#tpu.dimension_semantics<arbitrary>], iteration_bounds = array<i64: 2>, scalar_prefetch = 0 : i64, scratch_operands = 1 : i64, tpu.core_type = #tpu.core_type<tc>, window_params = [{transform_indices = @transform_0, window_bounds = array<i64: 512, 512>}, {transform_indices = @transform_1, window_bounds = array<i64: 512, 128>}, {pipeline_mode = #tpu.pipeline_mode<synchronous>, transform_indices = @transform_2, window_bounds = array<i64: 1, 128>}, {pipeline_mode = #tpu.pipeline_mode<synchronous>, transform_indices = @transform_3, window_bounds = array<i64: 1, 128>}, {pipeline_mode = #tpu.pipeline_mode<synchronous>, transform_indices = @transform_4, window_bounds = array<i64: 512, 128>}]} {
    %c0_i32 = arith.constant 0 : i32
    %0 = arith.cmpi eq, %arg0, %c0_i32 : i32
    %1 = arith.extui %0 : i1 to i32
    %c0_i32_0 = arith.constant 0 : i32
    %2 = arith.cmpi ne, %1, %c0_i32_0 : i32
    scf.if %2 {
      %cst_9 = arith.constant 0.000000e+00 : f32
      %12 = vector.broadcast %cst_9 : f32 to vector<512x128xf32>
      %c0_10 = arith.constant 0 : index
      %c0_11 = arith.constant 0 : index
      %13 = vector.load %arg6[%c0_10, %c0_11] : memref<512x128xf32, #tpu.memory_space<vmem>>, vector<512x128xf32>
      tpu.vector_store %arg6[%c0_10, %c0_11], %12 {strides = array<i32>} : memref<512x128xf32, #tpu.memory_space<vmem>>, vector<512x128xf32>,
    } else {
    }
    %c0 = arith.constant 0 : index
    %c0_1 = arith.constant 0 : index
    %3 = vector.load %arg6[%c0, %c0_1] : memref<512x128xf32, #tpu.memory_space<vmem>>, vector<512x128xf32>
    %c0_2 = arith.constant 0 : index
    %c0_3 = arith.constant 0 : index
    %4 = vector.load %arg1[%c0_2, %c0_3] : memref<512x512xbf16, #tpu.memory_space<vmem>>, vector<512x512xbf16>
    %c0_4 = arith.constant 0 : index
    %c0_5 = arith.constant 0 : index
    %5 = vector.load %arg2[%c0_4, %c0_5] : memref<512x128xbf16, #tpu.memory_space<vmem>>, vector<512x128xbf16>
    %cst = arith.constant dense<0.000000e+00> : vector<512x128xf32>
    %6 = tpu.matmul %4, %5, %cst {dimension_numbers = #tpu.dot_dimension_numbers<[1], [0], [0], [1], [0, 0, 1, 1], [], []>} : vector<512x512xbf16>, vector<512x128xbf16>, vector<512x128xf32> -> vector<512x128xf32>
    %7 = arith.addf %3, %6 : vector<512x128xf32>
    %c0_6 = arith.constant 0 : index
    %c0_7 = arith.constant 0 : index
    %8 = vector.load %arg6[%c0_6, %c0_7] : memref<512x128xf32, #tpu.memory_space<vmem>>, vector<512x128xf32>
    tpu.vector_store %arg6[%c0_6, %c0_7], %7 {strides = array<i32>} : memref<512x128xf32, #tpu.memory_space<vmem>>, vector<512x128xf32>,
    %c1_i32 = arith.constant 1 : i32
    %9 = arith.cmpi eq, %arg0, %c1_i32 : i32
    %10 = arith.extui %9 : i1 to i32
    %c0_i32_8 = arith.constant 0 : i32
    %11 = arith.cmpi ne, %10, %c0_i32_8 : i32
    scf.if %11 {
      %c0_9 = arith.constant 0 : index
      %c0_10 = arith.constant 0 : index
      %12 = vector.load %arg6[%c0_9, %c0_10] : memref<512x128xf32, #tpu.memory_space<vmem>>, vector<512x128xf32>
      %cst_11 = arith.constant dense<0.000000e+00> : vector<128xf32>
      %13 = vector.multi_reduction <add>, %12, %cst_11 [0] : vector<512x128xf32> to vector<128xf32>
      %14 = vector.shape_cast %13 : vector<128xf32> to vector<1x128xf32>
      %cst_12 = arith.constant 5.120000e+02 : f32
      %15 = vector.broadcast %cst_12 : f32 to vector<1x128xf32>
      %16 = arith.divf %14, %15 : vector<1x128xf32>
      %17 = vector.broadcast %16 : vector<1x128xf32> to vector<512x128xf32>
      %18 = arith.subf %12, %17 : vector<512x128xf32>
      %19 = arith.mulf %18, %18 : vector<512x128xf32>
      %cst_13 = arith.constant dense<0.000000e+00> : vector<128xf32>
      %20 = vector.multi_reduction <add>, %19, %cst_13 [0] : vector<512x128xf32> to vector<128xf32>
      %21 = vector.shape_cast %20 : vector<128xf32> to vector<1x128xf32>
      %cst_14 = arith.constant 5.120000e+02 : f32
      %22 = vector.broadcast %cst_14 : f32 to vector<1x128xf32>
      %23 = arith.divf %21, %22 : vector<1x128xf32>
      %cst_15 = arith.constant 9.99999974E-6 : f32
      %24 = vector.broadcast %cst_15 : f32 to vector<1x128xf32>
      %25 = arith.addf %23, %24 : vector<1x128xf32>
      %26 = math.rsqrt %25 : vector<1x128xf32>
      %27 = vector.broadcast %26 : vector<1x128xf32> to vector<512x128xf32>
      %28 = arith.mulf %18, %27 : vector<512x128xf32>
      %c0_16 = arith.constant 0 : index
      %c0_17 = arith.constant 0 : index
      %29 = vector.load %arg3[%c0_16, %c0_17] : memref<1x128xf32, #tpu.memory_space<vmem>>, vector<1x128xf32>
      %30 = vector.broadcast %29 : vector<1x128xf32> to vector<512x128xf32>
      %31 = arith.mulf %28, %30 : vector<512x128xf32>
      %c0_18 = arith.constant 0 : index
      %c0_19 = arith.constant 0 : index
      %32 = vector.load %arg4[%c0_18, %c0_19] : memref<1x128xf32, #tpu.memory_space<vmem>>, vector<1x128xf32>
      %33 = vector.broadcast %32 : vector<1x128xf32> to vector<512x128xf32>
      %34 = arith.addf %31, %33 : vector<512x128xf32>
      %cst_20 = arith.constant 0.000000e+00 : f32
      %35 = vector.broadcast %cst_20 : f32 to vector<512x128xf32>
      %36 = arith.cmpf oge, %34, %35 : vector<512x128xf32>
      %cst_21 = arith.constant 2.000000e-01 : f32
      %37 = vector.broadcast %cst_21 : f32 to vector<512x128xf32>
      %38 = arith.mulf %37, %34 : vector<512x128xf32>
      %39 = arith.select %36, %34, %38 : vector<512x128xi1>, vector<512x128xf32>
      %40 = arith.truncf %39 : vector<512x128xf32> to vector<512x128xbf16>
      %c0_22 = arith.constant 0 : index
      %c0_23 = arith.constant 0 : index
      %41 = vector.load %arg5[%c0_22, %c0_23] : memref<512x128xbf16, #tpu.memory_space<vmem>>, vector<512x128xbf16>
      tpu.vector_store %arg5[%c0_22, %c0_23], %40 {strides = array<i32>} : memref<512x128xbf16, #tpu.memory_space<vmem>>, vector<512x128xbf16>,
    } else {
    }
    return
  }
  func.func @transform_0(%arg0: i32) -> (i32, i32) {
    %c0_i32 = arith.constant 0 : i32
    %c0_i32_0 = arith.constant 0 : i32
    return %c0_i32, %arg0 : i32, i32
  }
  func.func @transform_1(%arg0: i32) -> (i32, i32) {
    %c0_i32 = arith.constant 0 : i32
    %c0_i32_0 = arith.constant 0 : i32
    return %arg0, %c0_i32 : i32, i32
  }
  func.func @transform_2(%arg0: i32) -> (i32, i32) {
    %c0_i32 = arith.constant 0 : i32
    %c0_i32_0 = arith.constant 0 : i32
    %c0_i32_1 = arith.constant 0 : i32
    return %c0_i32, %c0_i32_0 : i32, i32
  }
  func.func @transform_3(%arg0: i32) -> (i32, i32) {
    %c0_i32 = arith.constant 0 : i32
    %c0_i32_0 = arith.constant 0 : i32
    %c0_i32_1 = arith.constant 0 : i32
    return %c0_i32, %c0_i32_0 : i32, i32
  }
  func.func @transform_4(%arg0: i32) -> (i32, i32) {
    %c0_i32 = arith.constant 0 : i32
    %c0_i32_0 = arith.constant 0 : i32
    %c0_i32_1 = arith.constant 0 : i32
    return %c0_i32, %c0_i32_0 : i32, i32
  }
}

module attributes {stable_mosaic.version = 11 : i64} {
  func.func @_mm_bn_leaky_kernel(%arg0: i32, %arg1: memref<128x512xbf16, #tpu.memory_space<vmem>>, %arg2: memref<512x256xbf16, #tpu.memory_space<vmem>>, %arg3: memref<1x256xf32, #tpu.memory_space<vmem>>, %arg4: memref<1x256xf32, #tpu.memory_space<vmem>>, %arg5: memref<128x256xbf16, #tpu.memory_space<vmem>>, %arg6: memref<128x256xf32, #tpu.memory_space<vmem>>) attributes {dimension_semantics = [#tpu.dimension_semantics<arbitrary>], iteration_bounds = array<i64: 4>, scalar_prefetch = 0 : i64, scratch_operands = 1 : i64, tpu.core_type = #tpu.core_type<tc>, window_params = [{transform_indices = @transform_0, window_bounds = array<i64: 128, 512>}, {transform_indices = @transform_1, window_bounds = array<i64: 512, 256>}, {pipeline_mode = #tpu.pipeline_mode<synchronous>, transform_indices = @transform_2, window_bounds = array<i64: 1, 256>}, {pipeline_mode = #tpu.pipeline_mode<synchronous>, transform_indices = @transform_3, window_bounds = array<i64: 1, 256>}, {pipeline_mode = #tpu.pipeline_mode<synchronous>, transform_indices = @transform_4, window_bounds = array<i64: 128, 256>}]} {
    %c0_i32 = arith.constant 0 : i32
    %0 = arith.cmpi eq, %arg0, %c0_i32 : i32
    %1 = arith.extui %0 : i1 to i32
    %c0_i32_0 = arith.constant 0 : i32
    %2 = arith.cmpi ne, %1, %c0_i32_0 : i32
    scf.if %2 {
      %cst_9 = arith.constant 0.000000e+00 : f32
      %12 = vector.broadcast %cst_9 : f32 to vector<128x256xf32>
      %c0_10 = arith.constant 0 : index
      %c0_11 = arith.constant 0 : index
      %13 = vector.load %arg6[%c0_10, %c0_11] : memref<128x256xf32, #tpu.memory_space<vmem>>, vector<128x256xf32>
      tpu.vector_store %arg6[%c0_10, %c0_11], %12 {strides = array<i32>} : memref<128x256xf32, #tpu.memory_space<vmem>>, vector<128x256xf32>,
    } else {
    }
    %c0 = arith.constant 0 : index
    %c0_1 = arith.constant 0 : index
    %3 = vector.load %arg6[%c0, %c0_1] : memref<128x256xf32, #tpu.memory_space<vmem>>, vector<128x256xf32>
    %c0_2 = arith.constant 0 : index
    %c0_3 = arith.constant 0 : index
    %4 = vector.load %arg1[%c0_2, %c0_3] : memref<128x512xbf16, #tpu.memory_space<vmem>>, vector<128x512xbf16>
    %c0_4 = arith.constant 0 : index
    %c0_5 = arith.constant 0 : index
    %5 = vector.load %arg2[%c0_4, %c0_5] : memref<512x256xbf16, #tpu.memory_space<vmem>>, vector<512x256xbf16>
    %cst = arith.constant dense<0.000000e+00> : vector<128x256xf32>
    %6 = tpu.matmul %4, %5, %cst {dimension_numbers = #tpu.dot_dimension_numbers<[1], [0], [0], [1], [0, 0, 1, 1], [], []>} : vector<128x512xbf16>, vector<512x256xbf16>, vector<128x256xf32> -> vector<128x256xf32>
    %7 = arith.addf %3, %6 : vector<128x256xf32>
    %c0_6 = arith.constant 0 : index
    %c0_7 = arith.constant 0 : index
    %8 = vector.load %arg6[%c0_6, %c0_7] : memref<128x256xf32, #tpu.memory_space<vmem>>, vector<128x256xf32>
    tpu.vector_store %arg6[%c0_6, %c0_7], %7 {strides = array<i32>} : memref<128x256xf32, #tpu.memory_space<vmem>>, vector<128x256xf32>,
    %c3_i32 = arith.constant 3 : i32
    %9 = arith.cmpi eq, %arg0, %c3_i32 : i32
    %10 = arith.extui %9 : i1 to i32
    %c0_i32_8 = arith.constant 0 : i32
    %11 = arith.cmpi ne, %10, %c0_i32_8 : i32
    scf.if %11 {
      %c0_9 = arith.constant 0 : index
      %c0_10 = arith.constant 0 : index
      %12 = vector.load %arg6[%c0_9, %c0_10] : memref<128x256xf32, #tpu.memory_space<vmem>>, vector<128x256xf32>
      %cst_11 = arith.constant dense<0.000000e+00> : vector<256xf32>
      %13 = vector.multi_reduction <add>, %12, %cst_11 [0] : vector<128x256xf32> to vector<256xf32>
      %14 = vector.shape_cast %13 : vector<256xf32> to vector<1x256xf32>
      %cst_12 = arith.constant 1.280000e+02 : f32
      %15 = vector.broadcast %cst_12 : f32 to vector<1x256xf32>
      %16 = arith.divf %14, %15 : vector<1x256xf32>
      %17 = vector.broadcast %16 : vector<1x256xf32> to vector<128x256xf32>
      %18 = arith.subf %12, %17 : vector<128x256xf32>
      %19 = arith.mulf %18, %18 : vector<128x256xf32>
      %cst_13 = arith.constant dense<0.000000e+00> : vector<256xf32>
      %20 = vector.multi_reduction <add>, %19, %cst_13 [0] : vector<128x256xf32> to vector<256xf32>
      %21 = vector.shape_cast %20 : vector<256xf32> to vector<1x256xf32>
      %cst_14 = arith.constant 1.280000e+02 : f32
      %22 = vector.broadcast %cst_14 : f32 to vector<1x256xf32>
      %23 = arith.divf %21, %22 : vector<1x256xf32>
      %cst_15 = arith.constant 9.99999974E-6 : f32
      %24 = vector.broadcast %cst_15 : f32 to vector<1x256xf32>
      %25 = arith.addf %23, %24 : vector<1x256xf32>
      %26 = math.rsqrt %25 : vector<1x256xf32>
      %27 = vector.broadcast %26 : vector<1x256xf32> to vector<128x256xf32>
      %28 = arith.mulf %18, %27 : vector<128x256xf32>
      %c0_16 = arith.constant 0 : index
      %c0_17 = arith.constant 0 : index
      %29 = vector.load %arg3[%c0_16, %c0_17] : memref<1x256xf32, #tpu.memory_space<vmem>>, vector<1x256xf32>
      %30 = vector.broadcast %29 : vector<1x256xf32> to vector<128x256xf32>
      %31 = arith.mulf %28, %30 : vector<128x256xf32>
      %c0_18 = arith.constant 0 : index
      %c0_19 = arith.constant 0 : index
      %32 = vector.load %arg4[%c0_18, %c0_19] : memref<1x256xf32, #tpu.memory_space<vmem>>, vector<1x256xf32>
      %33 = vector.broadcast %32 : vector<1x256xf32> to vector<128x256xf32>
      %34 = arith.addf %31, %33 : vector<128x256xf32>
      %cst_20 = arith.constant 0.000000e+00 : f32
      %35 = vector.broadcast %cst_20 : f32 to vector<128x256xf32>
      %36 = arith.cmpf oge, %34, %35 : vector<128x256xf32>
      %cst_21 = arith.constant 2.000000e-01 : f32
      %37 = vector.broadcast %cst_21 : f32 to vector<128x256xf32>
      %38 = arith.mulf %37, %34 : vector<128x256xf32>
      %39 = arith.select %36, %34, %38 : vector<128x256xi1>, vector<128x256xf32>
      %40 = arith.truncf %39 : vector<128x256xf32> to vector<128x256xbf16>
      %c0_22 = arith.constant 0 : index
      %c0_23 = arith.constant 0 : index
      %41 = vector.load %arg5[%c0_22, %c0_23] : memref<128x256xbf16, #tpu.memory_space<vmem>>, vector<128x256xbf16>
      tpu.vector_store %arg5[%c0_22, %c0_23], %40 {strides = array<i32>} : memref<128x256xbf16, #tpu.memory_space<vmem>>, vector<128x256xbf16>,
    } else {
    }
    return
  }
  func.func @transform_0(%arg0: i32) -> (i32, i32) {
    %c0_i32 = arith.constant 0 : i32
    %c0_i32_0 = arith.constant 0 : i32
    return %c0_i32, %arg0 : i32, i32
  }
  func.func @transform_1(%arg0: i32) -> (i32, i32) {
    %c0_i32 = arith.constant 0 : i32
    %c0_i32_0 = arith.constant 0 : i32
    return %arg0, %c0_i32 : i32, i32
  }
  func.func @transform_2(%arg0: i32) -> (i32, i32) {
    %c0_i32 = arith.constant 0 : i32
    %c0_i32_0 = arith.constant 0 : i32
    %c0_i32_1 = arith.constant 0 : i32
    return %c0_i32, %c0_i32_0 : i32, i32
  }
  func.func @transform_3(%arg0: i32) -> (i32, i32) {
    %c0_i32 = arith.constant 0 : i32
    %c0_i32_0 = arith.constant 0 : i32
    %c0_i32_1 = arith.constant 0 : i32
    return %c0_i32, %c0_i32_0 : i32, i32
  }
  func.func @transform_4(%arg0: i32) -> (i32, i32) {
    %c0_i32 = arith.constant 0 : i32
    %c0_i32_0 = arith.constant 0 : i32
    %c0_i32_1 = arith.constant 0 : i32
    return %c0_i32, %c0_i32_0 : i32, i32
  }
}

module attributes {stable_mosaic.version = 11 : i64} {
  func.func @_mm_bn_leaky_kernel(%arg0: i32, %arg1: memref<32x512xbf16, #tpu.memory_space<vmem>>, %arg2: memref<512x512xbf16, #tpu.memory_space<vmem>>, %arg3: memref<1x512xf32, #tpu.memory_space<vmem>>, %arg4: memref<1x512xf32, #tpu.memory_space<vmem>>, %arg5: memref<32x512xbf16, #tpu.memory_space<vmem>>, %arg6: memref<32x512xf32, #tpu.memory_space<vmem>>) attributes {dimension_semantics = [#tpu.dimension_semantics<arbitrary>], iteration_bounds = array<i64: 8>, scalar_prefetch = 0 : i64, scratch_operands = 1 : i64, tpu.core_type = #tpu.core_type<tc>, window_params = [{transform_indices = @transform_0, window_bounds = array<i64: 32, 512>}, {transform_indices = @transform_1, window_bounds = array<i64: 512, 512>}, {pipeline_mode = #tpu.pipeline_mode<synchronous>, transform_indices = @transform_2, window_bounds = array<i64: 1, 512>}, {pipeline_mode = #tpu.pipeline_mode<synchronous>, transform_indices = @transform_3, window_bounds = array<i64: 1, 512>}, {pipeline_mode = #tpu.pipeline_mode<synchronous>, transform_indices = @transform_4, window_bounds = array<i64: 32, 512>}]} {
    %c0_i32 = arith.constant 0 : i32
    %0 = arith.cmpi eq, %arg0, %c0_i32 : i32
    %1 = arith.extui %0 : i1 to i32
    %c0_i32_0 = arith.constant 0 : i32
    %2 = arith.cmpi ne, %1, %c0_i32_0 : i32
    scf.if %2 {
      %cst_9 = arith.constant 0.000000e+00 : f32
      %12 = vector.broadcast %cst_9 : f32 to vector<32x512xf32>
      %c0_10 = arith.constant 0 : index
      %c0_11 = arith.constant 0 : index
      %13 = vector.load %arg6[%c0_10, %c0_11] : memref<32x512xf32, #tpu.memory_space<vmem>>, vector<32x512xf32>
      tpu.vector_store %arg6[%c0_10, %c0_11], %12 {strides = array<i32>} : memref<32x512xf32, #tpu.memory_space<vmem>>, vector<32x512xf32>,
    } else {
    }
    %c0 = arith.constant 0 : index
    %c0_1 = arith.constant 0 : index
    %3 = vector.load %arg6[%c0, %c0_1] : memref<32x512xf32, #tpu.memory_space<vmem>>, vector<32x512xf32>
    %c0_2 = arith.constant 0 : index
    %c0_3 = arith.constant 0 : index
    %4 = vector.load %arg1[%c0_2, %c0_3] : memref<32x512xbf16, #tpu.memory_space<vmem>>, vector<32x512xbf16>
    %c0_4 = arith.constant 0 : index
    %c0_5 = arith.constant 0 : index
    %5 = vector.load %arg2[%c0_4, %c0_5] : memref<512x512xbf16, #tpu.memory_space<vmem>>, vector<512x512xbf16>
    %cst = arith.constant dense<0.000000e+00> : vector<32x512xf32>
    %6 = tpu.matmul %4, %5, %cst {dimension_numbers = #tpu.dot_dimension_numbers<[1], [0], [0], [1], [0, 0, 1, 1], [], []>} : vector<32x512xbf16>, vector<512x512xbf16>, vector<32x512xf32> -> vector<32x512xf32>
    %7 = arith.addf %3, %6 : vector<32x512xf32>
    %c0_6 = arith.constant 0 : index
    %c0_7 = arith.constant 0 : index
    %8 = vector.load %arg6[%c0_6, %c0_7] : memref<32x512xf32, #tpu.memory_space<vmem>>, vector<32x512xf32>
    tpu.vector_store %arg6[%c0_6, %c0_7], %7 {strides = array<i32>} : memref<32x512xf32, #tpu.memory_space<vmem>>, vector<32x512xf32>,
    %c7_i32 = arith.constant 7 : i32
    %9 = arith.cmpi eq, %arg0, %c7_i32 : i32
    %10 = arith.extui %9 : i1 to i32
    %c0_i32_8 = arith.constant 0 : i32
    %11 = arith.cmpi ne, %10, %c0_i32_8 : i32
    scf.if %11 {
      %c0_9 = arith.constant 0 : index
      %c0_10 = arith.constant 0 : index
      %12 = vector.load %arg6[%c0_9, %c0_10] : memref<32x512xf32, #tpu.memory_space<vmem>>, vector<32x512xf32>
      %cst_11 = arith.constant dense<0.000000e+00> : vector<512xf32>
      %13 = vector.multi_reduction <add>, %12, %cst_11 [0] : vector<32x512xf32> to vector<512xf32>
      %14 = vector.shape_cast %13 : vector<512xf32> to vector<1x512xf32>
      %cst_12 = arith.constant 3.200000e+01 : f32
      %15 = vector.broadcast %cst_12 : f32 to vector<1x512xf32>
      %16 = arith.divf %14, %15 : vector<1x512xf32>
      %17 = vector.broadcast %16 : vector<1x512xf32> to vector<32x512xf32>
      %18 = arith.subf %12, %17 : vector<32x512xf32>
      %19 = arith.mulf %18, %18 : vector<32x512xf32>
      %cst_13 = arith.constant dense<0.000000e+00> : vector<512xf32>
      %20 = vector.multi_reduction <add>, %19, %cst_13 [0] : vector<32x512xf32> to vector<512xf32>
      %21 = vector.shape_cast %20 : vector<512xf32> to vector<1x512xf32>
      %cst_14 = arith.constant 3.200000e+01 : f32
      %22 = vector.broadcast %cst_14 : f32 to vector<1x512xf32>
      %23 = arith.divf %21, %22 : vector<1x512xf32>
      %cst_15 = arith.constant 9.99999974E-6 : f32
      %24 = vector.broadcast %cst_15 : f32 to vector<1x512xf32>
      %25 = arith.addf %23, %24 : vector<1x512xf32>
      %26 = math.rsqrt %25 : vector<1x512xf32>
      %27 = vector.broadcast %26 : vector<1x512xf32> to vector<32x512xf32>
      %28 = arith.mulf %18, %27 : vector<32x512xf32>
      %c0_16 = arith.constant 0 : index
      %c0_17 = arith.constant 0 : index
      %29 = vector.load %arg3[%c0_16, %c0_17] : memref<1x512xf32, #tpu.memory_space<vmem>>, vector<1x512xf32>
      %30 = vector.broadcast %29 : vector<1x512xf32> to vector<32x512xf32>
      %31 = arith.mulf %28, %30 : vector<32x512xf32>
      %c0_18 = arith.constant 0 : index
      %c0_19 = arith.constant 0 : index
      %32 = vector.load %arg4[%c0_18, %c0_19] : memref<1x512xf32, #tpu.memory_space<vmem>>, vector<1x512xf32>
      %33 = vector.broadcast %32 : vector<1x512xf32> to vector<32x512xf32>
      %34 = arith.addf %31, %33 : vector<32x512xf32>
      %cst_20 = arith.constant 0.000000e+00 : f32
      %35 = vector.broadcast %cst_20 : f32 to vector<32x512xf32>
      %36 = arith.cmpf oge, %34, %35 : vector<32x512xf32>
      %cst_21 = arith.constant 2.000000e-01 : f32
      %37 = vector.broadcast %cst_21 : f32 to vector<32x512xf32>
      %38 = arith.mulf %37, %34 : vector<32x512xf32>
      %39 = arith.select %36, %34, %38 : vector<32x512xi1>, vector<32x512xf32>
      %40 = arith.truncf %39 : vector<32x512xf32> to vector<32x512xbf16>
      %c0_22 = arith.constant 0 : index
      %c0_23 = arith.constant 0 : index
      %41 = vector.load %arg5[%c0_22, %c0_23] : memref<32x512xbf16, #tpu.memory_space<vmem>>, vector<32x512xbf16>
      tpu.vector_store %arg5[%c0_22, %c0_23], %40 {strides = array<i32>} : memref<32x512xbf16, #tpu.memory_space<vmem>>, vector<32x512xbf16>,
    } else {
    }
    return
  }
  func.func @transform_0(%arg0: i32) -> (i32, i32) {
    %c0_i32 = arith.constant 0 : i32
    %c0_i32_0 = arith.constant 0 : i32
    return %c0_i32, %arg0 : i32, i32
  }
  func.func @transform_1(%arg0: i32) -> (i32, i32) {
    %c0_i32 = arith.constant 0 : i32
    %c0_i32_0 = arith.constant 0 : i32
    return %arg0, %c0_i32 : i32, i32
  }
  func.func @transform_2(%arg0: i32) -> (i32, i32) {
    %c0_i32 = arith.constant 0 : i32
    %c0_i32_0 = arith.constant 0 : i32
    %c0_i32_1 = arith.constant 0 : i32
    return %c0_i32, %c0_i32_0 : i32, i32
  }
  func.func @transform_3(%arg0: i32) -> (i32, i32) {
    %c0_i32 = arith.constant 0 : i32
    %c0_i32_0 = arith.constant 0 : i32
    %c0_i32_1 = arith.constant 0 : i32
    return %c0_i32, %c0_i32_0 : i32, i32
  }
  func.func @transform_4(%arg0: i32) -> (i32, i32) {
    %c0_i32 = arith.constant 0 : i32
    %c0_i32_0 = arith.constant 0 : i32
    %c0_i32_1 = arith.constant 0 : i32
    return %c0_i32, %c0_i32_0 : i32, i32
  }
}

module attributes {stable_mosaic.version = 11 : i64} {
  func.func @_head_sigmoid_kernel(%arg0: memref<2x8192xbf16, #tpu.memory_space<vmem>>, %arg1: memref<1x8192xbf16, #tpu.memory_space<vmem>>, %arg2: memref<2x1xf32, #tpu.memory_space<vmem>>) attributes {dimension_semantics = [], scalar_prefetch = 0 : i64, scratch_operands = 0 : i64, tpu.core_type = #tpu.core_type<tc>} {
    %c0 = arith.constant 0 : index
    %c0_0 = arith.constant 0 : index
    %0 = vector.load %arg0[%c0, %c0_0] : memref<2x8192xbf16, #tpu.memory_space<vmem>>, vector<2x8192xbf16>
    %1 = arith.extf %0 : vector<2x8192xbf16> to vector<2x8192xf32>
    %c0_1 = arith.constant 0 : index
    %c0_2 = arith.constant 0 : index
    %2 = vector.load %arg1[%c0_1, %c0_2] : memref<1x8192xbf16, #tpu.memory_space<vmem>>, vector<1x8192xbf16>
    %3 = arith.extf %2 : vector<1x8192xbf16> to vector<1x8192xf32>
    %4 = vector.broadcast %3 : vector<1x8192xf32> to vector<2x8192xf32>
    %5 = arith.mulf %1, %4 : vector<2x8192xf32>
    %cst = arith.constant dense<0.000000e+00> : vector<2xf32>
    %6 = vector.multi_reduction <add>, %5, %cst [1] : vector<2x8192xf32> to vector<2xf32>
    %7 = vector.shape_cast %6 : vector<2xf32> to vector<2x1xf32>
    %8 = arith.negf %7 : vector<2x1xf32>
    %9 = math.exp %8 : vector<2x1xf32>
    %cst_3 = arith.constant 1.000000e+00 : f32
    %10 = vector.broadcast %cst_3 : f32 to vector<2x1xf32>
    %11 = arith.addf %10, %9 : vector<2x1xf32>
    %12 = arith.divf %10, %11 : vector<2x1xf32>
    %c0_4 = arith.constant 0 : index
    %c0_5 = arith.constant 0 : index
    %13 = vector.load %arg2[%c0_4, %c0_5] : memref<2x1xf32, #tpu.memory_space<vmem>>, vector<2x1xf32>
    tpu.vector_store %arg2[%c0_4, %c0_5], %12 {strides = array<i32>} : memref<2x1xf32, #tpu.memory_space<vmem>>, vector<2x1xf32>,
    return
  }
}

</mosaic_0001>

<llo_original>
// kernel: discriminator_forward.5
$region0: #{discriminator_forward.5}
  #allocation0 [shape = 'u32[]', space=smem, size = 0x4, offset = 0x4, fixed_abs, tag = 'smem constant byte address 0x4 - core index']
  #allocation1 [shape = 'u32[144,128]{1,0:T(1,128)}', space=vmem, size = 0x12000, scoped, tag = 'internal scratch']
  #allocation2 [shape = 'f32[512,64]{1,0:T(8,128)}', space=vmem, size = 0x40000, scoped, tag = 'scratch operand']
  %s0 = inlined_call_operand.vmem [shape: bf16[2048,48], index: 0, kind: input, shape index: {}]
  %s1 = inlined_call_operand.vmem [shape: bf16[48,64], index: 1, kind: input, shape index: {}]
  %s2 = inlined_call_operand.vmem [shape: bf16[2048,64], index: 2, kind: output, shape index: {}]
  %s3 = sld [smem:[#allocation0]]
  $region49: #{discriminator_forward.5} parent=0
    _
  %s5 = ssub.s32 1, %s3
  %s6 = scalar_select 0, %s5, %s3
  loop: start=0, step=1, limit=6
  $region2: #{discriminator_forward.5} parent=0 // loop_pre_header
    _
  $region3: #{discriminator_forward.5} parent=0 // loop_header
    %s8 = sphi 0, %s12
    %p9 = scmp.ge.s32.totalorder %s8, 6
    %s15 = sphi 0, %s27
    %s16 = sphi 0, %s23
    %s17 = sphi 0, %s15
    %s18 = sphi 0, %s16
    %s19 = sphi 0, %s17
    %s20 = sphi 0, %s18
    %s32 = sphi 0, %s34
    %s35 = sphi 0, %s32
    %s36 = sphi 0, %s35
    %s52 = sphi 0, %s36
    %s58 = sphi 0, %s60
    %s61 = sphi 0, %s58
    %s62 = sphi 0, %s61
    %s78 = sphi 0, %s62
    %s84 = sphi 0, %s86
    %s87 = sphi 0, %s84
    %s88 = sphi 0, %s87
    %s104 = sphi 0, %s88
  $region4: #{discriminator_forward.5} parent=0 // loop_header_branch
    %11 = sbr.rel (%p9) target = $region8
  $region5: #{discriminator_forward.5} parent=0 // loop_body
    %s13 = ssub.s32 %s8, 1
    %s14 = ssub.s32 %s8, 2
    %s21 = sadd.s32 1, %s16
    %p22 = scmp.ge.s32.totalorder %s21, 1
    %s23 = scalar_select %p22, 0, %s21
    %s24 = sadd.s32 1, %s15
    %s25 = scalar_select %p22, %s24, %s15
    %p26 = scmp.ge.s32.totalorder %s25, 4
    %s27 = scalar_select %p26, 0, %s25
    %s28 = ssub.s32 %s15, %s27
    %s29 = ssub.s32 %s16, %s23
    %s30 = sor.u32 %s28, %s29
    %p31 = scmp.eq.s32.totalorder %s30, 0
    %s33 = sadd.s32 %s32, 1
    %s34 = scalar_select %p31, %s32, %s33
    %p37 = pneg %p31
    %p38 = scmp.eq.s32.totalorder %s8, 3
    %p39 = por %p37, %p38
    %p40 = scmp.ne.s32.totalorder %s32, %s35
    %p41 = scmp.eq.s32.totalorder %s8, 0
    %p42 = por %p40, %p41
    %p43 = scmp.ne.s32.totalorder %s32, %s35
    %p44 = scmp.eq.s32.totalorder %s13, 3
    %p45 = por %p43, %p44
    %p46 = scmp.ne.s32.totalorder %s35, %s36
    %p47 = scmp.eq.s32.totalorder %s13, 0
    %p48 = por %p46, %p47
    %p49 = scmp.ne.s32.totalorder %s35, %s36
    %p50 = scmp.eq.s32.totalorder %s14, 3
    %p51 = por %p49, %p50
    %p53 = scmp.ne.s32.totalorder %s36, %s52
    %p54 = scmp.eq.s32.totalorder %s14, 0
    %p55 = por %p53, %p54
    %s56 = ssub.s32 %s16, %s23
    %p57 = scmp.eq.s32.totalorder %s56, 0
    %s59 = sadd.s32 %s58, 1
    %s60 = scalar_select %p57, %s58, %s59
    %p63 = pneg %p57
    %p64 = scmp.eq.s32.totalorder %s8, 3
    %p65 = por %p63, %p64
    %p66 = scmp.ne.s32.totalorder %s58, %s61
    %p67 = scmp.eq.s32.totalorder %s8, 0
    %p68 = por %p66, %p67
    %p69 = scmp.ne.s32.totalorder %s58, %s61
    %p70 = scmp.eq.s32.totalorder %s13, 3
    %p71 = por %p69, %p70
    %p72 = scmp.ne.s32.totalorder %s61, %s62
    %p73 = scmp.eq.s32.totalorder %s13, 0
    %p74 = por %p72, %p73
    %p75 = scmp.ne.s32.totalorder %s61, %s62
    %p76 = scmp.eq.s32.totalorder %s14, 3
    %p77 = por %p75, %p76
    %p79 = scmp.ne.s32.totalorder %s62, %s78
    %p80 = scmp.eq.s32.totalorder %s14, 0
    %p81 = por %p79, %p80
    %s82 = ssub.s32 %s15, %s27
    %p83 = scmp.eq.s32.totalorder %s82, 0
    %s85 = sadd.s32 %s84, 1
    %s86 = scalar_select %p83, %s84, %s85
    %p89 = pneg %p83
    %p90 = scmp.eq.s32.totalorder %s8, 3
    %p91 = por %p89, %p90
    %p92 = scmp.ne.s32.totalorder %s84, %s87
    %p93 = scmp.eq.s32.totalorder %s8, 0
    %p94 = por %p92, %p93
    %p95 = scmp.ne.s32.totalorder %s84, %s87
    %p96 = scmp.eq.s32.totalorder %s13, 3
    %p97 = por %p95, %p96
    %p98 = scmp.ne.s32.totalorder %s87, %s88
    %p99 = scmp.eq.s32.totalorder %s13, 0
    %p100 = por %p98, %p99
    %p101 = scmp.ne.s32.totalorder %s87, %s88
    %p102 = scmp.eq.s32.totalorder %s14, 3
    %p103 = por %p101, %p102
    %p105 = scmp.ne.s32.totalorder %s88, %s104
    %p106 = scmp.eq.s32.totalorder %s14, 0
    %p107 = por %p105, %p106
    %p108 = scmp.le.s32.totalorder 1, %s8
    %p109 = scmp.lt.s32.totalorder %s8, 5
    %p110 = pnand %p108, %p109
    %p111 = pneg %p110
    // Predicated region
    $region9: #{discriminator_forward.5} parent=5 // pred_check
      _
    $region10: #{discriminator_forward.5} parent=5 // pred_check_branch
      %113 = sbr.rel (%p110) target = $region12
    $region11: #{discriminator_forward.5} parent=5 // pred_region
      %s114 = ssub.s32 %s8, 1
      // Predicated region
      $region13: #{discriminator_forward.5} parent=11 // pred_check
        %p115 = pneg %p74
      $region14: #{discriminator_forward.5} parent=11 // pred_check_branch
        %117 = sbr.rel (%p115) target = $region16
      $region15: #{discriminator_forward.5} parent=11 // pred_region
        %s118 = smul.u32 6, %s18
        %p119 = scmp.lt.s32.totalorder %s118, 5
        %s120 = scalar_select %p119, %s118, 5
        %s121 = smul.addr %s120, 4
        %s122 = scalar_lea.vmem %s1, %s121
        %s123 = smul.u32 6, %s18
      $region16: #{discriminator_forward.5} parent=11 // pred_fallthru
        _
    $region12: #{discriminator_forward.5} parent=5 // pred_fallthru
      _
    %p124 = scmp.lt.s32.totalorder %s8, 4
    // Predicated region
    $region17: #{discriminator_forward.5} parent=5 // pred_check
      %p125 = pneg %p124
    $region18: #{discriminator_forward.5} parent=5 // pred_check_branch
      %127 = sbr.rel (%p125) target = $region20
    $region19: #{discriminator_forward.5} parent=5 // pred_region
      // Predicated region
      $region21: #{discriminator_forward.5} parent=19 // pred_check
        %p128 = pneg %p42
      $region22: #{discriminator_forward.5} parent=19 // pred_check_branch
        %130 = sbr.rel (%p128) target = $region24
      $region23: #{discriminator_forward.5} parent=19 // pred_region
        %s131 = smul.u32 64, %s15
        %p132 = scmp.lt.s32.totalorder %s131, 255
        %s133 = scalar_select %p132, %s131, 255
        %p134 = scmp.lt.s32.totalorder %s16, 0
        %s135 = scalar_select %p134, %s16, 0
        %s136 = sadd.s32 %s135, %s133
        %s137 = smul.addr %s136, 4
        %s138 = scalar_lea.vmem %s0, %s137
        %s139 = smul.u32 64, %s15
      $region24: #{discriminator_forward.5} parent=19 // pred_fallthru
        _
    $region20: #{discriminator_forward.5} parent=5 // pred_fallthru
      _
    %p140 = scmp.le.s32.totalorder 1, %s8
    %p141 = scmp.lt.s32.totalorder %s8, 5
    %p142 = pnand %p140, %p141
    %p143 = pneg %p142
    // Predicated region
    $region25: #{discriminator_forward.5} parent=5 // pred_check
      _
    $region26: #{discriminator_forward.5} parent=5 // pred_check_branch
      %145 = sbr.rel (%p142) target = $region28
    $region27: #{discriminator_forward.5} parent=5 // pred_region
      %s146 = ssub.s32 %s8, 1
      %s147 = smul.u32 64, %s17
      %p148 = scmp.lt.s32.totalorder %s147, 255
      %s149 = scalar_select %p148, %s147, 255
      %p150 = scmp.lt.s32.totalorder %s18, 0
      %s151 = scalar_select %p150, %s18, 0
      %s152 = sadd.s32 %s151, %s149
      %s153 = smul.addr %s152, 4
      %s154 = scalar_lea.vmem %s0, %s153
      %p155 = pneg %p48
      %p156 = pneg %p45
      %s157 = smul.u32 6, %s18
      %p158 = scmp.lt.s32.totalorder %s157, 5
      %s159 = scalar_select %p158, %s157, 5
      %s160 = smul.addr %s159, 4
      %s161 = scalar_lea.vmem %s1, %s160
      %p162 = pneg %p74
      %p163 = pneg %p71
      %p164 = pneg %p100
      %p165 = pneg %p97
      %s166 = smul.u32 64, %s17
      %p167 = scmp.lt.s32.totalorder %s166, 255
      %s168 = scalar_select %p167, %s166, 255
      %s169 = smul.addr %s168, 4
      %s170 = scalar_lea.vmem %s2, %s169
      %s171 = smul.u32 64, %s17
      %p172 = scmp.lt.s32.totalorder %s171, 255
      %s173 = scalar_select %p172, %s171, 255
      %p174 = scmp.lt.s32.totalorder %s18, 0
      %s175 = scalar_select %p174, %s18, 0
      %s176 = sadd.s32 %s175, %s173
      %s177 = smul.addr %s176, 4
      %s178 = scalar_lea.vmem %s0, %s177
      %s179 = smul.u32 64, %s17
      %s180 = smul.u32 6, %s18
      %p181 = scmp.lt.s32.totalorder %s180, 5
      %s182 = scalar_select %p181, %s180, 5
      %s183 = smul.addr %s182, 4
      %s184 = scalar_lea.vmem %s1, %s183
      %s185 = smul.u32 6, %s18
      %s186 = smul.u32 64, %s17
      %p187 = scmp.lt.s32.totalorder %s186, 255
      %s188 = scalar_select %p187, %s186, 255
      %s189 = smul.addr %s188, 4
      %s190 = scalar_lea.vmem %s2, %s189
      %s191 = smul.u32 64, %s17
      %p193 = scmp.eq.s32.totalorder %s18, 0
      // Predicated region
      $region29: #{discriminator_forward.5} parent=27 // pred_check
        %p194 = pneg %p193
      $region30: #{discriminator_forward.5} parent=27 // pred_check_branch
        %196 = sbr.rel (%p194) target = $region32
      $region31: #{discriminator_forward.5} parent=27 // pred_region
        %vm197 = vcmask 523264
        %198 = vst.msk [vmem:[#allocation2] sm:$0xff] %vm197, 0.0
        %199 = vst.msk [vmem:[#allocation2 + $0x8] sm:$0xff] %vm197, 0.0
        %200 = vst.msk [vmem:[#allocation2 + $0x10] sm:$0xff] %vm197, 0.0
        %201 = vst.msk [vmem:[#allocation2 + $0x18] sm:$0xff] %vm197, 0.0
        %202 = vst.msk [vmem:[#allocation2 + $0x20] sm:$0xff] %vm197, 0.0
        %203 = vst.msk [vmem:[#allocation2 + $0x28] sm:$0xff] %vm197, 0.0
        %204 = vst.msk [vmem:[#allocation2 + $0x30] sm:$0xff] %vm197, 0.0
        %205 = vst.msk [vmem:[#allocation2 + $0x38] sm:$0xff] %vm197, 0.0
        %206 = vst.msk [vmem:[#allocation2 + $0x40] sm:$0xff] %vm197, 0.0
        %207 = vst.msk [vmem:[#allocation2 + $0x48] sm:$0xff] %vm197, 0.0
        %208 = vst.msk [vmem:[#allocation2 + $0x50] sm:$0xff] %vm197, 0.0
        %209 = vst.msk [vmem:[#allocation2 + $0x58] sm:$0xff] %vm197, 0.0
        %210 = vst.msk [vmem:[#allocation2 + $0x60] sm:$0xff] %vm197, 0.0
        %211 = vst.msk [vmem:[#allocation2 + $0x68] sm:$0xff] %vm197, 0.0
        %212 = vst.msk [vmem:[#allocation2 + $0x70] sm:$0xff] %vm197, 0.0
        %213 = vst.msk [vmem:[#allocation2 + $0x78] sm:$0xff] %vm197, 0.0
        %214 = vst.msk [vmem:[#allocation2 + $0x80] sm:$0xff] %vm197, 0.0
        %215 = vst.msk [vmem:[#allocation2 + $0x88] sm:$0xff] %vm197, 0.0
        %216 = vst.msk [vmem:[#allocation2 + $0x90] sm:$0xff] %vm197, 0.0
        %217 = vst.msk [vmem:[#allocation2 + $0x98] sm:$0xff] %vm197, 0.0
        %218 = vst.msk [vmem:[#allocation2 + $0xa0] sm:$0xff] %vm197, 0.0
        %219 = vst.msk [vmem:[#allocation2 + $0xa8] sm:$0xff] %vm197, 0.0
        %220 = vst.msk [vmem:[#allocation2 + $0xb0] sm:$0xff] %vm197, 0.0
        %221 = vst.msk [vmem:[#allocation2 + $0xb8] sm:$0xff] %vm197, 0.0
        %222 = vst.msk [vmem:[#allocation2 + $0xc0] sm:$0xff] %vm197, 0.0
        %223 = vst.msk [vmem:[#allocation2 + $0xc8] sm:$0xff] %vm197, 0.0
        %224 = vst.msk [vmem:[#allocation2 + $0xd0] sm:$0xff] %vm197, 0.0
        %225 = vst.msk [vmem:[#allocation2 + $0xd8] sm:$0xff] %vm197, 0.0
        %226 = vst.msk [vmem:[#allocation2 + $0xe0] sm:$0xff] %vm197, 0.0
        %227 = vst.msk [vmem:[#allocation2 + $0xe8] sm:$0xff] %vm197, 0.0
        %228 = vst.msk [vmem:[#allocation2 + $0xf0] sm:$0xff] %vm197, 0.0
        %229 = vst.msk [vmem:[#allocation2 + $0xf8] sm:$0xff] %vm197, 0.0
        %230 = vst.msk [vmem:[#allocation2 + $0x100] sm:$0xff] %vm197, 0.0
        %231 = vst.msk [vmem:[#allocation2 + $0x108] sm:$0xff] %vm197, 0.0
        %232 = vst.msk [vmem:[#allocation2 + $0x110] sm:$0xff] %vm197, 0.0
        %233 = vst.msk [vmem:[#allocation2 + $0x118] sm:$0xff] %vm197, 0.0
        %234 = vst.msk [vmem:[#allocation2 + $0x120] sm:$0xff] %vm197, 0.0
        %235 = vst.msk [vmem:[#allocation2 + $0x128] sm:$0xff] %vm197, 0.0
        %236 = vst.msk [vmem:[#allocation2 + $0x130] sm:$0xff] %vm197, 0.0
        %237 = vst.msk [vmem:[#allocation2 + $0x138] sm:$0xff] %vm197, 0.0
        %238 = vst.msk [vmem:[#allocation2 + $0x140] sm:$0xff] %vm197, 0.0
        %239 = vst.msk [vmem:[#allocation2 + $0x148] sm:$0xff] %vm197, 0.0
        %240 = vst.msk [vmem:[#allocation2 + $0x150] sm:$0xff] %vm197, 0.0
        %241 = vst.msk [vmem:[#allocation2 + $0x158] sm:$0xff] %vm197, 0.0
        %242 = vst.msk [vmem:[#allocation2 + $0x160] sm:$0xff] %vm197, 0.0
        %243 = vst.msk [vmem:[#allocation2 + $0x168] sm:$0xff] %vm197, 0.0
        %244 = vst.msk [vmem:[#allocation2 + $0x170] sm:$0xff] %vm197, 0.0
        %245 = vst.msk [vmem:[#allocation2 + $0x178] sm:$0xff] %vm197, 0.0
        %246 = vst.msk [vmem:[#allocation2 + $0x180] sm:$0xff] %vm197, 0.0
        %247 = vst.msk [vmem:[#allocation2 + $0x188] sm:$0xff] %vm197, 0.0
        %248 = vst.msk [vmem:[#allocation2 + $0x190] sm:$0xff] %vm197, 0.0
        %249 = vst.msk [vmem:[#allocation2 + $0x198] sm:$0xff] %vm197, 0.0
        %250 = vst.msk [vmem:[#allocation2 + $0x1a0] sm:$0xff] %vm197, 0.0
        %251 = vst.msk [vmem:[#allocation2 + $0x1a8] sm:$0xff] %vm197, 0.0
        %252 = vst.msk [vmem:[#allocation2 + $0x1b0] sm:$0xff] %vm197, 0.0
        %253 = vst.msk [vmem:[#allocation2 + $0x1b8] sm:$0xff] %vm197, 0.0
        %254 = vst.msk [vmem:[#allocation2 + $0x1c0] sm:$0xff] %vm197, 0.0
        %255 = vst.msk [vmem:[#allocation2 + $0x1c8] sm:$0xff] %vm197, 0.0
        %256 = vst.msk [vmem:[#allocation2 + $0x1d0] sm:$0xff] %vm197, 0.0
        %257 = vst.msk [vmem:[#allocation2 + $0x1d8] sm:$0xff] %vm197, 0.0
        %258 = vst.msk [vmem:[#allocation2 + $0x1e0] sm:$0xff] %vm197, 0.0
        %259 = vst.msk [vmem:[#allocation2 + $0x1e8] sm:$0xff] %vm197, 0.0
        %260 = vst.msk [vmem:[#allocation2 + $0x1f0] sm:$0xff] %vm197, 0.0
        %261 = vst.msk [vmem:[#allocation2 + $0x1f8] sm:$0xff] %vm197, 0.0
      $region32: #{discriminator_forward.5} parent=27 // pred_fallthru
        _
      %v262 = vld [vmem:[#allocation2] sm:$0xff]
      %v263 = vld [vmem:[#allocation2 + $0x8] sm:$0xff]
      %v264 = vld [vmem:[#allocation2 + $0x10] sm:$0xff]
      %v265 = vld [vmem:[#allocation2 + $0x18] sm:$0xff]
      %v266 = vld [vmem:[#allocation2 + $0x20] sm:$0xff]
      %v267 = vld [vmem:[#allocation2 + $0x28] sm:$0xff]
      %v268 = vld [vmem:[#allocation2 + $0x30] sm:$0xff]
      %v269 = vld [vmem:[#allocation2 + $0x38] sm:$0xff]
      %v270 = vld [vmem:[#allocation2 + $0x40] sm:$0xff]
      %v271 = vld [vmem:[#allocation2 + $0x48] sm:$0xff]
      %v272 = vld [vmem:[#allocation2 + $0x50] sm:$0xff]
      %v273 = vld [vmem:[#allocation2 + $0x58] sm:$0xff]
      %v274 = vld [vmem:[#allocation2 + $0x60] sm:$0xff]
      %v275 = vld [vmem:[#allocation2 + $0x68] sm:$0xff]
      %v276 = vld [vmem:[#allocation2 + $0x70] sm:$0xff]
      %v277 = vld [vmem:[#allocation2 + $0x78] sm:$0xff]
      %v278 = vld [vmem:[#allocation2 + $0x80] sm:$0xff]
      %v279 = vld [vmem:[#allocation2 + $0x88] sm:$0xff]
      %v280 = vld [vmem:[#allocation2 + $0x90] sm:$0xff]
      %v281 = vld [vmem:[#allocation2 + $0x98] sm:$0xff]
      %v282 = vld [vmem:[#allocation2 + $0xa0] sm:$0xff]
      %v283 = vld [vmem:[#allocation2 + $0xa8] sm:$0xff]
      %v284 = vld [vmem:[#allocation2 + $0xb0] sm:$0xff]
      %v285 = vld [vmem:[#allocation2 + $0xb8] sm:$0xff]
      %v286 = vld [vmem:[#allocation2 + $0xc0] sm:$0xff]
      %v287 = vld [vmem:[#allocation2 + $0xc8] sm:$0xff]
      %v288 = vld [vmem:[#allocation2 + $0xd0] sm:$0xff]
      %v289 = vld [vmem:[#allocation2 + $0xd8] sm:$0xff]
      %v290 = vld [vmem:[#allocation2 + $0xe0] sm:$0xff]
      %v291 = vld [vmem:[#allocation2 + $0xe8] sm:$0xff]
      %v292 = vld [vmem:[#allocation2 + $0xf0] sm:$0xff]
      %v293 = vld [vmem:[#allocation2 + $0xf8] sm:$0xff]
      %v294 = vld [vmem:[#allocation2 + $0x100] sm:$0xff]
      %v295 = vld [vmem:[#allocation2 + $0x108] sm:$0xff]
      %v296 = vld [vmem:[#allocation2 + $0x110] sm:$0xff]
      %v297 = vld [vmem:[#allocation2 + $0x118] sm:$0xff]
      %v298 = vld [vmem:[#allocation2 + $0x120] sm:$0xff]
      %v299 = vld [vmem:[#allocation2 + $0x128] sm:$0xff]
      %v300 = vld [vmem:[#allocation2 + $0x130] sm:$0xff]
      %v301 = vld [vmem:[#allocation2 + $0x138] sm:$0xff]
      %v302 = vld [vmem:[#allocation2 + $0x140] sm:$0xff]
      %v303 = vld [vmem:[#allocation2 + $0x148] sm:$0xff]
      %v304 = vld [vmem:[#allocation2 + $0x150] sm:$0xff]
      %v305 = vld [vmem:[#allocation2 + $0x158] sm:$0xff]
      %v306 = vld [vmem:[#allocation2 + $0x160] sm:$0xff]
      %v307 = vld [vmem:[#allocation2 + $0x168] sm:$0xff]
      %v308 = vld [vmem:[#allocation2 + $0x170] sm:$0xff]
      %v309 = vld [vmem:[#allocation2 + $0x178] sm:$0xff]
      %v310 = vld [vmem:[#allocation2 + $0x180] sm:$0xff]
      %v311 = vld [vmem:[#allocation2 + $0x188] sm:$0xff]
      %v312 = vld [vmem:[#allocation2 + $0x190] sm:$0xff]
      %v313 = vld [vmem:[#allocation2 + $0x198] sm:$0xff]
      %v314 = vld [vmem:[#allocation2 + $0x1a0] sm:$0xff]
      %v315 = vld [vmem:[#allocation2 + $0x1a8] sm:$0xff]
      %v316 = vld [vmem:[#allocation2 + $0x1b0] sm:$0xff]
      %v317 = vld [vmem:[#allocation2 + $0x1b8] sm:$0xff]
      %v318 = vld [vmem:[#allocation2 + $0x1c0] sm:$0xff]
      %v319 = vld [vmem:[#allocation2 + $0x1c8] sm:$0xff]
      %v320 = vld [vmem:[#allocation2 + $0x1d0] sm:$0xff]
      %v321 = vld [vmem:[#allocation2 + $0x1d8] sm:$0xff]
      %v322 = vld [vmem:[#allocation2 + $0x1e0] sm:$0xff]
      %v323 = vld [vmem:[#allocation2 + $0x1e8] sm:$0xff]
      %v324 = vld [vmem:[#allocation2 + $0x1f0] sm:$0xff]
      %v325 = vld [vmem:[#allocation2 + $0x1f8] sm:$0xff]
      %v326 = vld [vmem:[%s178] sm:$0xf]
      %v327 = vld [vmem:[%s178 + $0x4] sm:$0xf]
      %v328 = vld [vmem:[%s178 + $0x8] sm:$0xf]
      %v329 = vld [vmem:[%s178 + $0xc] sm:$0xf]
      %v330 = vld [vmem:[%s178 + $0x10] sm:$0xf]
      %v331 = vld [vmem:[%s178 + $0x14] sm:$0xf]
      %v332 = vld [vmem:[%s178 + $0x18] sm:$0xf]
      %v333 = vld [vmem:[%s178 + $0x1c] sm:$0xf]
      %v334 = vld [vmem:[%s178 + $0x20] sm:$0xf]
      %v335 = vld [vmem:[%s178 + $0x24] sm:$0xf]
      %v336 = vld [vmem:[%s178 + $0x28] sm:$0xf]
      %v337 = vld [vmem:[%s178 + $0x2c] sm:$0xf]
      %v338 = vld [vmem:[%s178 + $0x30] sm:$0xf]
      %v339 = vld [vmem:[%s178 + $0x34] sm:$0xf]
      %v340 = vld [vmem:[%s178 + $0x38] sm:$0xf]
      %v341 = vld [vmem:[%s178 + $0x3c] sm:$0xf]
      %v342 = vld [vmem:[%s178 + $0x40] sm:$0xf]
      %v343 = vld [vmem:[%s178 + $0x44] sm:$0xf]
      %v344 = vld [vmem:[%s178 + $0x48] sm:$0xf]
      %v345 = vld [vmem:[%s178 + $0x4c] sm:$0xf]
      %v346 = vld [vmem:[%s178 + $0x50] sm:$0xf]
      %v347 = vld [vmem:[%s178 + $0x54] sm:$0xf]
      %v348 = vld [vmem:[%s178 + $0x58] sm:$0xf]
      %v349 = vld [vmem:[%s178 + $0x5c] sm:$0xf]
      %v350 = vld [vmem:[%s178 + $0x60] sm:$0xf]
      %v351 = vld [vmem:[%s178 + $0x64] sm:$0xf]
      %v352 = vld [vmem:[%s178 + $0x68] sm:$0xf]
      %v353 = vld [vmem:[%s178 + $0x6c] sm:$0xf]
      %v354 = vld [vmem:[%s178 + $0x70] sm:$0xf]
      %v355 = vld [vmem:[%s178 + $0x74] sm:$0xf]
      %v356 = vld [vmem:[%s178 + $0x78] sm:$0xf]
      %v357 = vld [vmem:[%s178 + $0x7c] sm:$0xf]
      %v358 = vld [vmem:[%s178 + $0x80] sm:$0xf]
      %v359 = vld [vmem:[%s178 + $0x84] sm:$0xf]
      %v360 = vld [vmem:[%s178 + $0x88] sm:$0xf]
      %v361 = vld [vmem:[%s178 + $0x8c] sm:$0xf]
      %v362 = vld [vmem:[%s178 + $0x90] sm:$0xf]
      %v363 = vld [vmem:[%s178 + $0x94] sm:$0xf]
      %v364 = vld [vmem:[%s178 + $0x98] sm:$0xf]
      %v365 = vld [vmem:[%s178 + $0x9c] sm:$0xf]
      %v366 = vld [vmem:[%s178 + $0xa0] sm:$0xf]
      %v367 = vld [vmem:[%s178 + $0xa4] sm:$0xf]
      %v368 = vld [vmem:[%s178 + $0xa8] sm:$0xf]
      %v369 = vld [vmem:[%s178 + $0xac] sm:$0xf]
      %v370 = vld [vmem:[%s178 + $0xb0] sm:$0xf]
      %v371 = vld [vmem:[%s178 + $0xb4] sm:$0xf]
      %v372 = vld [vmem:[%s178 + $0xb8] sm:$0xf]
      %v373 = vld [vmem:[%s178 + $0xbc] sm:$0xf]
      %v374 = vld [vmem:[%s178 + $0xc0] sm:$0xf]
      %v375 = vld [vmem:[%s178 + $0xc4] sm:$0xf]
      %v376 = vld [vmem:[%s178 + $0xc8] sm:$0xf]
      %v377 = vld [vmem:[%s178 + $0xcc] sm:$0xf]
      %v378 = vld [vmem:[%s178 + $0xd0] sm:$0xf]
      %v379 = vld [vmem:[%s178 + $0xd4] sm:$0xf]
      %v380 = vld [vmem:[%s178 + $0xd8] sm:$0xf]
      %v381 = vld [vmem:[%s178 + $0xdc] sm:$0xf]
      %v382 = vld [vmem:[%s178 + $0xe0] sm:$0xf]
      %v383 = vld [vmem:[%s178 + $0xe4] sm:$0xf]
      %v384 = vld [vmem:[%s178 + $0xe8] sm:$0xf]
      %v385 = vld [vmem:[%s178 + $0xec] sm:$0xf]
      %v386 = vld [vmem:[%s178 + $0xf0] sm:$0xf]
      %v387 = vld [vmem:[%s178 + $0xf4] sm:$0xf]
      %v388 = vld [vmem:[%s178 + $0xf8] sm:$0xf]
      %v389 = vld [vmem:[%s178 + $0xfc] sm:$0xf]
      %v390 = vld [vmem:[%s184] sm:$0xf]
      %v391 = vld [vmem:[%s184 + $0x4] sm:$0xf]
      %v392 = vld [vmem:[%s184 + $0x8] sm:$0xf]
      %v393 = vld [vmem:[%s184 + $0xc] sm:$0xf]
      %v394 = vld [vmem:[%s184 + $0x10] sm:$0xf]
      %v395 = vld [vmem:[%s184 + $0x14] sm:$0xf]
      %v460 = vunpack.c.l.b16 %v326
      %v461 = vunpack.c.l.b16 %v327
      %v462 = vunpack.c.l.b16 %v328
      %v463 = vunpack.c.l.b16 %v329
      %v464 = vunpack.c.l.b16 %v330
      %v465 = vunpack.c.l.b16 %v331
      %v466 = vunpack.c.l.b16 %v332
      %v467 = vunpack.c.l.b16 %v333
      %v468 = vunpack.c.l.b16 %v334
      %v469 = vunpack.c.l.b16 %v335
      %v470 = vunpack.c.l.b16 %v336
      %v471 = vunpack.c.l.b16 %v337
      %v472 = vunpack.c.l.b16 %v338
      %v473 = vunpack.c.l.b16 %v339
      %v474 = vunpack.c.l.b16 %v340
      %v475 = vunpack.c.l.b16 %v341
      %v476 = vunpack.c.l.b16 %v342
      %v477 = vunpack.c.l.b16 %v343
      %v478 = vunpack.c.l.b16 %v344
      %v479 = vunpack.c.l.b16 %v345
      %v480 = vunpack.c.l.b16 %v346
      %v481 = vunpack.c.l.b16 %v347
      %v482 = vunpack.c.l.b16 %v348
      %v483 = vunpack.c.l.b16 %v349
      %v484 = vunpack.c.l.b16 %v350
      %v485 = vunpack.c.l.b16 %v351
      %v486 = vunpack.c.l.b16 %v352
      %v487 = vunpack.c.l.b16 %v353
      %v488 = vunpack.c.l.b16 %v354
      %v489 = vunpack.c.l.b16 %v355
      %v490 = vunpack.c.l.b16 %v356
      %v491 = vunpack.c.l.b16 %v357
      %v492 = vunpack.c.l.b16 %v358
      %v493 = vunpack.c.l.b16 %v359
      %v494 = vunpack.c.l.b16 %v360
      %v495 = vunpack.c.l.b16 %v361
      %v496 = vunpack.c.l.b16 %v362
      %v497 = vunpack.c.l.b16 %v363
      %v498 = vunpack.c.l.b16 %v364
      %v499 = vunpack.c.l.b16 %v365
      %v500 = vunpack.c.l.b16 %v366
      %v501 = vunpack.c.l.b16 %v367
      %v502 = vunpack.c.l.b16 %v368
      %v503 = vunpack.c.l.b16 %v369
      %v504 = vunpack.c.l.b16 %v370
      %v505 = vunpack.c.l.b16 %v371
      %v506 = vunpack.c.l.b16 %v372
      %v507 = vunpack.c.l.b16 %v373
      %v508 = vunpack.c.l.b16 %v374
      %v509 = vunpack.c.l.b16 %v375
      %v510 = vunpack.c.l.b16 %v376
      %v511 = vunpack.c.l.b16 %v377
      %v512 = vunpack.c.l.b16 %v378
      %v513 = vunpack.c.l.b16 %v379
      %v514 = vunpack.c.l.b16 %v380
      %v515 = vunpack.c.l.b16 %v381
      %v516 = vunpack.c.l.b16 %v382
      %v517 = vunpack.c.l.b16 %v383
      %v518 = vunpack.c.l.b16 %v384
      %v519 = vunpack.c.l.b16 %v385
      %v520 = vunpack.c.l.b16 %v386
      %v521 = vunpack.c.l.b16 %v387
      %v522 = vunpack.c.l.b16 %v388
      %v523 = vunpack.c.l.b16 %v389
      %v524 = vpack.c.b16 %v461, %v460
      %v525 = vpack.c.b16 %v463, %v462
      %v526 = vpack.c.b16 %v465, %v464
      %v527 = vpack.c.b16 %v467, %v466
      %v528 = vpack.c.b16 %v469, %v468
      %v529 = vpack.c.b16 %v471, %v470
      %v530 = vpack.c.b16 %v473, %v472
      %v531 = vpack.c.b16 %v475, %v474
      %v532 = vpack.c.b16 %v477, %v476
      %v533 = vpack.c.b16 %v479, %v478
      %v534 = vpack.c.b16 %v481, %v480
      %v535 = vpack.c.b16 %v483, %v482
      %v536 = vpack.c.b16 %v485, %v484
      %v537 = vpack.c.b16 %v487, %v486
      %v538 = vpack.c.b16 %v489, %v488
      %v539 = vpack.c.b16 %v491, %v490
      %v540 = vpack.c.b16 %v493, %v492
      %v541 = vpack.c.b16 %v495, %v494
      %v542 = vpack.c.b16 %v497, %v496
      %v543 = vpack.c.b16 %v499, %v498
      %v544 = vpack.c.b16 %v501, %v500
      %v545 = vpack.c.b16 %v503, %v502
      %v546 = vpack.c.b16 %v505, %v504
      %v547 = vpack.c.b16 %v507, %v506
      %v548 = vpack.c.b16 %v509, %v508
      %v549 = vpack.c.b16 %v511, %v510
      %v550 = vpack.c.b16 %v513, %v512
      %v551 = vpack.c.b16 %v515, %v514
      %v552 = vpack.c.b16 %v517, %v516
      %v553 = vpack.c.b16 %v519, %v518
      %v554 = vpack.c.b16 %v521, %v520
      %v555 = vpack.c.b16 %v523, %v522
      %v562 = vunpack.c.l.b16 %v390
      %v563 = vunpack.c.l.b16 %v391
      %v564 = vunpack.c.l.b16 %v392
      %v565 = vunpack.c.l.b16 %v393
      %v566 = vunpack.c.l.b16 %v394
      %v567 = vunpack.c.l.b16 %v395
      %v568 = vpack.c.b16 %v563, %v562
      %v569 = vpack.c.b16 %v565, %v564
      %v570 = vpack.c.b16 %v567, %v566
      %vm574 = vcmask 392192
      %v576 = vsel %vm574, %v524, 0
      %v579 = vsel %vm574, %v525, 0
      %v582 = vsel %vm574, %v526, 0
      %v585 = vsel %vm574, %v527, 0
      %v588 = vsel %vm574, %v528, 0
      %v591 = vsel %vm574, %v529, 0
      %v594 = vsel %vm574, %v530, 0
      %v597 = vsel %vm574, %v531, 0
      %v600 = vsel %vm574, %v532, 0
      %v603 = vsel %vm574, %v533, 0
      %v606 = vsel %vm574, %v534, 0
      %v609 = vsel %vm574, %v535, 0
      %v612 = vsel %vm574, %v536, 0
      %v615 = vsel %vm574, %v537, 0
      %v618 = vsel %vm574, %v538, 0
      %v621 = vsel %vm574, %v539, 0
      %v624 = vsel %vm574, %v540, 0
      %v627 = vsel %vm574, %v541, 0
      %v630 = vsel %vm574, %v542, 0
      %v633 = vsel %vm574, %v543, 0
      %v636 = vsel %vm574, %v544, 0
      %v639 = vsel %vm574, %v545, 0
      %v642 = vsel %vm574, %v546, 0
      %v645 = vsel %vm574, %v547, 0
      %v648 = vsel %vm574, %v548, 0
      %v651 = vsel %vm574, %v549, 0
      %v654 = vsel %vm574, %v550, 0
      %v657 = vsel %vm574, %v551, 0
      %v660 = vsel %vm574, %v552, 0
      %v663 = vsel %vm574, %v553, 0
      %v666 = vsel %vm574, %v554, 0
      %v669 = vsel %vm574, %v555, 0
      %671 = vmatprep.subr.bf16.mxu0 0
      %672 = vmatpush1.bf16.msra.mxu0 %v568
      %673 = vmatprep.subr.bf16.mxu0 0
      %674 = vmatpush1.bf16.msra.mxu0 %v569
      %675 = vmatprep.subr.bf16.mxu0 0
      %676 = vmatpush1.bf16.msra.mxu0 %v570
      %677 = vmatprep.subr.bf16.mxu0 0
      %678 = vmatpush1.bf16.msra.mxu0 0
      %679 = vmatprep.subr.bf16.mxu0 0
      %680 = vmatpush1.bf16.msra.mxu0 0
      %681 = vmatprep.subr.bf16.mxu0 0
      %682 = vmatpush1.bf16.msra.mxu0 0
      %683 = vmatprep.subr.bf16.mxu0 0
      %684 = vmatpush1.bf16.msra.mxu0 0
      %685 = vmatprep.subr.bf16.mxu0 0
      %686 = vmatpush1.bf16.msra.mxu0 0
      %687 = vmatprep.subr.bf16.mxu0 0
      %688 = vmatpush1.bf16.msra.mxu0 0
      %689 = vmatprep.subr.bf16.mxu0 0
      %690 = vmatpush1.bf16.msra.mxu0 0
      %691 = vmatprep.subr.bf16.mxu0 0
      %692 = vmatpush1.bf16.msra.mxu0 0
      %693 = vmatprep.subr.bf16.mxu0 0
      %694 = vmatpush1.bf16.msra.mxu0 0
      %695 = vmatprep.subr.bf16.mxu0 0
      %696 = vmatpush1.bf16.msra.mxu0 0
      %697 = vmatprep.subr.bf16.mxu0 0
      %698 = vmatpush1.bf16.msra.mxu0 0
      %699 = vmatprep.subr.bf16.mxu0 0
      %700 = vmatpush1.bf16.msra.mxu0 0
      %701 = vmatprep.subr.bf16.mxu0 0
      %702 = vmatpush1.bf16.msra.mxu0 0
      %703 = vmatprep.mubr.bf16.mxu0 0
      %704 = vmatmul.mubr.bf16.gmra.mrb[0].mxu0 %v576
      %v705 = vpop.f32.mrb[0].mxu0
      %v706 = vadd.f32 0.0, %v705
      %v707 = vpop.f32.mrb[0].mxu0
      %v708 = vpop.f32.mrb[0].mxu0
      %v709 = vadd.f32 0.0, %v708
      %v710 = vpop.f32.mrb[0].mxu0
      %711 = vmatprep.mubr.bf16.mxu0 0
      %712 = vmatmul.mubr.bf16.gmra.mrb[0].mxu0 %v579
      %v713 = vpop.f32.mrb[0].mxu0
      %v714 = vadd.f32 0.0, %v713
      %v715 = vpop.f32.mrb[0].mxu0
      %v716 = vpop.f32.mrb[0].mxu0
      %v717 = vadd.f32 0.0, %v716
      %v718 = vpop.f32.mrb[0].mxu0
      %719 = vmatprep.mubr.bf16.mxu0 0
      %720 = vmatmul.mubr.bf16.gmra.mrb[0].mxu0 %v582
      %v721 = vpop.f32.mrb[0].mxu0
      %v722 = vadd.f32 0.0, %v721
      %v723 = vpop.f32.mrb[0].mxu0
      %v724 = vpop.f32.mrb[0].mxu0
      %v725 = vadd.f32 0.0, %v724
      %v726 = vpop.f32.mrb[0].mxu0
      %727 = vmatprep.mubr.bf16.mxu0 0
      %728 = vmatmul.mubr.bf16.gmra.mrb[0].mxu0 %v585
      %v729 = vpop.f32.mrb[0].mxu0
      %v730 = vadd.f32 0.0, %v729
      %v731 = vpop.f32.mrb[0].mxu0
      %v732 = vpop.f32.mrb[0].mxu0
      %v733 = vadd.f32 0.0, %v732
      %v734 = vpop.f32.mrb[0].mxu0
      %735 = vmatprep.mubr.bf16.mxu0 0
      %736 = vmatmul.mubr.bf16.gmra.mrb[0].mxu0 %v588
      %v737 = vpop.f32.mrb[0].mxu0
      %v738 = vadd.f32 0.0, %v737
      %v739 = vpop.f32.mrb[0].mxu0
      %v740 = vpop.f32.mrb[0].mxu0
      %v741 = vadd.f32 0.0, %v740
      %v742 = vpop.f32.mrb[0].mxu0
      %743 = vmatprep.mubr.bf16.mxu0 0
      %744 = vmatmul.mubr.bf16.gmra.mrb[0].mxu0 %v591
      %v745 = vpop.f32.mrb[0].mxu0
      %v746 = vadd.f32 0.0, %v745
      %v747 = vpop.f32.mrb[0].mxu0
      %v748 = vpop.f32.mrb[0].mxu0
      %v749 = vadd.f32 0.0, %v748
      %v750 = vpop.f32.mrb[0].mxu0
      %751 = vmatprep.mubr.bf16.mxu0 0
      %752 = vmatmul.mubr.bf16.gmra.mrb[0].mxu0 %v594
      %v753 = vpop.f32.mrb[0].mxu0
      %v754 = vadd.f32 0.0, %v753
      %v755 = vpop.f32.mrb[0].mxu0
      %v756 = vpop.f32.mrb[0].mxu0
      %v757 = vadd.f32 0.0, %v756
      %v758 = vpop.f32.mrb[0].mxu0
      %759 = vmatprep.mubr.bf16.mxu0 0
      %760 = vmatmul.mubr.bf16.gmra.mrb[0].mxu0 %v597
      %v761 = vpop.f32.mrb[0].mxu0
      %v762 = vadd.f32 0.0, %v761
      %v763 = vpop.f32.mrb[0].mxu0
      %v764 = vpop.f32.mrb[0].mxu0
      %v765 = vadd.f32 0.0, %v764
      %v766 = vpop.f32.mrb[0].mxu0
      %767 = vmatprep.mubr.bf16.mxu0 0
      %768 = vmatmul.mubr.bf16.gmra.mrb[0].mxu0 %v600
      %v769 = vpop.f32.mrb[0].mxu0
      %v770 = vadd.f32 0.0, %v769
      %v771 = vpop.f32.mrb[0].mxu0
      %v772 = vpop.f32.mrb[0].mxu0
      %v773 = vadd.f32 0.0, %v772
      %v774 = vpop.f32.mrb[0].mxu0
      %775 = vmatprep.mubr.bf16.mxu0 0
      %776 = vmatmul.mubr.bf16.gmra.mrb[0].mxu0 %v603
      %v777 = vpop.f32.mrb[0].mxu0
      %v778 = vadd.f32 0.0, %v777
      %v779 = vpop.f32.mrb[0].mxu0
      %v780 = vpop.f32.mrb[0].mxu0
      %v781 = vadd.f32 0.0, %v780
      %v782 = vpop.f32.mrb[0].mxu0
      %783 = vmatprep.mubr.bf16.mxu0 0
      %784 = vmatmul.mubr.bf16.gmra.mrb[0].mxu0 %v606
      %v785 = vpop.f32.mrb[0].mxu0
      %v786 = vadd.f32 0.0, %v785
      %v787 = vpop.f32.mrb[0].mxu0
      %v788 = vpop.f32.mrb[0].mxu0
      %v789 = vadd.f32 0.0, %v788
      %v790 = vpop.f32.mrb[0].mxu0
      %791 = vmatprep.mubr.bf16.mxu0 0
      %792 = vmatmul.mubr.bf16.gmra.mrb[0].mxu0 %v609
      %v793 = vpop.f32.mrb[0].mxu0
      %v794 = vadd.f32 0.0, %v793
      %v795 = vpop.f32.mrb[0].mxu0
      %v796 = vpop.f32.mrb[0].mxu0
      %v797 = vadd.f32 0.0, %v796
      %v798 = vpop.f32.mrb[0].mxu0
      %799 = vmatprep.mubr.bf16.mxu0 0
      %800 = vmatmul.mubr.bf16.gmra.mrb[0].mxu0 %v612
      %v801 = vpop.f32.mrb[0].mxu0
      %v802 = vadd.f32 0.0, %v801
      %v803 = vpop.f32.mrb[0].mxu0
      %v804 = vpop.f32.mrb[0].mxu0
      %v805 = vadd.f32 0.0, %v804
      %v806 = vpop.f32.mrb[0].mxu0
      %807 = vmatprep.mubr.bf16.mxu0 0
      %808 = vmatmul.mubr.bf16.gmra.mrb[0].mxu0 %v615
      %v809 = vpop.f32.mrb[0].mxu0
      %v810 = vadd.f32 0.0, %v809
      %v811 = vpop.f32.mrb[0].mxu0
      %v812 = vpop.f32.mrb[0].mxu0
      %v813 = vadd.f32 0.0, %v812
      %v814 = vpop.f32.mrb[0].mxu0
      %815 = vmatprep.mubr.bf16.mxu0 0
      %816 = vmatmul.mubr.bf16.gmra.mrb[0].mxu0 %v618
      %v817 = vpop.f32.mrb[0].mxu0
      %v818 = vadd.f32 0.0, %v817
      %v819 = vpop.f32.mrb[0].mxu0
      %v820 = vpop.f32.mrb[0].mxu0
      %v821 = vadd.f32 0.0, %v820
      %v822 = vpop.f32.mrb[0].mxu0
      %823 = vmatprep.mubr.bf16.mxu0 0
      %824 = vmatmul.mubr.bf16.gmra.mrb[0].mxu0 %v621
      %v825 = vpop.f32.mrb[0].mxu0
      %v826 = vadd.f32 0.0, %v825
      %v827 = vpop.f32.mrb[0].mxu0
      %v828 = vpop.f32.mrb[0].mxu0
      %v829 = vadd.f32 0.0, %v828
      %v830 = vpop.f32.mrb[0].mxu0
      %831 = vmatprep.mubr.bf16.mxu0 0
      %832 = vmatmul.mubr.bf16.gmra.mrb[0].mxu0 %v624
      %v833 = vpop.f32.mrb[0].mxu0
      %v834 = vadd.f32 0.0, %v833
      %v835 = vpop.f32.mrb[0].mxu0
      %v836 = vpop.f32.mrb[0].mxu0
      %v837 = vadd.f32 0.0, %v836
      %v838 = vpop.f32.mrb[0].mxu0
      %839 = vmatprep.mubr.bf16.mxu0 0
      %840 = vmatmul.mubr.bf16.gmra.mrb[0].mxu0 %v627
      %v841 = vpop.f32.mrb[0].mxu0
      %v842 = vadd.f32 0.0, %v841
      %v843 = vpop.f32.mrb[0].mxu0
      %v844 = vpop.f32.mrb[0].mxu0
      %v845 = vadd.f32 0.0, %v844
      %v846 = vpop.f32.mrb[0].mxu0
      %847 = vmatprep.mubr.bf16.mxu0 0
      %848 = vmatmul.mubr.bf16.gmra.mrb[0].mxu0 %v630
      %v849 = vpop.f32.mrb[0].mxu0
      %v850 = vadd.f32 0.0, %v849
      %v851 = vpop.f32.mrb[0].mxu0
      %v852 = vpop.f32.mrb[0].mxu0
      %v853 = vadd.f32 0.0, %v852
      %v854 = vpop.f32.mrb[0].mxu0
      %855 = vmatprep.mubr.bf16.mxu0 0
      %856 = vmatmul.mubr.bf16.gmra.mrb[0].mxu0 %v633
      %v857 = vpop.f32.mrb[0].mxu0
      %v858 = vadd.f32 0.0, %v857
      %v859 = vpop.f32.mrb[0].mxu0
      %v860 = vpop.f32.mrb[0].mxu0
      %v861 = vadd.f32 0.0, %v860
      %v862 = vpop.f32.mrb[0].mxu0
      %863 = vmatprep.mubr.bf16.mxu0 0
      %864 = vmatmul.mubr.bf16.gmra.mrb[0].mxu0 %v636
      %v865 = vpop.f32.mrb[0].mxu0
      %v866 = vadd.f32 0.0, %v865
      %v867 = vpop.f32.mrb[0].mxu0
      %v868 = vpop.f32.mrb[0].mxu0
      %v869 = vadd.f32 0.0, %v868
      %v870 = vpop.f32.mrb[0].mxu0
      %871 = vmatprep.mubr.bf16.mxu0 0
      %872 = vmatmul.mubr.bf16.gmra.mrb[0].mxu0 %v639
      %v873 = vpop.f32.mrb[0].mxu0
      %v874 = vadd.f32 0.0, %v873
      %v875 = vpop.f32.mrb[0].mxu0
      %v876 = vpop.f32.mrb[0].mxu0
      %v877 = vadd.f32 0.0, %v876
      %v878 = vpop.f32.mrb[0].mxu0
      %879 = vmatprep.mubr.bf16.mxu0 0
      %880 = vmatmul.mubr.bf16.gmra.mrb[0].mxu0 %v642
      %v881 = vpop.f32.mrb[0].mxu0
      %v882 = vadd.f32 0.0, %v881
      %v883 = vpop.f32.mrb[0].mxu0
      %v884 = vpop.f32.mrb[0].mxu0
      %v885 = vadd.f32 0.0, %v884
      %v886 = vpop.f32.mrb[0].mxu0
      %887 = vmatprep.mubr.bf16.mxu0 0
      %888 = vmatmul.mubr.bf16.gmra.mrb[0].mxu0 %v645
      %v889 = vpop.f32.mrb[0].mxu0
      %v890 = vadd.f32 0.0, %v889
      %v891 = vpop.f32.mrb[0].mxu0
      %v892 = vpop.f32.mrb[0].mxu0
      %v893 = vadd.f32 0.0, %v892
      %v894 = vpop.f32.mrb[0].mxu0
      %895 = vmatprep.mubr.bf16.mxu0 0
      %896 = vmatmul.mubr.bf16.gmra.mrb[0].mxu0 %v648
      %v897 = vpop.f32.mrb[0].mxu0
      %v898 = vadd.f32 0.0, %v897
      %v899 = vpop.f32.mrb[0].mxu0
      %v900 = vpop.f32.mrb[0].mxu0
      %v901 = vadd.f32 0.0, %v900
      %v902 = vpop.f32.mrb[0].mxu0
      %903 = vmatprep.mubr.bf16.mxu0 0
      %904 = vmatmul.mubr.bf16.gmra.mrb[0].mxu0 %v651
      %v905 = vpop.f32.mrb[0].mxu0
      %v906 = vadd.f32 0.0, %v905
      %v907 = vpop.f32.mrb[0].mxu0
      %v908 = vpop.f32.mrb[0].mxu0
      %v909 = vadd.f32 0.0, %v908
      %v910 = vpop.f32.mrb[0].mxu0
      %911 = vmatprep.mubr.bf16.mxu0 0
      %912 = vmatmul.mubr.bf16.gmra.mrb[0].mxu0 %v654
      %v913 = vpop.f32.mrb[0].mxu0
      %v914 = vadd.f32 0.0, %v913
      %v915 = vpop.f32.mrb[0].mxu0
      %v916 = vpop.f32.mrb[0].mxu0
      %v917 = vadd.f32 0.0, %v916
      %v918 = vpop.f32.mrb[0].mxu0
      %919 = vmatprep.mubr.bf16.mxu0 0
      %920 = vmatmul.mubr.bf16.gmra.mrb[0].mxu0 %v657
      %v921 = vpop.f32.mrb[0].mxu0
      %v922 = vadd.f32 0.0, %v921
      %v923 = vpop.f32.mrb[0].mxu0
      %v924 = vpop.f32.mrb[0].mxu0
      %v925 = vadd.f32 0.0, %v924
      %v926 = vpop.f32.mrb[0].mxu0
      %927 = vmatprep.mubr.bf16.mxu0 0
      %928 = vmatmul.mubr.bf16.gmra.mrb[0].mxu0 %v660
      %v929 = vpop.f32.mrb[0].mxu0
      %v930 = vadd.f32 0.0, %v929
      %v931 = vpop.f32.mrb[0].mxu0
      %v932 = vpop.f32.mrb[0].mxu0
      %v933 = vadd.f32 0.0, %v932
      %v934 = vpop.f32.mrb[0].mxu0
      %935 = vmatprep.mubr.bf16.mxu0 0
      %936 = vmatmul.mubr.bf16.gmra.mrb[0].mxu0 %v663
      %v937 = vpop.f32.mrb[0].mxu0
      %v938 = vadd.f32 0.0, %v937
      %v939 = vpop.f32.mrb[0].mxu0
      %v940 = vpop.f32.mrb[0].mxu0
      %v941 = vadd.f32 0.0, %v940
      %v942 = vpop.f32.mrb[0].mxu0
      %943 = vmatprep.mubr.bf16.mxu0 0
      %944 = vmatmul.mubr.bf16.gmra.mrb[0].mxu0 %v666
      %v945 = vpop.f32.mrb[0].mxu0
      %v946 = vadd.f32 0.0, %v945
      %v947 = vpop.f32.mrb[0].mxu0
      %v948 = vpop.f32.mrb[0].mxu0
      %v949 = vadd.f32 0.0, %v948
      %v950 = vpop.f32.mrb[0].mxu0
      %951 = vmatprep.mubr.bf16.mxu0 0
      %952 = vmatmul.mubr.bf16.gmra.mrb[0].mxu0 %v669
      %v953 = vpop.f32.mrb[0].mxu0
      %v954 = vadd.f32 0.0, %v953
      %v955 = vpop.f32.mrb[0].mxu0
      %v956 = vpop.f32.mrb[0].mxu0
      %v957 = vadd.f32 0.0, %v956
      %v958 = vpop.f32.mrb[0].mxu0
      %959 = vdwg.mxu0
      %v960 = vadd.f32 %v262, %v706
      %v961 = vadd.f32 %v263, %v709
      %v962 = vadd.f32 %v264, %v714
      %v963 = vadd.f32 %v265, %v717
      %v964 = vadd.f32 %v266, %v722
      %v965 = vadd.f32 %v267, %v725
      %v966 = vadd.f32 %v268, %v730
      %v967 = vadd.f32 %v269, %v733
      %v968 = vadd.f32 %v270, %v738
      %v969 = vadd.f32 %v271, %v741
      %v970 = vadd.f32 %v272, %v746
      %v971 = vadd.f32 %v273, %v749
      %v972 = vadd.f32 %v274, %v754
      %v973 = vadd.f32 %v275, %v757
      %v974 = vadd.f32 %v276, %v762
      %v975 = vadd.f32 %v277, %v765
      %v976 = vadd.f32 %v278, %v770
      %v977 = vadd.f32 %v279, %v773
      %v978 = vadd.f32 %v280, %v778
      %v979 = vadd.f32 %v281, %v781
      %v980 = vadd.f32 %v282, %v786
      %v981 = vadd.f32 %v283, %v789
      %v982 = vadd.f32 %v284, %v794
      %v983 = vadd.f32 %v285, %v797
      %v984 = vadd.f32 %v286, %v802
      %v985 = vadd.f32 %v287, %v805
      %v986 = vadd.f32 %v288, %v810
      %v987 = vadd.f32 %v289, %v813
      %v988 = vadd.f32 %v290, %v818
      %v989 = vadd.f32 %v291, %v821
      %v990 = vadd.f32 %v292, %v826
      %v991 = vadd.f32 %v293, %v829
      %v992 = vadd.f32 %v294, %v834
      %v993 = vadd.f32 %v295, %v837
      %v994 = vadd.f32 %v296, %v842
      %v995 = vadd.f32 %v297, %v845
      %v996 = vadd.f32 %v298, %v850
      %v997 = vadd.f32 %v299, %v853
      %v998 = vadd.f32 %v300, %v858
      %v999 = vadd.f32 %v301, %v861
      %v1000 = vadd.f32 %v302, %v866
      %v1001 = vadd.f32 %v303, %v869
      %v1002 = vadd.f32 %v304, %v874
      %v1003 = vadd.f32 %v305, %v877
      %v1004 = vadd.f32 %v306, %v882
      %v1005 = vadd.f32 %v307, %v885
      %v1006 = vadd.f32 %v308, %v890
      %v1007 = vadd.f32 %v309, %v893
      %v1008 = vadd.f32 %v310, %v898
      %v1009 = vadd.f32 %v311, %v901
      %v1010 = vadd.f32 %v312, %v906
      %v1011 = vadd.f32 %v313, %v909
      %v1012 = vadd.f32 %v314, %v914
      %v1013 = vadd.f32 %v315, %v917
      %v1014 = vadd.f32 %v316, %v922
      %v1015 = vadd.f32 %v317, %v925
      %v1016 = vadd.f32 %v318, %v930
      %v1017 = vadd.f32 %v319, %v933
      %v1018 = vadd.f32 %v320, %v938
      %v1019 = vadd.f32 %v321, %v941
      %v1020 = vadd.f32 %v322, %v946
      %v1021 = vadd.f32 %v323, %v949
      %v1022 = vadd.f32 %v324, %v954
      %v1023 = vadd.f32 %v325, %v957
      %vm1024 = vcmask 523264
      %1025 = vst.msk [vmem:[#allocation2] sm:$0xff] %vm1024, %v960
      %1026 = vst.msk [vmem:[#allocation2 + $0x8] sm:$0xff] %vm1024, %v961
      %1027 = vst.msk [vmem:[#allocation2 + $0x10] sm:$0xff] %vm1024, %v962
      %1028 = vst.msk [vmem:[#allocation2 + $0x18] sm:$0xff] %vm1024, %v963
      %1029 = vst.msk [vmem:[#allocation2 + $0x20] sm:$0xff] %vm1024, %v964
      %1030 = vst.msk [vmem:[#allocation2 + $0x28] sm:$0xff] %vm1024, %v965
      %1031 = vst.msk [vmem:[#allocation2 + $0x30] sm:$0xff] %vm1024, %v966
      %1032 = vst.msk [vmem:[#allocation2 + $0x38] sm:$0xff] %vm1024, %v967
      %1033 = vst.msk [vmem:[#allocation2 + $0x40] sm:$0xff] %vm1024, %v968
      %1034 = vst.msk [vmem:[#allocation2 + $0x48] sm:$0xff] %vm1024, %v969
      %1035 = vst.msk [vmem:[#allocation2 + $0x50] sm:$0xff] %vm1024, %v970
      %1036 = vst.msk [vmem:[#allocation2 + $0x58] sm:$0xff] %vm1024, %v971
      %1037 = vst.msk [vmem:[#allocation2 + $0x60] sm:$0xff] %vm1024, %v972
      %1038 = vst.msk [vmem:[#allocation2 + $0x68] sm:$0xff] %vm1024, %v973
      %1039 = vst.msk [vmem:[#allocation2 + $0x70] sm:$0xff] %vm1024, %v974
      %1040 = vst.msk [vmem:[#allocation2 + $0x78] sm:$0xff] %vm1024, %v975
      %1041 = vst.msk [vmem:[#allocation2 + $0x80] sm:$0xff] %vm1024, %v976
      %1042 = vst.msk [vmem:[#allocation2 + $0x88] sm:$0xff] %vm1024, %v977
      %1043 = vst.msk [vmem:[#allocation2 + $0x90] sm:$0xff] %vm1024, %v978
      %1044 = vst.msk [vmem:[#allocation2 + $0x98] sm:$0xff] %vm1024, %v979
      %1045 = vst.msk [vmem:[#allocation2 + $0xa0] sm:$0xff] %vm1024, %v980
      %1046 = vst.msk [vmem:[#allocation2 + $0xa8] sm:$0xff] %vm1024, %v981
      %1047 = vst.msk [vmem:[#allocation2 + $0xb0] sm:$0xff] %vm1024, %v982
      %1048 = vst.msk [vmem:[#allocation2 + $0xb8] sm:$0xff] %vm1024, %v983
      %1049 = vst.msk [vmem:[#allocation2 + $0xc0] sm:$0xff] %vm1024, %v984
      %1050 = vst.msk [vmem:[#allocation2 + $0xc8] sm:$0xff] %vm1024, %v985
      %1051 = vst.msk [vmem:[#allocation2 + $0xd0] sm:$0xff] %vm1024, %v986
      %1052 = vst.msk [vmem:[#allocation2 + $0xd8] sm:$0xff] %vm1024, %v987
      %1053 = vst.msk [vmem:[#allocation2 + $0xe0] sm:$0xff] %vm1024, %v988
      %1054 = vst.msk [vmem:[#allocation2 + $0xe8] sm:$0xff] %vm1024, %v989
      %1055 = vst.msk [vmem:[#allocation2 + $0xf0] sm:$0xff] %vm1024, %v990
      %1056 = vst.msk [vmem:[#allocation2 + $0xf8] sm:$0xff] %vm1024, %v991
      %1057 = vst.msk [vmem:[#allocation2 + $0x100] sm:$0xff] %vm1024, %v992
      %1058 = vst.msk [vmem:[#allocation2 + $0x108] sm:$0xff] %vm1024, %v993
      %1059 = vst.msk [vmem:[#allocation2 + $0x110] sm:$0xff] %vm1024, %v994
      %1060 = vst.msk [vmem:[#allocation2 + $0x118] sm:$0xff] %vm1024, %v995
      %1061 = vst.msk [vmem:[#allocation2 + $0x120] sm:$0xff] %vm1024, %v996
      %1062 = vst.msk [vmem:[#allocation2 + $0x128] sm:$0xff] %vm1024, %v997
      %1063 = vst.msk [vmem:[#allocation2 + $0x130] sm:$0xff] %vm1024, %v998
      %1064 = vst.msk [vmem:[#allocation2 + $0x138] sm:$0xff] %vm1024, %v999
      %1065 = vst.msk [vmem:[#allocation2 + $0x140] sm:$0xff] %vm1024, %v1000
      %1066 = vst.msk [vmem:[#allocation2 + $0x148] sm:$0xff] %vm1024, %v1001
      %1067 = vst.msk [vmem:[#allocation2 + $0x150] sm:$0xff] %vm1024, %v1002
      %1068 = vst.msk [vmem:[#allocation2 + $0x158] sm:$0xff] %vm1024, %v1003
      %1069 = vst.msk [vmem:[#allocation2 + $0x160] sm:$0xff] %vm1024, %v1004
      %1070 = vst.msk [vmem:[#allocation2 + $0x168] sm:$0xff] %vm1024, %v1005
      %1071 = vst.msk [vmem:[#allocation2 + $0x170] sm:$0xff] %vm1024, %v1006
      %1072 = vst.msk [vmem:[#allocation2 + $0x178] sm:$0xff] %vm1024, %v1007
      %1073 = vst.msk [vmem:[#allocation2 + $0x180] sm:$0xff] %vm1024, %v1008
      %1074 = vst.msk [vmem:[#allocation2 + $0x188] sm:$0xff] %vm1024, %v1009
      %1075 = vst.msk [vmem:[#allocation2 + $0x190] sm:$0xff] %vm1024, %v1010
      %1076 = vst.msk [vmem:[#allocation2 + $0x198] sm:$0xff] %vm1024, %v1011
      %1077 = vst.msk [vmem:[#allocation2 + $0x1a0] sm:$0xff] %vm1024, %v1012
      %1078 = vst.msk [vmem:[#allocation2 + $0x1a8] sm:$0xff] %vm1024, %v1013
      %1079 = vst.msk [vmem:[#allocation2 + $0x1b0] sm:$0xff] %vm1024, %v1014
      %1080 = vst.msk [vmem:[#allocation2 + $0x1b8] sm:$0xff] %vm1024, %v1015
      %1081 = vst.msk [vmem:[#allocation2 + $0x1c0] sm:$0xff] %vm1024, %v1016
      %1082 = vst.msk [vmem:[#allocation2 + $0x1c8] sm:$0xff] %vm1024, %v1017
      %1083 = vst.msk [vmem:[#allocation2 + $0x1d0] sm:$0xff] %vm1024, %v1018
      %1084 = vst.msk [vmem:[#allocation2 + $0x1d8] sm:$0xff] %vm1024, %v1019
      %1085 = vst.msk [vmem:[#allocation2 + $0x1e0] sm:$0xff] %vm1024, %v1020
      %1086 = vst.msk [vmem:[#allocation2 + $0x1e8] sm:$0xff] %vm1024, %v1021
      %1087 = vst.msk [vmem:[#allocation2 + $0x1f0] sm:$0xff] %vm1024, %v1022
      %1088 = vst.msk [vmem:[#allocation2 + $0x1f8] sm:$0xff] %vm1024, %v1023
      // Predicated region
      $region33: #{discriminator_forward.5} parent=27 // pred_check
        %p1089 = pneg %p193
      $region34: #{discriminator_forward.5} parent=27 // pred_check_branch
        %1091 = sbr.rel (%p1089) target = $region36
      $region35: #{discriminator_forward.5} parent=27 // pred_region
        %v1092 = vld [vmem:[#allocation2] sm:$0xff]
        %v1093 = vld [vmem:[#allocation2 + $0x8] sm:$0xff]
        %v1094 = vld [vmem:[#allocation2 + $0x10] sm:$0xff]
        %v1095 = vld [vmem:[#allocation2 + $0x18] sm:$0xff]
        %v1096 = vld [vmem:[#allocation2 + $0x20] sm:$0xff]
        %v1097 = vld [vmem:[#allocation2 + $0x28] sm:$0xff]
        %v1098 = vld [vmem:[#allocation2 + $0x30] sm:$0xff]
        %v1099 = vld [vmem:[#allocation2 + $0x38] sm:$0xff]
        %v1100 = vld [vmem:[#allocation2 + $0x40] sm:$0xff]
        %v1101 = vld [vmem:[#allocation2 + $0x48] sm:$0xff]
        %v1102 = vld [vmem:[#allocation2 + $0x50] sm:$0xff]
        %v1103 = vld [vmem:[#allocation2 + $0x58] sm:$0xff]
        %v1104 = vld [vmem:[#allocation2 + $0x60] sm:$0xff]
        %v1105 = vld [vmem:[#allocation2 + $0x68] sm:$0xff]
        %v1106 = vld [vmem:[#allocation2 + $0x70] sm:$0xff]
        %v1107 = vld [vmem:[#allocation2 + $0x78] sm:$0xff]
        %v1108 = vld [vmem:[#allocation2 + $0x80] sm:$0xff]
        %v1109 = vld [vmem:[#allocation2 + $0x88] sm:$0xff]
        %v1110 = vld [vmem:[#allocation2 + $0x90] sm:$0xff]
        %v1111 = vld [vmem:[#allocation2 + $0x98] sm:$0xff]
        %v1112 = vld [vmem:[#allocation2 + $0xa0] sm:$0xff]
        %v1113 = vld [vmem:[#allocation2 + $0xa8] sm:$0xff]
        %v1114 = vld [vmem:[#allocation2 + $0xb0] sm:$0xff]
        %v1115 = vld [vmem:[#allocation2 + $0xb8] sm:$0xff]
        %v1116 = vld [vmem:[#allocation2 + $0xc0] sm:$0xff]
        %v1117 = vld [vmem:[#allocation2 + $0xc8] sm:$0xff]
        %v1118 = vld [vmem:[#allocation2 + $0xd0] sm:$0xff]
        %v1119 = vld [vmem:[#allocation2 + $0xd8] sm:$0xff]
        %v1120 = vld [vmem:[#allocation2 + $0xe0] sm:$0xff]
        %v1121 = vld [vmem:[#allocation2 + $0xe8] sm:$0xff]
        %v1122 = vld [vmem:[#allocation2 + $0xf0] sm:$0xff]
        %v1123 = vld [vmem:[#allocation2 + $0xf8] sm:$0xff]
        %v1124 = vld [vmem:[#allocation2 + $0x100] sm:$0xff]
        %v1125 = vld [vmem:[#allocation2 + $0x108] sm:$0xff]
        %v1126 = vld [vmem:[#allocation2 + $0x110] sm:$0xff]
        %v1127 = vld [vmem:[#allocation2 + $0x118] sm:$0xff]
        %v1128 = vld [vmem:[#allocation2 + $0x120] sm:$0xff]
        %v1129 = vld [vmem:[#allocation2 + $0x128] sm:$0xff]
        %v1130 = vld [vmem:[#allocation2 + $0x130] sm:$0xff]
        %v1131 = vld [vmem:[#allocation2 + $0x138] sm:$0xff]
        %v1132 = vld [vmem:[#allocation2 + $0x140] sm:$0xff]
        %v1133 = vld [vmem:[#allocation2 + $0x148] sm:$0xff]
        %v1134 = vld [vmem:[#allocation2 + $0x150] sm:$0xff]
        %v1135 = vld [vmem:[#allocation2 + $0x158] sm:$0xff]
        %v1136 = vld [vmem:[#allocation2 + $0x160] sm:$0xff]
        %v1137 = vld [vmem:[#allocation2 + $0x168] sm:$0xff]
        %v1138 = vld [vmem:[#allocation2 + $0x170] sm:$0xff]
        %v1139 = vld [vmem:[#allocation2 + $0x178] sm:$0xff]
        %v1140 = vld [vmem:[#allocation2 + $0x180] sm:$0xff]
        %v1141 = vld [vmem:[#allocation2 + $0x188] sm:$0xff]
        %v1142 = vld [vmem:[#allocation2 + $0x190] sm:$0xff]
        %v1143 = vld [vmem:[#allocation2 + $0x198] sm:$0xff]
        %v1144 = vld [vmem:[#allocation2 + $0x1a0] sm:$0xff]
        %v1145 = vld [vmem:[#allocation2 + $0x1a8] sm:$0xff]
        %v1146 = vld [vmem:[#allocation2 + $0x1b0] sm:$0xff]
        %v1147 = vld [vmem:[#allocation2 + $0x1b8] sm:$0xff]
        %v1148 = vld [vmem:[#allocation2 + $0x1c0] sm:$0xff]
        %v1149 = vld [vmem:[#allocation2 + $0x1c8] sm:$0xff]
        %v1150 = vld [vmem:[#allocation2 + $0x1d0] sm:$0xff]
        %v1151 = vld [vmem:[#allocation2 + $0x1d8] sm:$0xff]
        %v1152 = vld [vmem:[#allocation2 + $0x1e0] sm:$0xff]
        %v1153 = vld [vmem:[#allocation2 + $0x1e8] sm:$0xff]
        %v1154 = vld [vmem:[#allocation2 + $0x1f0] sm:$0xff]
        %v1155 = vld [vmem:[#allocation2 + $0x1f8] sm:$0xff]
        %vm1156 = vcmp.ge.f32.partialorder %v1092, 0.0
        %vm1157 = vcmp.ge.f32.partialorder %v1093, 0.0
        %vm1158 = vcmp.ge.f32.partialorder %v1094, 0.0
        %vm1159 = vcmp.ge.f32.partialorder %v1095, 0.0
        %vm1160 = vcmp.ge.f32.partialorder %v1096, 0.0
        %vm1161 = vcmp.ge.f32.partialorder %v1097, 0.0
        %vm1162 = vcmp.ge.f32.partialorder %v1098, 0.0
        %vm1163 = vcmp.ge.f32.partialorder %v1099, 0.0
        %vm1164 = vcmp.ge.f32.partialorder %v1100, 0.0
        %vm1165 = vcmp.ge.f32.partialorder %v1101, 0.0
        %vm1166 = vcmp.ge.f32.partialorder %v1102, 0.0
        %vm1167 = vcmp.ge.f32.partialorder %v1103, 0.0
        %vm1168 = vcmp.ge.f32.partialorder %v1104, 0.0
        %vm1169 = vcmp.ge.f32.partialorder %v1105, 0.0
        %vm1170 = vcmp.ge.f32.partialorder %v1106, 0.0
        %vm1171 = vcmp.ge.f32.partialorder %v1107, 0.0
        %vm1172 = vcmp.ge.f32.partialorder %v1108, 0.0
        %vm1173 = vcmp.ge.f32.partialorder %v1109, 0.0
        %vm1174 = vcmp.ge.f32.partialorder %v1110, 0.0
        %vm1175 = vcmp.ge.f32.partialorder %v1111, 0.0
        %vm1176 = vcmp.ge.f32.partialorder %v1112, 0.0
        %vm1177 = vcmp.ge.f32.partialorder %v1113, 0.0
        %vm1178 = vcmp.ge.f32.partialorder %v1114, 0.0
        %vm1179 = vcmp.ge.f32.partialorder %v1115, 0.0
        %vm1180 = vcmp.ge.f32.partialorder %v1116, 0.0
        %vm1181 = vcmp.ge.f32.partialorder %v1117, 0.0
        %vm1182 = vcmp.ge.f32.partialorder %v1118, 0.0
        %vm1183 = vcmp.ge.f32.partialorder %v1119, 0.0
        %vm1184 = vcmp.ge.f32.partialorder %v1120, 0.0
        %vm1185 = vcmp.ge.f32.partialorder %v1121, 0.0
        %vm1186 = vcmp.ge.f32.partialorder %v1122, 0.0
        %vm1187 = vcmp.ge.f32.partialorder %v1123, 0.0
        %vm1188 = vcmp.ge.f32.partialorder %v1124, 0.0
        %vm1189 = vcmp.ge.f32.partialorder %v1125, 0.0
        %vm1190 = vcmp.ge.f32.partialorder %v1126, 0.0
        %vm1191 = vcmp.ge.f32.partialorder %v1127, 0.0
        %vm1192 = vcmp.ge.f32.partialorder %v1128, 0.0
        %vm1193 = vcmp.ge.f32.partialorder %v1129, 0.0
        %vm1194 = vcmp.ge.f32.partialorder %v1130, 0.0
        %vm1195 = vcmp.ge.f32.partialorder %v1131, 0.0
        %vm1196 = vcmp.ge.f32.partialorder %v1132, 0.0
        %vm1197 = vcmp.ge.f32.partialorder %v1133, 0.0
        %vm1198 = vcmp.ge.f32.partialorder %v1134, 0.0
        %vm1199 = vcmp.ge.f32.partialorder %v1135, 0.0
        %vm1200 = vcmp.ge.f32.partialorder %v1136, 0.0
        %vm1201 = vcmp.ge.f32.partialorder %v1137, 0.0
        %vm1202 = vcmp.ge.f32.partialorder %v1138, 0.0
        %vm1203 = vcmp.ge.f32.partialorder %v1139, 0.0
        %vm1204 = vcmp.ge.f32.partialorder %v1140, 0.0
        %vm1205 = vcmp.ge.f32.partialorder %v1141, 0.0
        %vm1206 = vcmp.ge.f32.partialorder %v1142, 0.0
        %vm1207 = vcmp.ge.f32.partialorder %v1143, 0.0
        %vm1208 = vcmp.ge.f32.partialorder %v1144, 0.0
        %vm1209 = vcmp.ge.f32.partialorder %v1145, 0.0
        %vm1210 = vcmp.ge.f32.partialorder %v1146, 0.0
        %vm1211 = vcmp.ge.f32.partialorder %v1147, 0.0
        %vm1212 = vcmp.ge.f32.partialorder %v1148, 0.0
        %vm1213 = vcmp.ge.f32.partialorder %v1149, 0.0
        %vm1214 = vcmp.ge.f32.partialorder %v1150, 0.0
        %vm1215 = vcmp.ge.f32.partialorder %v1151, 0.0
        %vm1216 = vcmp.ge.f32.partialorder %v1152, 0.0
        %vm1217 = vcmp.ge.f32.partialorder %v1153, 0.0
        %vm1218 = vcmp.ge.f32.partialorder %v1154, 0.0
        %vm1219 = vcmp.ge.f32.partialorder %v1155, 0.0
        %v1220 = vmul.f32 %v1092, 0.2
        %v1221 = vmul.f32 %v1093, 0.2
        %v1222 = vmul.f32 %v1094, 0.2
        %v1223 = vmul.f32 %v1095, 0.2
        %v1224 = vmul.f32 %v1096, 0.2
        %v1225 = vmul.f32 %v1097, 0.2
        %v1226 = vmul.f32 %v1098, 0.2
        %v1227 = vmul.f32 %v1099, 0.2
        %v1228 = vmul.f32 %v1100, 0.2
        %v1229 = vmul.f32 %v1101, 0.2
        %v1230 = vmul.f32 %v1102, 0.2
        %v1231 = vmul.f32 %v1103, 0.2
        %v1232 = vmul.f32 %v1104, 0.2
        %v1233 = vmul.f32 %v1105, 0.2
        %v1234 = vmul.f32 %v1106, 0.2
        %v1235 = vmul.f32 %v1107, 0.2
        %v1236 = vmul.f32 %v1108, 0.2
        %v1237 = vmul.f32 %v1109, 0.2
        %v1238 = vmul.f32 %v1110, 0.2
        %v1239 = vmul.f32 %v1111, 0.2
        %v1240 = vmul.f32 %v1112, 0.2
        %v1241 = vmul.f32 %v1113, 0.2
        %v1242 = vmul.f32 %v1114, 0.2
        %v1243 = vmul.f32 %v1115, 0.2
        %v1244 = vmul.f32 %v1116, 0.2
        %v1245 = vmul.f32 %v1117, 0.2
        %v1246 = vmul.f32 %v1118, 0.2
        %v1247 = vmul.f32 %v1119, 0.2
        %v1248 = vmul.f32 %v1120, 0.2
        %v1249 = vmul.f32 %v1121, 0.2
        %v1250 = vmul.f32 %v1122, 0.2
        %v1251 = vmul.f32 %v1123, 0.2
        %v1252 = vmul.f32 %v1124, 0.2
        %v1253 = vmul.f32 %v1125, 0.2
        %v1254 = vmul.f32 %v1126, 0.2
        %v1255 = vmul.f32 %v1127, 0.2
        %v1256 = vmul.f32 %v1128, 0.2
        %v1257 = vmul.f32 %v1129, 0.2
        %v1258 = vmul.f32 %v1130, 0.2
        %v1259 = vmul.f32 %v1131, 0.2
        %v1260 = vmul.f32 %v1132, 0.2
        %v1261 = vmul.f32 %v1133, 0.2
        %v1262 = vmul.f32 %v1134, 0.2
        %v1263 = vmul.f32 %v1135, 0.2
        %v1264 = vmul.f32 %v1136, 0.2
        %v1265 = vmul.f32 %v1137, 0.2
        %v1266 = vmul.f32 %v1138, 0.2
        %v1267 = vmul.f32 %v1139, 0.2
        %v1268 = vmul.f32 %v1140, 0.2
        %v1269 = vmul.f32 %v1141, 0.2
        %v1270 = vmul.f32 %v1142, 0.2
        %v1271 = vmul.f32 %v1143, 0.2
        %v1272 = vmul.f32 %v1144, 0.2
        %v1273 = vmul.f32 %v1145, 0.2
        %v1274 = vmul.f32 %v1146, 0.2
        %v1275 = vmul.f32 %v1147, 0.2
        %v1276 = vmul.f32 %v1148, 0.2
        %v1277 = vmul.f32 %v1149, 0.2
        %v1278 = vmul.f32 %v1150, 0.2
        %v1279 = vmul.f32 %v1151, 0.2
        %v1280 = vmul.f32 %v1152, 0.2
        %v1281 = vmul.f32 %v1153, 0.2
        %v1282 = vmul.f32 %v1154, 0.2
        %v1283 = vmul.f32 %v1155, 0.2
        %v1284 = vsel %vm1156, %v1092, %v1220
        %v1285 = vsel %vm1157, %v1093, %v1221
        %v1286 = vsel %vm1158, %v1094, %v1222
        %v1287 = vsel %vm1159, %v1095, %v1223
        %v1288 = vsel %vm1160, %v1096, %v1224
        %v1289 = vsel %vm1161, %v1097, %v1225
        %v1290 = vsel %vm1162, %v1098, %v1226
        %v1291 = vsel %vm1163, %v1099, %v1227
        %v1292 = vsel %vm1164, %v1100, %v1228
        %v1293 = vsel %vm1165, %v1101, %v1229
        %v1294 = vsel %vm1166, %v1102, %v1230
        %v1295 = vsel %vm1167, %v1103, %v1231
        %v1296 = vsel %vm1168, %v1104, %v1232
        %v1297 = vsel %vm1169, %v1105, %v1233
        %v1298 = vsel %vm1170, %v1106, %v1234
        %v1299 = vsel %vm1171, %v1107, %v1235
        %v1300 = vsel %vm1172, %v1108, %v1236
        %v1301 = vsel %vm1173, %v1109, %v1237
        %v1302 = vsel %vm1174, %v1110, %v1238
        %v1303 = vsel %vm1175, %v1111, %v1239
        %v1304 = vsel %vm1176, %v1112, %v1240
        %v1305 = vsel %vm1177, %v1113, %v1241
        %v1306 = vsel %vm1178, %v1114, %v1242
        %v1307 = vsel %vm1179, %v1115, %v1243
        %v1308 = vsel %vm1180, %v1116, %v1244
        %v1309 = vsel %vm1181, %v1117, %v1245
        %v1310 = vsel %vm1182, %v1118, %v1246
        %v1311 = vsel %vm1183, %v1119, %v1247
        %v1312 = vsel %vm1184, %v1120, %v1248
        %v1313 = vsel %vm1185, %v1121, %v1249
        %v1314 = vsel %vm1186, %v1122, %v1250
        %v1315 = vsel %vm1187, %v1123, %v1251
        %v1316 = vsel %vm1188, %v1124, %v1252
        %v1317 = vsel %vm1189, %v1125, %v1253
        %v1318 = vsel %vm1190, %v1126, %v1254
        %v1319 = vsel %vm1191, %v1127, %v1255
        %v1320 = vsel %vm1192, %v1128, %v1256
        %v1321 = vsel %vm1193, %v1129, %v1257
        %v1322 = vsel %vm1194, %v1130, %v1258
        %v1323 = vsel %vm1195, %v1131, %v1259
        %v1324 = vsel %vm1196, %v1132, %v1260
        %v1325 = vsel %vm1197, %v1133, %v1261
        %v1326 = vsel %vm1198, %v1134, %v1262
        %v1327 = vsel %vm1199, %v1135, %v1263
        %v1328 = vsel %vm1200, %v1136, %v1264
        %v1329 = vsel %vm1201, %v1137, %v1265
        %v1330 = vsel %vm1202, %v1138, %v1266
        %v1331 = vsel %vm1203, %v1139, %v1267
        %v1332 = vsel %vm1204, %v1140, %v1268
        %v1333 = vsel %vm1205, %v1141, %v1269
        %v1334 = vsel %vm1206, %v1142, %v1270
        %v1335 = vsel %vm1207, %v1143, %v1271
        %v1336 = vsel %vm1208, %v1144, %v1272
        %v1337 = vsel %vm1209, %v1145, %v1273
        %v1338 = vsel %vm1210, %v1146, %v1274
        %v1339 = vsel %vm1211, %v1147, %v1275
        %v1340 = vsel %vm1212, %v1148, %v1276
        %v1341 = vsel %vm1213, %v1149, %v1277
        %v1342 = vsel %vm1214, %v1150, %v1278
        %v1343 = vsel %vm1215, %v1151, %v1279
        %v1344 = vsel %vm1216, %v1152, %v1280
        %v1345 = vsel %vm1217, %v1153, %v1281
        %v1346 = vsel %vm1218, %v1154, %v1282
        %v1347 = vsel %vm1219, %v1155, %v1283
        %v1348 = vpack.c.bf16 %v1285, %v1284
        %v1349 = vpack.c.bf16 %v1287, %v1286
        %v1350 = vpack.c.bf16 %v1289, %v1288
        %v1351 = vpack.c.bf16 %v1291, %v1290
        %v1352 = vpack.c.bf16 %v1293, %v1292
        %v1353 = vpack.c.bf16 %v1295, %v1294
        %v1354 = vpack.c.bf16 %v1297, %v1296
        %v1355 = vpack.c.bf16 %v1299, %v1298
        %v1356 = vpack.c.bf16 %v1301, %v1300
        %v1357 = vpack.c.bf16 %v1303, %v1302
        %v1358 = vpack.c.bf16 %v1305, %v1304
        %v1359 = vpack.c.bf16 %v1307, %v1306
        %v1360 = vpack.c.bf16 %v1309, %v1308
        %v1361 = vpack.c.bf16 %v1311, %v1310
        %v1362 = vpack.c.bf16 %v1313, %v1312
        %v1363 = vpack.c.bf16 %v1315, %v1314
        %v1364 = vpack.c.bf16 %v1317, %v1316
        %v1365 = vpack.c.bf16 %v1319, %v1318
        %v1366 = vpack.c.bf16 %v1321, %v1320
        %v1367 = vpack.c.bf16 %v1323, %v1322
        %v1368 = vpack.c.bf16 %v1325, %v1324
        %v1369 = vpack.c.bf16 %v1327, %v1326
        %v1370 = vpack.c.bf16 %v1329, %v1328
        %v1371 = vpack.c.bf16 %v1331, %v1330
        %v1372 = vpack.c.bf16 %v1333, %v1332
        %v1373 = vpack.c.bf16 %v1335, %v1334
        %v1374 = vpack.c.bf16 %v1337, %v1336
        %v1375 = vpack.c.bf16 %v1339, %v1338
        %v1376 = vpack.c.bf16 %v1341, %v1340
        %v1377 = vpack.c.bf16 %v1343, %v1342
        %v1378 = vpack.c.bf16 %v1345, %v1344
        %v1379 = vpack.c.bf16 %v1347, %v1346
        %v1412 = vunpack.c.l.b16 %v1348
        %v1413 = vunpack.c.h.b16 %v1348
        %v1414 = vunpack.c.l.b16 %v1349
        %v1415 = vunpack.c.h.b16 %v1349
        %v1416 = vunpack.c.l.b16 %v1350
        %v1417 = vunpack.c.h.b16 %v1350
        %v1418 = vunpack.c.l.b16 %v1351
        %v1419 = vunpack.c.h.b16 %v1351
        %v1420 = vunpack.c.l.b16 %v1352
        %v1421 = vunpack.c.h.b16 %v1352
        %v1422 = vunpack.c.l.b16 %v1353
        %v1423 = vunpack.c.h.b16 %v1353
        %v1424 = vunpack.c.l.b16 %v1354
        %v1425 = vunpack.c.h.b16 %v1354
        %v1426 = vunpack.c.l.b16 %v1355
        %v1427 = vunpack.c.h.b16 %v1355
        %v1428 = vunpack.c.l.b16 %v1356
        %v1429 = vunpack.c.h.b16 %v1356
        %v1430 = vunpack.c.l.b16 %v1357
        %v1431 = vunpack.c.h.b16 %v1357
        %v1432 = vunpack.c.l.b16 %v1358
        %v1433 = vunpack.c.h.b16 %v1358
        %v1434 = vunpack.c.l.b16 %v1359
        %v1435 = vunpack.c.h.b16 %v1359
        %v1436 = vunpack.c.l.b16 %v1360
        %v1437 = vunpack.c.h.b16 %v1360
        %v1438 = vunpack.c.l.b16 %v1361
        %v1439 = vunpack.c.h.b16 %v1361
        %v1440 = vunpack.c.l.b16 %v1362
        %v1441 = vunpack.c.h.b16 %v1362
        %v1442 = vunpack.c.l.b16 %v1363
        %v1443 = vunpack.c.h.b16 %v1363
        %v1444 = vunpack.c.l.b16 %v1364
        %v1445 = vunpack.c.h.b16 %v1364
        %v1446 = vunpack.c.l.b16 %v1365
        %v1447 = vunpack.c.h.b16 %v1365
        %v1448 = vunpack.c.l.b16 %v1366
        %v1449 = vunpack.c.h.b16 %v1366
        %v1450 = vunpack.c.l.b16 %v1367
        %v1451 = vunpack.c.h.b16 %v1367
        %v1452 = vunpack.c.l.b16 %v1368
        %v1453 = vunpack.c.h.b16 %v1368
        %v1454 = vunpack.c.l.b16 %v1369
        %v1455 = vunpack.c.h.b16 %v1369
        %v1456 = vunpack.c.l.b16 %v1370
        %v1457 = vunpack.c.h.b16 %v1370
        %v1458 = vunpack.c.l.b16 %v1371
        %v1459 = vunpack.c.h.b16 %v1371
        %v1460 = vunpack.c.l.b16 %v1372
        %v1461 = vunpack.c.h.b16 %v1372
        %v1462 = vunpack.c.l.b16 %v1373
        %v1463 = vunpack.c.h.b16 %v1373
        %v1464 = vunpack.c.l.b16 %v1374
        %v1465 = vunpack.c.h.b16 %v1374
        %v1466 = vunpack.c.l.b16 %v1375
        %v1467 = vunpack.c.h.b16 %v1375
        %v1468 = vunpack.c.l.b16 %v1376
        %v1469 = vunpack.c.h.b16 %v1376
        %v1470 = vunpack.c.l.b16 %v1377
        %v1471 = vunpack.c.h.b16 %v1377
        %v1472 = vunpack.c.l.b16 %v1378
        %v1473 = vunpack.c.h.b16 %v1378
        %v1474 = vunpack.c.l.b16 %v1379
        %v1475 = vunpack.c.h.b16 %v1379
        %v1476 = vpack.c.b16 %v1412, %v1412
        %v1477 = vpack.c.b16 %v1413, %v1413
        %v1478 = vpack.c.b16 %v1414, %v1414
        %v1479 = vpack.c.b16 %v1415, %v1415
        %v1480 = vpack.c.b16 %v1416, %v1416
        %v1481 = vpack.c.b16 %v1417, %v1417
        %v1482 = vpack.c.b16 %v1418, %v1418
        %v1483 = vpack.c.b16 %v1419, %v1419
        %v1484 = vpack.c.b16 %v1420, %v1420
        %v1485 = vpack.c.b16 %v1421, %v1421
        %v1486 = vpack.c.b16 %v1422, %v1422
        %v1487 = vpack.c.b16 %v1423, %v1423
        %v1488 = vpack.c.b16 %v1424, %v1424
        %v1489 = vpack.c.b16 %v1425, %v1425
        %v1490 = vpack.c.b16 %v1426, %v1426
        %v1491 = vpack.c.b16 %v1427, %v1427
        %v1492 = vpack.c.b16 %v1428, %v1428
        %v1493 = vpack.c.b16 %v1429, %v1429
        %v1494 = vpack.c.b16 %v1430, %v1430
        %v1495 = vpack.c.b16 %v1431, %v1431
        %v1496 = vpack.c.b16 %v1432, %v1432
        %v1497 = vpack.c.b16 %v1433, %v1433
        %v1498 = vpack.c.b16 %v1434, %v1434
        %v1499 = vpack.c.b16 %v1435, %v1435
        %v1500 = vpack.c.b16 %v1436, %v1436
        %v1501 = vpack.c.b16 %v1437, %v1437
        %v1502 = vpack.c.b16 %v1438, %v1438
        %v1503 = vpack.c.b16 %v1439, %v1439
        %v1504 = vpack.c.b16 %v1440, %v1440
        %v1505 = vpack.c.b16 %v1441, %v1441
        %v1506 = vpack.c.b16 %v1442, %v1442
        %v1507 = vpack.c.b16 %v1443, %v1443
        %v1508 = vpack.c.b16 %v1444, %v1444
        %v1509 = vpack.c.b16 %v1445, %v1445
        %v1510 = vpack.c.b16 %v1446, %v1446
        %v1511 = vpack.c.b16 %v1447, %v1447
        %v1512 = vpack.c.b16 %v1448, %v1448
        %v1513 = vpack.c.b16 %v1449, %v1449
        %v1514 = vpack.c.b16 %v1450, %v1450
        %v1515 = vpack.c.b16 %v1451, %v1451
        %v1516 = vpack.c.b16 %v1452, %v1452
        %v1517 = vpack.c.b16 %v1453, %v1453
        %v1518 = vpack.c.b16 %v1454, %v1454
        %v1519 = vpack.c.b16 %v1455, %v1455
        %v1520 = vpack.c.b16 %v1456, %v1456
        %v1521 = vpack.c.b16 %v1457, %v1457
        %v1522 = vpack.c.b16 %v1458, %v1458
        %v1523 = vpack.c.b16 %v1459, %v1459
        %v1524 = vpack.c.b16 %v1460, %v1460
        %v1525 = vpack.c.b16 %v1461, %v1461
        %v1526 = vpack.c.b16 %v1462, %v1462
        %v1527 = vpack.c.b16 %v1463, %v1463
        %v1528 = vpack.c.b16 %v1464, %v1464
        %v1529 = vpack.c.b16 %v1465, %v1465
        %v1530 = vpack.c.b16 %v1466, %v1466
        %v1531 = vpack.c.b16 %v1467, %v1467
        %v1532 = vpack.c.b16 %v1468, %v1468
        %v1533 = vpack.c.b16 %v1469, %v1469
        %v1534 = vpack.c.b16 %v1470, %v1470
        %v1535 = vpack.c.b16 %v1471, %v1471
        %v1536 = vpack.c.b16 %v1472, %v1472
        %v1537 = vpack.c.b16 %v1473, %v1473
        %v1538 = vpack.c.b16 %v1474, %v1474
        %v1539 = vpack.c.b16 %v1475, %v1475
        %vm1604 = vcmask 519168
        %1605 = vst.msk [vmem:[%s190] sm:$0xf] %vm1604, %v1476
        %1606 = vst.msk [vmem:[%s190 + $0x4] sm:$0xf] %vm1604, %v1477
        %1607 = vst.msk [vmem:[%s190 + $0x8] sm:$0xf] %vm1604, %v1478
        %1608 = vst.msk [vmem:[%s190 + $0xc] sm:$0xf] %vm1604, %v1479
        %1609 = vst.msk [vmem:[%s190 + $0x10] sm:$0xf] %vm1604, %v1480
        %1610 = vst.msk [vmem:[%s190 + $0x14] sm:$0xf] %vm1604, %v1481
        %1611 = vst.msk [vmem:[%s190 + $0x18] sm:$0xf] %vm1604, %v1482
        %1612 = vst.msk [vmem:[%s190 + $0x1c] sm:$0xf] %vm1604, %v1483
        %1613 = vst.msk [vmem:[%s190 + $0x20] sm:$0xf] %vm1604, %v1484
        %1614 = vst.msk [vmem:[%s190 + $0x24] sm:$0xf] %vm1604, %v1485
        %1615 = vst.msk [vmem:[%s190 + $0x28] sm:$0xf] %vm1604, %v1486
        %1616 = vst.msk [vmem:[%s190 + $0x2c] sm:$0xf] %vm1604, %v1487
        %1617 = vst.msk [vmem:[%s190 + $0x30] sm:$0xf] %vm1604, %v1488
        %1618 = vst.msk [vmem:[%s190 + $0x34] sm:$0xf] %vm1604, %v1489
        %1619 = vst.msk [vmem:[%s190 + $0x38] sm:$0xf] %vm1604, %v1490
        %1620 = vst.msk [vmem:[%s190 + $0x3c] sm:$0xf] %vm1604, %v1491
        %1621 = vst.msk [vmem:[%s190 + $0x40] sm:$0xf] %vm1604, %v1492
        %1622 = vst.msk [vmem:[%s190 + $0x44] sm:$0xf] %vm1604, %v1493
        %1623 = vst.msk [vmem:[%s190 + $0x48] sm:$0xf] %vm1604, %v1494
        %1624 = vst.msk [vmem:[%s190 + $0x4c] sm:$0xf] %vm1604, %v1495
        %1625 = vst.msk [vmem:[%s190 + $0x50] sm:$0xf] %vm1604, %v1496
        %1626 = vst.msk [vmem:[%s190 + $0x54] sm:$0xf] %vm1604, %v1497
        %1627 = vst.msk [vmem:[%s190 + $0x58] sm:$0xf] %vm1604, %v1498
        %1628 = vst.msk [vmem:[%s190 + $0x5c] sm:$0xf] %vm1604, %v1499
        %1629 = vst.msk [vmem:[%s190 + $0x60] sm:$0xf] %vm1604, %v1500
        %1630 = vst.msk [vmem:[%s190 + $0x64] sm:$0xf] %vm1604, %v1501
        %1631 = vst.msk [vmem:[%s190 + $0x68] sm:$0xf] %vm1604, %v1502
        %1632 = vst.msk [vmem:[%s190 + $0x6c] sm:$0xf] %vm1604, %v1503
        %1633 = vst.msk [vmem:[%s190 + $0x70] sm:$0xf] %vm1604, %v1504
        %1634 = vst.msk [vmem:[%s190 + $0x74] sm:$0xf] %vm1604, %v1505
        %1635 = vst.msk [vmem:[%s190 + $0x78] sm:$0xf] %vm1604, %v1506
        %1636 = vst.msk [vmem:[%s190 + $0x7c] sm:$0xf] %vm1604, %v1507
        %1637 = vst.msk [vmem:[%s190 + $0x80] sm:$0xf] %vm1604, %v1508
        %1638 = vst.msk [vmem:[%s190 + $0x84] sm:$0xf] %vm1604, %v1509
        %1639 = vst.msk [vmem:[%s190 + $0x88] sm:$0xf] %vm1604, %v1510
        %1640 = vst.msk [vmem:[%s190 + $0x8c] sm:$0xf] %vm1604, %v1511
        %1641 = vst.msk [vmem:[%s190 + $0x90] sm:$0xf] %vm1604, %v1512
        %1642 = vst.msk [vmem:[%s190 + $0x94] sm:$0xf] %vm1604, %v1513
        %1643 = vst.msk [vmem:[%s190 + $0x98] sm:$0xf] %vm1604, %v1514
        %1644 = vst.msk [vmem:[%s190 + $0x9c] sm:$0xf] %vm1604, %v1515
        %1645 = vst.msk [vmem:[%s190 + $0xa0] sm:$0xf] %vm1604, %v1516
        %1646 = vst.msk [vmem:[%s190 + $0xa4] sm:$0xf] %vm1604, %v1517
        %1647 = vst.msk [vmem:[%s190 + $0xa8] sm:$0xf] %vm1604, %v1518
        %1648 = vst.msk [vmem:[%s190 + $0xac] sm:$0xf] %vm1604, %v1519
        %1649 = vst.msk [vmem:[%s190 + $0xb0] sm:$0xf] %vm1604, %v1520
        %1650 = vst.msk [vmem:[%s190 + $0xb4] sm:$0xf] %vm1604, %v1521
        %1651 = vst.msk [vmem:[%s190 + $0xb8] sm:$0xf] %vm1604, %v1522
        %1652 = vst.msk [vmem:[%s190 + $0xbc] sm:$0xf] %vm1604, %v1523
        %1653 = vst.msk [vmem:[%s190 + $0xc0] sm:$0xf] %vm1604, %v1524
        %1654 = vst.msk [vmem:[%s190 + $0xc4] sm:$0xf] %vm1604, %v1525
        %1655 = vst.msk [vmem:[%s190 + $0xc8] sm:$0xf] %vm1604, %v1526
        %1656 = vst.msk [vmem:[%s190 + $0xcc] sm:$0xf] %vm1604, %v1527
        %1657 = vst.msk [vmem:[%s190 + $0xd0] sm:$0xf] %vm1604, %v1528
        %1658 = vst.msk [vmem:[%s190 + $0xd4] sm:$0xf] %vm1604, %v1529
        %1659 = vst.msk [vmem:[%s190 + $0xd8] sm:$0xf] %vm1604, %v1530
        %1660 = vst.msk [vmem:[%s190 + $0xdc] sm:$0xf] %vm1604, %v1531
        %1661 = vst.msk [vmem:[%s190 + $0xe0] sm:$0xf] %vm1604, %v1532
        %1662 = vst.msk [vmem:[%s190 + $0xe4] sm:$0xf] %vm1604, %v1533
        %1663 = vst.msk [vmem:[%s190 + $0xe8] sm:$0xf] %vm1604, %v1534
        %1664 = vst.msk [vmem:[%s190 + $0xec] sm:$0xf] %vm1604, %v1535
        %1665 = vst.msk [vmem:[%s190 + $0xf0] sm:$0xf] %vm1604, %v1536
        %1666 = vst.msk [vmem:[%s190 + $0xf4] sm:$0xf] %vm1604, %v1537
        %1667 = vst.msk [vmem:[%s190 + $0xf8] sm:$0xf] %vm1604, %v1538
        %1668 = vst.msk [vmem:[%s190 + $0xfc] sm:$0xf] %vm1604, %v1539
      $region36: #{discriminator_forward.5} parent=27 // pred_fallthru
        _
      %s1669 = smul.u32 64, %s17
      %p1670 = scmp.lt.s32.totalorder %s1669, 255
      %s1671 = scalar_select %p1670, %s1669, 255
      %s1672 = smul.addr %s1671, 4
      %s1673 = scalar_lea.vmem %s2, %s1672
      // Predicated region
      $region37: #{discriminator_forward.5} parent=27 // pred_check
        %p1674 = pneg %p97
      $region38: #{discriminator_forward.5} parent=27 // pred_check_branch
        %1676 = sbr.rel (%p1674) target = $region40
      $region39: #{discriminator_forward.5} parent=27 // pred_region
        %s1677 = smul.u32 64, %s17
      $region40: #{discriminator_forward.5} parent=27 // pred_fallthru
        _
    $region28: #{discriminator_forward.5} parent=5 // pred_fallthru
      _
    %p1678 = scmp.le.s32.totalorder 2, %s8
    // Predicated region
    $region41: #{discriminator_forward.5} parent=5 // pred_check
      %p1679 = pneg %p1678
    $region42: #{discriminator_forward.5} parent=5 // pred_check_branch
      %1681 = sbr.rel (%p1679) target = $region44
    $region43: #{discriminator_forward.5} parent=5 // pred_region
      %s1682 = ssub.s32 %s8, 2
      // Predicated region
      $region45: #{discriminator_forward.5} parent=43 // pred_check
        %p1683 = pneg %p103
      $region46: #{discriminator_forward.5} parent=43 // pred_check_branch
        %1685 = sbr.rel (%p1683) target = $region48
      $region47: #{discriminator_forward.5} parent=43 // pred_region
        %s1686 = smul.u32 64, %s19
        %p1687 = scmp.lt.s32.totalorder %s1686, 255
        %s1688 = scalar_select %p1687, %s1686, 255
        %s1689 = smul.addr %s1688, 4
        %s1690 = scalar_lea.vmem %s2, %s1689
      $region48: #{discriminator_forward.5} parent=43 // pred_fallthru
        _
    $region44: #{discriminator_forward.5} parent=5 // pred_fallthru
      _
  $region6: #{discriminator_forward.5} parent=0 // loop_footer
    %s12 = sadd.s32 1, %s8
  $region7: #{discriminator_forward.5} parent=0 // loop_footer_branch
    %7 = sbr.rel target = $region3
  $region8: #{discriminator_forward.5} parent=0 // loop_exit
    _

// kernel: discriminator_forward.6
$region0: #{discriminator_forward.6}
  #allocation0 [shape = 'u32[]', space=smem, size = 0x4, offset = 0x4, fixed_abs, tag = 'smem constant byte address 0x4 - core index']
  #allocation1 [shape = 'u32[144,128]{1,0:T(1,128)}', space=vmem, size = 0x12000, scoped, tag = 'internal scratch']
  #allocation2 [shape = 'f32[512,128]{1,0:T(8,128)}', space=vmem, size = 0x40000, scoped, tag = 'scratch operand']
  %s0 = inlined_call_operand.vmem [shape: bf16[512,1024], index: 0, kind: input, shape index: {}]
  %s1 = inlined_call_operand.vmem [shape: bf16[1024,128], index: 1, kind: input, shape index: {}]
  %s2 = inlined_call_operand.vmem [shape: f32[1,128], index: 2, kind: input, shape index: {}]
  %s3 = inlined_call_operand.vmem [shape: f32[1,128], index: 3, kind: input, shape index: {}]
  %s4 = inlined_call_operand.vmem [shape: bf16[512,128], index: 4, kind: output, shape index: {}]
  %s5 = sld [smem:[#allocation0]]
  $region80: #{discriminator_forward.6} parent=0
    _
  %s7 = ssub.s32 1, %s5
  %s8 = scalar_select 0, %s7, %s5
  $region1: #{discriminator_forward.6} parent=0
    #allocation3 [shape = 'u8[1048576]{0}', space=vmem, size = 0x100000, scoped, tag = 'input window, operand 0']
    loop: start=0, step=1, limit=4
    $region2: #{discriminator_forward.6} parent=1 // loop_pre_header
      _
    $region3: #{discriminator_forward.6} parent=1 // loop_header
      %s10 = sphi 0, %s14
      %p11 = scmp.ge.s32.totalorder %s10, 4
      %s20 = sphi 0, %s22
      %s23 = sphi 0, %s20
      %s24 = sphi 0, %s23
      %s40 = sphi 0, %s24
      %s46 = sphi 0, %s48
      %s49 = sphi 0, %s46
      %s50 = sphi 0, %s49
      %s66 = sphi 0, %s50
      %s70 = sphi 0, %s70
      %s72 = sphi 0, %s70
      %s73 = sphi 0, %s72
      %s87 = sphi 0, %s73
      %s91 = sphi 0, %s91
      %s93 = sphi 0, %s91
      %s94 = sphi 0, %s93
      %s108 = sphi 0, %s94
      %s112 = sphi 0, %s112
      %s114 = sphi 0, %s112
      %s115 = sphi 0, %s114
      %s129 = sphi 0, %s115
    $region4: #{discriminator_forward.6} parent=1 // loop_header_branch
      %13 = sbr.rel (%p11) target = $region8
    $region5: #{discriminator_forward.6} parent=1 // loop_body
      %s15 = ssub.s32 %s10, 1
      %s16 = ssub.s32 %s10, 2
      %s17 = sadd.s32 %s10, 1
      %s18 = ssub.s32 %s10, %s17
      %p19 = scmp.eq.s32.totalorder %s18, 0
      %s21 = sadd.s32 %s20, 1
      %s22 = scalar_select %p19, %s20, %s21
      %p25 = pneg %p19
      %p26 = scmp.eq.s32.totalorder %s10, 1
      %p27 = por %p25, %p26
      %p28 = scmp.ne.s32.totalorder %s20, %s23
      %p29 = scmp.eq.s32.totalorder %s10, 0
      %p30 = por %p28, %p29
      %p31 = scmp.ne.s32.totalorder %s20, %s23
      %p32 = scmp.eq.s32.totalorder %s15, 1
      %p33 = por %p31, %p32
      %p34 = scmp.ne.s32.totalorder %s23, %s24
      %p35 = scmp.eq.s32.totalorder %s15, 0
      %p36 = por %p34, %p35
      %p37 = scmp.ne.s32.totalorder %s23, %s24
      %p38 = scmp.eq.s32.totalorder %s16, 1
      %p39 = por %p37, %p38
      %p41 = scmp.ne.s32.totalorder %s24, %s40
      %p42 = scmp.eq.s32.totalorder %s16, 0
      %p43 = por %p41, %p42
      %s44 = ssub.s32 %s10, %s17
      %p45 = scmp.eq.s32.totalorder %s44, 0
      %s47 = sadd.s32 %s46, 1
      %s48 = scalar_select %p45, %s46, %s47
      %p51 = pneg %p45
      %p52 = scmp.eq.s32.totalorder %s10, 1
      %p53 = por %p51, %p52
      %p54 = scmp.ne.s32.totalorder %s46, %s49
      %p55 = scmp.eq.s32.totalorder %s10, 0
      %p56 = por %p54, %p55
      %p57 = scmp.ne.s32.totalorder %s46, %s49
      %p58 = scmp.eq.s32.totalorder %s15, 1
      %p59 = por %p57, %p58
      %p60 = scmp.ne.s32.totalorder %s49, %s50
      %p61 = scmp.eq.s32.totalorder %s15, 0
      %p62 = por %p60, %p61
      %p63 = scmp.ne.s32.totalorder %s49, %s50
      %p64 = scmp.eq.s32.totalorder %s16, 1
      %p65 = por %p63, %p64
      %p67 = scmp.ne.s32.totalorder %s50, %s66
      %p68 = scmp.eq.s32.totalorder %s16, 0
      %p69 = por %p67, %p68
      %s71 = sadd.s32 %s70, 1
      %p74 = scmp.eq.s32.totalorder %s10, 1
      %p75 = scmp.ne.s32.totalorder %s70, %s72
      %p76 = scmp.eq.s32.totalorder %s10, 0
      %p77 = por %p75, %p76
      %p78 = scmp.ne.s32.totalorder %s70, %s72
      %p79 = scmp.eq.s32.totalorder %s15, 1
      %p80 = por %p78, %p79
      %p81 = scmp.ne.s32.totalorder %s72, %s73
      %p82 = scmp.eq.s32.totalorder %s15, 0
      %p83 = por %p81, %p82
      %p84 = scmp.ne.s32.totalorder %s72, %s73
      %p85 = scmp.eq.s32.totalorder %s16, 1
      %p86 = por %p84, %p85
      %p88 = scmp.ne.s32.totalorder %s73, %s87
      %p89 = scmp.eq.s32.totalorder %s16, 0
      %p90 = por %p88, %p89
      %s92 = sadd.s32 %s91, 1
      %p95 = scmp.eq.s32.totalorder %s10, 1
      %p96 = scmp.ne.s32.totalorder %s91, %s93
      %p97 = scmp.eq.s32.totalorder %s10, 0
      %p98 = por %p96, %p97
      %p99 = scmp.ne.s32.totalorder %s91, %s93
      %p100 = scmp.eq.s32.totalorder %s15, 1
      %p101 = por %p99, %p100
      %p102 = scmp.ne.s32.totalorder %s93, %s94
      %p103 = scmp.eq.s32.totalorder %s15, 0
      %p104 = por %p102, %p103
      %p105 = scmp.ne.s32.totalorder %s93, %s94
      %p106 = scmp.eq.s32.totalorder %s16, 1
      %p107 = por %p105, %p106
      %p109 = scmp.ne.s32.totalorder %s94, %s108
      %p110 = scmp.eq.s32.totalorder %s16, 0
      %p111 = por %p109, %p110
      %s113 = sadd.s32 %s112, 1
      %p116 = scmp.eq.s32.totalorder %s10, 1
      %p117 = scmp.ne.s32.totalorder %s112, %s114
      %p118 = scmp.eq.s32.totalorder %s10, 0
      %p119 = por %p117, %p118
      %p120 = scmp.ne.s32.totalorder %s112, %s114
      %p121 = scmp.eq.s32.totalorder %s15, 1
      %p122 = por %p120, %p121
      %p123 = scmp.ne.s32.totalorder %s114, %s115
      %p124 = scmp.eq.s32.totalorder %s15, 0
      %p125 = por %p123, %p124
      %p126 = scmp.ne.s32.totalorder %s114, %s115
      %p127 = scmp.eq.s32.totalorder %s16, 1
      %p128 = por %p126, %p127
      %p130 = scmp.ne.s32.totalorder %s115, %s129
      %p131 = scmp.eq.s32.totalorder %s16, 0
      %p132 = por %p130, %p131
      %p133 = scmp.le.s32.totalorder 1, %s10
      %p134 = scmp.lt.s32.totalorder %s10, 3
      %p135 = pnand %p133, %p134
      %p136 = pneg %p135
      // Predicated region
      $region9: #{discriminator_forward.6} parent=5 // pred_check
        _
      $region10: #{discriminator_forward.6} parent=5 // pred_check_branch
        %138 = sbr.rel (%p135) target = $region12
      $region11: #{discriminator_forward.6} parent=5 // pred_region
        %s139 = ssub.s32 %s10, 1
        // Predicated region
        $region13: #{discriminator_forward.6} parent=11 // pred_check
          %p140 = pneg %p83
        $region14: #{discriminator_forward.6} parent=11 // pred_check_branch
          %142 = sbr.rel (%p140) target = $region16
        $region15: #{discriminator_forward.6} parent=11 // pred_region
          _
        $region16: #{discriminator_forward.6} parent=11 // pred_fallthru
          _
        // Predicated region
        $region17: #{discriminator_forward.6} parent=11 // pred_check
          %p143 = pneg %p104
        $region18: #{discriminator_forward.6} parent=11 // pred_check_branch
          %145 = sbr.rel (%p143) target = $region20
        $region19: #{discriminator_forward.6} parent=11 // pred_region
          _
        $region20: #{discriminator_forward.6} parent=11 // pred_fallthru
          _
      $region12: #{discriminator_forward.6} parent=5 // pred_fallthru
        _
      %p146 = scmp.lt.s32.totalorder %s10, 2
      // Predicated region
      $region21: #{discriminator_forward.6} parent=5 // pred_check
        %p147 = pneg %p146
      $region22: #{discriminator_forward.6} parent=5 // pred_check_branch
        %149 = sbr.rel (%p147) target = $region24
      $region23: #{discriminator_forward.6} parent=5 // pred_region
        // Predicated region
        $region25: #{discriminator_forward.6} parent=23 // pred_check
          %p150 = pneg %p30
        $region26: #{discriminator_forward.6} parent=23 // pred_check_branch
          %152 = sbr.rel (%p150) target = $region28
        $region27: #{discriminator_forward.6} parent=23 // pred_region
          %s153 = sand.u32 %s20, 1
          %s154 = sand.u32 %s20, 1
          %s155 = smul.addr %s154, 1024
          %s156 = scalar_lea.vmem [#allocation3], %s155
          %s157 = smul.u32 4, %s10
          %s158 = smul.addr %s157, 4
          %s159 = scalar_lea.vmem %s0, %s158
          // Predicated region
          $region29: #{discriminator_forward.6} parent=27 // pred_check
            _
          $region30: #{discriminator_forward.6} parent=27 // pred_check_branch
            %161 = sbr.rel (0) target = $region32
          $region31: #{discriminator_forward.6} parent=27 // pred_region
            // Predicated region
            $region33: #{discriminator_forward.6} parent=31 // pred_check
              _
            $region34: #{discriminator_forward.6} parent=31 // pred_check_branch
              %163 = sbr.rel (0) target = $region36
            $region35: #{discriminator_forward.6} parent=31 // pred_region
              loop: start=0, step=1, limit=1
              $region37: #{discriminator_forward.6} parent=35 // loop_pre_header
                _
              $region38: #{discriminator_forward.6} parent=35 // loop_header
                %s165 = sphi 0, %s169
                %p166 = scmp.ge.s32.totalorder %s165, 1
                %s170 = sphi %s159, %s159
                %s171 = sphi %s156, %s156
              $region39: #{discriminator_forward.6} parent=35 // loop_header_branch
                %168 = sbr.rel (%p166) target = $region43
              $region40: #{discriminator_forward.6} parent=35 // loop_body
                %v172 = vld [vmem:[%s170] sm:$0xff]
                %173 = vst [vmem:[%s171] sm:$0xff] %v172
                %v174 = vld [vmem:[%s170 + $0x8] sm:$0xff]
                %175 = vst [vmem:[%s171 + $0x8] sm:$0xff] %v174
                %v176 = vld [vmem:[%s170 + $0x20] sm:$0xff]
                %177 = vst [vmem:[%s171 + $0x10] sm:$0xff] %v176
                %v178 = vld [vmem:[%s170 + $0x28] sm:$0xff]
                %179 = vst [vmem:[%s171 + $0x18] sm:$0xff] %v178
                %v180 = vld [vmem:[%s170 + $0x40] sm:$0xff]
                %181 = vst [vmem:[%s171 + $0x20] sm:$0xff] %v180
                %v182 = vld [vmem:[%s170 + $0x48] sm:$0xff]
                %183 = vst [vmem:[%s171 + $0x28] sm:$0xff] %v182
                %v184 = vld [vmem:[%s170 + $0x60] sm:$0xff]
                %185 = vst [vmem:[%s171 + $0x30] sm:$0xff] %v184
                %v186 = vld [vmem:[%s170 + $0x68] sm:$0xff]
                %187 = vst [vmem:[%s171 + $0x38] sm:$0xff] %v186
                %v188 = vld [vmem:[%s170 + $0x80] sm:$0xff]
                %189 = vst [vmem:[%s171 + $0x40] sm:$0xff] %v188
                %v190 = vld [vmem:[%s170 + $0x88] sm:$0xff]
                %191 = vst [vmem:[%s171 + $0x48] sm:$0xff] %v190
                %v192 = vld [vmem:[%s170 + $0xa0] sm:$0xff]
                %193 = vst [vmem:[%s171 + $0x50] sm:$0xff] %v192
                %v194 = vld [vmem:[%s170 + $0xa8] sm:$0xff]
                %195 = vst [vmem:[%s171 + $0x58] sm:$0xff] %v194
                %v196 = vld [vmem:[%s170 + $0xc0] sm:$0xff]
                %197 = vst [vmem:[%s171 + $0x60] sm:$0xff] %v196
                %v198 = vld [vmem:[%s170 + $0xc8] sm:$0xff]
                %199 = vst [vmem:[%s171 + $0x68] sm:$0xff] %v198
                %v200 = vld [vmem:[%s170 + $0xe0] sm:$0xff]
                %201 = vst [vmem:[%s171 + $0x70] sm:$0xff] %v200
                %v202 = vld [vmem:[%s170 + $0xe8] sm:$0xff]
                %203 = vst [vmem:[%s171 + $0x78] sm:$0xff] %v202
                %v204 = vld [vmem:[%s170 + $0x100] sm:$0xff]
                %205 = vst [vmem:[%s171 + $0x80] sm:$0xff] %v204
                %v206 = vld [vmem:[%s170 + $0x108] sm:$0xff]
                %207 = vst [vmem:[%s171 + $0x88] sm:$0xff] %v206
                %v208 = vld [vmem:[%s170 + $0x120] sm:$0xff]
                %209 = vst [vmem:[%s171 + $0x90] sm:$0xff] %v208
                %v210 = vld [vmem:[%s170 + $0x128] sm:$0xff]
                %211 = vst [vmem:[%s171 + $0x98] sm:$0xff] %v210
                %v212 = vld [vmem:[%s170 + $0x140] sm:$0xff]
                %213 = vst [vmem:[%s171 + $0xa0] sm:$0xff] %v212
                %v214 = vld [vmem:[%s170 + $0x148] sm:$0xff]
                %215 = vst [vmem:[%s171 + $0xa8] sm:$0xff] %v214
                %v216 = vld [vmem:[%s170 + $0x160] sm:$0xff]
                %217 = vst [vmem:[%s171 + $0xb0] sm:$0xff] %v216
                %v218 = vld [vmem:[%s170 + $0x168] sm:$0xff]
                %219 = vst [vmem:[%s171 + $0xb8] sm:$0xff] %v218
                %v220 = vld [vmem:[%s170 + $0x180] sm:$0xff]
                %221 = vst [vmem:[%s171 + $0xc0] sm:$0xff] %v220
                %v222 = vld [vmem:[%s170 + $0x188] sm:$0xff]
                %223 = vst [vmem:[%s171 + $0xc8] sm:$0xff] %v222
                %v224 = vld [vmem:[%s170 + $0x1a0] sm:$0xff]
                %225 = vst [vmem:[%s171 + $0xd0] sm:$0xff] %v224
                %v226 = vld [vmem:[%s170 + $0x1a8] sm:$0xff]
                %227 = vst [vmem:[%s171 + $0xd8] sm:$0xff] %v226
                %v228 = vld [vmem:[%s170 + $0x1c0] sm:$0xff]
                %229 = vst [vmem:[%s171 + $0xe0] sm:$0xff] %v228
                %v230 = vld [vmem:[%s170 + $0x1c8] sm:$0xff]
                %231 = vst [vmem:[%s171 + $0xe8] sm:$0xff] %v230
                %v232 = vld [vmem:[%s170 + $0x1e0] sm:$0xff]
                %233 = vst [vmem:[%s171 + $0xf0] sm:$0xff] %v232
                %v234 = vld [vmem:[%s170 + $0x1e8] sm:$0xff]
                %235 = vst [vmem:[%s171 + $0xf8] sm:$0xff] %v234
                %v236 = vld [vmem:[%s170 + $0x200] sm:$0xff]
                %237 = vst [vmem:[%s171 + $0x100] sm:$0xff] %v236
                %v238 = vld [vmem:[%s170 + $0x208] sm:$0xff]
                %239 = vst [vmem:[%s171 + $0x108] sm:$0xff] %v238
                %v240 = vld [vmem:[%s170 + $0x220] sm:$0xff]
                %241 = vst [vmem:[%s171 + $0x110] sm:$0xff] %v240
                %v242 = vld [vmem:[%s170 + $0x228] sm:$0xff]
                %243 = vst [vmem:[%s171 + $0x118] sm:$0xff] %v242
                %v244 = vld [vmem:[%s170 + $0x240] sm:$0xff]
                %245 = vst [vmem:[%s171 + $0x120] sm:$0xff] %v244
                %v246 = vld [vmem:[%s170 + $0x248] sm:$0xff]
                %247 = vst [vmem:[%s171 + $0x128] sm:$0xff] %v246
                %v248 = vld [vmem:[%s170 + $0x260] sm:$0xff]
                %249 = vst [vmem:[%s171 + $0x130] sm:$0xff] %v248
                %v250 = vld [vmem:[%s170 + $0x268] sm:$0xff]
                %251 = vst [vmem:[%s171 + $0x138] sm:$0xff] %v250
                %v252 = vld [vmem:[%s170 + $0x280] sm:$0xff]
                %253 = vst [vmem:[%s171 + $0x140] sm:$0xff] %v252
                %v254 = vld [vmem:[%s170 + $0x288] sm:$0xff]
                %255 = vst [vmem:[%s171 + $0x148] sm:$0xff] %v254
                %v256 = vld [vmem:[%s170 + $0x2a0] sm:$0xff]
                %257 = vst [vmem:[%s171 + $0x150] sm:$0xff] %v256
                %v258 = vld [vmem:[%s170 + $0x2a8] sm:$0xff]
                %259 = vst [vmem:[%s171 + $0x158] sm:$0xff] %v258
                %v260 = vld [vmem:[%s170 + $0x2c0] sm:$0xff]
                %261 = vst [vmem:[%s171 + $0x160] sm:$0xff] %v260
                %v262 = vld [vmem:[%s170 + $0x2c8] sm:$0xff]
                %263 = vst [vmem:[%s171 + $0x168] sm:$0xff] %v262
                %v264 = vld [vmem:[%s170 + $0x2e0] sm:$0xff]
                %265 = vst [vmem:[%s171 + $0x170] sm:$0xff] %v264
                %v266 = vld [vmem:[%s170 + $0x2e8] sm:$0xff]
                %267 = vst [vmem:[%s171 + $0x178] sm:$0xff] %v266
                %v268 = vld [vmem:[%s170 + $0x300] sm:$0xff]
                %269 = vst [vmem:[%s171 + $0x180] sm:$0xff] %v268
                %v270 = vld [vmem:[%s170 + $0x308] sm:$0xff]
                %271 = vst [vmem:[%s171 + $0x188] sm:$0xff] %v270
                %v272 = vld [vmem:[%s170 + $0x320] sm:$0xff]
                %273 = vst [vmem:[%s171 + $0x190] sm:$0xff] %v272
                %v274 = vld [vmem:[%s170 + $0x328] sm:$0xff]
                %275 = vst [vmem:[%s171 + $0x198] sm:$0xff] %v274
                %v276 = vld [vmem:[%s170 + $0x340] sm:$0xff]
                %277 = vst [vmem:[%s171 + $0x1a0] sm:$0xff] %v276
                %v278 = vld [vmem:[%s170 + $0x348] sm:$0xff]
                %279 = vst [vmem:[%s171 + $0x1a8] sm:$0xff] %v278
                %v280 = vld [vmem:[%s170 + $0x360] sm:$0xff]
                %281 = vst [vmem:[%s171 + $0x1b0] sm:$0xff] %v280
                %v282 = vld [vmem:[%s170 + $0x368] sm:$0xff]
                %283 = vst [vmem:[%s171 + $0x1b8] sm:$0xff] %v282
                %v284 = vld [vmem:[%s170 + $0x380] sm:$0xff]
                %285 = vst [vmem:[%s171 + $0x1c0] sm:$0xff] %v284
                %v286 = vld [vmem:[%s170 + $0x388] sm:$0xff]
                %287 = vst [vmem:[%s171 + $0x1c8] sm:$0xff] %v286
                %v288 = vld [vmem:[%s170 + $0x3a0] sm:$0xff]
                %289 = vst [vmem:[%s171 + $0x1d0] sm:$0xff] %v288
                %v290 = vld [vmem:[%s170 + $0x3a8] sm:$0xff]
                %291 = vst [vmem:[%s171 + $0x1d8] sm:$0xff] %v290
                %v292 = vld [vmem:[%s170 + $0x3c0] sm:$0xff]
                %293 = vst [vmem:[%s171 + $0x1e0] sm:$0xff] %v292
                %v294 = vld [vmem:[%s170 + $0x3c8] sm:$0xff]
                %295 = vst [vmem:[%s171 + $0x1e8] sm:$0xff] %v294
                %v296 = vld [vmem:[%s170 + $0x3e0] sm:$0xff]
                %297 = vst [vmem:[%s171 + $0x1f0] sm:$0xff] %v296
                %v298 = vld [vmem:[%s170 + $0x3e8] sm:$0xff]
                %299 = vst [vmem:[%s171 + $0x1f8] sm:$0xff] %v298
                %v300 = vld [vmem:[%s170 + $0x400] sm:$0xff]
                %301 = vst [vmem:[%s171 + $0x200] sm:$0xff] %v300
                %v302 = vld [vmem:[%s170 + $0x408] sm:$0xff]
                %303 = vst [vmem:[%s171 + $0x208] sm:$0xff] %v302
                %v304 = vld [vmem:[%s170 + $0x420] sm:$0xff]
                %305 = vst [vmem:[%s171 + $0x210] sm:$0xff] %v304
                %v306 = vld [vmem:[%s170 + $0x428] sm:$0xff]
                %307 = vst [vmem:[%s171 + $0x218] sm:$0xff] %v306
                %v308 = vld [vmem:[%s170 + $0x440] sm:$0xff]
                %309 = vst [vmem:[%s171 + $0x220] sm:$0xff] %v308
                %v310 = vld [vmem:[%s170 + $0x448] sm:$0xff]
                %311 = vst [vmem:[%s171 + $0x228] sm:$0xff] %v310
                %v312 = vld [vmem:[%s170 + $0x460] sm:$0xff]
                %313 = vst [vmem:[%s171 + $0x230] sm:$0xff] %v312
                %v314 = vld [vmem:[%s170 + $0x468] sm:$0xff]
                %315 = vst [vmem:[%s171 + $0x238] sm:$0xff] %v314
                %v316 = vld [vmem:[%s170 + $0x480] sm:$0xff]
                %317 = vst [vmem:[%s171 + $0x240] sm:$0xff] %v316
                %v318 = vld [vmem:[%s170 + $0x488] sm:$0xff]
                %319 = vst [vmem:[%s171 + $0x248] sm:$0xff] %v318
                %v320 = vld [vmem:[%s170 + $0x4a0] sm:$0xff]
                %321 = vst [vmem:[%s171 + $0x250] sm:$0xff] %v320
                %v322 = vld [vmem:[%s170 + $0x4a8] sm:$0xff]
                %323 = vst [vmem:[%s171 + $0x258] sm:$0xff] %v322
                %v324 = vld [vmem:[%s170 + $0x4c0] sm:$0xff]
                %325 = vst [vmem:[%s171 + $0x260] sm:$0xff] %v324
                %v326 = vld [vmem:[%s170 + $0x4c8] sm:$0xff]
                %327 = vst [vmem:[%s171 + $0x268] sm:$0xff] %v326
                %v328 = vld [vmem:[%s170 + $0x4e0] sm:$0xff]
                %329 = vst [vmem:[%s171 + $0x270] sm:$0xff] %v328
                %v330 = vld [vmem:[%s170 + $0x4e8] sm:$0xff]
                %331 = vst [vmem:[%s171 + $0x278] sm:$0xff] %v330
                %v332 = vld [vmem:[%s170 + $0x500] sm:$0xff]
                %333 = vst [vmem:[%s171 + $0x280] sm:$0xff] %v332
                %v334 = vld [vmem:[%s170 + $0x508] sm:$0xff]
                %335 = vst [vmem:[%s171 + $0x288] sm:$0xff] %v334
                %v336 = vld [vmem:[%s170 + $0x520] sm:$0xff]
                %337 = vst [vmem:[%s171 + $0x290] sm:$0xff] %v336
                %v338 = vld [vmem:[%s170 + $0x528] sm:$0xff]
                %339 = vst [vmem:[%s171 + $0x298] sm:$0xff] %v338
                %v340 = vld [vmem:[%s170 + $0x540] sm:$0xff]
                %341 = vst [vmem:[%s171 + $0x2a0] sm:$0xff] %v340
                %v342 = vld [vmem:[%s170 + $0x548] sm:$0xff]
                %343 = vst [vmem:[%s171 + $0x2a8] sm:$0xff] %v342
                %v344 = vld [vmem:[%s170 + $0x560] sm:$0xff]
                %345 = vst [vmem:[%s171 + $0x2b0] sm:$0xff] %v344
                %v346 = vld [vmem:[%s170 + $0x568] sm:$0xff]
                %347 = vst [vmem:[%s171 + $0x2b8] sm:$0xff] %v346
                %v348 = vld [vmem:[%s170 + $0x580] sm:$0xff]
                %349 = vst [vmem:[%s171 + $0x2c0] sm:$0xff] %v348
                %v350 = vld [vmem:[%s170 + $0x588] sm:$0xff]
                %351 = vst [vmem:[%s171 + $0x2c8] sm:$0xff] %v350
                %v352 = vld [vmem:[%s170 + $0x5a0] sm:$0xff]
                %353 = vst [vmem:[%s171 + $0x2d0] sm:$0xff] %v352
                %v354 = vld [vmem:[%s170 + $0x5a8] sm:$0xff]
                %355 = vst [vmem:[%s171 + $0x2d8] sm:$0xff] %v354
                %v356 = vld [vmem:[%s170 + $0x5c0] sm:$0xff]
                %357 = vst [vmem:[%s171 + $0x2e0] sm:$0xff] %v356
                %v358 = vld [vmem:[%s170 + $0x5c8] sm:$0xff]
                %359 = vst [vmem:[%s171 + $0x2e8] sm:$0xff] %v358
                %v360 = vld [vmem:[%s170 + $0x5e0] sm:$0xff]
                %361 = vst [vmem:[%s171 + $0x2f0] sm:$0xff] %v360
                %v362 = vld [vmem:[%s170 + $0x5e8] sm:$0xff]
                %363 = vst [vmem:[%s171 + $0x2f8] sm:$0xff] %v362
                %v364 = vld [vmem:[%s170 + $0x600] sm:$0xff]
                %365 = vst [vmem:[%s171 + $0x300] sm:$0xff] %v364
                %v366 = vld [vmem:[%s170 + $0x608] sm:$0xff]
                %367 = vst [vmem:[%s171 + $0x308] sm:$0xff] %v366
                %v368 = vld [vmem:[%s170 + $0x620] sm:$0xff]
                %369 = vst [vmem:[%s171 + $0x310] sm:$0xff] %v368
                %v370 = vld [vmem:[%s170 + $0x628] sm:$0xff]
                %371 = vst [vmem:[%s171 + $0x318] sm:$0xff] %v370
                %v372 = vld [vmem:[%s170 + $0x640] sm:$0xff]
                %373 = vst [vmem:[%s171 + $0x320] sm:$0xff] %v372
                %v374 = vld [vmem:[%s170 + $0x648] sm:$0xff]
                %375 = vst [vmem:[%s171 + $0x328] sm:$0xff] %v374
                %v376 = vld [vmem:[%s170 + $0x660] sm:$0xff]
                %377 = vst [vmem:[%s171 + $0x330] sm:$0xff] %v376
                %v378 = vld [vmem:[%s170 + $0x668] sm:$0xff]
                %379 = vst [vmem:[%s171 + $0x338] sm:$0xff] %v378
                %v380 = vld [vmem:[%s170 + $0x680] sm:$0xff]
                %381 = vst [vmem:[%s171 + $0x340] sm:$0xff] %v380
                %v382 = vld [vmem:[%s170 + $0x688] sm:$0xff]
                %383 = vst [vmem:[%s171 + $0x348] sm:$0xff] %v382
                %v384 = vld [vmem:[%s170 + $0x6a0] sm:$0xff]
                %385 = vst [vmem:[%s171 + $0x350] sm:$0xff] %v384
                %v386 = vld [vmem:[%s170 + $0x6a8] sm:$0xff]
                %387 = vst [vmem:[%s171 + $0x358] sm:$0xff] %v386
                %v388 = vld [vmem:[%s170 + $0x6c0] sm:$0xff]
                %389 = vst [vmem:[%s171 + $0x360] sm:$0xff] %v388
                %v390 = vld [vmem:[%s170 + $0x6c8] sm:$0xff]
                %391 = vst [vmem:[%s171 + $0x368] sm:$0xff] %v390
                %v392 = vld [vmem:[%s170 + $0x6e0] sm:$0xff]
                %393 = vst [vmem:[%s171 + $0x370] sm:$0xff] %v392
                %v394 = vld [vmem:[%s170 + $0x6e8] sm:$0xff]
                %395 = vst [vmem:[%s171 + $0x378] sm:$0xff] %v394
                %v396 = vld [vmem:[%s170 + $0x700] sm:$0xff]
                %397 = vst [vmem:[%s171 + $0x380] sm:$0xff] %v396
                %v398 = vld [vmem:[%s170 + $0x708] sm:$0xff]
                %399 = vst [vmem:[%s171 + $0x388] sm:$0xff] %v398
                %v400 = vld [vmem:[%s170 + $0x720] sm:$0xff]
                %401 = vst [vmem:[%s171 + $0x390] sm:$0xff] %v400
                %v402 = vld [vmem:[%s170 + $0x728] sm:$0xff]
                %403 = vst [vmem:[%s171 + $0x398] sm:$0xff] %v402
                %v404 = vld [vmem:[%s170 + $0x740] sm:$0xff]
                %405 = vst [vmem:[%s171 + $0x3a0] sm:$0xff] %v404
                %v406 = vld [vmem:[%s170 + $0x748] sm:$0xff]
                %407 = vst [vmem:[%s171 + $0x3a8] sm:$0xff] %v406
                %v408 = vld [vmem:[%s170 + $0x760] sm:$0xff]
                %409 = vst [vmem:[%s171 + $0x3b0] sm:$0xff] %v408
                %v410 = vld [vmem:[%s170 + $0x768] sm:$0xff]
                %411 = vst [vmem:[%s171 + $0x3b8] sm:$0xff] %v410
                %v412 = vld [vmem:[%s170 + $0x780] sm:$0xff]
                %413 = vst [vmem:[%s171 + $0x3c0] sm:$0xff] %v412
                %v414 = vld [vmem:[%s170 + $0x788] sm:$0xff]
                %415 = vst [vmem:[%s171 + $0x3c8] sm:$0xff] %v414
                %v416 = vld [vmem:[%s170 + $0x7a0] sm:$0xff]
                %417 = vst [vmem:[%s171 + $0x3d0] sm:$0xff] %v416
                %v418 = vld [vmem:[%s170 + $0x7a8] sm:$0xff]
                %419 = vst [vmem:[%s171 + $0x3d8] sm:$0xff] %v418
                %v420 = vld [vmem:[%s170 + $0x7c0] sm:$0xff]
                %421 = vst [vmem:[%s171 + $0x3e0] sm:$0xff] %v420
                %v422 = vld [vmem:[%s170 + $0x7c8] sm:$0xff]
                %423 = vst [vmem:[%s171 + $0x3e8] sm:$0xff] %v422
                %v424 = vld [vmem:[%s170 + $0x7e0] sm:$0xff]
                %425 = vst [vmem:[%s171 + $0x3f0] sm:$0xff] %v424
                %v426 = vld [vmem:[%s170 + $0x7e8] sm:$0xff]
                %427 = vst [vmem:[%s171 + $0x3f8] sm:$0xff] %v426
              $region41: #{discriminator_forward.6} parent=35 // loop_footer
                %s169 = sadd.s32 1, %s165
              $region42: #{discriminator_forward.6} parent=35 // loop_footer_branch
                %164 = sbr.rel target = $region38
              $region43: #{discriminator_forward.6} parent=35 // loop_exit
                _
            $region36: #{discriminator_forward.6} parent=31 // pred_fallthru
              _
            // Predicated region
            $region44: #{discriminator_forward.6} parent=31 // pred_check
              _
            $region45: #{discriminator_forward.6} parent=31 // pred_check_branch
              %429 = sbr.rel target = $region47
            $region46: #{discriminator_forward.6} parent=31 // pred_region
              _
            $region47: #{discriminator_forward.6} parent=31 // pred_fallthru
              _
          $region32: #{discriminator_forward.6} parent=27 // pred_fallthru
            _
          %430 = vnop
        $region28: #{discriminator_forward.6} parent=23 // pred_fallthru
          _
        // Predicated region
        $region48: #{discriminator_forward.6} parent=23 // pred_check
          %p431 = pneg %p56
        $region49: #{discriminator_forward.6} parent=23 // pred_check_branch
          %433 = sbr.rel (%p431) target = $region51
        $region50: #{discriminator_forward.6} parent=23 // pred_region
          %s434 = smul.u32 64, %s10
          %p435 = scmp.lt.s32.totalorder %s434, 127
          %s436 = scalar_select %p435, %s434, 127
          %s437 = smul.addr %s436, 4
          %s438 = scalar_lea.vmem %s1, %s437
          %s439 = smul.u32 64, %s10
        $region51: #{discriminator_forward.6} parent=23 // pred_fallthru
          _
      $region24: #{discriminator_forward.6} parent=5 // pred_fallthru
        _
      %p440 = scmp.le.s32.totalorder 1, %s10
      %p441 = scmp.lt.s32.totalorder %s10, 3
      %p442 = pnand %p440, %p441
      %p443 = pneg %p442
      // Predicated region
      $region52: #{discriminator_forward.6} parent=5 // pred_check
        _
      $region53: #{discriminator_forward.6} parent=5 // pred_check_branch
        %445 = sbr.rel (%p442) target = $region55
      $region54: #{discriminator_forward.6} parent=5 // pred_region
        %s446 = ssub.s32 %s10, 1
        %s447 = sand.u32 %s23, 1
        %s448 = sand.u32 %s23, 1
        %s449 = smul.addr %s448, 1024
        %s450 = scalar_lea.vmem [#allocation3], %s449
        // Predicated region
        $region56: #{discriminator_forward.6} parent=54 // pred_check
          %p451 = pneg %p36
        $region57: #{discriminator_forward.6} parent=54 // pred_check_branch
          %453 = sbr.rel (%p451) target = $region59
        $region58: #{discriminator_forward.6} parent=54 // pred_region
          _
        $region59: #{discriminator_forward.6} parent=54 // pred_fallthru
          _
        %s454 = sand.u32 %s23, 1
        %s455 = sand.u32 %s23, 1
        %s456 = smul.addr %s455, 1024
        %s457 = scalar_lea.vmem [#allocation3], %s456
        %p458 = pneg %p36
        %p459 = pneg %p33
        %s460 = smul.u32 64, %s15
        %p461 = scmp.lt.s32.totalorder %s460, 127
        %s462 = scalar_select %p461, %s460, 127
        %s463 = smul.addr %s462, 4
        %s464 = scalar_lea.vmem %s1, %s463
        %p465 = pneg %p62
        %p466 = pneg %p59
        %p467 = pneg %p83
        %p468 = pneg %p80
        %p469 = pneg %p104
        %p470 = pneg %p101
        %p471 = pneg %p125
        %p472 = pneg %p122
        %s473 = smul.u32 4, %s15
        %s474 = smul.u32 64, %s15
        %p475 = scmp.lt.s32.totalorder %s474, 127
        %s476 = scalar_select %p475, %s474, 127
        %s477 = smul.addr %s476, 4
        %s478 = scalar_lea.vmem %s1, %s477
        %s479 = smul.u32 64, %s15
        %p481 = scmp.eq.s32.totalorder %s15, 0
        // Predicated region
        $region60: #{discriminator_forward.6} parent=54 // pred_check
          %p482 = pneg %p481
        $region61: #{discriminator_forward.6} parent=54 // pred_check_branch
          %484 = sbr.rel (%p482) target = $region63
        $region62: #{discriminator_forward.6} parent=54 // pred_region
          %485 = vst [vmem:[#allocation2] sm:$0xff] 0.0
          %486 = vst [vmem:[#allocation2 + $0x8] sm:$0xff] 0.0
          %487 = vst [vmem:[#allocation2 + $0x10] sm:$0xff] 0.0
          %488 = vst [vmem:[#allocation2 + $0x18] sm:$0xff] 0.0
          %489 = vst [vmem:[#allocation2 + $0x20] sm:$0xff] 0.0
          %490 = vst [vmem:[#allocation2 + $0x28] sm:$0xff] 0.0
          %491 = vst [vmem:[#allocation2 + $0x30] sm:$0xff] 0.0
          %492 = vst [vmem:[#allocation2 + $0x38] sm:$0xff] 0.0
          %493 = vst [vmem:[#allocation2 + $0x40] sm:$0xff] 0.0
          %494 = vst [vmem:[#allocation2 + $0x48] sm:$0xff] 0.0
          %495 = vst [vmem:[#allocation2 + $0x50] sm:$0xff] 0.0
          %496 = vst [vmem:[#allocation2 + $0x58] sm:$0xff] 0.0
          %497 = vst [vmem:[#allocation2 + $0x60] sm:$0xff] 0.0
          %498 = vst [vmem:[#allocation2 + $0x68] sm:$0xff] 0.0
          %499 = vst [vmem:[#allocation2 + $0x70] sm:$0xff] 0.0
          %500 = vst [vmem:[#allocation2 + $0x78] sm:$0xff] 0.0
          %501 = vst [vmem:[#allocation2 + $0x80] sm:$0xff] 0.0
          %502 = vst [vmem:[#allocation2 + $0x88] sm:$0xff] 0.0
          %503 = vst [vmem:[#allocation2 + $0x90] sm:$0xff] 0.0
          %504 = vst [vmem:[#allocation2 + $0x98] sm:$0xff] 0.0
          %505 = vst [vmem:[#allocation2 + $0xa0] sm:$0xff] 0.0
          %506 = vst [vmem:[#allocation2 + $0xa8] sm:$0xff] 0.0
          %507 = vst [vmem:[#allocation2 + $0xb0] sm:$0xff] 0.0
          %508 = vst [vmem:[#allocation2 + $0xb8] sm:$0xff] 0.0
          %509 = vst [vmem:[#allocation2 + $0xc0] sm:$0xff] 0.0
          %510 = vst [vmem:[#allocation2 + $0xc8] sm:$0xff] 0.0
          %511 = vst [vmem:[#allocation2 + $0xd0] sm:$0xff] 0.0
          %512 = vst [vmem:[#allocation2 + $0xd8] sm:$0xff] 0.0
          %513 = vst [vmem:[#allocation2 + $0xe0] sm:$0xff] 0.0
          %514 = vst [vmem:[#allocation2 + $0xe8] sm:$0xff] 0.0
          %515 = vst [vmem:[#allocation2 + $0xf0] sm:$0xff] 0.0
          %516 = vst [vmem:[#allocation2 + $0xf8] sm:$0xff] 0.0
          %517 = vst [vmem:[#allocation2 + $0x100] sm:$0xff] 0.0
          %518 = vst [vmem:[#allocation2 + $0x108] sm:$0xff] 0.0
          %519 = vst [vmem:[#allocation2 + $0x110] sm:$0xff] 0.0
          %520 = vst [vmem:[#allocation2 + $0x118] sm:$0xff] 0.0
          %521 = vst [vmem:[#allocation2 + $0x120] sm:$0xff] 0.0
          %522 = vst [vmem:[#allocation2 + $0x128] sm:$0xff] 0.0
          %523 = vst [vmem:[#allocation2 + $0x130] sm:$0xff] 0.0
          %524 = vst [vmem:[#allocation2 + $0x138] sm:$0xff] 0.0
          %525 = vst [vmem:[#allocation2 + $0x140] sm:$0xff] 0.0
          %526 = vst [vmem:[#allocation2 + $0x148] sm:$0xff] 0.0
          %527 = vst [vmem:[#allocation2 + $0x150] sm:$0xff] 0.0
          %528 = vst [vmem:[#allocation2 + $0x158] sm:$0xff] 0.0
          %529 = vst [vmem:[#allocation2 + $0x160] sm:$0xff] 0.0
          %530 = vst [vmem:[#allocation2 + $0x168] sm:$0xff] 0.0
          %531 = vst [vmem:[#allocation2 + $0x170] sm:$0xff] 0.0
          %532 = vst [vmem:[#allocation2 + $0x178] sm:$0xff] 0.0
          %533 = vst [vmem:[#allocation2 + $0x180] sm:$0xff] 0.0
          %534 = vst [vmem:[#allocation2 + $0x188] sm:$0xff] 0.0
          %535 = vst [vmem:[#allocation2 + $0x190] sm:$0xff] 0.0
          %536 = vst [vmem:[#allocation2 + $0x198] sm:$0xff] 0.0
          %537 = vst [vmem:[#allocation2 + $0x1a0] sm:$0xff] 0.0
          %538 = vst [vmem:[#allocation2 + $0x1a8] sm:$0xff] 0.0
          %539 = vst [vmem:[#allocation2 + $0x1b0] sm:$0xff] 0.0
          %540 = vst [vmem:[#allocation2 + $0x1b8] sm:$0xff] 0.0
          %541 = vst [vmem:[#allocation2 + $0x1c0] sm:$0xff] 0.0
          %542 = vst [vmem:[#allocation2 + $0x1c8] sm:$0xff] 0.0
          %543 = vst [vmem:[#allocation2 + $0x1d0] sm:$0xff] 0.0
          %544 = vst [vmem:[#allocation2 + $0x1d8] sm:$0xff] 0.0
          %545 = vst [vmem:[#allocation2 + $0x1e0] sm:$0xff] 0.0
          %546 = vst [vmem:[#allocation2 + $0x1e8] sm:$0xff] 0.0
          %547 = vst [vmem:[#allocation2 + $0x1f0] sm:$0xff] 0.0
          %548 = vst [vmem:[#allocation2 + $0x1f8] sm:$0xff] 0.0
        $region63: #{discriminator_forward.6} parent=54 // pred_fallthru
          _
        %v549 = vld [vmem:[#allocation2] sm:$0xff]
        %v550 = vld [vmem:[#allocation2 + $0x8] sm:$0xff]
        %v551 = vld [vmem:[#allocation2 + $0x10] sm:$0xff]
        %v552 = vld [vmem:[#allocation2 + $0x18] sm:$0xff]
        %v553 = vld [vmem:[#allocation2 + $0x20] sm:$0xff]
        %v554 = vld [vmem:[#allocation2 + $0x28] sm:$0xff]
        %v555 = vld [vmem:[#allocation2 + $0x30] sm:$0xff]
        %v556 = vld [vmem:[#allocation2 + $0x38] sm:$0xff]
        %v557 = vld [vmem:[#allocation2 + $0x40] sm:$0xff]
        %v558 = vld [vmem:[#allocation2 + $0x48] sm:$0xff]
        %v559 = vld [vmem:[#allocation2 + $0x50] sm:$0xff]
        %v560 = vld [vmem:[#allocation2 + $0x58] sm:$0xff]
        %v561 = vld [vmem:[#allocation2 + $0x60] sm:$0xff]
        %v562 = vld [vmem:[#allocation2 + $0x68] sm:$0xff]
        %v563 = vld [vmem:[#allocation2 + $0x70] sm:$0xff]
        %v564 = vld [vmem:[#allocation2 + $0x78] sm:$0xff]
        %v565 = vld [vmem:[#allocation2 + $0x80] sm:$0xff]
        %v566 = vld [vmem:[#allocation2 + $0x88] sm:$0xff]
        %v567 = vld [vmem:[#allocation2 + $0x90] sm:$0xff]
        %v568 = vld [vmem:[#allocation2 + $0x98] sm:$0xff]
        %v569 = vld [vmem:[#allocation2 + $0xa0] sm:$0xff]
        %v570 = vld [vmem:[#allocation2 + $0xa8] sm:$0xff]
        %v571 = vld [vmem:[#allocation2 + $0xb0] sm:$0xff]
        %v572 = vld [vmem:[#allocation2 + $0xb8] sm:$0xff]
        %v573 = vld [vmem:[#allocation2 + $0xc0] sm:$0xff]
        %v574 = vld [vmem:[#allocation2 + $0xc8] sm:$0xff]
        %v575 = vld [vmem:[#allocation2 + $0xd0] sm:$0xff]
        %v576 = vld [vmem:[#allocation2 + $0xd8] sm:$0xff]
        %v577 = vld [vmem:[#allocation2 + $0xe0] sm:$0xff]
        %v578 = vld [vmem:[#allocation2 + $0xe8] sm:$0xff]
        %v579 = vld [vmem:[#allocation2 + $0xf0] sm:$0xff]
        %v580 = vld [vmem:[#allocation2 + $0xf8] sm:$0xff]
        %v581 = vld [vmem:[#allocation2 + $0x100] sm:$0xff]
        %v582 = vld [vmem:[#allocation2 + $0x108] sm:$0xff]
        %v583 = vld [vmem:[#allocation2 + $0x110] sm:$0xff]
        %v584 = vld [vmem:[#allocation2 + $0x118] sm:$0xff]
        %v585 = vld [vmem:[#allocation2 + $0x120] sm:$0xff]
        %v586 = vld [vmem:[#allocation2 + $0x128] sm:$0xff]
        %v587 = vld [vmem:[#allocation2 + $0x130] sm:$0xff]
        %v588 = vld [vmem:[#allocation2 + $0x138] sm:$0xff]
        %v589 = vld [vmem:[#allocation2 + $0x140] sm:$0xff]
        %v590 = vld [vmem:[#allocation2 + $0x148] sm:$0xff]
        %v591 = vld [vmem:[#allocation2 + $0x150] sm:$0xff]
        %v592 = vld [vmem:[#allocation2 + $0x158] sm:$0xff]
        %v593 = vld [vmem:[#allocation2 + $0x160] sm:$0xff]
        %v594 = vld [vmem:[#allocation2 + $0x168] sm:$0xff]
        %v595 = vld [vmem:[#allocation2 + $0x170] sm:$0xff]
        %v596 = vld [vmem:[#allocation2 + $0x178] sm:$0xff]
        %v597 = vld [vmem:[#allocation2 + $0x180] sm:$0xff]
        %v598 = vld [vmem:[#allocation2 + $0x188] sm:$0xff]
        %v599 = vld [vmem:[#allocation2 + $0x190] sm:$0xff]
        %v600 = vld [vmem:[#allocation2 + $0x198] sm:$0xff]
        %v601 = vld [vmem:[#allocation2 + $0x1a0] sm:$0xff]
        %v602 = vld [vmem:[#allocation2 + $0x1a8] sm:$0xff]
        %v603 = vld [vmem:[#allocation2 + $0x1b0] sm:$0xff]
        %v604 = vld [vmem:[#allocation2 + $0x1b8] sm:$0xff]
        %v605 = vld [vmem:[#allocation2 + $0x1c0] sm:$0xff]
        %v606 = vld [vmem:[#allocation2 + $0x1c8] sm:$0xff]
        %v607 = vld [vmem:[#allocation2 + $0x1d0] sm:$0xff]
        %v608 = vld [vmem:[#allocation2 + $0x1d8] sm:$0xff]
        %v609 = vld [vmem:[#allocation2 + $0x1e0] sm:$0xff]
        %v610 = vld [vmem:[#allocation2 + $0x1e8] sm:$0xff]
        %v611 = vld [vmem:[#allocation2 + $0x1f0] sm:$0xff]
        %v612 = vld [vmem:[#allocation2 + $0x1f8] sm:$0xff]
        %v613 = vld [vmem:[%s450] sm:$0xff]
        %v614 = vld [vmem:[%s450 + $0x8] sm:$0xff]
        %v615 = vld [vmem:[%s450 + $0x10] sm:$0xff]
        %v616 = vld [vmem:[%s450 + $0x18] sm:$0xff]
        %v617 = vld [vmem:[%s450 + $0x20] sm:$0xff]
        %v618 = vld [vmem:[%s450 + $0x28] sm:$0xff]
        %v619 = vld [vmem:[%s450 + $0x30] sm:$0xff]
        %v620 = vld [vmem:[%s450 + $0x38] sm:$0xff]
        %v621 = vld [vmem:[%s450 + $0x40] sm:$0xff]
        %v622 = vld [vmem:[%s450 + $0x48] sm:$0xff]
        %v623 = vld [vmem:[%s450 + $0x50] sm:$0xff]
        %v624 = vld [vmem:[%s450 + $0x58] sm:$0xff]
        %v625 = vld [vmem:[%s450 + $0x60] sm:$0xff]
        %v626 = vld [vmem:[%s450 + $0x68] sm:$0xff]
        %v627 = vld [vmem:[%s450 + $0x70] sm:$0xff]
        %v628 = vld [vmem:[%s450 + $0x78] sm:$0xff]
        %v629 = vld [vmem:[%s450 + $0x80] sm:$0xff]
        %v630 = vld [vmem:[%s450 + $0x88] sm:$0xff]
        %v631 = vld [vmem:[%s450 + $0x90] sm:$0xff]
        %v632 = vld [vmem:[%s450 + $0x98] sm:$0xff]
        %v633 = vld [vmem:[%s450 + $0xa0] sm:$0xff]
        %v634 = vld [vmem:[%s450 + $0xa8] sm:$0xff]
        %v635 = vld [vmem:[%s450 + $0xb0] sm:$0xff]
        %v636 = vld [vmem:[%s450 + $0xb8] sm:$0xff]
        %v637 = vld [vmem:[%s450 + $0xc0] sm:$0xff]
        %v638 = vld [vmem:[%s450 + $0xc8] sm:$0xff]
        %v639 = vld [vmem:[%s450 + $0xd0] sm:$0xff]
        %v640 = vld [vmem:[%s450 + $0xd8] sm:$0xff]
        %v641 = vld [vmem:[%s450 + $0xe0] sm:$0xff]
        %v642 = vld [vmem:[%s450 + $0xe8] sm:$0xff]
        %v643 = vld [vmem:[%s450 + $0xf0] sm:$0xff]
        %v644 = vld [vmem:[%s450 + $0xf8] sm:$0xff]
        %v645 = vld [vmem:[%s450 + $0x100] sm:$0xff]
        %v646 = vld [vmem:[%s450 + $0x108] sm:$0xff]
        %v647 = vld [vmem:[%s450 + $0x110] sm:$0xff]
        %v648 = vld [vmem:[%s450 + $0x118] sm:$0xff]
        %v649 = vld [vmem:[%s450 + $0x120] sm:$0xff]
        %v650 = vld [vmem:[%s450 + $0x128] sm:$0xff]
        %v651 = vld [vmem:[%s450 + $0x130] sm:$0xff]
        %v652 = vld [vmem:[%s450 + $0x138] sm:$0xff]
        %v653 = vld [vmem:[%s450 + $0x140] sm:$0xff]
        %v654 = vld [vmem:[%s450 + $0x148] sm:$0xff]
        %v655 = vld [vmem:[%s450 + $0x150] sm:$0xff]
        %v656 = vld [vmem:[%s450 + $0x158] sm:$0xff]
        %v657 = vld [vmem:[%s450 + $0x160] sm:$0xff]
        %v658 = vld [vmem:[%s450 + $0x168] sm:$0xff]
        %v659 = vld [vmem:[%s450 + $0x170] sm:$0xff]
        %v660 = vld [vmem:[%s450 + $0x178] sm:$0xff]
        %v661 = vld [vmem:[%s450 + $0x180] sm:$0xff]
        %v662 = vld [vmem:[%s450 + $0x188] sm:$0xff]
        %v663 = vld [vmem:[%s450 + $0x190] sm:$0xff]
        %v664 = vld [vmem:[%s450 + $0x198] sm:$0xff]
        %v665 = vld [vmem:[%s450 + $0x1a0] sm:$0xff]
        %v666 = vld [vmem:[%s450 + $0x1a8] sm:$0xff]
        %v667 = vld [vmem:[%s450 + $0x1b0] sm:$0xff]
        %v668 = vld [vmem:[%s450 + $0x1b8] sm:$0xff]
        %v669 = vld [vmem:[%s450 + $0x1c0] sm:$0xff]
        %v670 = vld [vmem:[%s450 + $0x1c8] sm:$0xff]
        %v671 = vld [vmem:[%s450 + $0x1d0] sm:$0xff]
        %v672 = vld [vmem:[%s450 + $0x1d8] sm:$0xff]
        %v673 = vld [vmem:[%s450 + $0x1e0] sm:$0xff]
        %v674 = vld [vmem:[%s450 + $0x1e8] sm:$0xff]
        %v675 = vld [vmem:[%s450 + $0x1f0] sm:$0xff]
        %v676 = vld [vmem:[%s450 + $0x1f8] sm:$0xff]
        %v677 = vld [vmem:[%s450 + $0x200] sm:$0xff]
        %v678 = vld [vmem:[%s450 + $0x208] sm:$0xff]
        %v679 = vld [vmem:[%s450 + $0x210] sm:$0xff]
        %v680 = vld [vmem:[%s450 + $0x218] sm:$0xff]
        %v681 = vld [vmem:[%s450 + $0x220] sm:$0xff]
        %v682 = vld [vmem:[%s450 + $0x228] sm:$0xff]
        %v683 = vld [vmem:[%s450 + $0x230] sm:$0xff]
        %v684 = vld [vmem:[%s450 + $0x238] sm:$0xff]
        %v685 = vld [vmem:[%s450 + $0x240] sm:$0xff]
        %v686 = vld [vmem:[%s450 + $0x248] sm:$0xff]
        %v687 = vld [vmem:[%s450 + $0x250] sm:$0xff]
        %v688 = vld [vmem:[%s450 + $0x258] sm:$0xff]
        %v689 = vld [vmem:[%s450 + $0x260] sm:$0xff]
        %v690 = vld [vmem:[%s450 + $0x268] sm:$0xff]
        %v691 = vld [vmem:[%s450 + $0x270] sm:$0xff]
        %v692 = vld [vmem:[%s450 + $0x278] sm:$0xff]
        %v693 = vld [vmem:[%s450 + $0x280] sm:$0xff]
        %v694 = vld [vmem:[%s450 + $0x288] sm:$0xff]
        %v695 = vld [vmem:[%s450 + $0x290] sm:$0xff]
        %v696 = vld [vmem:[%s450 + $0x298] sm:$0xff]
        %v697 = vld [vmem:[%s450 + $0x2a0] sm:$0xff]
        %v698 = vld [vmem:[%s450 + $0x2a8] sm:$0xff]
        %v699 = vld [vmem:[%s450 + $0x2b0] sm:$0xff]
        %v700 = vld [vmem:[%s450 + $0x2b8] sm:$0xff]
        %v701 = vld [vmem:[%s450 + $0x2c0] sm:$0xff]
        %v702 = vld [vmem:[%s450 + $0x2c8] sm:$0xff]
        %v703 = vld [vmem:[%s450 + $0x2d0] sm:$0xff]
        %v704 = vld [vmem:[%s450 + $0x2d8] sm:$0xff]
        %v705 = vld [vmem:[%s450 + $0x2e0] sm:$0xff]
        %v706 = vld [vmem:[%s450 + $0x2e8] sm:$0xff]
        %v707 = vld [vmem:[%s450 + $0x2f0] sm:$0xff]
        %v708 = vld [vmem:[%s450 + $0x2f8] sm:$0xff]
        %v709 = vld [vmem:[%s450 + $0x300] sm:$0xff]
        %v710 = vld [vmem:[%s450 + $0x308] sm:$0xff]
        %v711 = vld [vmem:[%s450 + $0x310] sm:$0xff]
        %v712 = vld [vmem:[%s450 + $0x318] sm:$0xff]
        %v713 = vld [vmem:[%s450 + $0x320] sm:$0xff]
        %v714 = vld [vmem:[%s450 + $0x328] sm:$0xff]
        %v715 = vld [vmem:[%s450 + $0x330] sm:$0xff]
        %v716 = vld [vmem:[%s450 + $0x338] sm:$0xff]
        %v717 = vld [vmem:[%s450 + $0x340] sm:$0xff]
        %v718 = vld [vmem:[%s450 + $0x348] sm:$0xff]
        %v719 = vld [vmem:[%s450 + $0x350] sm:$0xff]
        %v720 = vld [vmem:[%s450 + $0x358] sm:$0xff]
        %v721 = vld [vmem:[%s450 + $0x360] sm:$0xff]
        %v722 = vld [vmem:[%s450 + $0x368] sm:$0xff]
        %v723 = vld [vmem:[%s450 + $0x370] sm:$0xff]
        %v724 = vld [vmem:[%s450 + $0x378] sm:$0xff]
        %v725 = vld [vmem:[%s450 + $0x380] sm:$0xff]
        %v726 = vld [vmem:[%s450 + $0x388] sm:$0xff]
        %v727 = vld [vmem:[%s450 + $0x390] sm:$0xff]
        %v728 = vld [vmem:[%s450 + $0x398] sm:$0xff]
        %v729 = vld [vmem:[%s450 + $0x3a0] sm:$0xff]
        %v730 = vld [vmem:[%s450 + $0x3a8] sm:$0xff]
        %v731 = vld [vmem:[%s450 + $0x3b0] sm:$0xff]
        %v732 = vld [vmem:[%s450 + $0x3b8] sm:$0xff]
        %v733 = vld [vmem:[%s450 + $0x3c0] sm:$0xff]
        %v734 = vld [vmem:[%s450 + $0x3c8] sm:$0xff]
        %v735 = vld [vmem:[%s450 + $0x3d0] sm:$0xff]
        %v736 = vld [vmem:[%s450 + $0x3d8] sm:$0xff]
        %v737 = vld [vmem:[%s450 + $0x3e0] sm:$0xff]
        %v738 = vld [vmem:[%s450 + $0x3e8] sm:$0xff]
        %v739 = vld [vmem:[%s450 + $0x3f0] sm:$0xff]
        %v740 = vld [vmem:[%s450 + $0x3f8] sm:$0xff]
        %v741 = vld [vmem:[%s478] sm:$0xf]
        %v742 = vld [vmem:[%s478 + $0x4] sm:$0xf]
        %v743 = vld [vmem:[%s478 + $0x8] sm:$0xf]
        %v744 = vld [vmem:[%s478 + $0xc] sm:$0xf]
        %v745 = vld [vmem:[%s478 + $0x10] sm:$0xf]
        %v746 = vld [vmem:[%s478 + $0x14] sm:$0xf]
        %v747 = vld [vmem:[%s478 + $0x18] sm:$0xf]
        %v748 = vld [vmem:[%s478 + $0x1c] sm:$0xf]
        %v749 = vld [vmem:[%s478 + $0x20] sm:$0xf]
        %v750 = vld [vmem:[%s478 + $0x24] sm:$0xf]
        %v751 = vld [vmem:[%s478 + $0x28] sm:$0xf]
        %v752 = vld [vmem:[%s478 + $0x2c] sm:$0xf]
        %v753 = vld [vmem:[%s478 + $0x30] sm:$0xf]
        %v754 = vld [vmem:[%s478 + $0x34] sm:$0xf]
        %v755 = vld [vmem:[%s478 + $0x38] sm:$0xf]
        %v756 = vld [vmem:[%s478 + $0x3c] sm:$0xf]
        %v757 = vld [vmem:[%s478 + $0x40] sm:$0xf]
        %v758 = vld [vmem:[%s478 + $0x44] sm:$0xf]
        %v759 = vld [vmem:[%s478 + $0x48] sm:$0xf]
        %v760 = vld [vmem:[%s478 + $0x4c] sm:$0xf]
        %v761 = vld [vmem:[%s478 + $0x50] sm:$0xf]
        %v762 = vld [vmem:[%s478 + $0x54] sm:$0xf]
        %v763 = vld [vmem:[%s478 + $0x58] sm:$0xf]
        %v764 = vld [vmem:[%s478 + $0x5c] sm:$0xf]
        %v765 = vld [vmem:[%s478 + $0x60] sm:$0xf]
        %v766 = vld [vmem:[%s478 + $0x64] sm:$0xf]
        %v767 = vld [vmem:[%s478 + $0x68] sm:$0xf]
        %v768 = vld [vmem:[%s478 + $0x6c] sm:$0xf]
        %v769 = vld [vmem:[%s478 + $0x70] sm:$0xf]
        %v770 = vld [vmem:[%s478 + $0x74] sm:$0xf]
        %v771 = vld [vmem:[%s478 + $0x78] sm:$0xf]
        %v772 = vld [vmem:[%s478 + $0x7c] sm:$0xf]
        %v773 = vld [vmem:[%s478 + $0x80] sm:$0xf]
        %v774 = vld [vmem:[%s478 + $0x84] sm:$0xf]
        %v775 = vld [vmem:[%s478 + $0x88] sm:$0xf]
        %v776 = vld [vmem:[%s478 + $0x8c] sm:$0xf]
        %v777 = vld [vmem:[%s478 + $0x90] sm:$0xf]
        %v778 = vld [vmem:[%s478 + $0x94] sm:$0xf]
        %v779 = vld [vmem:[%s478 + $0x98] sm:$0xf]
        %v780 = vld [vmem:[%s478 + $0x9c] sm:$0xf]
        %v781 = vld [vmem:[%s478 + $0xa0] sm:$0xf]
        %v782 = vld [vmem:[%s478 + $0xa4] sm:$0xf]
        %v783 = vld [vmem:[%s478 + $0xa8] sm:$0xf]
        %v784 = vld [vmem:[%s478 + $0xac] sm:$0xf]
        %v785 = vld [vmem:[%s478 + $0xb0] sm:$0xf]
        %v786 = vld [vmem:[%s478 + $0xb4] sm:$0xf]
        %v787 = vld [vmem:[%s478 + $0xb8] sm:$0xf]
        %v788 = vld [vmem:[%s478 + $0xbc] sm:$0xf]
        %v789 = vld [vmem:[%s478 + $0xc0] sm:$0xf]
        %v790 = vld [vmem:[%s478 + $0xc4] sm:$0xf]
        %v791 = vld [vmem:[%s478 + $0xc8] sm:$0xf]
        %v792 = vld [vmem:[%s478 + $0xcc] sm:$0xf]
        %v793 = vld [vmem:[%s478 + $0xd0] sm:$0xf]
        %v794 = vld [vmem:[%s478 + $0xd4] sm:$0xf]
        %v795 = vld [vmem:[%s478 + $0xd8] sm:$0xf]
        %v796 = vld [vmem:[%s478 + $0xdc] sm:$0xf]
        %v797 = vld [vmem:[%s478 + $0xe0] sm:$0xf]
        %v798 = vld [vmem:[%s478 + $0xe4] sm:$0xf]
        %v799 = vld [vmem:[%s478 + $0xe8] sm:$0xf]
        %v800 = vld [vmem:[%s478 + $0xec] sm:$0xf]
        %v801 = vld [vmem:[%s478 + $0xf0] sm:$0xf]
        %v802 = vld [vmem:[%s478 + $0xf4] sm:$0xf]
        %v803 = vld [vmem:[%s478 + $0xf8] sm:$0xf]
        %v804 = vld [vmem:[%s478 + $0xfc] sm:$0xf]
        %v933 = vunpack.c.l.b16 %v613
        %v934 = vunpack.c.h.b16 %v613
        %v935 = vunpack.c.l.b16 %v614
        %v936 = vunpack.c.h.b16 %v614
        %v937 = vunpack.c.l.b16 %v615
        %v938 = vunpack.c.h.b16 %v615
        %v939 = vunpack.c.l.b16 %v616
        %v940 = vunpack.c.h.b16 %v616
        %v941 = vunpack.c.l.b16 %v617
        %v942 = vunpack.c.h.b16 %v617
        %v943 = vunpack.c.l.b16 %v618
        %v944 = vunpack.c.h.b16 %v618
        %v945 = vunpack.c.l.b16 %v619
        %v946 = vunpack.c.h.b16 %v619
        %v947 = vunpack.c.l.b16 %v620
        %v948 = vunpack.c.h.b16 %v620
        %v949 = vunpack.c.l.b16 %v621
        %v950 = vunpack.c.h.b16 %v621
        %v951 = vunpack.c.l.b16 %v622
        %v952 = vunpack.c.h.b16 %v622
        %v953 = vunpack.c.l.b16 %v623
        %v954 = vunpack.c.h.b16 %v623
        %v955 = vunpack.c.l.b16 %v624
        %v956 = vunpack.c.h.b16 %v624
        %v957 = vunpack.c.l.b16 %v625
        %v958 = vunpack.c.h.b16 %v625
        %v959 = vunpack.c.l.b16 %v626
        %v960 = vunpack.c.h.b16 %v626
        %v961 = vunpack.c.l.b16 %v627
        %v962 = vunpack.c.h.b16 %v627
        %v963 = vunpack.c.l.b16 %v628
        %v964 = vunpack.c.h.b16 %v628
        %v965 = vunpack.c.l.b16 %v629
        %v966 = vunpack.c.h.b16 %v629
        %v967 = vunpack.c.l.b16 %v630
        %v968 = vunpack.c.h.b16 %v630
        %v969 = vunpack.c.l.b16 %v631
        %v970 = vunpack.c.h.b16 %v631
        %v971 = vunpack.c.l.b16 %v632
        %v972 = vunpack.c.h.b16 %v632
        %v973 = vunpack.c.l.b16 %v633
        %v974 = vunpack.c.h.b16 %v633
        %v975 = vunpack.c.l.b16 %v634
        %v976 = vunpack.c.h.b16 %v634
        %v977 = vunpack.c.l.b16 %v635
        %v978 = vunpack.c.h.b16 %v635
        %v979 = vunpack.c.l.b16 %v636
        %v980 = vunpack.c.h.b16 %v636
        %v981 = vunpack.c.l.b16 %v637
        %v982 = vunpack.c.h.b16 %v637
        %v983 = vunpack.c.l.b16 %v638
        %v984 = vunpack.c.h.b16 %v638
        %v985 = vunpack.c.l.b16 %v639
        %v986 = vunpack.c.h.b16 %v639
        %v987 = vunpack.c.l.b16 %v640
        %v988 = vunpack.c.h.b16 %v640
        %v989 = vunpack.c.l.b16 %v641
        %v990 = vunpack.c.h.b16 %v641
        %v991 = vunpack.c.l.b16 %v642
        %v992 = vunpack.c.h.b16 %v642
        %v993 = vunpack.c.l.b16 %v643
        %v994 = vunpack.c.h.b16 %v643
        %v995 = vunpack.c.l.b16 %v644
        %v996 = vunpack.c.h.b16 %v644
        %v997 = vunpack.c.l.b16 %v645
        %v998 = vunpack.c.h.b16 %v645
        %v999 = vunpack.c.l.b16 %v646
        %v1000 = vunpack.c.h.b16 %v646
        %v1001 = vunpack.c.l.b16 %v647
        %v1002 = vunpack.c.h.b16 %v647
        %v1003 = vunpack.c.l.b16 %v648
        %v1004 = vunpack.c.h.b16 %v648
        %v1005 = vunpack.c.l.b16 %v649
        %v1006 = vunpack.c.h.b16 %v649
        %v1007 = vunpack.c.l.b16 %v650
        %v1008 = vunpack.c.h.b16 %v650
        %v1009 = vunpack.c.l.b16 %v651
        %v1010 = vunpack.c.h.b16 %v651
        %v1011 = vunpack.c.l.b16 %v652
        %v1012 = vunpack.c.h.b16 %v652
        %v1013 = vunpack.c.l.b16 %v653
        %v1014 = vunpack.c.h.b16 %v653
        %v1015 = vunpack.c.l.b16 %v654
        %v1016 = vunpack.c.h.b16 %v654
        %v1017 = vunpack.c.l.b16 %v655
        %v1018 = vunpack.c.h.b16 %v655
        %v1019 = vunpack.c.l.b16 %v656
        %v1020 = vunpack.c.h.b16 %v656
        %v1021 = vunpack.c.l.b16 %v657
        %v1022 = vunpack.c.h.b16 %v657
        %v1023 = vunpack.c.l.b16 %v658
        %v1024 = vunpack.c.h.b16 %v658
        %v1025 = vunpack.c.l.b16 %v659
        %v1026 = vunpack.c.h.b16 %v659
        %v1027 = vunpack.c.l.b16 %v660
        %v1028 = vunpack.c.h.b16 %v660
        %v1029 = vunpack.c.l.b16 %v661
        %v1030 = vunpack.c.h.b16 %v661
        %v1031 = vunpack.c.l.b16 %v662
        %v1032 = vunpack.c.h.b16 %v662
        %v1033 = vunpack.c.l.b16 %v663
        %v1034 = vunpack.c.h.b16 %v663
        %v1035 = vunpack.c.l.b16 %v664
        %v1036 = vunpack.c.h.b16 %v664
        %v1037 = vunpack.c.l.b16 %v665
        %v1038 = vunpack.c.h.b16 %v665
        %v1039 = vunpack.c.l.b16 %v666
        %v1040 = vunpack.c.h.b16 %v666
        %v1041 = vunpack.c.l.b16 %v667
        %v1042 = vunpack.c.h.b16 %v667
        %v1043 = vunpack.c.l.b16 %v668
        %v1044 = vunpack.c.h.b16 %v668
        %v1045 = vunpack.c.l.b16 %v669
        %v1046 = vunpack.c.h.b16 %v669
        %v1047 = vunpack.c.l.b16 %v670
        %v1048 = vunpack.c.h.b16 %v670
        %v1049 = vunpack.c.l.b16 %v671
        %v1050 = vunpack.c.h.b16 %v671
        %v1051 = vunpack.c.l.b16 %v672
        %v1052 = vunpack.c.h.b16 %v672
        %v1053 = vunpack.c.l.b16 %v673
        %v1054 = vunpack.c.h.b16 %v673
        %v1055 = vunpack.c.l.b16 %v674
        %v1056 = vunpack.c.h.b16 %v674
        %v1057 = vunpack.c.l.b16 %v675
        %v1058 = vunpack.c.h.b16 %v675
        %v1059 = vunpack.c.l.b16 %v676
        %v1060 = vunpack.c.h.b16 %v676
        %v1061 = vunpack.c.l.b16 %v677
        %v1062 = vunpack.c.h.b16 %v677
        %v1063 = vunpack.c.l.b16 %v678
        %v1064 = vunpack.c.h.b16 %v678
        %v1065 = vunpack.c.l.b16 %v679
        %v1066 = vunpack.c.h.b16 %v679
        %v1067 = vunpack.c.l.b16 %v680
        %v1068 = vunpack.c.h.b16 %v680
        %v1069 = vunpack.c.l.b16 %v681
        %v1070 = vunpack.c.h.b16 %v681
        %v1071 = vunpack.c.l.b16 %v682
        %v1072 = vunpack.c.h.b16 %v682
        %v1073 = vunpack.c.l.b16 %v683
        %v1074 = vunpack.c.h.b16 %v683
        %v1075 = vunpack.c.l.b16 %v684
        %v1076 = vunpack.c.h.b16 %v684
        %v1077 = vunpack.c.l.b16 %v685
        %v1078 = vunpack.c.h.b16 %v685
        %v1079 = vunpack.c.l.b16 %v686
        %v1080 = vunpack.c.h.b16 %v686
        %v1081 = vunpack.c.l.b16 %v687
        %v1082 = vunpack.c.h.b16 %v687
        %v1083 = vunpack.c.l.b16 %v688
        %v1084 = vunpack.c.h.b16 %v688
        %v1085 = vunpack.c.l.b16 %v689
        %v1086 = vunpack.c.h.b16 %v689
        %v1087 = vunpack.c.l.b16 %v690
        %v1088 = vunpack.c.h.b16 %v690
        %v1089 = vunpack.c.l.b16 %v691
        %v1090 = vunpack.c.h.b16 %v691
        %v1091 = vunpack.c.l.b16 %v692
        %v1092 = vunpack.c.h.b16 %v692
        %v1093 = vunpack.c.l.b16 %v693
        %v1094 = vunpack.c.h.b16 %v693
        %v1095 = vunpack.c.l.b16 %v694
        %v1096 = vunpack.c.h.b16 %v694
        %v1097 = vunpack.c.l.b16 %v695
        %v1098 = vunpack.c.h.b16 %v695
        %v1099 = vunpack.c.l.b16 %v696
        %v1100 = vunpack.c.h.b16 %v696
        %v1101 = vunpack.c.l.b16 %v697
        %v1102 = vunpack.c.h.b16 %v697
        %v1103 = vunpack.c.l.b16 %v698
        %v1104 = vunpack.c.h.b16 %v698
        %v1105 = vunpack.c.l.b16 %v699
        %v1106 = vunpack.c.h.b16 %v699
        %v1107 = vunpack.c.l.b16 %v700
        %v1108 = vunpack.c.h.b16 %v700
        %v1109 = vunpack.c.l.b16 %v701
        %v1110 = vunpack.c.h.b16 %v701
        %v1111 = vunpack.c.l.b16 %v702
        %v1112 = vunpack.c.h.b16 %v702
        %v1113 = vunpack.c.l.b16 %v703
        %v1114 = vunpack.c.h.b16 %v703
        %v1115 = vunpack.c.l.b16 %v704
        %v1116 = vunpack.c.h.b16 %v704
        %v1117 = vunpack.c.l.b16 %v705
        %v1118 = vunpack.c.h.b16 %v705
        %v1119 = vunpack.c.l.b16 %v706
        %v1120 = vunpack.c.h.b16 %v706
        %v1121 = vunpack.c.l.b16 %v707
        %v1122 = vunpack.c.h.b16 %v707
        %v1123 = vunpack.c.l.b16 %v708
        %v1124 = vunpack.c.h.b16 %v708
        %v1125 = vunpack.c.l.b16 %v709
        %v1126 = vunpack.c.h.b16 %v709
        %v1127 = vunpack.c.l.b16 %v710
        %v1128 = vunpack.c.h.b16 %v710
        %v1129 = vunpack.c.l.b16 %v711
        %v1130 = vunpack.c.h.b16 %v711
        %v1131 = vunpack.c.l.b16 %v712
        %v1132 = vunpack.c.h.b16 %v712
        %v1133 = vunpack.c.l.b16 %v713
        %v1134 = vunpack.c.h.b16 %v713
        %v1135 = vunpack.c.l.b16 %v714
        %v1136 = vunpack.c.h.b16 %v714
        %v1137 = vunpack.c.l.b16 %v715
        %v1138 = vunpack.c.h.b16 %v715
        %v1139 = vunpack.c.l.b16 %v716
        %v1140 = vunpack.c.h.b16 %v716
        %v1141 = vunpack.c.l.b16 %v717
        %v1142 = vunpack.c.h.b16 %v717
        %v1143 = vunpack.c.l.b16 %v718
        %v1144 = vunpack.c.h.b16 %v718
        %v1145 = vunpack.c.l.b16 %v719
        %v1146 = vunpack.c.h.b16 %v719
        %v1147 = vunpack.c.l.b16 %v720
        %v1148 = vunpack.c.h.b16 %v720
        %v1149 = vunpack.c.l.b16 %v721
        %v1150 = vunpack.c.h.b16 %v721
        %v1151 = vunpack.c.l.b16 %v722
        %v1152 = vunpack.c.h.b16 %v722
        %v1153 = vunpack.c.l.b16 %v723
        %v1154 = vunpack.c.h.b16 %v723
        %v1155 = vunpack.c.l.b16 %v724
        %v1156 = vunpack.c.h.b16 %v724
        %v1157 = vunpack.c.l.b16 %v725
        %v1158 = vunpack.c.h.b16 %v725
        %v1159 = vunpack.c.l.b16 %v726
        %v1160 = vunpack.c.h.b16 %v726
        %v1161 = vunpack.c.l.b16 %v727
        %v1162 = vunpack.c.h.b16 %v727
        %v1163 = vunpack.c.l.b16 %v728
        %v1164 = vunpack.c.h.b16 %v728
        %v1165 = vunpack.c.l.b16 %v729
        %v1166 = vunpack.c.h.b16 %v729
        %v1167 = vunpack.c.l.b16 %v730
        %v1168 = vunpack.c.h.b16 %v730
        %v1169 = vunpack.c.l.b16 %v731
        %v1170 = vunpack.c.h.b16 %v731
        %v1171 = vunpack.c.l.b16 %v732
        %v1172 = vunpack.c.h.b16 %v732
        %v1173 = vunpack.c.l.b16 %v733
        %v1174 = vunpack.c.h.b16 %v733
        %v1175 = vunpack.c.l.b16 %v734
        %v1176 = vunpack.c.h.b16 %v734
        %v1177 = vunpack.c.l.b16 %v735
        %v1178 = vunpack.c.h.b16 %v735
        %v1179 = vunpack.c.l.b16 %v736
        %v1180 = vunpack.c.h.b16 %v736
        %v1181 = vunpack.c.l.b16 %v737
        %v1182 = vunpack.c.h.b16 %v737
        %v1183 = vunpack.c.l.b16 %v738
        %v1184 = vunpack.c.h.b16 %v738
        %v1185 = vunpack.c.l.b16 %v739
        %v1186 = vunpack.c.h.b16 %v739
        %v1187 = vunpack.c.l.b16 %v740
        %v1188 = vunpack.c.h.b16 %v740
        %v1189 = vpack.c.b16 %v937, %v933
        %v1190 = vpack.c.b16 %v938, %v934
        %v1191 = vpack.c.b16 %v939, %v935
        %v1192 = vpack.c.b16 %v940, %v936
        %v1193 = vpack.c.b16 %v945, %v941
        %v1194 = vpack.c.b16 %v946, %v942
        %v1195 = vpack.c.b16 %v947, %v943
        %v1196 = vpack.c.b16 %v948, %v944
        %v1197 = vpack.c.b16 %v953, %v949
        %v1198 = vpack.c.b16 %v954, %v950
        %v1199 = vpack.c.b16 %v955, %v951
        %v1200 = vpack.c.b16 %v956, %v952
        %v1201 = vpack.c.b16 %v961, %v957
        %v1202 = vpack.c.b16 %v962, %v958
        %v1203 = vpack.c.b16 %v963, %v959
        %v1204 = vpack.c.b16 %v964, %v960
        %v1205 = vpack.c.b16 %v969, %v965
        %v1206 = vpack.c.b16 %v970, %v966
        %v1207 = vpack.c.b16 %v971, %v967
        %v1208 = vpack.c.b16 %v972, %v968
        %v1209 = vpack.c.b16 %v977, %v973
        %v1210 = vpack.c.b16 %v978, %v974
        %v1211 = vpack.c.b16 %v979, %v975
        %v1212 = vpack.c.b16 %v980, %v976
        %v1213 = vpack.c.b16 %v985, %v981
        %v1214 = vpack.c.b16 %v986, %v982
        %v1215 = vpack.c.b16 %v987, %v983
        %v1216 = vpack.c.b16 %v988, %v984
        %v1217 = vpack.c.b16 %v993, %v989
        %v1218 = vpack.c.b16 %v994, %v990
        %v1219 = vpack.c.b16 %v995, %v991
        %v1220 = vpack.c.b16 %v996, %v992
        %v1221 = vpack.c.b16 %v1001, %v997
        %v1222 = vpack.c.b16 %v1002, %v998
        %v1223 = vpack.c.b16 %v1003, %v999
        %v1224 = vpack.c.b16 %v1004, %v1000
        %v1225 = vpack.c.b16 %v1009, %v1005
        %v1226 = vpack.c.b16 %v1010, %v1006
        %v1227 = vpack.c.b16 %v1011, %v1007
        %v1228 = vpack.c.b16 %v1012, %v1008
        %v1229 = vpack.c.b16 %v1017, %v1013
        %v1230 = vpack.c.b16 %v1018, %v1014
        %v1231 = vpack.c.b16 %v1019, %v1015
        %v1232 = vpack.c.b16 %v1020, %v1016
        %v1233 = vpack.c.b16 %v1025, %v1021
        %v1234 = vpack.c.b16 %v1026, %v1022
        %v1235 = vpack.c.b16 %v1027, %v1023
        %v1236 = vpack.c.b16 %v1028, %v1024
        %v1237 = vpack.c.b16 %v1033, %v1029
        %v1238 = vpack.c.b16 %v1034, %v1030
        %v1239 = vpack.c.b16 %v1035, %v1031
        %v1240 = vpack.c.b16 %v1036, %v1032
        %v1241 = vpack.c.b16 %v1041, %v1037
        %v1242 = vpack.c.b16 %v1042, %v1038
        %v1243 = vpack.c.b16 %v1043, %v1039
        %v1244 = vpack.c.b16 %v1044, %v1040
        %v1245 = vpack.c.b16 %v1049, %v1045
        %v1246 = vpack.c.b16 %v1050, %v1046
        %v1247 = vpack.c.b16 %v1051, %v1047
        %v1248 = vpack.c.b16 %v1052, %v1048
        %v1249 = vpack.c.b16 %v1057, %v1053
        %v1250 = vpack.c.b16 %v1058, %v1054
        %v1251 = vpack.c.b16 %v1059, %v1055
        %v1252 = vpack.c.b16 %v1060, %v1056
        %v1253 = vpack.c.b16 %v1065, %v1061
        %v1254 = vpack.c.b16 %v1066, %v1062
        %v1255 = vpack.c.b16 %v1067, %v1063
        %v1256 = vpack.c.b16 %v1068, %v1064
        %v1257 = vpack.c.b16 %v1073, %v1069
        %v1258 = vpack.c.b16 %v1074, %v1070
        %v1259 = vpack.c.b16 %v1075, %v1071
        %v1260 = vpack.c.b16 %v1076, %v1072
        %v1261 = vpack.c.b16 %v1081, %v1077
        %v1262 = vpack.c.b16 %v1082, %v1078
        %v1263 = vpack.c.b16 %v1083, %v1079
        %v1264 = vpack.c.b16 %v1084, %v1080
        %v1265 = vpack.c.b16 %v1089, %v1085
        %v1266 = vpack.c.b16 %v1090, %v1086
        %v1267 = vpack.c.b16 %v1091, %v1087
        %v1268 = vpack.c.b16 %v1092, %v1088
        %v1269 = vpack.c.b16 %v1097, %v1093
        %v1270 = vpack.c.b16 %v1098, %v1094
        %v1271 = vpack.c.b16 %v1099, %v1095
        %v1272 = vpack.c.b16 %v1100, %v1096
        %v1273 = vpack.c.b16 %v1105, %v1101
        %v1274 = vpack.c.b16 %v1106, %v1102
        %v1275 = vpack.c.b16 %v1107, %v1103
        %v1276 = vpack.c.b16 %v1108, %v1104
        %v1277 = vpack.c.b16 %v1113, %v1109
        %v1278 = vpack.c.b16 %v1114, %v1110
        %v1279 = vpack.c.b16 %v1115, %v1111
        %v1280 = vpack.c.b16 %v1116, %v1112
        %v1281 = vpack.c.b16 %v1121, %v1117
        %v1282 = vpack.c.b16 %v1122, %v1118
        %v1283 = vpack.c.b16 %v1123, %v1119
        %v1284 = vpack.c.b16 %v1124, %v1120
        %v1285 = vpack.c.b16 %v1129, %v1125
        %v1286 = vpack.c.b16 %v1130, %v1126
        %v1287 = vpack.c.b16 %v1131, %v1127
        %v1288 = vpack.c.b16 %v1132, %v1128
        %v1289 = vpack.c.b16 %v1137, %v1133
        %v1290 = vpack.c.b16 %v1138, %v1134
        %v1291 = vpack.c.b16 %v1139, %v1135
        %v1292 = vpack.c.b16 %v1140, %v1136
        %v1293 = vpack.c.b16 %v1145, %v1141
        %v1294 = vpack.c.b16 %v1146, %v1142
        %v1295 = vpack.c.b16 %v1147, %v1143
        %v1296 = vpack.c.b16 %v1148, %v1144
        %v1297 = vpack.c.b16 %v1153, %v1149
        %v1298 = vpack.c.b16 %v1154, %v1150
        %v1299 = vpack.c.b16 %v1155, %v1151
        %v1300 = vpack.c.b16 %v1156, %v1152
        %v1301 = vpack.c.b16 %v1161, %v1157
        %v1302 = vpack.c.b16 %v1162, %v1158
        %v1303 = vpack.c.b16 %v1163, %v1159
        %v1304 = vpack.c.b16 %v1164, %v1160
        %v1305 = vpack.c.b16 %v1169, %v1165
        %v1306 = vpack.c.b16 %v1170, %v1166
        %v1307 = vpack.c.b16 %v1171, %v1167
        %v1308 = vpack.c.b16 %v1172, %v1168
        %v1309 = vpack.c.b16 %v1177, %v1173
        %v1310 = vpack.c.b16 %v1178, %v1174
        %v1311 = vpack.c.b16 %v1179, %v1175
        %v1312 = vpack.c.b16 %v1180, %v1176
        %v1313 = vpack.c.b16 %v1185, %v1181
        %v1314 = vpack.c.b16 %v1186, %v1182
        %v1315 = vpack.c.b16 %v1187, %v1183
        %v1316 = vpack.c.b16 %v1188, %v1184
        %v1509 = vunpack.c.l.b16 %v741
        %v1510 = vunpack.c.l.b16 %v742
        %v1511 = vunpack.c.l.b16 %v743
        %v1512 = vunpack.c.l.b16 %v744
        %v1513 = vunpack.c.l.b16 %v745
        %v1514 = vunpack.c.l.b16 %v746
        %v1515 = vunpack.c.l.b16 %v747
        %v1516 = vunpack.c.l.b16 %v748
        %v1517 = vunpack.c.l.b16 %v749
        %v1518 = vunpack.c.l.b16 %v750
        %v1519 = vunpack.c.l.b16 %v751
        %v1520 = vunpack.c.l.b16 %v752
        %v1521 = vunpack.c.l.b16 %v753
        %v1522 = vunpack.c.l.b16 %v754
        %v1523 = vunpack.c.l.b16 %v755
        %v1524 = vunpack.c.l.b16 %v756
        %v1525 = vunpack.c.l.b16 %v757
        %v1526 = vunpack.c.l.b16 %v758
        %v1527 = vunpack.c.l.b16 %v759
        %v1528 = vunpack.c.l.b16 %v760
        %v1529 = vunpack.c.l.b16 %v761
        %v1530 = vunpack.c.l.b16 %v762
        %v1531 = vunpack.c.l.b16 %v763
        %v1532 = vunpack.c.l.b16 %v764
        %v1533 = vunpack.c.l.b16 %v765
        %v1534 = vunpack.c.l.b16 %v766
        %v1535 = vunpack.c.l.b16 %v767
        %v1536 = vunpack.c.l.b16 %v768
        %v1537 = vunpack.c.l.b16 %v769
        %v1538 = vunpack.c.l.b16 %v770
        %v1539 = vunpack.c.l.b16 %v771
        %v1540 = vunpack.c.l.b16 %v772
        %v1541 = vunpack.c.l.b16 %v773
        %v1542 = vunpack.c.l.b16 %v774
        %v1543 = vunpack.c.l.b16 %v775
        %v1544 = vunpack.c.l.b16 %v776
        %v1545 = vunpack.c.l.b16 %v777
        %v1546 = vunpack.c.l.b16 %v778
        %v1547 = vunpack.c.l.b16 %v779
        %v1548 = vunpack.c.l.b16 %v780
        %v1549 = vunpack.c.l.b16 %v781
        %v1550 = vunpack.c.l.b16 %v782
        %v1551 = vunpack.c.l.b16 %v783
        %v1552 = vunpack.c.l.b16 %v784
        %v1553 = vunpack.c.l.b16 %v785
        %v1554 = vunpack.c.l.b16 %v786
        %v1555 = vunpack.c.l.b16 %v787
        %v1556 = vunpack.c.l.b16 %v788
        %v1557 = vunpack.c.l.b16 %v789
        %v1558 = vunpack.c.l.b16 %v790
        %v1559 = vunpack.c.l.b16 %v791
        %v1560 = vunpack.c.l.b16 %v792
        %v1561 = vunpack.c.l.b16 %v793
        %v1562 = vunpack.c.l.b16 %v794
        %v1563 = vunpack.c.l.b16 %v795
        %v1564 = vunpack.c.l.b16 %v796
        %v1565 = vunpack.c.l.b16 %v797
        %v1566 = vunpack.c.l.b16 %v798
        %v1567 = vunpack.c.l.b16 %v799
        %v1568 = vunpack.c.l.b16 %v800
        %v1569 = vunpack.c.l.b16 %v801
        %v1570 = vunpack.c.l.b16 %v802
        %v1571 = vunpack.c.l.b16 %v803
        %v1572 = vunpack.c.l.b16 %v804
        %v1573 = vpack.c.b16 %v1510, %v1509
        %v1574 = vpack.c.b16 %v1512, %v1511
        %v1575 = vpack.c.b16 %v1514, %v1513
        %v1576 = vpack.c.b16 %v1516, %v1515
        %v1577 = vpack.c.b16 %v1518, %v1517
        %v1578 = vpack.c.b16 %v1520, %v1519
        %v1579 = vpack.c.b16 %v1522, %v1521
        %v1580 = vpack.c.b16 %v1524, %v1523
        %v1581 = vpack.c.b16 %v1526, %v1525
        %v1582 = vpack.c.b16 %v1528, %v1527
        %v1583 = vpack.c.b16 %v1530, %v1529
        %v1584 = vpack.c.b16 %v1532, %v1531
        %v1585 = vpack.c.b16 %v1534, %v1533
        %v1586 = vpack.c.b16 %v1536, %v1535
        %v1587 = vpack.c.b16 %v1538, %v1537
        %v1588 = vpack.c.b16 %v1540, %v1539
        %v1589 = vpack.c.b16 %v1542, %v1541
        %v1590 = vpack.c.b16 %v1544, %v1543
        %v1591 = vpack.c.b16 %v1546, %v1545
        %v1592 = vpack.c.b16 %v1548, %v1547
        %v1593 = vpack.c.b16 %v1550, %v1549
        %v1594 = vpack.c.b16 %v1552, %v1551
        %v1595 = vpack.c.b16 %v1554, %v1553
        %v1596 = vpack.c.b16 %v1556, %v1555
        %v1597 = vpack.c.b16 %v1558, %v1557
        %v1598 = vpack.c.b16 %v1560, %v1559
        %v1599 = vpack.c.b16 %v1562, %v1561
        %v1600 = vpack.c.b16 %v1564, %v1563
        %v1601 = vpack.c.b16 %v1566, %v1565
        %v1602 = vpack.c.b16 %v1568, %v1567
        %v1603 = vpack.c.b16 %v1570, %v1569
        %v1604 = vpack.c.b16 %v1572, %v1571
        %1637 = vmatprep.subr.bf16.mxu0 0
        %1638 = vmatpush1.bf16.msra.mxu0 %v1573
        %1639 = vmatprep.subr.bf16.mxu0 0
        %1640 = vmatpush1.bf16.msra.mxu0 %v1574
        %1641 = vmatprep.subr.bf16.mxu0 0
        %1642 = vmatpush1.bf16.msra.mxu0 %v1575
        %1643 = vmatprep.subr.bf16.mxu0 0
        %1644 = vmatpush1.bf16.msra.mxu0 %v1576
        %1645 = vmatprep.subr.bf16.mxu0 0
        %1646 = vmatpush1.bf16.msra.mxu0 %v1577
        %1647 = vmatprep.subr.bf16.mxu0 0
        %1648 = vmatpush1.bf16.msra.mxu0 %v1578
        %1649 = vmatprep.subr.bf16.mxu0 0
        %1650 = vmatpush1.bf16.msra.mxu0 %v1579
        %1651 = vmatprep.subr.bf16.mxu0 0
        %1652 = vmatpush1.bf16.msra.mxu0 %v1580
        %1653 = vmatprep.subr.bf16.mxu0 0
        %1654 = vmatpush1.bf16.msra.mxu0 %v1581
        %1655 = vmatprep.subr.bf16.mxu0 0
        %1656 = vmatpush1.bf16.msra.mxu0 %v1582
        %1657 = vmatprep.subr.bf16.mxu0 0
        %1658 = vmatpush1.bf16.msra.mxu0 %v1583
        %1659 = vmatprep.subr.bf16.mxu0 0
        %1660 = vmatpush1.bf16.msra.mxu0 %v1584
        %1661 = vmatprep.subr.bf16.mxu0 0
        %1662 = vmatpush1.bf16.msra.mxu0 %v1585
        %1663 = vmatprep.subr.bf16.mxu0 0
        %1664 = vmatpush1.bf16.msra.mxu0 %v1586
        %1665 = vmatprep.subr.bf16.mxu0 0
        %1666 = vmatpush1.bf16.msra.mxu0 %v1587
        %1667 = vmatprep.subr.bf16.mxu0 0
        %1668 = vmatpush1.bf16.msra.mxu0 %v1588
        %1669 = vmatprep.mubr.bf16.mxu0 %v1190
        %1670 = vmatmul.mubr.bf16.gmra.mrb[0].mxu0 %v1189
        %v1671 = vpop.f32.mrb[0].mxu0
        %v1672 = vadd.f32 0.0, %v1671
        %v1673 = vpop.f32.mrb[0].mxu0
        %v1674 = vpop.f32.mrb[0].mxu0
        %v1675 = vadd.f32 0.0, %v1674
        %v1676 = vpop.f32.mrb[0].mxu0
        %1677 = vmatprep.mubr.bf16.mxu0 %v1194
        %1678 = vmatmul.mubr.bf16.gmra.mrb[0].mxu0 %v1193
        %v1679 = vpop.f32.mrb[0].mxu0
        %v1680 = vadd.f32 0.0, %v1679
        %v1681 = vpop.f32.mrb[0].mxu0
        %v1682 = vpop.f32.mrb[0].mxu0
        %v1683 = vadd.f32 0.0, %v1682
        %v1684 = vpop.f32.mrb[0].mxu0
        %1685 = vmatprep.mubr.bf16.mxu0 %v1198
        %1686 = vmatmul.mubr.bf16.gmra.mrb[0].mxu0 %v1197
        %v1687 = vpop.f32.mrb[0].mxu0
        %v1688 = vadd.f32 0.0, %v1687
        %v1689 = vpop.f32.mrb[0].mxu0
        %v1690 = vpop.f32.mrb[0].mxu0
        %v1691 = vadd.f32 0.0, %v1690
        %v1692 = vpop.f32.mrb[0].mxu0
        %1693 = vmatprep.mubr.bf16.mxu0 %v1202
        %1694 = vmatmul.mubr.bf16.gmra.mrb[0].mxu0 %v1201
        %v1695 = vpop.f32.mrb[0].mxu0
        %v1696 = vadd.f32 0.0, %v1695
        %v1697 = vpop.f32.mrb[0].mxu0
        %v1698 = vpop.f32.mrb[0].mxu0
        %v1699 = vadd.f32 0.0, %v1698
        %v1700 = vpop.f32.mrb[0].mxu0
        %1701 = vmatprep.mubr.bf16.mxu0 %v1206
        %1702 = vmatmul.mubr.bf16.gmra.mrb[0].mxu0 %v1205
        %v1703 = vpop.f32.mrb[0].mxu0
        %v1704 = vadd.f32 0.0, %v1703
        %v1705 = vpop.f32.mrb[0].mxu0
        %v1706 = vpop.f32.mrb[0].mxu0
        %v1707 = vadd.f32 0.0, %v1706
        %v1708 = vpop.f32.mrb[0].mxu0
        %1709 = vmatprep.mubr.bf16.mxu0 %v1210
        %1710 = vmatmul.mubr.bf16.gmra.mrb[0].mxu0 %v1209
        %v1711 = vpop.f32.mrb[0].mxu0
        %v1712 = vadd.f32 0.0, %v1711
        %v1713 = vpop.f32.mrb[0].mxu0
        %v1714 = vpop.f32.mrb[0].mxu0
        %v1715 = vadd.f32 0.0, %v1714
        %v1716 = vpop.f32.mrb[0].mxu0
        %1717 = vmatprep.mubr.bf16.mxu0 %v1214
        %1718 = vmatmul.mubr.bf16.gmra.mrb[0].mxu0 %v1213
        %v1719 = vpop.f32.mrb[0].mxu0
        %v1720 = vadd.f32 0.0, %v1719
        %v1721 = vpop.f32.mrb[0].mxu0
        %v1722 = vpop.f32.mrb[0].mxu0
        %v1723 = vadd.f32 0.0, %v1722
        %v1724 = vpop.f32.mrb[0].mxu0
        %1725 = vmatprep.mubr.bf16.mxu0 %v1218
        %1726 = vmatmul.mubr.bf16.gmra.mrb[0].mxu0 %v1217
        %v1727 = vpop.f32.mrb[0].mxu0
        %v1728 = vadd.f32 0.0, %v1727
        %v1729 = vpop.f32.mrb[0].mxu0
        %v1730 = vpop.f32.mrb[0].mxu0
        %v1731 = vadd.f32 0.0, %v1730
        %v1732 = vpop.f32.mrb[0].mxu0
        %1733 = vmatprep.mubr.bf16.mxu0 %v1222
        %1734 = vmatmul.mubr.bf16.gmra.mrb[0].mxu0 %v1221
        %v1735 = vpop.f32.mrb[0].mxu0
        %v1736 = vadd.f32 0.0, %v1735
        %v1737 = vpop.f32.mrb[0].mxu0
        %v1738 = vpop.f32.mrb[0].mxu0
        %v1739 = vadd.f32 0.0, %v1738
        %v1740 = vpop.f32.mrb[0].mxu0
        %1741 = vmatprep.mubr.bf16.mxu0 %v1226
        %1742 = vmatmul.mubr.bf16.gmra.mrb[0].mxu0 %v1225
        %v1743 = vpop.f32.mrb[0].mxu0
        %v1744 = vadd.f32 0.0, %v1743
        %v1745 = vpop.f32.mrb[0].mxu0
        %v1746 = vpop.f32.mrb[0].mxu0
        %v1747 = vadd.f32 0.0, %v1746
        %v1748 = vpop.f32.mrb[0].mxu0
        %1749 = vmatprep.mubr.bf16.mxu0 %v1230
        %1750 = vmatmul.mubr.bf16.gmra.mrb[0].mxu0 %v1229
        %v1751 = vpop.f32.mrb[0].mxu0
        %v1752 = vadd.f32 0.0, %v1751
        %v1753 = vpop.f32.mrb[0].mxu0
        %v1754 = vpop.f32.mrb[0].mxu0
        %v1755 = vadd.f32 0.0, %v1754
        %v1756 = vpop.f32.mrb[0].mxu0
        %1757 = vmatprep.mubr.bf16.mxu0 %v1234
        %1758 = vmatmul.mubr.bf16.gmra.mrb[0].mxu0 %v1233
        %v1759 = vpop.f32.mrb[0].mxu0
        %v1760 = vadd.f32 0.0, %v1759
        %v1761 = vpop.f32.mrb[0].mxu0
        %v1762 = vpop.f32.mrb[0].mxu0
        %v1763 = vadd.f32 0.0, %v1762
        %v1764 = vpop.f32.mrb[0].mxu0
        %1765 = vmatprep.mubr.bf16.mxu0 %v1238
        %1766 = vmatmul.mubr.bf16.gmra.mrb[0].mxu0 %v1237
        %v1767 = vpop.f32.mrb[0].mxu0
        %v1768 = vadd.f32 0.0, %v1767
        %v1769 = vpop.f32.mrb[0].mxu0
        %v1770 = vpop.f32.mrb[0].mxu0
        %v1771 = vadd.f32 0.0, %v1770
        %v1772 = vpop.f32.mrb[0].mxu0
        %1773 = vmatprep.mubr.bf16.mxu0 %v1242
        %1774 = vmatmul.mubr.bf16.gmra.mrb[0].mxu0 %v1241
        %v1775 = vpop.f32.mrb[0].mxu0
        %v1776 = vadd.f32 0.0, %v1775
        %v1777 = vpop.f32.mrb[0].mxu0
        %v1778 = vpop.f32.mrb[0].mxu0
        %v1779 = vadd.f32 0.0, %v1778
        %v1780 = vpop.f32.mrb[0].mxu0
        %1781 = vmatprep.mubr.bf16.mxu0 %v1246
        %1782 = vmatmul.mubr.bf16.gmra.mrb[0].mxu0 %v1245
        %v1783 = vpop.f32.mrb[0].mxu0
        %v1784 = vadd.f32 0.0, %v1783
        %v1785 = vpop.f32.mrb[0].mxu0
        %v1786 = vpop.f32.mrb[0].mxu0
        %v1787 = vadd.f32 0.0, %v1786
        %v1788 = vpop.f32.mrb[0].mxu0
        %1789 = vmatprep.mubr.bf16.mxu0 %v1250
        %1790 = vmatmul.mubr.bf16.gmra.mrb[0].mxu0 %v1249
        %v1791 = vpop.f32.mrb[0].mxu0
        %v1792 = vadd.f32 0.0, %v1791
        %v1793 = vpop.f32.mrb[0].mxu0
        %v1794 = vpop.f32.mrb[0].mxu0
        %v1795 = vadd.f32 0.0, %v1794
        %v1796 = vpop.f32.mrb[0].mxu0
        %1797 = vmatprep.mubr.bf16.mxu0 %v1254
        %1798 = vmatmul.mubr.bf16.gmra.mrb[0].mxu0 %v1253
        %v1799 = vpop.f32.mrb[0].mxu0
        %v1800 = vadd.f32 0.0, %v1799
        %v1801 = vpop.f32.mrb[0].mxu0
        %v1802 = vpop.f32.mrb[0].mxu0
        %v1803 = vadd.f32 0.0, %v1802
        %v1804 = vpop.f32.mrb[0].mxu0
        %1805 = vmatprep.mubr.bf16.mxu0 %v1258
        %1806 = vmatmul.mubr.bf16.gmra.mrb[0].mxu0 %v1257
        %v1807 = vpop.f32.mrb[0].mxu0
        %v1808 = vadd.f32 0.0, %v1807
        %v1809 = vpop.f32.mrb[0].mxu0
        %v1810 = vpop.f32.mrb[0].mxu0
        %v1811 = vadd.f32 0.0, %v1810
        %v1812 = vpop.f32.mrb[0].mxu0
        %1813 = vmatprep.mubr.bf16.mxu0 %v1262
        %1814 = vmatmul.mubr.bf16.gmra.mrb[0].mxu0 %v1261
        %v1815 = vpop.f32.mrb[0].mxu0
        %v1816 = vadd.f32 0.0, %v1815
        %v1817 = vpop.f32.mrb[0].mxu0
        %v1818 = vpop.f32.mrb[0].mxu0
        %v1819 = vadd.f32 0.0, %v1818
        %v1820 = vpop.f32.mrb[0].mxu0
        %1821 = vmatprep.mubr.bf16.mxu0 %v1266
        %1822 = vmatmul.mubr.bf16.gmra.mrb[0].mxu0 %v1265
        %v1823 = vpop.f32.mrb[0].mxu0
        %v1824 = vadd.f32 0.0, %v1823
        %v1825 = vpop.f32.mrb[0].mxu0
        %v1826 = vpop.f32.mrb[0].mxu0
        %v1827 = vadd.f32 0.0, %v1826
        %v1828 = vpop.f32.mrb[0].mxu0
        %1829 = vmatprep.mubr.bf16.mxu0 %v1270
        %1830 = vmatmul.mubr.bf16.gmra.mrb[0].mxu0 %v1269
        %v1831 = vpop.f32.mrb[0].mxu0
        %v1832 = vadd.f32 0.0, %v1831
        %v1833 = vpop.f32.mrb[0].mxu0
        %v1834 = vpop.f32.mrb[0].mxu0
        %v1835 = vadd.f32 0.0, %v1834
        %v1836 = vpop.f32.mrb[0].mxu0
        %1837 = vmatprep.mubr.bf16.mxu0 %v1274
        %1838 = vmatmul.mubr.bf16.gmra.mrb[0].mxu0 %v1273
        %v1839 = vpop.f32.mrb[0].mxu0
        %v1840 = vadd.f32 0.0, %v1839
        %v1841 = vpop.f32.mrb[0].mxu0
        %v1842 = vpop.f32.mrb[0].mxu0
        %v1843 = vadd.f32 0.0, %v1842
        %v1844 = vpop.f32.mrb[0].mxu0
        %1845 = vmatprep.mubr.bf16.mxu0 %v1278
        %1846 = vmatmul.mubr.bf16.gmra.mrb[0].mxu0 %v1277
        %v1847 = vpop.f32.mrb[0].mxu0
        %v1848 = vadd.f32 0.0, %v1847
        %v1849 = vpop.f32.mrb[0].mxu0
        %v1850 = vpop.f32.mrb[0].mxu0
        %v1851 = vadd.f32 0.0, %v1850
        %v1852 = vpop.f32.mrb[0].mxu0
        %1853 = vmatprep.mubr.bf16.mxu0 %v1282
        %1854 = vmatmul.mubr.bf16.gmra.mrb[0].mxu0 %v1281
        %v1855 = vpop.f32.mrb[0].mxu0
        %v1856 = vadd.f32 0.0, %v1855
        %v1857 = vpop.f32.mrb[0].mxu0
        %v1858 = vpop.f32.mrb[0].mxu0
        %v1859 = vadd.f32 0.0, %v1858
        %v1860 = vpop.f32.mrb[0].mxu0
        %1861 = vmatprep.mubr.bf16.mxu0 %v1286
        %1862 = vmatmul.mubr.bf16.gmra.mrb[0].mxu0 %v1285
        %v1863 = vpop.f32.mrb[0].mxu0
        %v1864 = vadd.f32 0.0, %v1863
        %v1865 = vpop.f32.mrb[0].mxu0
        %v1866 = vpop.f32.mrb[0].mxu0
        %v1867 = vadd.f32 0.0, %v1866
        %v1868 = vpop.f32.mrb[0].mxu0
        %1869 = vmatprep.mubr.bf16.mxu0 %v1290
        %1870 = vmatmul.mubr.bf16.gmra.mrb[0].mxu0 %v1289
        %v1871 = vpop.f32.mrb[0].mxu0
        %v1872 = vadd.f32 0.0, %v1871
        %v1873 = vpop.f32.mrb[0].mxu0
        %v1874 = vpop.f32.mrb[0].mxu0
        %v1875 = vadd.f32 0.0, %v1874
        %v1876 = vpop.f32.mrb[0].mxu0
        %1877 = vmatprep.mubr.bf16.mxu0 %v1294
        %1878 = vmatmul.mubr.bf16.gmra.mrb[0].mxu0 %v1293
        %v1879 = vpop.f32.mrb[0].mxu0
        %v1880 = vadd.f32 0.0, %v1879
        %v1881 = vpop.f32.mrb[0].mxu0
        %v1882 = vpop.f32.mrb[0].mxu0
        %v1883 = vadd.f32 0.0, %v1882
        %v1884 = vpop.f32.mrb[0].mxu0
        %1885 = vmatprep.mubr.bf16.mxu0 %v1298
        %1886 = vmatmul.mubr.bf16.gmra.mrb[0].mxu0 %v1297
        %v1887 = vpop.f32.mrb[0].mxu0
        %v1888 = vadd.f32 0.0, %v1887
        %v1889 = vpop.f32.mrb[0].mxu0
        %v1890 = vpop.f32.mrb[0].mxu0
        %v1891 = vadd.f32 0.0, %v1890
        %v1892 = vpop.f32.mrb[0].mxu0
        %1893 = vmatprep.mubr.bf16.mxu0 %v1302
        %1894 = vmatmul.mubr.bf16.gmra.mrb[0].mxu0 %v1301
        %v1895 = vpop.f32.mrb[0].mxu0
        %v1896 = vadd.f32 0.0, %v1895
        %v1897 = vpop.f32.mrb[0].mxu0
        %v1898 = vpop.f32.mrb[0].mxu0
        %v1899 = vadd.f32 0.0, %v1898
        %v1900 = vpop.f32.mrb[0].mxu0
        %1901 = vmatprep.mubr.bf16.mxu0 %v1306
        %1902 = vmatmul.mubr.bf16.gmra.mrb[0].mxu0 %v1305
        %v1903 = vpop.f32.mrb[0].mxu0
        %v1904 = vadd.f32 0.0, %v1903
        %v1905 = vpop.f32.mrb[0].mxu0
        %v1906 = vpop.f32.mrb[0].mxu0
        %v1907 = vadd.f32 0.0, %v1906
        %v1908 = vpop.f32.mrb[0].mxu0
        %1909 = vmatprep.mubr.bf16.mxu0 %v1310
        %1910 = vmatmul.mubr.bf16.gmra.mrb[0].mxu0 %v1309
        %v1911 = vpop.f32.mrb[0].mxu0
        %v1912 = vadd.f32 0.0, %v1911
        %v1913 = vpop.f32.mrb[0].mxu0
        %v1914 = vpop.f32.mrb[0].mxu0
        %v1915 = vadd.f32 0.0, %v1914
        %v1916 = vpop.f32.mrb[0].mxu0
        %1917 = vmatprep.mubr.bf16.mxu0 %v1314
        %1918 = vmatmul.mubr.bf16.gmra.mrb[0].mxu0 %v1313
        %v1919 = vpop.f32.mrb[0].mxu0
        %v1920 = vadd.f32 0.0, %v1919
        %v1921 = vpop.f32.mrb[0].mxu0
        %v1922 = vpop.f32.mrb[0].mxu0
        %v1923 = vadd.f32 0.0, %v1922
        %v1924 = vpop.f32.mrb[0].mxu0
        %1925 = vdwg.mxu0
        %1926 = vmatprep.subr.bf16.mxu0 0
        %1927 = vmatpush1.bf16.msra.mxu0 %v1589
        %1928 = vmatprep.subr.bf16.mxu0 0
        %1929 = vmatpush1.bf16.msra.mxu0 %v1590
        %1930 = vmatprep.subr.bf16.mxu0 0
        %1931 = vmatpush1.bf16.msra.mxu0 %v1591
        %1932 = vmatprep.subr.bf16.mxu0 0
        %1933 = vmatpush1.bf16.msra.mxu0 %v1592
        %1934 = vmatprep.subr.bf16.mxu0 0
        %1935 = vmatpush1.bf16.msra.mxu0 %v1593
        %1936 = vmatprep.subr.bf16.mxu0 0
        %1937 = vmatpush1.bf16.msra.mxu0 %v1594
        %1938 = vmatprep.subr.bf16.mxu0 0
        %1939 = vmatpush1.bf16.msra.mxu0 %v1595
        %1940 = vmatprep.subr.bf16.mxu0 0
        %1941 = vmatpush1.bf16.msra.mxu0 %v1596
        %1942 = vmatprep.subr.bf16.mxu0 0
        %1943 = vmatpush1.bf16.msra.mxu0 %v1597
        %1944 = vmatprep.subr.bf16.mxu0 0
        %1945 = vmatpush1.bf16.msra.mxu0 %v1598
        %1946 = vmatprep.subr.bf16.mxu0 0
        %1947 = vmatpush1.bf16.msra.mxu0 %v1599
        %1948 = vmatprep.subr.bf16.mxu0 0
        %1949 = vmatpush1.bf16.msra.mxu0 %v1600
        %1950 = vmatprep.subr.bf16.mxu0 0
        %1951 = vmatpush1.bf16.msra.mxu0 %v1601
        %1952 = vmatprep.subr.bf16.mxu0 0
        %1953 = vmatpush1.bf16.msra.mxu0 %v1602
        %1954 = vmatprep.subr.bf16.mxu0 0
        %1955 = vmatpush1.bf16.msra.mxu0 %v1603
        %1956 = vmatprep.subr.bf16.mxu0 0
        %1957 = vmatpush1.bf16.msra.mxu0 %v1604
        %1958 = vmatprep.mubr.bf16.mxu0 %v1192
        %1959 = vmatmul.mubr.bf16.gmra.mrb[0].mxu0 %v1191
        %v1960 = vpop.f32.mrb[0].mxu0
        %v1961 = vadd.f32 %v1672, %v1960
        %v1962 = vpop.f32.mrb[0].mxu0
        %v1963 = vpop.f32.mrb[0].mxu0
        %v1964 = vadd.f32 %v1675, %v1963
        %v1965 = vpop.f32.mrb[0].mxu0
        %1966 = vmatprep.mubr.bf16.mxu0 %v1196
        %1967 = vmatmul.mubr.bf16.gmra.mrb[0].mxu0 %v1195
        %v1968 = vpop.f32.mrb[0].mxu0
        %v1969 = vadd.f32 %v1680, %v1968
        %v1970 = vpop.f32.mrb[0].mxu0
        %v1971 = vpop.f32.mrb[0].mxu0
        %v1972 = vadd.f32 %v1683, %v1971
        %v1973 = vpop.f32.mrb[0].mxu0
        %1974 = vmatprep.mubr.bf16.mxu0 %v1200
        %1975 = vmatmul.mubr.bf16.gmra.mrb[0].mxu0 %v1199
        %v1976 = vpop.f32.mrb[0].mxu0
        %v1977 = vadd.f32 %v1688, %v1976
        %v1978 = vpop.f32.mrb[0].mxu0
        %v1979 = vpop.f32.mrb[0].mxu0
        %v1980 = vadd.f32 %v1691, %v1979
        %v1981 = vpop.f32.mrb[0].mxu0
        %1982 = vmatprep.mubr.bf16.mxu0 %v1204
        %1983 = vmatmul.mubr.bf16.gmra.mrb[0].mxu0 %v1203
        %v1984 = vpop.f32.mrb[0].mxu0
        %v1985 = vadd.f32 %v1696, %v1984
        %v1986 = vpop.f32.mrb[0].mxu0
        %v1987 = vpop.f32.mrb[0].mxu0
        %v1988 = vadd.f32 %v1699, %v1987
        %v1989 = vpop.f32.mrb[0].mxu0
        %1990 = vmatprep.mubr.bf16.mxu0 %v1208
        %1991 = vmatmul.mubr.bf16.gmra.mrb[0].mxu0 %v1207
        %v1992 = vpop.f32.mrb[0].mxu0
        %v1993 = vadd.f32 %v1704, %v1992
        %v1994 = vpop.f32.mrb[0].mxu0
        %v1995 = vpop.f32.mrb[0].mxu0
        %v1996 = vadd.f32 %v1707, %v1995
        %v1997 = vpop.f32.mrb[0].mxu0
        %1998 = vmatprep.mubr.bf16.mxu0 %v1212
        %1999 = vmatmul.mubr.bf16.gmra.mrb[0].mxu0 %v1211
        %v2000 = vpop.f32.mrb[0].mxu0
        %v2001 = vadd.f32 %v1712, %v2000
        %v2002 = vpop.f32.mrb[0].mxu0
        %v2003 = vpop.f32.mrb[0].mxu0
        %v2004 = vadd.f32 %v1715, %v2003
        %v2005 = vpop.f32.mrb[0].mxu0
        %2006 = vmatprep.mubr.bf16.mxu0 %v1216
        %2007 = vmatmul.mubr.bf16.gmra.mrb[0].mxu0 %v1215
        %v2008 = vpop.f32.mrb[0].mxu0
        %v2009 = vadd.f32 %v1720, %v2008
        %v2010 = vpop.f32.mrb[0].mxu0
        %v2011 = vpop.f32.mrb[0].mxu0
        %v2012 = vadd.f32 %v1723, %v2011
        %v2013 = vpop.f32.mrb[0].mxu0
        %2014 = vmatprep.mubr.bf16.mxu0 %v1220
        %2015 = vmatmul.mubr.bf16.gmra.mrb[0].mxu0 %v1219
        %v2016 = vpop.f32.mrb[0].mxu0
        %v2017 = vadd.f32 %v1728, %v2016
        %v2018 = vpop.f32.mrb[0].mxu0
        %v2019 = vpop.f32.mrb[0].mxu0
        %v2020 = vadd.f32 %v1731, %v2019
        %v2021 = vpop.f32.mrb[0].mxu0
        %2022 = vmatprep.mubr.bf16.mxu0 %v1224
        %2023 = vmatmul.mubr.bf16.gmra.mrb[0].mxu0 %v1223
        %v2024 = vpop.f32.mrb[0].mxu0
        %v2025 = vadd.f32 %v1736, %v2024
        %v2026 = vpop.f32.mrb[0].mxu0
        %v2027 = vpop.f32.mrb[0].mxu0
        %v2028 = vadd.f32 %v1739, %v2027
        %v2029 = vpop.f32.mrb[0].mxu0
        %2030 = vmatprep.mubr.bf16.mxu0 %v1228
        %2031 = vmatmul.mubr.bf16.gmra.mrb[0].mxu0 %v1227
        %v2032 = vpop.f32.mrb[0].mxu0
        %v2033 = vadd.f32 %v1744, %v2032
        %v2034 = vpop.f32.mrb[0].mxu0
        %v2035 = vpop.f32.mrb[0].mxu0
        %v2036 = vadd.f32 %v1747, %v2035
        %v2037 = vpop.f32.mrb[0].mxu0
        %2038 = vmatprep.mubr.bf16.mxu0 %v1232
        %2039 = vmatmul.mubr.bf16.gmra.mrb[0].mxu0 %v1231
        %v2040 = vpop.f32.mrb[0].mxu0
        %v2041 = vadd.f32 %v1752, %v2040
        %v2042 = vpop.f32.mrb[0].mxu0
        %v2043 = vpop.f32.mrb[0].mxu0
        %v2044 = vadd.f32 %v1755, %v2043
        %v2045 = vpop.f32.mrb[0].mxu0
        %2046 = vmatprep.mubr.bf16.mxu0 %v1236
        %2047 = vmatmul.mubr.bf16.gmra.mrb[0].mxu0 %v1235
        %v2048 = vpop.f32.mrb[0].mxu0
        %v2049 = vadd.f32 %v1760, %v2048
        %v2050 = vpop.f32.mrb[0].mxu0
        %v2051 = vpop.f32.mrb[0].mxu0
        %v2052 = vadd.f32 %v1763, %v2051
        %v2053 = vpop.f32.mrb[0].mxu0
        %2054 = vmatprep.mubr.bf16.mxu0 %v1240
        %2055 = vmatmul.mubr.bf16.gmra.mrb[0].mxu0 %v1239
        %v2056 = vpop.f32.mrb[0].mxu0
        %v2057 = vadd.f32 %v1768, %v2056
        %v2058 = vpop.f32.mrb[0].mxu0
        %v2059 = vpop.f32.mrb[0].mxu0
        %v2060 = vadd.f32 %v1771, %v2059
        %v2061 = vpop.f32.mrb[0].mxu0
        %2062 = vmatprep.mubr.bf16.mxu0 %v1244
        %2063 = vmatmul.mubr.bf16.gmra.mrb[0].mxu0 %v1243
        %v2064 = vpop.f32.mrb[0].mxu0
        %v2065 = vadd.f32 %v1776, %v2064
        %v2066 = vpop.f32.mrb[0].mxu0
        %v2067 = vpop.f32.mrb[0].mxu0
        %v2068 = vadd.f32 %v1779, %v2067
        %v2069 = vpop.f32.mrb[0].mxu0
        %2070 = vmatprep.mubr.bf16.mxu0 %v1248
        %2071 = vmatmul.mubr.bf16.gmra.mrb[0].mxu0 %v1247
        %v2072 = vpop.f32.mrb[0].mxu0
        %v2073 = vadd.f32 %v1784, %v2072
        %v2074 = vpop.f32.mrb[0].mxu0
        %v2075 = vpop.f32.mrb[0].mxu0
        %v2076 = vadd.f32 %v1787, %v2075
        %v2077 = vpop.f32.mrb[0].mxu0
        %2078 = vmatprep.mubr.bf16.mxu0 %v1252
        %2079 = vmatmul.mubr.bf16.gmra.mrb[0].mxu0 %v1251
        %v2080 = vpop.f32.mrb[0].mxu0
        %v2081 = vadd.f32 %v1792, %v2080
        %v2082 = vpop.f32.mrb[0].mxu0
        %v2083 = vpop.f32.mrb[0].mxu0
        %v2084 = vadd.f32 %v1795, %v2083
        %v2085 = vpop.f32.mrb[0].mxu0
        %2086 = vmatprep.mubr.bf16.mxu0 %v1256
        %2087 = vmatmul.mubr.bf16.gmra.mrb[0].mxu0 %v1255
        %v2088 = vpop.f32.mrb[0].mxu0
        %v2089 = vadd.f32 %v1800, %v2088
        %v2090 = vpop.f32.mrb[0].mxu0
        %v2091 = vpop.f32.mrb[0].mxu0
        %v2092 = vadd.f32 %v1803, %v2091
        %v2093 = vpop.f32.mrb[0].mxu0
        %2094 = vmatprep.mubr.bf16.mxu0 %v1260
        %2095 = vmatmul.mubr.bf16.gmra.mrb[0].mxu0 %v1259
        %v2096 = vpop.f32.mrb[0].mxu0
        %v2097 = vadd.f32 %v1808, %v2096
        %v2098 = vpop.f32.mrb[0].mxu0
        %v2099 = vpop.f32.mrb[0].mxu0
        %v2100 = vadd.f32 %v1811, %v2099
        %v2101 = vpop.f32.mrb[0].mxu0
        %2102 = vmatprep.mubr.bf16.mxu0 %v1264
        %2103 = vmatmul.mubr.bf16.gmra.mrb[0].mxu0 %v1263
        %v2104 = vpop.f32.mrb[0].mxu0
        %v2105 = vadd.f32 %v1816, %v2104
        %v2106 = vpop.f32.mrb[0].mxu0
        %v2107 = vpop.f32.mrb[0].mxu0
        %v2108 = vadd.f32 %v1819, %v2107
        %v2109 = vpop.f32.mrb[0].mxu0
        %2110 = vmatprep.mubr.bf16.mxu0 %v1268
        %2111 = vmatmul.mubr.bf16.gmra.mrb[0].mxu0 %v1267
        %v2112 = vpop.f32.mrb[0].mxu0
        %v2113 = vadd.f32 %v1824, %v2112
        %v2114 = vpop.f32.mrb[0].mxu0
        %v2115 = vpop.f32.mrb[0].mxu0
        %v2116 = vadd.f32 %v1827, %v2115
        %v2117 = vpop.f32.mrb[0].mxu0
        %2118 = vmatprep.mubr.bf16.mxu0 %v1272
        %2119 = vmatmul.mubr.bf16.gmra.mrb[0].mxu0 %v1271
        %v2120 = vpop.f32.mrb[0].mxu0
        %v2121 = vadd.f32 %v1832, %v2120
        %v2122 = vpop.f32.mrb[0].mxu0
        %v2123 = vpop.f32.mrb[0].mxu0
        %v2124 = vadd.f32 %v1835, %v2123
        %v2125 = vpop.f32.mrb[0].mxu0
        %2126 = vmatprep.mubr.bf16.mxu0 %v1276
        %2127 = vmatmul.mubr.bf16.gmra.mrb[0].mxu0 %v1275
        %v2128 = vpop.f32.mrb[0].mxu0
        %v2129 = vadd.f32 %v1840, %v2128
        %v2130 = vpop.f32.mrb[0].mxu0
        %v2131 = vpop.f32.mrb[0].mxu0
        %v2132 = vadd.f32 %v1843, %v2131
        %v2133 = vpop.f32.mrb[0].mxu0
        %2134 = vmatprep.mubr.bf16.mxu0 %v1280
        %2135 = vmatmul.mubr.bf16.gmra.mrb[0].mxu0 %v1279
        %v2136 = vpop.f32.mrb[0].mxu0
        %v2137 = vadd.f32 %v1848, %v2136
        %v2138 = vpop.f32.mrb[0].mxu0
        %v2139 = vpop.f32.mrb[0].mxu0
        %v2140 = vadd.f32 %v1851, %v2139
        %v2141 = vpop.f32.mrb[0].mxu0
        %2142 = vmatprep.mubr.bf16.mxu0 %v1284
        %2143 = vmatmul.mubr.bf16.gmra.mrb[0].mxu0 %v1283
        %v2144 = vpop.f32.mrb[0].mxu0
        %v2145 = vadd.f32 %v1856, %v2144
        %v2146 = vpop.f32.mrb[0].mxu0
        %v2147 = vpop.f32.mrb[0].mxu0
        %v2148 = vadd.f32 %v1859, %v2147
        %v2149 = vpop.f32.mrb[0].mxu0
        %2150 = vmatprep.mubr.bf16.mxu0 %v1288
        %2151 = vmatmul.mubr.bf16.gmra.mrb[0].mxu0 %v1287
        %v2152 = vpop.f32.mrb[0].mxu0
        %v2153 = vadd.f32 %v1864, %v2152
        %v2154 = vpop.f32.mrb[0].mxu0
        %v2155 = vpop.f32.mrb[0].mxu0
        %v2156 = vadd.f32 %v1867, %v2155
        %v2157 = vpop.f32.mrb[0].mxu0
        %2158 = vmatprep.mubr.bf16.mxu0 %v1292
        %2159 = vmatmul.mubr.bf16.gmra.mrb[0].mxu0 %v1291
        %v2160 = vpop.f32.mrb[0].mxu0
        %v2161 = vadd.f32 %v1872, %v2160
        %v2162 = vpop.f32.mrb[0].mxu0
        %v2163 = vpop.f32.mrb[0].mxu0
        %v2164 = vadd.f32 %v1875, %v2163
        %v2165 = vpop.f32.mrb[0].mxu0
        %2166 = vmatprep.mubr.bf16.mxu0 %v1296
        %2167 = vmatmul.mubr.bf16.gmra.mrb[0].mxu0 %v1295
        %v2168 = vpop.f32.mrb[0].mxu0
        %v2169 = vadd.f32 %v1880, %v2168
        %v2170 = vpop.f32.mrb[0].mxu0
        %v2171 = vpop.f32.mrb[0].mxu0
        %v2172 = vadd.f32 %v1883, %v2171
        %v2173 = vpop.f32.mrb[0].mxu0
        %2174 = vmatprep.mubr.bf16.mxu0 %v1300
        %2175 = vmatmul.mubr.bf16.gmra.mrb[0].mxu0 %v1299
        %v2176 = vpop.f32.mrb[0].mxu0
        %v2177 = vadd.f32 %v1888, %v2176
        %v2178 = vpop.f32.mrb[0].mxu0
        %v2179 = vpop.f32.mrb[0].mxu0
        %v2180 = vadd.f32 %v1891, %v2179
        %v2181 = vpop.f32.mrb[0].mxu0
        %2182 = vmatprep.mubr.bf16.mxu0 %v1304
        %2183 = vmatmul.mubr.bf16.gmra.mrb[0].mxu0 %v1303
        %v2184 = vpop.f32.mrb[0].mxu0
        %v2185 = vadd.f32 %v1896, %v2184
        %v2186 = vpop.f32.mrb[0].mxu0
        %v2187 = vpop.f32.mrb[0].mxu0
        %v2188 = vadd.f32 %v1899, %v2187
        %v2189 = vpop.f32.mrb[0].mxu0
        %2190 = vmatprep.mubr.bf16.mxu0 %v1308
        %2191 = vmatmul.mubr.bf16.gmra.mrb[0].mxu0 %v1307
        %v2192 = vpop.f32.mrb[0].mxu0
        %v2193 = vadd.f32 %v1904, %v2192
        %v2194 = vpop.f32.mrb[0].mxu0
        %v2195 = vpop.f32.mrb[0].mxu0
        %v2196 = vadd.f32 %v1907, %v2195
        %v2197 = vpop.f32.mrb[0].mxu0
        %2198 = vmatprep.mubr.bf16.mxu0 %v1312
        %2199 = vmatmul.mubr.bf16.gmra.mrb[0].mxu0 %v1311
        %v2200 = vpop.f32.mrb[0].mxu0
        %v2201 = vadd.f32 %v1912, %v2200
        %v2202 = vpop.f32.mrb[0].mxu0
        %v2203 = vpop.f32.mrb[0].mxu0
        %v2204 = vadd.f32 %v1915, %v2203
        %v2205 = vpop.f32.mrb[0].mxu0
        %2206 = vmatprep.mubr.bf16.mxu0 %v1316
        %2207 = vmatmul.mubr.bf16.gmra.mrb[0].mxu0 %v1315
        %v2208 = vpop.f32.mrb[0].mxu0
        %v2209 = vadd.f32 %v1920, %v2208
        %v2210 = vpop.f32.mrb[0].mxu0
        %v2211 = vpop.f32.mrb[0].mxu0
        %v2212 = vadd.f32 %v1923, %v2211
        %v2213 = vpop.f32.mrb[0].mxu0
        %2214 = vdwg.mxu0
        %v2215 = vadd.f32 %v549, %v1961
        %v2216 = vadd.f32 %v550, %v1964
        %v2217 = vadd.f32 %v551, %v1969
        %v2218 = vadd.f32 %v552, %v1972
        %v2219 = vadd.f32 %v553, %v1977
        %v2220 = vadd.f32 %v554, %v1980
        %v2221 = vadd.f32 %v555, %v1985
        %v2222 = vadd.f32 %v556, %v1988
        %v2223 = vadd.f32 %v557, %v1993
        %v2224 = vadd.f32 %v558, %v1996
        %v2225 = vadd.f32 %v559, %v2001
        %v2226 = vadd.f32 %v560, %v2004
        %v2227 = vadd.f32 %v561, %v2009
        %v2228 = vadd.f32 %v562, %v2012
        %v2229 = vadd.f32 %v563, %v2017
        %v2230 = vadd.f32 %v564, %v2020
        %v2231 = vadd.f32 %v565, %v2025
        %v2232 = vadd.f32 %v566, %v2028
        %v2233 = vadd.f32 %v567, %v2033
        %v2234 = vadd.f32 %v568, %v2036
        %v2235 = vadd.f32 %v569, %v2041
        %v2236 = vadd.f32 %v570, %v2044
        %v2237 = vadd.f32 %v571, %v2049
        %v2238 = vadd.f32 %v572, %v2052
        %v2239 = vadd.f32 %v573, %v2057
        %v2240 = vadd.f32 %v574, %v2060
        %v2241 = vadd.f32 %v575, %v2065
        %v2242 = vadd.f32 %v576, %v2068
        %v2243 = vadd.f32 %v577, %v2073
        %v2244 = vadd.f32 %v578, %v2076
        %v2245 = vadd.f32 %v579, %v2081
        %v2246 = vadd.f32 %v580, %v2084
        %v2247 = vadd.f32 %v581, %v2089
        %v2248 = vadd.f32 %v582, %v2092
        %v2249 = vadd.f32 %v583, %v2097
        %v2250 = vadd.f32 %v584, %v2100
        %v2251 = vadd.f32 %v585, %v2105
        %v2252 = vadd.f32 %v586, %v2108
        %v2253 = vadd.f32 %v587, %v2113
        %v2254 = vadd.f32 %v588, %v2116
        %v2255 = vadd.f32 %v589, %v2121
        %v2256 = vadd.f32 %v590, %v2124
        %v2257 = vadd.f32 %v591, %v2129
        %v2258 = vadd.f32 %v592, %v2132
        %v2259 = vadd.f32 %v593, %v2137
        %v2260 = vadd.f32 %v594, %v2140
        %v2261 = vadd.f32 %v595, %v2145
        %v2262 = vadd.f32 %v596, %v2148
        %v2263 = vadd.f32 %v597, %v2153
        %v2264 = vadd.f32 %v598, %v2156
        %v2265 = vadd.f32 %v599, %v2161
        %v2266 = vadd.f32 %v600, %v2164
        %v2267 = vadd.f32 %v601, %v2169
        %v2268 = vadd.f32 %v602, %v2172
        %v2269 = vadd.f32 %v603, %v2177
        %v2270 = vadd.f32 %v604, %v2180
        %v2271 = vadd.f32 %v605, %v2185
        %v2272 = vadd.f32 %v606, %v2188
        %v2273 = vadd.f32 %v607, %v2193
        %v2274 = vadd.f32 %v608, %v2196
        %v2275 = vadd.f32 %v609, %v2201
        %v2276 = vadd.f32 %v610, %v2204
        %v2277 = vadd.f32 %v611, %v2209
        %v2278 = vadd.f32 %v612, %v2212
        %2279 = vst [vmem:[#allocation2] sm:$0xff] %v2215
        %2280 = vst [vmem:[#allocation2 + $0x8] sm:$0xff] %v2216
        %2281 = vst [vmem:[#allocation2 + $0x10] sm:$0xff] %v2217
        %2282 = vst [vmem:[#allocation2 + $0x18] sm:$0xff] %v2218
        %2283 = vst [vmem:[#allocation2 + $0x20] sm:$0xff] %v2219
        %2284 = vst [vmem:[#allocation2 + $0x28] sm:$0xff] %v2220
        %2285 = vst [vmem:[#allocation2 + $0x30] sm:$0xff] %v2221
        %2286 = vst [vmem:[#allocation2 + $0x38] sm:$0xff] %v2222
        %2287 = vst [vmem:[#allocation2 + $0x40] sm:$0xff] %v2223
        %2288 = vst [vmem:[#allocation2 + $0x48] sm:$0xff] %v2224
        %2289 = vst [vmem:[#allocation2 + $0x50] sm:$0xff] %v2225
        %2290 = vst [vmem:[#allocation2 + $0x58] sm:$0xff] %v2226
        %2291 = vst [vmem:[#allocation2 + $0x60] sm:$0xff] %v2227
        %2292 = vst [vmem:[#allocation2 + $0x68] sm:$0xff] %v2228
        %2293 = vst [vmem:[#allocation2 + $0x70] sm:$0xff] %v2229
        %2294 = vst [vmem:[#allocation2 + $0x78] sm:$0xff] %v2230
        %2295 = vst [vmem:[#allocation2 + $0x80] sm:$0xff] %v2231
        %2296 = vst [vmem:[#allocation2 + $0x88] sm:$0xff] %v2232
        %2297 = vst [vmem:[#allocation2 + $0x90] sm:$0xff] %v2233
        %2298 = vst [vmem:[#allocation2 + $0x98] sm:$0xff] %v2234
        %2299 = vst [vmem:[#allocation2 + $0xa0] sm:$0xff] %v2235
        %2300 = vst [vmem:[#allocation2 + $0xa8] sm:$0xff] %v2236
        %2301 = vst [vmem:[#allocation2 + $0xb0] sm:$0xff] %v2237
        %2302 = vst [vmem:[#allocation2 + $0xb8] sm:$0xff] %v2238
        %2303 = vst [vmem:[#allocation2 + $0xc0] sm:$0xff] %v2239
        %2304 = vst [vmem:[#allocation2 + $0xc8] sm:$0xff] %v2240
        %2305 = vst [vmem:[#allocation2 + $0xd0] sm:$0xff] %v2241
        %2306 = vst [vmem:[#allocation2 + $0xd8] sm:$0xff] %v2242
        %2307 = vst [vmem:[#allocation2 + $0xe0] sm:$0xff] %v2243
        %2308 = vst [vmem:[#allocation2 + $0xe8] sm:$0xff] %v2244
        %2309 = vst [vmem:[#allocation2 + $0xf0] sm:$0xff] %v2245
        %2310 = vst [vmem:[#allocation2 + $0xf8] sm:$0xff] %v2246
        %2311 = vst [vmem:[#allocation2 + $0x100] sm:$0xff] %v2247
        %2312 = vst [vmem:[#allocation2 + $0x108] sm:$0xff] %v2248
        %2313 = vst [vmem:[#allocation2 + $0x110] sm:$0xff] %v2249
        %2314 = vst [vmem:[#allocation2 + $0x118] sm:$0xff] %v2250
        %2315 = vst [vmem:[#allocation2 + $0x120] sm:$0xff] %v2251
        %2316 = vst [vmem:[#allocation2 + $0x128] sm:$0xff] %v2252
        %2317 = vst [vmem:[#allocation2 + $0x130] sm:$0xff] %v2253
        %2318 = vst [vmem:[#allocation2 + $0x138] sm:$0xff] %v2254
        %2319 = vst [vmem:[#allocation2 + $0x140] sm:$0xff] %v2255
        %2320 = vst [vmem:[#allocation2 + $0x148] sm:$0xff] %v2256
        %2321 = vst [vmem:[#allocation2 + $0x150] sm:$0xff] %v2257
        %2322 = vst [vmem:[#allocation2 + $0x158] sm:$0xff] %v2258
        %2323 = vst [vmem:[#allocation2 + $0x160] sm:$0xff] %v2259
        %2324 = vst [vmem:[#allocation2 + $0x168] sm:$0xff] %v2260
        %2325 = vst [vmem:[#allocation2 + $0x170] sm:$0xff] %v2261
        %2326 = vst [vmem:[#allocation2 + $0x178] sm:$0xff] %v2262
        %2327 = vst [vmem:[#allocation2 + $0x180] sm:$0xff] %v2263
        %2328 = vst [vmem:[#allocation2 + $0x188] sm:$0xff] %v2264
        %2329 = vst [vmem:[#allocation2 + $0x190] sm:$0xff] %v2265
        %2330 = vst [vmem:[#allocation2 + $0x198] sm:$0xff] %v2266
        %2331 = vst [vmem:[#allocation2 + $0x1a0] sm:$0xff] %v2267
        %2332 = vst [vmem:[#allocation2 + $0x1a8] sm:$0xff] %v2268
        %2333 = vst [vmem:[#allocation2 + $0x1b0] sm:$0xff] %v2269
        %2334 = vst [vmem:[#allocation2 + $0x1b8] sm:$0xff] %v2270
        %2335 = vst [vmem:[#allocation2 + $0x1c0] sm:$0xff] %v2271
        %2336 = vst [vmem:[#allocation2 + $0x1c8] sm:$0xff] %v2272
        %2337 = vst [vmem:[#allocation2 + $0x1d0] sm:$0xff] %v2273
        %2338 = vst [vmem:[#allocation2 + $0x1d8] sm:$0xff] %v2274
        %2339 = vst [vmem:[#allocation2 + $0x1e0] sm:$0xff] %v2275
        %2340 = vst [vmem:[#allocation2 + $0x1e8] sm:$0xff] %v2276
        %2341 = vst [vmem:[#allocation2 + $0x1f0] sm:$0xff] %v2277
        %2342 = vst [vmem:[#allocation2 + $0x1f8] sm:$0xff] %v2278
        %p2343 = scmp.eq.s32.totalorder %s15, 1
        // Predicated region
        $region64: #{discriminator_forward.6} parent=54 // pred_check
          %p2344 = pneg %p2343
        $region65: #{discriminator_forward.6} parent=54 // pred_check_branch
          %2346 = sbr.rel (%p2344) target = $region67
        $region66: #{discriminator_forward.6} parent=54 // pred_region
          %v2347 = vld [vmem:[#allocation2] sm:$0xff]
          %v2348 = vld [vmem:[#allocation2 + $0x8] sm:$0xff]
          %v2349 = vld [vmem:[#allocation2 + $0x10] sm:$0xff]
          %v2350 = vld [vmem:[#allocation2 + $0x18] sm:$0xff]
          %v2351 = vld [vmem:[#allocation2 + $0x20] sm:$0xff]
          %v2352 = vld [vmem:[#allocation2 + $0x28] sm:$0xff]
          %v2353 = vld [vmem:[#allocation2 + $0x30] sm:$0xff]
          %v2354 = vld [vmem:[#allocation2 + $0x38] sm:$0xff]
          %v2355 = vld [vmem:[#allocation2 + $0x40] sm:$0xff]
          %v2356 = vld [vmem:[#allocation2 + $0x48] sm:$0xff]
          %v2357 = vld [vmem:[#allocation2 + $0x50] sm:$0xff]
          %v2358 = vld [vmem:[#allocation2 + $0x58] sm:$0xff]
          %v2359 = vld [vmem:[#allocation2 + $0x60] sm:$0xff]
          %v2360 = vld [vmem:[#allocation2 + $0x68] sm:$0xff]
          %v2361 = vld [vmem:[#allocation2 + $0x70] sm:$0xff]
          %v2362 = vld [vmem:[#allocation2 + $0x78] sm:$0xff]
          %v2363 = vld [vmem:[#allocation2 + $0x80] sm:$0xff]
          %v2364 = vld [vmem:[#allocation2 + $0x88] sm:$0xff]
          %v2365 = vld [vmem:[#allocation2 + $0x90] sm:$0xff]
          %v2366 = vld [vmem:[#allocation2 + $0x98] sm:$0xff]
          %v2367 = vld [vmem:[#allocation2 + $0xa0] sm:$0xff]
          %v2368 = vld [vmem:[#allocation2 + $0xa8] sm:$0xff]
          %v2369 = vld [vmem:[#allocation2 + $0xb0] sm:$0xff]
          %v2370 = vld [vmem:[#allocation2 + $0xb8] sm:$0xff]
          %v2371 = vld [vmem:[#allocation2 + $0xc0] sm:$0xff]
          %v2372 = vld [vmem:[#allocation2 + $0xc8] sm:$0xff]
          %v2373 = vld [vmem:[#allocation2 + $0xd0] sm:$0xff]
          %v2374 = vld [vmem:[#allocation2 + $0xd8] sm:$0xff]
          %v2375 = vld [vmem:[#allocation2 + $0xe0] sm:$0xff]
          %v2376 = vld [vmem:[#allocation2 + $0xe8] sm:$0xff]
          %v2377 = vld [vmem:[#allocation2 + $0xf0] sm:$0xff]
          %v2378 = vld [vmem:[#allocation2 + $0xf8] sm:$0xff]
          %v2379 = vld [vmem:[#allocation2 + $0x100] sm:$0xff]
          %v2380 = vld [vmem:[#allocation2 + $0x108] sm:$0xff]
          %v2381 = vld [vmem:[#allocation2 + $0x110] sm:$0xff]
          %v2382 = vld [vmem:[#allocation2 + $0x118] sm:$0xff]
          %v2383 = vld [vmem:[#allocation2 + $0x120] sm:$0xff]
          %v2384 = vld [vmem:[#allocation2 + $0x128] sm:$0xff]
          %v2385 = vld [vmem:[#allocation2 + $0x130] sm:$0xff]
          %v2386 = vld [vmem:[#allocation2 + $0x138] sm:$0xff]
          %v2387 = vld [vmem:[#allocation2 + $0x140] sm:$0xff]
          %v2388 = vld [vmem:[#allocation2 + $0x148] sm:$0xff]
          %v2389 = vld [vmem:[#allocation2 + $0x150] sm:$0xff]
          %v2390 = vld [vmem:[#allocation2 + $0x158] sm:$0xff]
          %v2391 = vld [vmem:[#allocation2 + $0x160] sm:$0xff]
          %v2392 = vld [vmem:[#allocation2 + $0x168] sm:$0xff]
          %v2393 = vld [vmem:[#allocation2 + $0x170] sm:$0xff]
          %v2394 = vld [vmem:[#allocation2 + $0x178] sm:$0xff]
          %v2395 = vld [vmem:[#allocation2 + $0x180] sm:$0xff]
          %v2396 = vld [vmem:[#allocation2 + $0x188] sm:$0xff]
          %v2397 = vld [vmem:[#allocation2 + $0x190] sm:$0xff]
          %v2398 = vld [vmem:[#allocation2 + $0x198] sm:$0xff]
          %v2399 = vld [vmem:[#allocation2 + $0x1a0] sm:$0xff]
          %v2400 = vld [vmem:[#allocation2 + $0x1a8] sm:$0xff]
          %v2401 = vld [vmem:[#allocation2 + $0x1b0] sm:$0xff]
          %v2402 = vld [vmem:[#allocation2 + $0x1b8] sm:$0xff]
          %v2403 = vld [vmem:[#allocation2 + $0x1c0] sm:$0xff]
          %v2404 = vld [vmem:[#allocation2 + $0x1c8] sm:$0xff]
          %v2405 = vld [vmem:[#allocation2 + $0x1d0] sm:$0xff]
          %v2406 = vld [vmem:[#allocation2 + $0x1d8] sm:$0xff]
          %v2407 = vld [vmem:[#allocation2 + $0x1e0] sm:$0xff]
          %v2408 = vld [vmem:[#allocation2 + $0x1e8] sm:$0xff]
          %v2409 = vld [vmem:[#allocation2 + $0x1f0] sm:$0xff]
          %v2410 = vld [vmem:[#allocation2 + $0x1f8] sm:$0xff]
          %v2411 = vadd.f32 %v2347, %v2348
          %v2412 = vadd.f32 %v2411, %v2349
          %v2413 = vadd.f32 %v2412, %v2350
          %v2414 = vadd.f32 %v2413, %v2351
          %v2415 = vadd.f32 %v2414, %v2352
          %v2416 = vadd.f32 %v2415, %v2353
          %v2417 = vadd.f32 %v2416, %v2354
          %v2418 = vadd.f32 %v2417, %v2355
          %v2419 = vadd.f32 %v2418, %v2356
          %v2420 = vadd.f32 %v2419, %v2357
          %v2421 = vadd.f32 %v2420, %v2358
          %v2422 = vadd.f32 %v2421, %v2359
          %v2423 = vadd.f32 %v2422, %v2360
          %v2424 = vadd.f32 %v2423, %v2361
          %v2425 = vadd.f32 %v2424, %v2362
          %v2426 = vadd.f32 %v2425, %v2363
          %v2427 = vadd.f32 %v2426, %v2364
          %v2428 = vadd.f32 %v2427, %v2365
          %v2429 = vadd.f32 %v2428, %v2366
          %v2430 = vadd.f32 %v2429, %v2367
          %v2431 = vadd.f32 %v2430, %v2368
          %v2432 = vadd.f32 %v2431, %v2369
          %v2433 = vadd.f32 %v2432, %v2370
          %v2434 = vadd.f32 %v2433, %v2371
          %v2435 = vadd.f32 %v2434, %v2372
          %v2436 = vadd.f32 %v2435, %v2373
          %v2437 = vadd.f32 %v2436, %v2374
          %v2438 = vadd.f32 %v2437, %v2375
          %v2439 = vadd.f32 %v2438, %v2376
          %v2440 = vadd.f32 %v2439, %v2377
          %v2441 = vadd.f32 %v2440, %v2378
          %v2442 = vadd.f32 %v2441, %v2379
          %v2443 = vadd.f32 %v2442, %v2380
          %v2444 = vadd.f32 %v2443, %v2381
          %v2445 = vadd.f32 %v2444, %v2382
          %v2446 = vadd.f32 %v2445, %v2383
          %v2447 = vadd.f32 %v2446, %v2384
          %v2448 = vadd.f32 %v2447, %v2385
          %v2449 = vadd.f32 %v2448, %v2386
          %v2450 = vadd.f32 %v2449, %v2387
          %v2451 = vadd.f32 %v2450, %v2388
          %v2452 = vadd.f32 %v2451, %v2389
          %v2453 = vadd.f32 %v2452, %v2390
          %v2454 = vadd.f32 %v2453, %v2391
          %v2455 = vadd.f32 %v2454, %v2392
          %v2456 = vadd.f32 %v2455, %v2393
          %v2457 = vadd.f32 %v2456, %v2394
          %v2458 = vadd.f32 %v2457, %v2395
          %v2459 = vadd.f32 %v2458, %v2396
          %v2460 = vadd.f32 %v2459, %v2397
          %v2461 = vadd.f32 %v2460, %v2398
          %v2462 = vadd.f32 %v2461, %v2399
          %v2463 = vadd.f32 %v2462, %v2400
          %v2464 = vadd.f32 %v2463, %v2401
          %v2465 = vadd.f32 %v2464, %v2402
          %v2466 = vadd.f32 %v2465, %v2403
          %v2467 = vadd.f32 %v2466, %v2404
          %v2468 = vadd.f32 %v2467, %v2405
          %v2469 = vadd.f32 %v2468, %v2406
          %v2470 = vadd.f32 %v2469, %v2407
          %v2471 = vadd.f32 %v2470, %v2408
          %v2472 = vadd.f32 %v2471, %v2409
          %v2473 = vadd.f32 %v2472, %v2410
          %v2474 = vrot.slane %v2473, 4
          %v2475 = vadd.f32 %v2473, %v2474
          %v2476 = vrot.slane %v2475, 2
          %v2477 = vadd.f32 %v2475, %v2476
          %v2478 = vrot.slane %v2477, 1
          %v2479 = vadd.f32 %v2477, %v2478
          %v2480 = vrcp.pop 512.0
          %v2481 = vmul.f32 %v2479, %v2480
          %v2482 = vsub.f32 %v2347, %v2481
          %v2483 = vsub.f32 %v2348, %v2481
          %v2484 = vsub.f32 %v2349, %v2481
          %v2485 = vsub.f32 %v2350, %v2481
          %v2486 = vsub.f32 %v2351, %v2481
          %v2487 = vsub.f32 %v2352, %v2481
          %v2488 = vsub.f32 %v2353, %v2481
          %v2489 = vsub.f32 %v2354, %v2481
          %v2490 = vsub.f32 %v2355, %v2481
          %v2491 = vsub.f32 %v2356, %v2481
          %v2492 = vsub.f32 %v2357, %v2481
          %v2493 = vsub.f32 %v2358, %v2481
          %v2494 = vsub.f32 %v2359, %v2481
          %v2495 = vsub.f32 %v2360, %v2481
          %v2496 = vsub.f32 %v2361, %v2481
          %v2497 = vsub.f32 %v2362, %v2481
          %v2498 = vsub.f32 %v2363, %v2481
          %v2499 = vsub.f32 %v2364, %v2481
          %v2500 = vsub.f32 %v2365, %v2481
          %v2501 = vsub.f32 %v2366, %v2481
          %v2502 = vsub.f32 %v2367, %v2481
          %v2503 = vsub.f32 %v2368, %v2481
          %v2504 = vsub.f32 %v2369, %v2481
          %v2505 = vsub.f32 %v2370, %v2481
          %v2506 = vsub.f32 %v2371, %v2481
          %v2507 = vsub.f32 %v2372, %v2481
          %v2508 = vsub.f32 %v2373, %v2481
          %v2509 = vsub.f32 %v2374, %v2481
          %v2510 = vsub.f32 %v2375, %v2481
          %v2511 = vsub.f32 %v2376, %v2481
          %v2512 = vsub.f32 %v2377, %v2481
          %v2513 = vsub.f32 %v2378, %v2481
          %v2514 = vsub.f32 %v2379, %v2481
          %v2515 = vsub.f32 %v2380, %v2481
          %v2516 = vsub.f32 %v2381, %v2481
          %v2517 = vsub.f32 %v2382, %v2481
          %v2518 = vsub.f32 %v2383, %v2481
          %v2519 = vsub.f32 %v2384, %v2481
          %v2520 = vsub.f32 %v2385, %v2481
          %v2521 = vsub.f32 %v2386, %v2481
          %v2522 = vsub.f32 %v2387, %v2481
          %v2523 = vsub.f32 %v2388, %v2481
          %v2524 = vsub.f32 %v2389, %v2481
          %v2525 = vsub.f32 %v2390, %v2481
          %v2526 = vsub.f32 %v2391, %v2481
          %v2527 = vsub.f32 %v2392, %v2481
          %v2528 = vsub.f32 %v2393, %v2481
          %v2529 = vsub.f32 %v2394, %v2481
          %v2530 = vsub.f32 %v2395, %v2481
          %v2531 = vsub.f32 %v2396, %v2481
          %v2532 = vsub.f32 %v2397, %v2481
          %v2533 = vsub.f32 %v2398, %v2481
          %v2534 = vsub.f32 %v2399, %v2481
          %v2535 = vsub.f32 %v2400, %v2481
          %v2536 = vsub.f32 %v2401, %v2481
          %v2537 = vsub.f32 %v2402, %v2481
          %v2538 = vsub.f32 %v2403, %v2481
          %v2539 = vsub.f32 %v2404, %v2481
          %v2540 = vsub.f32 %v2405, %v2481
          %v2541 = vsub.f32 %v2406, %v2481
          %v2542 = vsub.f32 %v2407, %v2481
          %v2543 = vsub.f32 %v2408, %v2481
          %v2544 = vsub.f32 %v2409, %v2481
          %v2545 = vsub.f32 %v2410, %v2481
          %v2546 = vmul.f32 %v2482, %v2482
          %v2547 = vmul.f32 %v2483, %v2483
          %v2548 = vmul.f32 %v2484, %v2484
          %v2549 = vmul.f32 %v2485, %v2485
          %v2550 = vmul.f32 %v2486, %v2486
          %v2551 = vmul.f32 %v2487, %v2487
          %v2552 = vmul.f32 %v2488, %v2488
          %v2553 = vmul.f32 %v2489, %v2489
          %v2554 = vmul.f32 %v2490, %v2490
          %v2555 = vmul.f32 %v2491, %v2491
          %v2556 = vmul.f32 %v2492, %v2492
          %v2557 = vmul.f32 %v2493, %v2493
          %v2558 = vmul.f32 %v2494, %v2494
          %v2559 = vmul.f32 %v2495, %v2495
          %v2560 = vmul.f32 %v2496, %v2496
          %v2561 = vmul.f32 %v2497, %v2497
          %v2562 = vmul.f32 %v2498, %v2498
          %v2563 = vmul.f32 %v2499, %v2499
          %v2564 = vmul.f32 %v2500, %v2500
          %v2565 = vmul.f32 %v2501, %v2501
          %v2566 = vmul.f32 %v2502, %v2502
          %v2567 = vmul.f32 %v2503, %v2503
          %v2568 = vmul.f32 %v2504, %v2504
          %v2569 = vmul.f32 %v2505, %v2505
          %v2570 = vmul.f32 %v2506, %v2506
          %v2571 = vmul.f32 %v2507, %v2507
          %v2572 = vmul.f32 %v2508, %v2508
          %v2573 = vmul.f32 %v2509, %v2509
          %v2574 = vmul.f32 %v2510, %v2510
          %v2575 = vmul.f32 %v2511, %v2511
          %v2576 = vmul.f32 %v2512, %v2512
          %v2577 = vmul.f32 %v2513, %v2513
          %v2578 = vmul.f32 %v2514, %v2514
          %v2579 = vmul.f32 %v2515, %v2515
          %v2580 = vmul.f32 %v2516, %v2516
          %v2581 = vmul.f32 %v2517, %v2517
          %v2582 = vmul.f32 %v2518, %v2518
          %v2583 = vmul.f32 %v2519, %v2519
          %v2584 = vmul.f32 %v2520, %v2520
          %v2585 = vmul.f32 %v2521, %v2521
          %v2586 = vmul.f32 %v2522, %v2522
          %v2587 = vmul.f32 %v2523, %v2523
          %v2588 = vmul.f32 %v2524, %v2524
          %v2589 = vmul.f32 %v2525, %v2525
          %v2590 = vmul.f32 %v2526, %v2526
          %v2591 = vmul.f32 %v2527, %v2527
          %v2592 = vmul.f32 %v2528, %v2528
          %v2593 = vmul.f32 %v2529, %v2529
          %v2594 = vmul.f32 %v2530, %v2530
          %v2595 = vmul.f32 %v2531, %v2531
          %v2596 = vmul.f32 %v2532, %v2532
          %v2597 = vmul.f32 %v2533, %v2533
          %v2598 = vmul.f32 %v2534, %v2534
          %v2599 = vmul.f32 %v2535, %v2535
          %v2600 = vmul.f32 %v2536, %v2536
          %v2601 = vmul.f32 %v2537, %v2537
          %v2602 = vmul.f32 %v2538, %v2538
          %v2603 = vmul.f32 %v2539, %v2539
          %v2604 = vmul.f32 %v2540, %v2540
          %v2605 = vmul.f32 %v2541, %v2541
          %v2606 = vmul.f32 %v2542, %v2542
          %v2607 = vmul.f32 %v2543, %v2543
          %v2608 = vmul.f32 %v2544, %v2544
          %v2609 = vmul.f32 %v2545, %v2545
          %v2610 = vadd.f32 %v2546, %v2547
          %v2611 = vadd.f32 %v2610, %v2548
          %v2612 = vadd.f32 %v2611, %v2549
          %v2613 = vadd.f32 %v2612, %v2550
          %v2614 = vadd.f32 %v2613, %v2551
          %v2615 = vadd.f32 %v2614, %v2552
          %v2616 = vadd.f32 %v2615, %v2553
          %v2617 = vadd.f32 %v2616, %v2554
          %v2618 = vadd.f32 %v2617, %v2555
          %v2619 = vadd.f32 %v2618, %v2556
          %v2620 = vadd.f32 %v2619, %v2557
          %v2621 = vadd.f32 %v2620, %v2558
          %v2622 = vadd.f32 %v2621, %v2559
          %v2623 = vadd.f32 %v2622, %v2560
          %v2624 = vadd.f32 %v2623, %v2561
          %v2625 = vadd.f32 %v2624, %v2562
          %v2626 = vadd.f32 %v2625, %v2563
          %v2627 = vadd.f32 %v2626, %v2564
          %v2628 = vadd.f32 %v2627, %v2565
          %v2629 = vadd.f32 %v2628, %v2566
          %v2630 = vadd.f32 %v2629, %v2567
          %v2631 = vadd.f32 %v2630, %v2568
          %v2632 = vadd.f32 %v2631, %v2569
          %v2633 = vadd.f32 %v2632, %v2570
          %v2634 = vadd.f32 %v2633, %v2571
          %v2635 = vadd.f32 %v2634, %v2572
          %v2636 = vadd.f32 %v2635, %v2573
          %v2637 = vadd.f32 %v2636, %v2574
          %v2638 = vadd.f32 %v2637, %v2575
          %v2639 = vadd.f32 %v2638, %v2576
          %v2640 = vadd.f32 %v2639, %v2577
          %v2641 = vadd.f32 %v2640, %v2578
          %v2642 = vadd.f32 %v2641, %v2579
          %v2643 = vadd.f32 %v2642, %v2580
          %v2644 = vadd.f32 %v2643, %v2581
          %v2645 = vadd.f32 %v2644, %v2582
          %v2646 = vadd.f32 %v2645, %v2583
          %v2647 = vadd.f32 %v2646, %v2584
          %v2648 = vadd.f32 %v2647, %v2585
          %v2649 = vadd.f32 %v2648, %v2586
          %v2650 = vadd.f32 %v2649, %v2587
          %v2651 = vadd.f32 %v2650, %v2588
          %v2652 = vadd.f32 %v2651, %v2589
          %v2653 = vadd.f32 %v2652, %v2590
          %v2654 = vadd.f32 %v2653, %v2591
          %v2655 = vadd.f32 %v2654, %v2592
          %v2656 = vadd.f32 %v2655, %v2593
          %v2657 = vadd.f32 %v2656, %v2594
          %v2658 = vadd.f32 %v2657, %v2595
          %v2659 = vadd.f32 %v2658, %v2596
          %v2660 = vadd.f32 %v2659, %v2597
          %v2661 = vadd.f32 %v2660, %v2598
          %v2662 = vadd.f32 %v2661, %v2599
          %v2663 = vadd.f32 %v2662, %v2600
          %v2664 = vadd.f32 %v2663, %v2601
          %v2665 = vadd.f32 %v2664, %v2602
          %v2666 = vadd.f32 %v2665, %v2603
          %v2667 = vadd.f32 %v2666, %v2604
          %v2668 = vadd.f32 %v2667, %v2605
          %v2669 = vadd.f32 %v2668, %v2606
          %v2670 = vadd.f32 %v2669, %v2607
          %v2671 = vadd.f32 %v2670, %v2608
          %v2672 = vadd.f32 %v2671, %v2609
          %v2673 = vrot.slane %v2672, 4
          %v2674 = vadd.f32 %v2672, %v2673
          %v2675 = vrot.slane %v2674, 2
          %v2676 = vadd.f32 %v2674, %v2675
          %v2677 = vrot.slane %v2676, 1
          %v2678 = vadd.f32 %v2676, %v2677
          %v2679 = vmul.f32 %v2678, %v2480
          %v2680 = vadd.f32 %v2679, 1e-05
          %v2681 = vrsqrt.pop %v2680
          %v2682 = vmul.f32 %v2482, %v2681
          %v2683 = vmul.f32 %v2483, %v2681
          %v2684 = vmul.f32 %v2484, %v2681
          %v2685 = vmul.f32 %v2485, %v2681
          %v2686 = vmul.f32 %v2486, %v2681
          %v2687 = vmul.f32 %v2487, %v2681
          %v2688 = vmul.f32 %v2488, %v2681
          %v2689 = vmul.f32 %v2489, %v2681
          %v2690 = vmul.f32 %v2490, %v2681
          %v2691 = vmul.f32 %v2491, %v2681
          %v2692 = vmul.f32 %v2492, %v2681
          %v2693 = vmul.f32 %v2493, %v2681
          %v2694 = vmul.f32 %v2494, %v2681
          %v2695 = vmul.f32 %v2495, %v2681
          %v2696 = vmul.f32 %v2496, %v2681
          %v2697 = vmul.f32 %v2497, %v2681
          %v2698 = vmul.f32 %v2498, %v2681
          %v2699 = vmul.f32 %v2499, %v2681
          %v2700 = vmul.f32 %v2500, %v2681
          %v2701 = vmul.f32 %v2501, %v2681
          %v2702 = vmul.f32 %v2502, %v2681
          %v2703 = vmul.f32 %v2503, %v2681
          %v2704 = vmul.f32 %v2504, %v2681
          %v2705 = vmul.f32 %v2505, %v2681
          %v2706 = vmul.f32 %v2506, %v2681
          %v2707 = vmul.f32 %v2507, %v2681
          %v2708 = vmul.f32 %v2508, %v2681
          %v2709 = vmul.f32 %v2509, %v2681
          %v2710 = vmul.f32 %v2510, %v2681
          %v2711 = vmul.f32 %v2511, %v2681
          %v2712 = vmul.f32 %v2512, %v2681
          %v2713 = vmul.f32 %v2513, %v2681
          %v2714 = vmul.f32 %v2514, %v2681
          %v2715 = vmul.f32 %v2515, %v2681
          %v2716 = vmul.f32 %v2516, %v2681
          %v2717 = vmul.f32 %v2517, %v2681
          %v2718 = vmul.f32 %v2518, %v2681
          %v2719 = vmul.f32 %v2519, %v2681
          %v2720 = vmul.f32 %v2520, %v2681
          %v2721 = vmul.f32 %v2521, %v2681
          %v2722 = vmul.f32 %v2522, %v2681
          %v2723 = vmul.f32 %v2523, %v2681
          %v2724 = vmul.f32 %v2524, %v2681
          %v2725 = vmul.f32 %v2525, %v2681
          %v2726 = vmul.f32 %v2526, %v2681
          %v2727 = vmul.f32 %v2527, %v2681
          %v2728 = vmul.f32 %v2528, %v2681
          %v2729 = vmul.f32 %v2529, %v2681
          %v2730 = vmul.f32 %v2530, %v2681
          %v2731 = vmul.f32 %v2531, %v2681
          %v2732 = vmul.f32 %v2532, %v2681
          %v2733 = vmul.f32 %v2533, %v2681
          %v2734 = vmul.f32 %v2534, %v2681
          %v2735 = vmul.f32 %v2535, %v2681
          %v2736 = vmul.f32 %v2536, %v2681
          %v2737 = vmul.f32 %v2537, %v2681
          %v2738 = vmul.f32 %v2538, %v2681
          %v2739 = vmul.f32 %v2539, %v2681
          %v2740 = vmul.f32 %v2540, %v2681
          %v2741 = vmul.f32 %v2541, %v2681
          %v2742 = vmul.f32 %v2542, %v2681
          %v2743 = vmul.f32 %v2543, %v2681
          %v2744 = vmul.f32 %v2544, %v2681
          %v2745 = vmul.f32 %v2545, %v2681
          %v2746 = vld [vmem:[%s2] sm:$0x1]
          %v2748 = vlaneseq
          %v2749 = vshrl.u32 %v2748, 7
          %v2750 = vsub.s32 0, %v2749
          %v2751 = vrot.slane %v2746, %v2750
          %v2753 = vmul.f32 %v2682, %v2751
          %v2754 = vmul.f32 %v2683, %v2751
          %v2755 = vmul.f32 %v2684, %v2751
          %v2756 = vmul.f32 %v2685, %v2751
          %v2757 = vmul.f32 %v2686, %v2751
          %v2758 = vmul.f32 %v2687, %v2751
          %v2759 = vmul.f32 %v2688, %v2751
          %v2760 = vmul.f32 %v2689, %v2751
          %v2761 = vmul.f32 %v2690, %v2751
          %v2762 = vmul.f32 %v2691, %v2751
          %v2763 = vmul.f32 %v2692, %v2751
          %v2764 = vmul.f32 %v2693, %v2751
          %v2765 = vmul.f32 %v2694, %v2751
          %v2766 = vmul.f32 %v2695, %v2751
          %v2767 = vmul.f32 %v2696, %v2751
          %v2768 = vmul.f32 %v2697, %v2751
          %v2769 = vmul.f32 %v2698, %v2751
          %v2770 = vmul.f32 %v2699, %v2751
          %v2771 = vmul.f32 %v2700, %v2751
          %v2772 = vmul.f32 %v2701, %v2751
          %v2773 = vmul.f32 %v2702, %v2751
          %v2774 = vmul.f32 %v2703, %v2751
          %v2775 = vmul.f32 %v2704, %v2751
          %v2776 = vmul.f32 %v2705, %v2751
          %v2777 = vmul.f32 %v2706, %v2751
          %v2778 = vmul.f32 %v2707, %v2751
          %v2779 = vmul.f32 %v2708, %v2751
          %v2780 = vmul.f32 %v2709, %v2751
          %v2781 = vmul.f32 %v2710, %v2751
          %v2782 = vmul.f32 %v2711, %v2751
          %v2783 = vmul.f32 %v2712, %v2751
          %v2784 = vmul.f32 %v2713, %v2751
          %v2785 = vmul.f32 %v2714, %v2751
          %v2786 = vmul.f32 %v2715, %v2751
          %v2787 = vmul.f32 %v2716, %v2751
          %v2788 = vmul.f32 %v2717, %v2751
          %v2789 = vmul.f32 %v2718, %v2751
          %v2790 = vmul.f32 %v2719, %v2751
          %v2791 = vmul.f32 %v2720, %v2751
          %v2792 = vmul.f32 %v2721, %v2751
          %v2793 = vmul.f32 %v2722, %v2751
          %v2794 = vmul.f32 %v2723, %v2751
          %v2795 = vmul.f32 %v2724, %v2751
          %v2796 = vmul.f32 %v2725, %v2751
          %v2797 = vmul.f32 %v2726, %v2751
          %v2798 = vmul.f32 %v2727, %v2751
          %v2799 = vmul.f32 %v2728, %v2751
          %v2800 = vmul.f32 %v2729, %v2751
          %v2801 = vmul.f32 %v2730, %v2751
          %v2802 = vmul.f32 %v2731, %v2751
          %v2803 = vmul.f32 %v2732, %v2751
          %v2804 = vmul.f32 %v2733, %v2751
          %v2805 = vmul.f32 %v2734, %v2751
          %v2806 = vmul.f32 %v2735, %v2751
          %v2807 = vmul.f32 %v2736, %v2751
          %v2808 = vmul.f32 %v2737, %v2751
          %v2809 = vmul.f32 %v2738, %v2751
          %v2810 = vmul.f32 %v2739, %v2751
          %v2811 = vmul.f32 %v2740, %v2751
          %v2812 = vmul.f32 %v2741, %v2751
          %v2813 = vmul.f32 %v2742, %v2751
          %v2814 = vmul.f32 %v2743, %v2751
          %v2815 = vmul.f32 %v2744, %v2751
          %v2816 = vmul.f32 %v2745, %v2751
          %v2817 = vld [vmem:[%s3] sm:$0x1]
          %v2819 = vlaneseq
          %v2820 = vshrl.u32 %v2819, 7
          %v2821 = vsub.s32 0, %v2820
          %v2822 = vrot.slane %v2817, %v2821
          %v2824 = vadd.f32 %v2753, %v2822
          %v2825 = vadd.f32 %v2754, %v2822
          %v2826 = vadd.f32 %v2755, %v2822
          %v2827 = vadd.f32 %v2756, %v2822
          %v2828 = vadd.f32 %v2757, %v2822
          %v2829 = vadd.f32 %v2758, %v2822
          %v2830 = vadd.f32 %v2759, %v2822
          %v2831 = vadd.f32 %v2760, %v2822
          %v2832 = vadd.f32 %v2761, %v2822
          %v2833 = vadd.f32 %v2762, %v2822
          %v2834 = vadd.f32 %v2763, %v2822
          %v2835 = vadd.f32 %v2764, %v2822
          %v2836 = vadd.f32 %v2765, %v2822
          %v2837 = vadd.f32 %v2766, %v2822
          %v2838 = vadd.f32 %v2767, %v2822
          %v2839 = vadd.f32 %v2768, %v2822
          %v2840 = vadd.f32 %v2769, %v2822
          %v2841 = vadd.f32 %v2770, %v2822
          %v2842 = vadd.f32 %v2771, %v2822
          %v2843 = vadd.f32 %v2772, %v2822
          %v2844 = vadd.f32 %v2773, %v2822
          %v2845 = vadd.f32 %v2774, %v2822
          %v2846 = vadd.f32 %v2775, %v2822
          %v2847 = vadd.f32 %v2776, %v2822
          %v2848 = vadd.f32 %v2777, %v2822
          %v2849 = vadd.f32 %v2778, %v2822
          %v2850 = vadd.f32 %v2779, %v2822
          %v2851 = vadd.f32 %v2780, %v2822
          %v2852 = vadd.f32 %v2781, %v2822
          %v2853 = vadd.f32 %v2782, %v2822
          %v2854 = vadd.f32 %v2783, %v2822
          %v2855 = vadd.f32 %v2784, %v2822
          %v2856 = vadd.f32 %v2785, %v2822
          %v2857 = vadd.f32 %v2786, %v2822
          %v2858 = vadd.f32 %v2787, %v2822
          %v2859 = vadd.f32 %v2788, %v2822
          %v2860 = vadd.f32 %v2789, %v2822
          %v2861 = vadd.f32 %v2790, %v2822
          %v2862 = vadd.f32 %v2791, %v2822
          %v2863 = vadd.f32 %v2792, %v2822
          %v2864 = vadd.f32 %v2793, %v2822
          %v2865 = vadd.f32 %v2794, %v2822
          %v2866 = vadd.f32 %v2795, %v2822
          %v2867 = vadd.f32 %v2796, %v2822
          %v2868 = vadd.f32 %v2797, %v2822
          %v2869 = vadd.f32 %v2798, %v2822
          %v2870 = vadd.f32 %v2799, %v2822
          %v2871 = vadd.f32 %v2800, %v2822
          %v2872 = vadd.f32 %v2801, %v2822
          %v2873 = vadd.f32 %v2802, %v2822
          %v2874 = vadd.f32 %v2803, %v2822
          %v2875 = vadd.f32 %v2804, %v2822
          %v2876 = vadd.f32 %v2805, %v2822
          %v2877 = vadd.f32 %v2806, %v2822
          %v2878 = vadd.f32 %v2807, %v2822
          %v2879 = vadd.f32 %v2808, %v2822
          %v2880 = vadd.f32 %v2809, %v2822
          %v2881 = vadd.f32 %v2810, %v2822
          %v2882 = vadd.f32 %v2811, %v2822
          %v2883 = vadd.f32 %v2812, %v2822
          %v2884 = vadd.f32 %v2813, %v2822
          %v2885 = vadd.f32 %v2814, %v2822
          %v2886 = vadd.f32 %v2815, %v2822
          %v2887 = vadd.f32 %v2816, %v2822
          %vm2888 = vcmp.ge.f32.partialorder %v2824, 0.0
          %vm2889 = vcmp.ge.f32.partialorder %v2825, 0.0
          %vm2890 = vcmp.ge.f32.partialorder %v2826, 0.0
          %vm2891 = vcmp.ge.f32.partialorder %v2827, 0.0
          %vm2892 = vcmp.ge.f32.partialorder %v2828, 0.0
          %vm2893 = vcmp.ge.f32.partialorder %v2829, 0.0
          %vm2894 = vcmp.ge.f32.partialorder %v2830, 0.0
          %vm2895 = vcmp.ge.f32.partialorder %v2831, 0.0
          %vm2896 = vcmp.ge.f32.partialorder %v2832, 0.0
          %vm2897 = vcmp.ge.f32.partialorder %v2833, 0.0
          %vm2898 = vcmp.ge.f32.partialorder %v2834, 0.0
          %vm2899 = vcmp.ge.f32.partialorder %v2835, 0.0
          %vm2900 = vcmp.ge.f32.partialorder %v2836, 0.0
          %vm2901 = vcmp.ge.f32.partialorder %v2837, 0.0
          %vm2902 = vcmp.ge.f32.partialorder %v2838, 0.0
          %vm2903 = vcmp.ge.f32.partialorder %v2839, 0.0
          %vm2904 = vcmp.ge.f32.partialorder %v2840, 0.0
          %vm2905 = vcmp.ge.f32.partialorder %v2841, 0.0
          %vm2906 = vcmp.ge.f32.partialorder %v2842, 0.0
          %vm2907 = vcmp.ge.f32.partialorder %v2843, 0.0
          %vm2908 = vcmp.ge.f32.partialorder %v2844, 0.0
          %vm2909 = vcmp.ge.f32.partialorder %v2845, 0.0
          %vm2910 = vcmp.ge.f32.partialorder %v2846, 0.0
          %vm2911 = vcmp.ge.f32.partialorder %v2847, 0.0
          %vm2912 = vcmp.ge.f32.partialorder %v2848, 0.0
          %vm2913 = vcmp.ge.f32.partialorder %v2849, 0.0
          %vm2914 = vcmp.ge.f32.partialorder %v2850, 0.0
          %vm2915 = vcmp.ge.f32.partialorder %v2851, 0.0
          %vm2916 = vcmp.ge.f32.partialorder %v2852, 0.0
          %vm2917 = vcmp.ge.f32.partialorder %v2853, 0.0
          %vm2918 = vcmp.ge.f32.partialorder %v2854, 0.0
          %vm2919 = vcmp.ge.f32.partialorder %v2855, 0.0
          %vm2920 = vcmp.ge.f32.partialorder %v2856, 0.0
          %vm2921 = vcmp.ge.f32.partialorder %v2857, 0.0
          %vm2922 = vcmp.ge.f32.partialorder %v2858, 0.0
          %vm2923 = vcmp.ge.f32.partialorder %v2859, 0.0
          %vm2924 = vcmp.ge.f32.partialorder %v2860, 0.0
          %vm2925 = vcmp.ge.f32.partialorder %v2861, 0.0
          %vm2926 = vcmp.ge.f32.partialorder %v2862, 0.0
          %vm2927 = vcmp.ge.f32.partialorder %v2863, 0.0
          %vm2928 = vcmp.ge.f32.partialorder %v2864, 0.0
          %vm2929 = vcmp.ge.f32.partialorder %v2865, 0.0
          %vm2930 = vcmp.ge.f32.partialorder %v2866, 0.0
          %vm2931 = vcmp.ge.f32.partialorder %v2867, 0.0
          %vm2932 = vcmp.ge.f32.partialorder %v2868, 0.0
          %vm2933 = vcmp.ge.f32.partialorder %v2869, 0.0
          %vm2934 = vcmp.ge.f32.partialorder %v2870, 0.0
          %vm2935 = vcmp.ge.f32.partialorder %v2871, 0.0
          %vm2936 = vcmp.ge.f32.partialorder %v2872, 0.0
          %vm2937 = vcmp.ge.f32.partialorder %v2873, 0.0
          %vm2938 = vcmp.ge.f32.partialorder %v2874, 0.0
          %vm2939 = vcmp.ge.f32.partialorder %v2875, 0.0
          %vm2940 = vcmp.ge.f32.partialorder %v2876, 0.0
          %vm2941 = vcmp.ge.f32.partialorder %v2877, 0.0
          %vm2942 = vcmp.ge.f32.partialorder %v2878, 0.0
          %vm2943 = vcmp.ge.f32.partialorder %v2879, 0.0
          %vm2944 = vcmp.ge.f32.partialorder %v2880, 0.0
          %vm2945 = vcmp.ge.f32.partialorder %v2881, 0.0
          %vm2946 = vcmp.ge.f32.partialorder %v2882, 0.0
          %vm2947 = vcmp.ge.f32.partialorder %v2883, 0.0
          %vm2948 = vcmp.ge.f32.partialorder %v2884, 0.0
          %vm2949 = vcmp.ge.f32.partialorder %v2885, 0.0
          %vm2950 = vcmp.ge.f32.partialorder %v2886, 0.0
          %vm2951 = vcmp.ge.f32.partialorder %v2887, 0.0
          %v2952 = vmul.f32 %v2824, 0.2
          %v2953 = vmul.f32 %v2825, 0.2
          %v2954 = vmul.f32 %v2826, 0.2
          %v2955 = vmul.f32 %v2827, 0.2
          %v2956 = vmul.f32 %v2828, 0.2
          %v2957 = vmul.f32 %v2829, 0.2
          %v2958 = vmul.f32 %v2830, 0.2
          %v2959 = vmul.f32 %v2831, 0.2
          %v2960 = vmul.f32 %v2832, 0.2
          %v2961 = vmul.f32 %v2833, 0.2
          %v2962 = vmul.f32 %v2834, 0.2
          %v2963 = vmul.f32 %v2835, 0.2
          %v2964 = vmul.f32 %v2836, 0.2
          %v2965 = vmul.f32 %v2837, 0.2
          %v2966 = vmul.f32 %v2838, 0.2
          %v2967 = vmul.f32 %v2839, 0.2
          %v2968 = vmul.f32 %v2840, 0.2
          %v2969 = vmul.f32 %v2841, 0.2
          %v2970 = vmul.f32 %v2842, 0.2
          %v2971 = vmul.f32 %v2843, 0.2
          %v2972 = vmul.f32 %v2844, 0.2
          %v2973 = vmul.f32 %v2845, 0.2
          %v2974 = vmul.f32 %v2846, 0.2
          %v2975 = vmul.f32 %v2847, 0.2
          %v2976 = vmul.f32 %v2848, 0.2
          %v2977 = vmul.f32 %v2849, 0.2
          %v2978 = vmul.f32 %v2850, 0.2
          %v2979 = vmul.f32 %v2851, 0.2
          %v2980 = vmul.f32 %v2852, 0.2
          %v2981 = vmul.f32 %v2853, 0.2
          %v2982 = vmul.f32 %v2854, 0.2
          %v2983 = vmul.f32 %v2855, 0.2
          %v2984 = vmul.f32 %v2856, 0.2
          %v2985 = vmul.f32 %v2857, 0.2
          %v2986 = vmul.f32 %v2858, 0.2
          %v2987 = vmul.f32 %v2859, 0.2
          %v2988 = vmul.f32 %v2860, 0.2
          %v2989 = vmul.f32 %v2861, 0.2
          %v2990 = vmul.f32 %v2862, 0.2
          %v2991 = vmul.f32 %v2863, 0.2
          %v2992 = vmul.f32 %v2864, 0.2
          %v2993 = vmul.f32 %v2865, 0.2
          %v2994 = vmul.f32 %v2866, 0.2
          %v2995 = vmul.f32 %v2867, 0.2
          %v2996 = vmul.f32 %v2868, 0.2
          %v2997 = vmul.f32 %v2869, 0.2
          %v2998 = vmul.f32 %v2870, 0.2
          %v2999 = vmul.f32 %v2871, 0.2
          %v3000 = vmul.f32 %v2872, 0.2
          %v3001 = vmul.f32 %v2873, 0.2
          %v3002 = vmul.f32 %v2874, 0.2
          %v3003 = vmul.f32 %v2875, 0.2
          %v3004 = vmul.f32 %v2876, 0.2
          %v3005 = vmul.f32 %v2877, 0.2
          %v3006 = vmul.f32 %v2878, 0.2
          %v3007 = vmul.f32 %v2879, 0.2
          %v3008 = vmul.f32 %v2880, 0.2
          %v3009 = vmul.f32 %v2881, 0.2
          %v3010 = vmul.f32 %v2882, 0.2
          %v3011 = vmul.f32 %v2883, 0.2
          %v3012 = vmul.f32 %v2884, 0.2
          %v3013 = vmul.f32 %v2885, 0.2
          %v3014 = vmul.f32 %v2886, 0.2
          %v3015 = vmul.f32 %v2887, 0.2
          %v3016 = vsel %vm2888, %v2824, %v2952
          %v3017 = vsel %vm2889, %v2825, %v2953
          %v3018 = vsel %vm2890, %v2826, %v2954
          %v3019 = vsel %vm2891, %v2827, %v2955
          %v3020 = vsel %vm2892, %v2828, %v2956
          %v3021 = vsel %vm2893, %v2829, %v2957
          %v3022 = vsel %vm2894, %v2830, %v2958
          %v3023 = vsel %vm2895, %v2831, %v2959
          %v3024 = vsel %vm2896, %v2832, %v2960
          %v3025 = vsel %vm2897, %v2833, %v2961
          %v3026 = vsel %vm2898, %v2834, %v2962
          %v3027 = vsel %vm2899, %v2835, %v2963
          %v3028 = vsel %vm2900, %v2836, %v2964
          %v3029 = vsel %vm2901, %v2837, %v2965
          %v3030 = vsel %vm2902, %v2838, %v2966
          %v3031 = vsel %vm2903, %v2839, %v2967
          %v3032 = vsel %vm2904, %v2840, %v2968
          %v3033 = vsel %vm2905, %v2841, %v2969
          %v3034 = vsel %vm2906, %v2842, %v2970
          %v3035 = vsel %vm2907, %v2843, %v2971
          %v3036 = vsel %vm2908, %v2844, %v2972
          %v3037 = vsel %vm2909, %v2845, %v2973
          %v3038 = vsel %vm2910, %v2846, %v2974
          %v3039 = vsel %vm2911, %v2847, %v2975
          %v3040 = vsel %vm2912, %v2848, %v2976
          %v3041 = vsel %vm2913, %v2849, %v2977
          %v3042 = vsel %vm2914, %v2850, %v2978
          %v3043 = vsel %vm2915, %v2851, %v2979
          %v3044 = vsel %vm2916, %v2852, %v2980
          %v3045 = vsel %vm2917, %v2853, %v2981
          %v3046 = vsel %vm2918, %v2854, %v2982
          %v3047 = vsel %vm2919, %v2855, %v2983
          %v3048 = vsel %vm2920, %v2856, %v2984
          %v3049 = vsel %vm2921, %v2857, %v2985
          %v3050 = vsel %vm2922, %v2858, %v2986
          %v3051 = vsel %vm2923, %v2859, %v2987
          %v3052 = vsel %vm2924, %v2860, %v2988
          %v3053 = vsel %vm2925, %v2861, %v2989
          %v3054 = vsel %vm2926, %v2862, %v2990
          %v3055 = vsel %vm2927, %v2863, %v2991
          %v3056 = vsel %vm2928, %v2864, %v2992
          %v3057 = vsel %vm2929, %v2865, %v2993
          %v3058 = vsel %vm2930, %v2866, %v2994
          %v3059 = vsel %vm2931, %v2867, %v2995
          %v3060 = vsel %vm2932, %v2868, %v2996
          %v3061 = vsel %vm2933, %v2869, %v2997
          %v3062 = vsel %vm2934, %v2870, %v2998
          %v3063 = vsel %vm2935, %v2871, %v2999
          %v3064 = vsel %vm2936, %v2872, %v3000
          %v3065 = vsel %vm2937, %v2873, %v3001
          %v3066 = vsel %vm2938, %v2874, %v3002
          %v3067 = vsel %vm2939, %v2875, %v3003
          %v3068 = vsel %vm2940, %v2876, %v3004
          %v3069 = vsel %vm2941, %v2877, %v3005
          %v3070 = vsel %vm2942, %v2878, %v3006
          %v3071 = vsel %vm2943, %v2879, %v3007
          %v3072 = vsel %vm2944, %v2880, %v3008
          %v3073 = vsel %vm2945, %v2881, %v3009
          %v3074 = vsel %vm2946, %v2882, %v3010
          %v3075 = vsel %vm2947, %v2883, %v3011
          %v3076 = vsel %vm2948, %v2884, %v3012
          %v3077 = vsel %vm2949, %v2885, %v3013
          %v3078 = vsel %vm2950, %v2886, %v3014
          %v3079 = vsel %vm2951, %v2887, %v3015
          %v3080 = vpack.c.bf16 %v3017, %v3016
          %v3081 = vpack.c.bf16 %v3019, %v3018
          %v3082 = vpack.c.bf16 %v3021, %v3020
          %v3083 = vpack.c.bf16 %v3023, %v3022
          %v3084 = vpack.c.bf16 %v3025, %v3024
          %v3085 = vpack.c.bf16 %v3027, %v3026
          %v3086 = vpack.c.bf16 %v3029, %v3028
          %v3087 = vpack.c.bf16 %v3031, %v3030
          %v3088 = vpack.c.bf16 %v3033, %v3032
          %v3089 = vpack.c.bf16 %v3035, %v3034
          %v3090 = vpack.c.bf16 %v3037, %v3036
          %v3091 = vpack.c.bf16 %v3039, %v3038
          %v3092 = vpack.c.bf16 %v3041, %v3040
          %v3093 = vpack.c.bf16 %v3043, %v3042
          %v3094 = vpack.c.bf16 %v3045, %v3044
          %v3095 = vpack.c.bf16 %v3047, %v3046
          %v3096 = vpack.c.bf16 %v3049, %v3048
          %v3097 = vpack.c.bf16 %v3051, %v3050
          %v3098 = vpack.c.bf16 %v3053, %v3052
          %v3099 = vpack.c.bf16 %v3055, %v3054
          %v3100 = vpack.c.bf16 %v3057, %v3056
          %v3101 = vpack.c.bf16 %v3059, %v3058
          %v3102 = vpack.c.bf16 %v3061, %v3060
          %v3103 = vpack.c.bf16 %v3063, %v3062
          %v3104 = vpack.c.bf16 %v3065, %v3064
          %v3105 = vpack.c.bf16 %v3067, %v3066
          %v3106 = vpack.c.bf16 %v3069, %v3068
          %v3107 = vpack.c.bf16 %v3071, %v3070
          %v3108 = vpack.c.bf16 %v3073, %v3072
          %v3109 = vpack.c.bf16 %v3075, %v3074
          %v3110 = vpack.c.bf16 %v3077, %v3076
          %v3111 = vpack.c.bf16 %v3079, %v3078
          %v3144 = vunpack.c.l.b16 %v3080
          %v3145 = vunpack.c.h.b16 %v3080
          %v3146 = vunpack.c.l.b16 %v3081
          %v3147 = vunpack.c.h.b16 %v3081
          %v3148 = vunpack.c.l.b16 %v3082
          %v3149 = vunpack.c.h.b16 %v3082
          %v3150 = vunpack.c.l.b16 %v3083
          %v3151 = vunpack.c.h.b16 %v3083
          %v3152 = vunpack.c.l.b16 %v3084
          %v3153 = vunpack.c.h.b16 %v3084
          %v3154 = vunpack.c.l.b16 %v3085
          %v3155 = vunpack.c.h.b16 %v3085
          %v3156 = vunpack.c.l.b16 %v3086
          %v3157 = vunpack.c.h.b16 %v3086
          %v3158 = vunpack.c.l.b16 %v3087
          %v3159 = vunpack.c.h.b16 %v3087
          %v3160 = vunpack.c.l.b16 %v3088
          %v3161 = vunpack.c.h.b16 %v3088
          %v3162 = vunpack.c.l.b16 %v3089
          %v3163 = vunpack.c.h.b16 %v3089
          %v3164 = vunpack.c.l.b16 %v3090
          %v3165 = vunpack.c.h.b16 %v3090
          %v3166 = vunpack.c.l.b16 %v3091
          %v3167 = vunpack.c.h.b16 %v3091
          %v3168 = vunpack.c.l.b16 %v3092
          %v3169 = vunpack.c.h.b16 %v3092
          %v3170 = vunpack.c.l.b16 %v3093
          %v3171 = vunpack.c.h.b16 %v3093
          %v3172 = vunpack.c.l.b16 %v3094
          %v3173 = vunpack.c.h.b16 %v3094
          %v3174 = vunpack.c.l.b16 %v3095
          %v3175 = vunpack.c.h.b16 %v3095
          %v3176 = vunpack.c.l.b16 %v3096
          %v3177 = vunpack.c.h.b16 %v3096
          %v3178 = vunpack.c.l.b16 %v3097
          %v3179 = vunpack.c.h.b16 %v3097
          %v3180 = vunpack.c.l.b16 %v3098
          %v3181 = vunpack.c.h.b16 %v3098
          %v3182 = vunpack.c.l.b16 %v3099
          %v3183 = vunpack.c.h.b16 %v3099
          %v3184 = vunpack.c.l.b16 %v3100
          %v3185 = vunpack.c.h.b16 %v3100
          %v3186 = vunpack.c.l.b16 %v3101
          %v3187 = vunpack.c.h.b16 %v3101
          %v3188 = vunpack.c.l.b16 %v3102
          %v3189 = vunpack.c.h.b16 %v3102
          %v3190 = vunpack.c.l.b16 %v3103
          %v3191 = vunpack.c.h.b16 %v3103
          %v3192 = vunpack.c.l.b16 %v3104
          %v3193 = vunpack.c.h.b16 %v3104
          %v3194 = vunpack.c.l.b16 %v3105
          %v3195 = vunpack.c.h.b16 %v3105
          %v3196 = vunpack.c.l.b16 %v3106
          %v3197 = vunpack.c.h.b16 %v3106
          %v3198 = vunpack.c.l.b16 %v3107
          %v3199 = vunpack.c.h.b16 %v3107
          %v3200 = vunpack.c.l.b16 %v3108
          %v3201 = vunpack.c.h.b16 %v3108
          %v3202 = vunpack.c.l.b16 %v3109
          %v3203 = vunpack.c.h.b16 %v3109
          %v3204 = vunpack.c.l.b16 %v3110
          %v3205 = vunpack.c.h.b16 %v3110
          %v3206 = vunpack.c.l.b16 %v3111
          %v3207 = vunpack.c.h.b16 %v3111
          %v3208 = vpack.c.b16 %v3144, %v3144
          %v3209 = vpack.c.b16 %v3145, %v3145
          %v3210 = vpack.c.b16 %v3146, %v3146
          %v3211 = vpack.c.b16 %v3147, %v3147
          %v3212 = vpack.c.b16 %v3148, %v3148
          %v3213 = vpack.c.b16 %v3149, %v3149
          %v3214 = vpack.c.b16 %v3150, %v3150
          %v3215 = vpack.c.b16 %v3151, %v3151
          %v3216 = vpack.c.b16 %v3152, %v3152
          %v3217 = vpack.c.b16 %v3153, %v3153
          %v3218 = vpack.c.b16 %v3154, %v3154
          %v3219 = vpack.c.b16 %v3155, %v3155
          %v3220 = vpack.c.b16 %v3156, %v3156
          %v3221 = vpack.c.b16 %v3157, %v3157
          %v3222 = vpack.c.b16 %v3158, %v3158
          %v3223 = vpack.c.b16 %v3159, %v3159
          %v3224 = vpack.c.b16 %v3160, %v3160
          %v3225 = vpack.c.b16 %v3161, %v3161
          %v3226 = vpack.c.b16 %v3162, %v3162
          %v3227 = vpack.c.b16 %v3163, %v3163
          %v3228 = vpack.c.b16 %v3164, %v3164
          %v3229 = vpack.c.b16 %v3165, %v3165
          %v3230 = vpack.c.b16 %v3166, %v3166
          %v3231 = vpack.c.b16 %v3167, %v3167
          %v3232 = vpack.c.b16 %v3168, %v3168
          %v3233 = vpack.c.b16 %v3169, %v3169
          %v3234 = vpack.c.b16 %v3170, %v3170
          %v3235 = vpack.c.b16 %v3171, %v3171
          %v3236 = vpack.c.b16 %v3172, %v3172
          %v3237 = vpack.c.b16 %v3173, %v3173
          %v3238 = vpack.c.b16 %v3174, %v3174
          %v3239 = vpack.c.b16 %v3175, %v3175
          %v3240 = vpack.c.b16 %v3176, %v3176
          %v3241 = vpack.c.b16 %v3177, %v3177
          %v3242 = vpack.c.b16 %v3178, %v3178
          %v3243 = vpack.c.b16 %v3179, %v3179
          %v3244 = vpack.c.b16 %v3180, %v3180
          %v3245 = vpack.c.b16 %v3181, %v3181
          %v3246 = vpack.c.b16 %v3182, %v3182
          %v3247 = vpack.c.b16 %v3183, %v3183
          %v3248 = vpack.c.b16 %v3184, %v3184
          %v3249 = vpack.c.b16 %v3185, %v3185
          %v3250 = vpack.c.b16 %v3186, %v3186
          %v3251 = vpack.c.b16 %v3187, %v3187
          %v3252 = vpack.c.b16 %v3188, %v3188
          %v3253 = vpack.c.b16 %v3189, %v3189
          %v3254 = vpack.c.b16 %v3190, %v3190
          %v3255 = vpack.c.b16 %v3191, %v3191
          %v3256 = vpack.c.b16 %v3192, %v3192
          %v3257 = vpack.c.b16 %v3193, %v3193
          %v3258 = vpack.c.b16 %v3194, %v3194
          %v3259 = vpack.c.b16 %v3195, %v3195
          %v3260 = vpack.c.b16 %v3196, %v3196
          %v3261 = vpack.c.b16 %v3197, %v3197
          %v3262 = vpack.c.b16 %v3198, %v3198
          %v3263 = vpack.c.b16 %v3199, %v3199
          %v3264 = vpack.c.b16 %v3200, %v3200
          %v3265 = vpack.c.b16 %v3201, %v3201
          %v3266 = vpack.c.b16 %v3202, %v3202
          %v3267 = vpack.c.b16 %v3203, %v3203
          %v3268 = vpack.c.b16 %v3204, %v3204
          %v3269 = vpack.c.b16 %v3205, %v3205
          %v3270 = vpack.c.b16 %v3206, %v3206
          %v3271 = vpack.c.b16 %v3207, %v3207
          %3336 = vst [vmem:[%s4] sm:$0xf] %v3208
          %3337 = vst [vmem:[%s4 + $0x4] sm:$0xf] %v3209
          %3338 = vst [vmem:[%s4 + $0x8] sm:$0xf] %v3210
          %3339 = vst [vmem:[%s4 + $0xc] sm:$0xf] %v3211
          %3340 = vst [vmem:[%s4 + $0x10] sm:$0xf] %v3212
          %3341 = vst [vmem:[%s4 + $0x14] sm:$0xf] %v3213
          %3342 = vst [vmem:[%s4 + $0x18] sm:$0xf] %v3214
          %3343 = vst [vmem:[%s4 + $0x1c] sm:$0xf] %v3215
          %3344 = vst [vmem:[%s4 + $0x20] sm:$0xf] %v3216
          %3345 = vst [vmem:[%s4 + $0x24] sm:$0xf] %v3217
          %3346 = vst [vmem:[%s4 + $0x28] sm:$0xf] %v3218
          %3347 = vst [vmem:[%s4 + $0x2c] sm:$0xf] %v3219
          %3348 = vst [vmem:[%s4 + $0x30] sm:$0xf] %v3220
          %3349 = vst [vmem:[%s4 + $0x34] sm:$0xf] %v3221
          %3350 = vst [vmem:[%s4 + $0x38] sm:$0xf] %v3222
          %3351 = vst [vmem:[%s4 + $0x3c] sm:$0xf] %v3223
          %3352 = vst [vmem:[%s4 + $0x40] sm:$0xf] %v3224
          %3353 = vst [vmem:[%s4 + $0x44] sm:$0xf] %v3225
          %3354 = vst [vmem:[%s4 + $0x48] sm:$0xf] %v3226
          %3355 = vst [vmem:[%s4 + $0x4c] sm:$0xf] %v3227
          %3356 = vst [vmem:[%s4 + $0x50] sm:$0xf] %v3228
          %3357 = vst [vmem:[%s4 + $0x54] sm:$0xf] %v3229
          %3358 = vst [vmem:[%s4 + $0x58] sm:$0xf] %v3230
          %3359 = vst [vmem:[%s4 + $0x5c] sm:$0xf] %v3231
          %3360 = vst [vmem:[%s4 + $0x60] sm:$0xf] %v3232
          %3361 = vst [vmem:[%s4 + $0x64] sm:$0xf] %v3233
          %3362 = vst [vmem:[%s4 + $0x68] sm:$0xf] %v3234
          %3363 = vst [vmem:[%s4 + $0x6c] sm:$0xf] %v3235
          %3364 = vst [vmem:[%s4 + $0x70] sm:$0xf] %v3236
          %3365 = vst [vmem:[%s4 + $0x74] sm:$0xf] %v3237
          %3366 = vst [vmem:[%s4 + $0x78] sm:$0xf] %v3238
          %3367 = vst [vmem:[%s4 + $0x7c] sm:$0xf] %v3239
          %3368 = vst [vmem:[%s4 + $0x80] sm:$0xf] %v3240
          %3369 = vst [vmem:[%s4 + $0x84] sm:$0xf] %v3241
          %3370 = vst [vmem:[%s4 + $0x88] sm:$0xf] %v3242
          %3371 = vst [vmem:[%s4 + $0x8c] sm:$0xf] %v3243
          %3372 = vst [vmem:[%s4 + $0x90] sm:$0xf] %v3244
          %3373 = vst [vmem:[%s4 + $0x94] sm:$0xf] %v3245
          %3374 = vst [vmem:[%s4 + $0x98] sm:$0xf] %v3246
          %3375 = vst [vmem:[%s4 + $0x9c] sm:$0xf] %v3247
          %3376 = vst [vmem:[%s4 + $0xa0] sm:$0xf] %v3248
          %3377 = vst [vmem:[%s4 + $0xa4] sm:$0xf] %v3249
          %3378 = vst [vmem:[%s4 + $0xa8] sm:$0xf] %v3250
          %3379 = vst [vmem:[%s4 + $0xac] sm:$0xf] %v3251
          %3380 = vst [vmem:[%s4 + $0xb0] sm:$0xf] %v3252
          %3381 = vst [vmem:[%s4 + $0xb4] sm:$0xf] %v3253
          %3382 = vst [vmem:[%s4 + $0xb8] sm:$0xf] %v3254
          %3383 = vst [vmem:[%s4 + $0xbc] sm:$0xf] %v3255
          %3384 = vst [vmem:[%s4 + $0xc0] sm:$0xf] %v3256
          %3385 = vst [vmem:[%s4 + $0xc4] sm:$0xf] %v3257
          %3386 = vst [vmem:[%s4 + $0xc8] sm:$0xf] %v3258
          %3387 = vst [vmem:[%s4 + $0xcc] sm:$0xf] %v3259
          %3388 = vst [vmem:[%s4 + $0xd0] sm:$0xf] %v3260
          %3389 = vst [vmem:[%s4 + $0xd4] sm:$0xf] %v3261
          %3390 = vst [vmem:[%s4 + $0xd8] sm:$0xf] %v3262
          %3391 = vst [vmem:[%s4 + $0xdc] sm:$0xf] %v3263
          %3392 = vst [vmem:[%s4 + $0xe0] sm:$0xf] %v3264
          %3393 = vst [vmem:[%s4 + $0xe4] sm:$0xf] %v3265
          %3394 = vst [vmem:[%s4 + $0xe8] sm:$0xf] %v3266
          %3395 = vst [vmem:[%s4 + $0xec] sm:$0xf] %v3267
          %3396 = vst [vmem:[%s4 + $0xf0] sm:$0xf] %v3268
          %3397 = vst [vmem:[%s4 + $0xf4] sm:$0xf] %v3269
          %3398 = vst [vmem:[%s4 + $0xf8] sm:$0xf] %v3270
          %3399 = vst [vmem:[%s4 + $0xfc] sm:$0xf] %v3271
        $region67: #{discriminator_forward.6} parent=54 // pred_fallthru
          _
        // Predicated region
        $region68: #{discriminator_forward.6} parent=54 // pred_check
          %p3400 = pneg %p122
        $region69: #{discriminator_forward.6} parent=54 // pred_check_branch
          %3402 = sbr.rel (%p3400) target = $region71
        $region70: #{discriminator_forward.6} parent=54 // pred_region
          _
        $region71: #{discriminator_forward.6} parent=54 // pred_fallthru
          _
        // Predicated region
        $region72: #{discriminator_forward.6} parent=54 // pred_check
          %p3403 = pneg %p122
        $region73: #{discriminator_forward.6} parent=54 // pred_check_branch
          %3405 = sbr.rel (%p3403) target = $region75
        $region74: #{discriminator_forward.6} parent=54 // pred_region
          _
        $region75: #{discriminator_forward.6} parent=54 // pred_fallthru
          _
      $region55: #{discriminator_forward.6} parent=5 // pred_fallthru
        _
      %p3406 = scmp.le.s32.totalorder 2, %s10
      // Predicated region
      $region76: #{discriminator_forward.6} parent=5 // pred_check
        %p3407 = pneg %p3406
      $region77: #{discriminator_forward.6} parent=5 // pred_check_branch
        %3409 = sbr.rel (%p3407) target = $region79
      $region78: #{discriminator_forward.6} parent=5 // pred_region
        %s3410 = ssub.s32 %s10, 2
      $region79: #{discriminator_forward.6} parent=5 // pred_fallthru
        _
    $region6: #{discriminator_forward.6} parent=1 // loop_footer
      %s14 = sadd.s32 1, %s10
    $region7: #{discriminator_forward.6} parent=1 // loop_footer_branch
      %9 = sbr.rel target = $region3
    $region8: #{discriminator_forward.6} parent=1 // loop_exit
      _

// kernel: discriminator_forward.7
$region0: #{discriminator_forward.7}
  #allocation0 [shape = 'u32[]', space=smem, size = 0x4, offset = 0x4, fixed_abs, tag = 'smem constant byte address 0x4 - core index']
  #allocation1 [shape = 'u32[144,128]{1,0:T(1,128)}', space=vmem, size = 0x12000, scoped, tag = 'internal scratch']
  #allocation2 [shape = 'f32[128,256]{1,0:T(8,128)}', space=vmem, size = 0x20000, scoped, tag = 'scratch operand']
  %s0 = inlined_call_operand.vmem [shape: bf16[128,2048], index: 0, kind: input, shape index: {}]
  %s1 = inlined_call_operand.vmem [shape: bf16[2048,256], index: 1, kind: input, shape index: {}]
  %s2 = inlined_call_operand.vmem [shape: f32[1,256], index: 2, kind: input, shape index: {}]
  %s3 = inlined_call_operand.vmem [shape: f32[1,256], index: 3, kind: input, shape index: {}]
  %s4 = inlined_call_operand.vmem [shape: bf16[128,256], index: 4, kind: output, shape index: {}]
  %s5 = sld [smem:[#allocation0]]
  $region80: #{discriminator_forward.7} parent=0
    _
  %s7 = ssub.s32 1, %s5
  %s8 = scalar_select 0, %s7, %s5
  $region1: #{discriminator_forward.7} parent=0
    #allocation3 [shape = 'u8[262144]{0}', space=vmem, size = 0x40000, scoped, tag = 'input window, operand 0']
    loop: start=0, step=1, limit=6
    $region2: #{discriminator_forward.7} parent=1 // loop_pre_header
      _
    $region3: #{discriminator_forward.7} parent=1 // loop_header
      %s10 = sphi 0, %s14
      %p11 = scmp.ge.s32.totalorder %s10, 6
      %s20 = sphi 0, %s22
      %s23 = sphi 0, %s20
      %s24 = sphi 0, %s23
      %s40 = sphi 0, %s24
      %s46 = sphi 0, %s48
      %s49 = sphi 0, %s46
      %s50 = sphi 0, %s49
      %s66 = sphi 0, %s50
      %s70 = sphi 0, %s70
      %s72 = sphi 0, %s70
      %s73 = sphi 0, %s72
      %s87 = sphi 0, %s73
      %s91 = sphi 0, %s91
      %s93 = sphi 0, %s91
      %s94 = sphi 0, %s93
      %s108 = sphi 0, %s94
      %s112 = sphi 0, %s112
      %s114 = sphi 0, %s112
      %s115 = sphi 0, %s114
      %s129 = sphi 0, %s115
    $region4: #{discriminator_forward.7} parent=1 // loop_header_branch
      %13 = sbr.rel (%p11) target = $region8
    $region5: #{discriminator_forward.7} parent=1 // loop_body
      %s15 = ssub.s32 %s10, 1
      %s16 = ssub.s32 %s10, 2
      %s17 = sadd.s32 %s10, 1
      %s18 = ssub.s32 %s10, %s17
      %p19 = scmp.eq.s32.totalorder %s18, 0
      %s21 = sadd.s32 %s20, 1
      %s22 = scalar_select %p19, %s20, %s21
      %p25 = pneg %p19
      %p26 = scmp.eq.s32.totalorder %s10, 3
      %p27 = por %p25, %p26
      %p28 = scmp.ne.s32.totalorder %s20, %s23
      %p29 = scmp.eq.s32.totalorder %s10, 0
      %p30 = por %p28, %p29
      %p31 = scmp.ne.s32.totalorder %s20, %s23
      %p32 = scmp.eq.s32.totalorder %s15, 3
      %p33 = por %p31, %p32
      %p34 = scmp.ne.s32.totalorder %s23, %s24
      %p35 = scmp.eq.s32.totalorder %s15, 0
      %p36 = por %p34, %p35
      %p37 = scmp.ne.s32.totalorder %s23, %s24
      %p38 = scmp.eq.s32.totalorder %s16, 3
      %p39 = por %p37, %p38
      %p41 = scmp.ne.s32.totalorder %s24, %s40
      %p42 = scmp.eq.s32.totalorder %s16, 0
      %p43 = por %p41, %p42
      %s44 = ssub.s32 %s10, %s17
      %p45 = scmp.eq.s32.totalorder %s44, 0
      %s47 = sadd.s32 %s46, 1
      %s48 = scalar_select %p45, %s46, %s47
      %p51 = pneg %p45
      %p52 = scmp.eq.s32.totalorder %s10, 3
      %p53 = por %p51, %p52
      %p54 = scmp.ne.s32.totalorder %s46, %s49
      %p55 = scmp.eq.s32.totalorder %s10, 0
      %p56 = por %p54, %p55
      %p57 = scmp.ne.s32.totalorder %s46, %s49
      %p58 = scmp.eq.s32.totalorder %s15, 3
      %p59 = por %p57, %p58
      %p60 = scmp.ne.s32.totalorder %s49, %s50
      %p61 = scmp.eq.s32.totalorder %s15, 0
      %p62 = por %p60, %p61
      %p63 = scmp.ne.s32.totalorder %s49, %s50
      %p64 = scmp.eq.s32.totalorder %s16, 3
      %p65 = por %p63, %p64
      %p67 = scmp.ne.s32.totalorder %s50, %s66
      %p68 = scmp.eq.s32.totalorder %s16, 0
      %p69 = por %p67, %p68
      %s71 = sadd.s32 %s70, 1
      %p74 = scmp.eq.s32.totalorder %s10, 3
      %p75 = scmp.ne.s32.totalorder %s70, %s72
      %p76 = scmp.eq.s32.totalorder %s10, 0
      %p77 = por %p75, %p76
      %p78 = scmp.ne.s32.totalorder %s70, %s72
      %p79 = scmp.eq.s32.totalorder %s15, 3
      %p80 = por %p78, %p79
      %p81 = scmp.ne.s32.totalorder %s72, %s73
      %p82 = scmp.eq.s32.totalorder %s15, 0
      %p83 = por %p81, %p82
      %p84 = scmp.ne.s32.totalorder %s72, %s73
      %p85 = scmp.eq.s32.totalorder %s16, 3
      %p86 = por %p84, %p85
      %p88 = scmp.ne.s32.totalorder %s73, %s87
      %p89 = scmp.eq.s32.totalorder %s16, 0
      %p90 = por %p88, %p89
      %s92 = sadd.s32 %s91, 1
      %p95 = scmp.eq.s32.totalorder %s10, 3
      %p96 = scmp.ne.s32.totalorder %s91, %s93
      %p97 = scmp.eq.s32.totalorder %s10, 0
      %p98 = por %p96, %p97
      %p99 = scmp.ne.s32.totalorder %s91, %s93
      %p100 = scmp.eq.s32.totalorder %s15, 3
      %p101 = por %p99, %p100
      %p102 = scmp.ne.s32.totalorder %s93, %s94
      %p103 = scmp.eq.s32.totalorder %s15, 0
      %p104 = por %p102, %p103
      %p105 = scmp.ne.s32.totalorder %s93, %s94
      %p106 = scmp.eq.s32.totalorder %s16, 3
      %p107 = por %p105, %p106
      %p109 = scmp.ne.s32.totalorder %s94, %s108
      %p110 = scmp.eq.s32.totalorder %s16, 0
      %p111 = por %p109, %p110
      %s113 = sadd.s32 %s112, 1
      %p116 = scmp.eq.s32.totalorder %s10, 3
      %p117 = scmp.ne.s32.totalorder %s112, %s114
      %p118 = scmp.eq.s32.totalorder %s10, 0
      %p119 = por %p117, %p118
      %p120 = scmp.ne.s32.totalorder %s112, %s114
      %p121 = scmp.eq.s32.totalorder %s15, 3
      %p122 = por %p120, %p121
      %p123 = scmp.ne.s32.totalorder %s114, %s115
      %p124 = scmp.eq.s32.totalorder %s15, 0
      %p125 = por %p123, %p124
      %p126 = scmp.ne.s32.totalorder %s114, %s115
      %p127 = scmp.eq.s32.totalorder %s16, 3
      %p128 = por %p126, %p127
      %p130 = scmp.ne.s32.totalorder %s115, %s129
      %p131 = scmp.eq.s32.totalorder %s16, 0
      %p132 = por %p130, %p131
      %p133 = scmp.le.s32.totalorder 1, %s10
      %p134 = scmp.lt.s32.totalorder %s10, 5
      %p135 = pnand %p133, %p134
      %p136 = pneg %p135
      // Predicated region
      $region9: #{discriminator_forward.7} parent=5 // pred_check
        _
      $region10: #{discriminator_forward.7} parent=5 // pred_check_branch
        %138 = sbr.rel (%p135) target = $region12
      $region11: #{discriminator_forward.7} parent=5 // pred_region
        %s139 = ssub.s32 %s10, 1
        // Predicated region
        $region13: #{discriminator_forward.7} parent=11 // pred_check
          %p140 = pneg %p83
        $region14: #{discriminator_forward.7} parent=11 // pred_check_branch
          %142 = sbr.rel (%p140) target = $region16
        $region15: #{discriminator_forward.7} parent=11 // pred_region
          _
        $region16: #{discriminator_forward.7} parent=11 // pred_fallthru
          _
        // Predicated region
        $region17: #{discriminator_forward.7} parent=11 // pred_check
          %p143 = pneg %p104
        $region18: #{discriminator_forward.7} parent=11 // pred_check_branch
          %145 = sbr.rel (%p143) target = $region20
        $region19: #{discriminator_forward.7} parent=11 // pred_region
          _
        $region20: #{discriminator_forward.7} parent=11 // pred_fallthru
          _
      $region12: #{discriminator_forward.7} parent=5 // pred_fallthru
        _
      %p146 = scmp.lt.s32.totalorder %s10, 4
      // Predicated region
      $region21: #{discriminator_forward.7} parent=5 // pred_check
        %p147 = pneg %p146
      $region22: #{discriminator_forward.7} parent=5 // pred_check_branch
        %149 = sbr.rel (%p147) target = $region24
      $region23: #{discriminator_forward.7} parent=5 // pred_region
        // Predicated region
        $region25: #{discriminator_forward.7} parent=23 // pred_check
          %p150 = pneg %p30
        $region26: #{discriminator_forward.7} parent=23 // pred_check_branch
          %152 = sbr.rel (%p150) target = $region28
        $region27: #{discriminator_forward.7} parent=23 // pred_region
          %s153 = sand.u32 %s20, 1
          %s154 = sand.u32 %s20, 1
          %s155 = smul.addr %s154, 256
          %s156 = scalar_lea.vmem [#allocation3], %s155
          %s157 = smul.u32 4, %s10
          %s158 = smul.addr %s157, 4
          %s159 = scalar_lea.vmem %s0, %s158
          // Predicated region
          $region29: #{discriminator_forward.7} parent=27 // pred_check
            _
          $region30: #{discriminator_forward.7} parent=27 // pred_check_branch
            %161 = sbr.rel (0) target = $region32
          $region31: #{discriminator_forward.7} parent=27 // pred_region
            // Predicated region
            $region33: #{discriminator_forward.7} parent=31 // pred_check
              _
            $region34: #{discriminator_forward.7} parent=31 // pred_check_branch
              %163 = sbr.rel (0) target = $region36
            $region35: #{discriminator_forward.7} parent=31 // pred_region
              loop: start=0, step=1, limit=1
              $region37: #{discriminator_forward.7} parent=35 // loop_pre_header
                _
              $region38: #{discriminator_forward.7} parent=35 // loop_header
                %s165 = sphi 0, %s169
                %p166 = scmp.ge.s32.totalorder %s165, 1
                %s170 = sphi %s159, %s159
                %s171 = sphi %s156, %s156
              $region39: #{discriminator_forward.7} parent=35 // loop_header_branch
                %168 = sbr.rel (%p166) target = $region43
              $region40: #{discriminator_forward.7} parent=35 // loop_body
                %v172 = vld [vmem:[%s170] sm:$0xff]
                %173 = vst [vmem:[%s171] sm:$0xff] %v172
                %v174 = vld [vmem:[%s170 + $0x8] sm:$0xff]
                %175 = vst [vmem:[%s171 + $0x8] sm:$0xff] %v174
                %v176 = vld [vmem:[%s170 + $0x40] sm:$0xff]
                %177 = vst [vmem:[%s171 + $0x10] sm:$0xff] %v176
                %v178 = vld [vmem:[%s170 + $0x48] sm:$0xff]
                %179 = vst [vmem:[%s171 + $0x18] sm:$0xff] %v178
                %v180 = vld [vmem:[%s170 + $0x80] sm:$0xff]
                %181 = vst [vmem:[%s171 + $0x20] sm:$0xff] %v180
                %v182 = vld [vmem:[%s170 + $0x88] sm:$0xff]
                %183 = vst [vmem:[%s171 + $0x28] sm:$0xff] %v182
                %v184 = vld [vmem:[%s170 + $0xc0] sm:$0xff]
                %185 = vst [vmem:[%s171 + $0x30] sm:$0xff] %v184
                %v186 = vld [vmem:[%s170 + $0xc8] sm:$0xff]
                %187 = vst [vmem:[%s171 + $0x38] sm:$0xff] %v186
                %v188 = vld [vmem:[%s170 + $0x100] sm:$0xff]
                %189 = vst [vmem:[%s171 + $0x40] sm:$0xff] %v188
                %v190 = vld [vmem:[%s170 + $0x108] sm:$0xff]
                %191 = vst [vmem:[%s171 + $0x48] sm:$0xff] %v190
                %v192 = vld [vmem:[%s170 + $0x140] sm:$0xff]
                %193 = vst [vmem:[%s171 + $0x50] sm:$0xff] %v192
                %v194 = vld [vmem:[%s170 + $0x148] sm:$0xff]
                %195 = vst [vmem:[%s171 + $0x58] sm:$0xff] %v194
                %v196 = vld [vmem:[%s170 + $0x180] sm:$0xff]
                %197 = vst [vmem:[%s171 + $0x60] sm:$0xff] %v196
                %v198 = vld [vmem:[%s170 + $0x188] sm:$0xff]
                %199 = vst [vmem:[%s171 + $0x68] sm:$0xff] %v198
                %v200 = vld [vmem:[%s170 + $0x1c0] sm:$0xff]
                %201 = vst [vmem:[%s171 + $0x70] sm:$0xff] %v200
                %v202 = vld [vmem:[%s170 + $0x1c8] sm:$0xff]
                %203 = vst [vmem:[%s171 + $0x78] sm:$0xff] %v202
                %v204 = vld [vmem:[%s170 + $0x200] sm:$0xff]
                %205 = vst [vmem:[%s171 + $0x80] sm:$0xff] %v204
                %v206 = vld [vmem:[%s170 + $0x208] sm:$0xff]
                %207 = vst [vmem:[%s171 + $0x88] sm:$0xff] %v206
                %v208 = vld [vmem:[%s170 + $0x240] sm:$0xff]
                %209 = vst [vmem:[%s171 + $0x90] sm:$0xff] %v208
                %v210 = vld [vmem:[%s170 + $0x248] sm:$0xff]
                %211 = vst [vmem:[%s171 + $0x98] sm:$0xff] %v210
                %v212 = vld [vmem:[%s170 + $0x280] sm:$0xff]
                %213 = vst [vmem:[%s171 + $0xa0] sm:$0xff] %v212
                %v214 = vld [vmem:[%s170 + $0x288] sm:$0xff]
                %215 = vst [vmem:[%s171 + $0xa8] sm:$0xff] %v214
                %v216 = vld [vmem:[%s170 + $0x2c0] sm:$0xff]
                %217 = vst [vmem:[%s171 + $0xb0] sm:$0xff] %v216
                %v218 = vld [vmem:[%s170 + $0x2c8] sm:$0xff]
                %219 = vst [vmem:[%s171 + $0xb8] sm:$0xff] %v218
                %v220 = vld [vmem:[%s170 + $0x300] sm:$0xff]
                %221 = vst [vmem:[%s171 + $0xc0] sm:$0xff] %v220
                %v222 = vld [vmem:[%s170 + $0x308] sm:$0xff]
                %223 = vst [vmem:[%s171 + $0xc8] sm:$0xff] %v222
                %v224 = vld [vmem:[%s170 + $0x340] sm:$0xff]
                %225 = vst [vmem:[%s171 + $0xd0] sm:$0xff] %v224
                %v226 = vld [vmem:[%s170 + $0x348] sm:$0xff]
                %227 = vst [vmem:[%s171 + $0xd8] sm:$0xff] %v226
                %v228 = vld [vmem:[%s170 + $0x380] sm:$0xff]
                %229 = vst [vmem:[%s171 + $0xe0] sm:$0xff] %v228
                %v230 = vld [vmem:[%s170 + $0x388] sm:$0xff]
                %231 = vst [vmem:[%s171 + $0xe8] sm:$0xff] %v230
                %v232 = vld [vmem:[%s170 + $0x3c0] sm:$0xff]
                %233 = vst [vmem:[%s171 + $0xf0] sm:$0xff] %v232
                %v234 = vld [vmem:[%s170 + $0x3c8] sm:$0xff]
                %235 = vst [vmem:[%s171 + $0xf8] sm:$0xff] %v234
              $region41: #{discriminator_forward.7} parent=35 // loop_footer
                %s169 = sadd.s32 1, %s165
              $region42: #{discriminator_forward.7} parent=35 // loop_footer_branch
                %164 = sbr.rel target = $region38
              $region43: #{discriminator_forward.7} parent=35 // loop_exit
                _
            $region36: #{discriminator_forward.7} parent=31 // pred_fallthru
              _
            // Predicated region
            $region44: #{discriminator_forward.7} parent=31 // pred_check
              _
            $region45: #{discriminator_forward.7} parent=31 // pred_check_branch
              %237 = sbr.rel target = $region47
            $region46: #{discriminator_forward.7} parent=31 // pred_region
              _
            $region47: #{discriminator_forward.7} parent=31 // pred_fallthru
              _
          $region32: #{discriminator_forward.7} parent=27 // pred_fallthru
            _
          %238 = vnop
        $region28: #{discriminator_forward.7} parent=23 // pred_fallthru
          _
        // Predicated region
        $region48: #{discriminator_forward.7} parent=23 // pred_check
          %p239 = pneg %p56
        $region49: #{discriminator_forward.7} parent=23 // pred_check_branch
          %241 = sbr.rel (%p239) target = $region51
        $region50: #{discriminator_forward.7} parent=23 // pred_region
          %s242 = smul.u32 64, %s10
          %p243 = scmp.lt.s32.totalorder %s242, 255
          %s244 = scalar_select %p243, %s242, 255
          %s245 = smul.addr %s244, 2
          %s246 = smul.addr %s245, 4
          %s247 = scalar_lea.vmem %s1, %s246
          %s248 = smul.u32 64, %s10
        $region51: #{discriminator_forward.7} parent=23 // pred_fallthru
          _
      $region24: #{discriminator_forward.7} parent=5 // pred_fallthru
        _
      %p249 = scmp.le.s32.totalorder 1, %s10
      %p250 = scmp.lt.s32.totalorder %s10, 5
      %p251 = pnand %p249, %p250
      %p252 = pneg %p251
      // Predicated region
      $region52: #{discriminator_forward.7} parent=5 // pred_check
        _
      $region53: #{discriminator_forward.7} parent=5 // pred_check_branch
        %254 = sbr.rel (%p251) target = $region55
      $region54: #{discriminator_forward.7} parent=5 // pred_region
        %s255 = ssub.s32 %s10, 1
        %s256 = sand.u32 %s23, 1
        %s257 = sand.u32 %s23, 1
        %s258 = smul.addr %s257, 256
        %s259 = scalar_lea.vmem [#allocation3], %s258
        // Predicated region
        $region56: #{discriminator_forward.7} parent=54 // pred_check
          %p260 = pneg %p36
        $region57: #{discriminator_forward.7} parent=54 // pred_check_branch
          %262 = sbr.rel (%p260) target = $region59
        $region58: #{discriminator_forward.7} parent=54 // pred_region
          _
        $region59: #{discriminator_forward.7} parent=54 // pred_fallthru
          _
        %s263 = sand.u32 %s23, 1
        %s264 = sand.u32 %s23, 1
        %s265 = smul.addr %s264, 256
        %s266 = scalar_lea.vmem [#allocation3], %s265
        %p267 = pneg %p36
        %p268 = pneg %p33
        %s269 = smul.u32 64, %s15
        %p270 = scmp.lt.s32.totalorder %s269, 255
        %s271 = scalar_select %p270, %s269, 255
        %s272 = smul.addr %s271, 2
        %s273 = smul.addr %s272, 4
        %s274 = scalar_lea.vmem %s1, %s273
        %p275 = pneg %p62
        %p276 = pneg %p59
        %p277 = pneg %p83
        %p278 = pneg %p80
        %p279 = pneg %p104
        %p280 = pneg %p101
        %p281 = pneg %p125
        %p282 = pneg %p122
        %s283 = smul.u32 4, %s15
        %s284 = smul.u32 64, %s15
        %p285 = scmp.lt.s32.totalorder %s284, 255
        %s286 = scalar_select %p285, %s284, 255
        %s287 = smul.addr %s286, 2
        %s288 = smul.addr %s287, 4
        %s289 = scalar_lea.vmem %s1, %s288
        %s290 = smul.u32 64, %s15
        %p291 = scmp.eq.s32.totalorder %s15, 0
        // Predicated region
        $region60: #{discriminator_forward.7} parent=54 // pred_check
          %p292 = pneg %p291
        $region61: #{discriminator_forward.7} parent=54 // pred_check_branch
          %294 = sbr.rel (%p292) target = $region63
        $region62: #{discriminator_forward.7} parent=54 // pred_region
          %295 = vst [vmem:[#allocation2] sm:$0xff] 0.0
          %296 = vst [vmem:[#allocation2 + $0x8] sm:$0xff] 0.0
          %297 = vst [vmem:[#allocation2 + $0x10] sm:$0xff] 0.0
          %298 = vst [vmem:[#allocation2 + $0x18] sm:$0xff] 0.0
          %299 = vst [vmem:[#allocation2 + $0x20] sm:$0xff] 0.0
          %300 = vst [vmem:[#allocation2 + $0x28] sm:$0xff] 0.0
          %301 = vst [vmem:[#allocation2 + $0x30] sm:$0xff] 0.0
          %302 = vst [vmem:[#allocation2 + $0x38] sm:$0xff] 0.0
          %303 = vst [vmem:[#allocation2 + $0x40] sm:$0xff] 0.0
          %304 = vst [vmem:[#allocation2 + $0x48] sm:$0xff] 0.0
          %305 = vst [vmem:[#allocation2 + $0x50] sm:$0xff] 0.0
          %306 = vst [vmem:[#allocation2 + $0x58] sm:$0xff] 0.0
          %307 = vst [vmem:[#allocation2 + $0x60] sm:$0xff] 0.0
          %308 = vst [vmem:[#allocation2 + $0x68] sm:$0xff] 0.0
          %309 = vst [vmem:[#allocation2 + $0x70] sm:$0xff] 0.0
          %310 = vst [vmem:[#allocation2 + $0x78] sm:$0xff] 0.0
          %311 = vst [vmem:[#allocation2 + $0x80] sm:$0xff] 0.0
          %312 = vst [vmem:[#allocation2 + $0x88] sm:$0xff] 0.0
          %313 = vst [vmem:[#allocation2 + $0x90] sm:$0xff] 0.0
          %314 = vst [vmem:[#allocation2 + $0x98] sm:$0xff] 0.0
          %315 = vst [vmem:[#allocation2 + $0xa0] sm:$0xff] 0.0
          %316 = vst [vmem:[#allocation2 + $0xa8] sm:$0xff] 0.0
          %317 = vst [vmem:[#allocation2 + $0xb0] sm:$0xff] 0.0
          %318 = vst [vmem:[#allocation2 + $0xb8] sm:$0xff] 0.0
          %319 = vst [vmem:[#allocation2 + $0xc0] sm:$0xff] 0.0
          %320 = vst [vmem:[#allocation2 + $0xc8] sm:$0xff] 0.0
          %321 = vst [vmem:[#allocation2 + $0xd0] sm:$0xff] 0.0
          %322 = vst [vmem:[#allocation2 + $0xd8] sm:$0xff] 0.0
          %323 = vst [vmem:[#allocation2 + $0xe0] sm:$0xff] 0.0
          %324 = vst [vmem:[#allocation2 + $0xe8] sm:$0xff] 0.0
          %325 = vst [vmem:[#allocation2 + $0xf0] sm:$0xff] 0.0
          %326 = vst [vmem:[#allocation2 + $0xf8] sm:$0xff] 0.0
        $region63: #{discriminator_forward.7} parent=54 // pred_fallthru
          _
        %v327 = vld [vmem:[#allocation2] sm:$0xff]
        %v328 = vld [vmem:[#allocation2 + $0x8] sm:$0xff]
        %v329 = vld [vmem:[#allocation2 + $0x10] sm:$0xff]
        %v330 = vld [vmem:[#allocation2 + $0x18] sm:$0xff]
        %v331 = vld [vmem:[#allocation2 + $0x20] sm:$0xff]
        %v332 = vld [vmem:[#allocation2 + $0x28] sm:$0xff]
        %v333 = vld [vmem:[#allocation2 + $0x30] sm:$0xff]
        %v334 = vld [vmem:[#allocation2 + $0x38] sm:$0xff]
        %v335 = vld [vmem:[#allocation2 + $0x40] sm:$0xff]
        %v336 = vld [vmem:[#allocation2 + $0x48] sm:$0xff]
        %v337 = vld [vmem:[#allocation2 + $0x50] sm:$0xff]
        %v338 = vld [vmem:[#allocation2 + $0x58] sm:$0xff]
        %v339 = vld [vmem:[#allocation2 + $0x60] sm:$0xff]
        %v340 = vld [vmem:[#allocation2 + $0x68] sm:$0xff]
        %v341 = vld [vmem:[#allocation2 + $0x70] sm:$0xff]
        %v342 = vld [vmem:[#allocation2 + $0x78] sm:$0xff]
        %v343 = vld [vmem:[#allocation2 + $0x80] sm:$0xff]
        %v344 = vld [vmem:[#allocation2 + $0x88] sm:$0xff]
        %v345 = vld [vmem:[#allocation2 + $0x90] sm:$0xff]
        %v346 = vld [vmem:[#allocation2 + $0x98] sm:$0xff]
        %v347 = vld [vmem:[#allocation2 + $0xa0] sm:$0xff]
        %v348 = vld [vmem:[#allocation2 + $0xa8] sm:$0xff]
        %v349 = vld [vmem:[#allocation2 + $0xb0] sm:$0xff]
        %v350 = vld [vmem:[#allocation2 + $0xb8] sm:$0xff]
        %v351 = vld [vmem:[#allocation2 + $0xc0] sm:$0xff]
        %v352 = vld [vmem:[#allocation2 + $0xc8] sm:$0xff]
        %v353 = vld [vmem:[#allocation2 + $0xd0] sm:$0xff]
        %v354 = vld [vmem:[#allocation2 + $0xd8] sm:$0xff]
        %v355 = vld [vmem:[#allocation2 + $0xe0] sm:$0xff]
        %v356 = vld [vmem:[#allocation2 + $0xe8] sm:$0xff]
        %v357 = vld [vmem:[#allocation2 + $0xf0] sm:$0xff]
        %v358 = vld [vmem:[#allocation2 + $0xf8] sm:$0xff]
        %v359 = vld [vmem:[%s259] sm:$0xff]
        %v360 = vld [vmem:[%s259 + $0x8] sm:$0xff]
        %v361 = vld [vmem:[%s259 + $0x10] sm:$0xff]
        %v362 = vld [vmem:[%s259 + $0x18] sm:$0xff]
        %v363 = vld [vmem:[%s259 + $0x20] sm:$0xff]
        %v364 = vld [vmem:[%s259 + $0x28] sm:$0xff]
        %v365 = vld [vmem:[%s259 + $0x30] sm:$0xff]
        %v366 = vld [vmem:[%s259 + $0x38] sm:$0xff]
        %v367 = vld [vmem:[%s259 + $0x40] sm:$0xff]
        %v368 = vld [vmem:[%s259 + $0x48] sm:$0xff]
        %v369 = vld [vmem:[%s259 + $0x50] sm:$0xff]
        %v370 = vld [vmem:[%s259 + $0x58] sm:$0xff]
        %v371 = vld [vmem:[%s259 + $0x60] sm:$0xff]
        %v372 = vld [vmem:[%s259 + $0x68] sm:$0xff]
        %v373 = vld [vmem:[%s259 + $0x70] sm:$0xff]
        %v374 = vld [vmem:[%s259 + $0x78] sm:$0xff]
        %v375 = vld [vmem:[%s259 + $0x80] sm:$0xff]
        %v376 = vld [vmem:[%s259 + $0x88] sm:$0xff]
        %v377 = vld [vmem:[%s259 + $0x90] sm:$0xff]
        %v378 = vld [vmem:[%s259 + $0x98] sm:$0xff]
        %v379 = vld [vmem:[%s259 + $0xa0] sm:$0xff]
        %v380 = vld [vmem:[%s259 + $0xa8] sm:$0xff]
        %v381 = vld [vmem:[%s259 + $0xb0] sm:$0xff]
        %v382 = vld [vmem:[%s259 + $0xb8] sm:$0xff]
        %v383 = vld [vmem:[%s259 + $0xc0] sm:$0xff]
        %v384 = vld [vmem:[%s259 + $0xc8] sm:$0xff]
        %v385 = vld [vmem:[%s259 + $0xd0] sm:$0xff]
        %v386 = vld [vmem:[%s259 + $0xd8] sm:$0xff]
        %v387 = vld [vmem:[%s259 + $0xe0] sm:$0xff]
        %v388 = vld [vmem:[%s259 + $0xe8] sm:$0xff]
        %v389 = vld [vmem:[%s259 + $0xf0] sm:$0xff]
        %v390 = vld [vmem:[%s259 + $0xf8] sm:$0xff]
        %v391 = vld [vmem:[%s289] sm:$0xff]
        %v392 = vld [vmem:[%s289 + $0x8] sm:$0xff]
        %v393 = vld [vmem:[%s289 + $0x10] sm:$0xff]
        %v394 = vld [vmem:[%s289 + $0x18] sm:$0xff]
        %v395 = vld [vmem:[%s289 + $0x20] sm:$0xff]
        %v396 = vld [vmem:[%s289 + $0x28] sm:$0xff]
        %v397 = vld [vmem:[%s289 + $0x30] sm:$0xff]
        %v398 = vld [vmem:[%s289 + $0x38] sm:$0xff]
        %v399 = vld [vmem:[%s289 + $0x40] sm:$0xff]
        %v400 = vld [vmem:[%s289 + $0x48] sm:$0xff]
        %v401 = vld [vmem:[%s289 + $0x50] sm:$0xff]
        %v402 = vld [vmem:[%s289 + $0x58] sm:$0xff]
        %v403 = vld [vmem:[%s289 + $0x60] sm:$0xff]
        %v404 = vld [vmem:[%s289 + $0x68] sm:$0xff]
        %v405 = vld [vmem:[%s289 + $0x70] sm:$0xff]
        %v406 = vld [vmem:[%s289 + $0x78] sm:$0xff]
        %v407 = vld [vmem:[%s289 + $0x80] sm:$0xff]
        %v408 = vld [vmem:[%s289 + $0x88] sm:$0xff]
        %v409 = vld [vmem:[%s289 + $0x90] sm:$0xff]
        %v410 = vld [vmem:[%s289 + $0x98] sm:$0xff]
        %v411 = vld [vmem:[%s289 + $0xa0] sm:$0xff]
        %v412 = vld [vmem:[%s289 + $0xa8] sm:$0xff]
        %v413 = vld [vmem:[%s289 + $0xb0] sm:$0xff]
        %v414 = vld [vmem:[%s289 + $0xb8] sm:$0xff]
        %v415 = vld [vmem:[%s289 + $0xc0] sm:$0xff]
        %v416 = vld [vmem:[%s289 + $0xc8] sm:$0xff]
        %v417 = vld [vmem:[%s289 + $0xd0] sm:$0xff]
        %v418 = vld [vmem:[%s289 + $0xd8] sm:$0xff]
        %v419 = vld [vmem:[%s289 + $0xe0] sm:$0xff]
        %v420 = vld [vmem:[%s289 + $0xe8] sm:$0xff]
        %v421 = vld [vmem:[%s289 + $0xf0] sm:$0xff]
        %v422 = vld [vmem:[%s289 + $0xf8] sm:$0xff]
        %v423 = vld [vmem:[%s289 + $0x100] sm:$0xff]
        %v424 = vld [vmem:[%s289 + $0x108] sm:$0xff]
        %v425 = vld [vmem:[%s289 + $0x110] sm:$0xff]
        %v426 = vld [vmem:[%s289 + $0x118] sm:$0xff]
        %v427 = vld [vmem:[%s289 + $0x120] sm:$0xff]
        %v428 = vld [vmem:[%s289 + $0x128] sm:$0xff]
        %v429 = vld [vmem:[%s289 + $0x130] sm:$0xff]
        %v430 = vld [vmem:[%s289 + $0x138] sm:$0xff]
        %v431 = vld [vmem:[%s289 + $0x140] sm:$0xff]
        %v432 = vld [vmem:[%s289 + $0x148] sm:$0xff]
        %v433 = vld [vmem:[%s289 + $0x150] sm:$0xff]
        %v434 = vld [vmem:[%s289 + $0x158] sm:$0xff]
        %v435 = vld [vmem:[%s289 + $0x160] sm:$0xff]
        %v436 = vld [vmem:[%s289 + $0x168] sm:$0xff]
        %v437 = vld [vmem:[%s289 + $0x170] sm:$0xff]
        %v438 = vld [vmem:[%s289 + $0x178] sm:$0xff]
        %v439 = vld [vmem:[%s289 + $0x180] sm:$0xff]
        %v440 = vld [vmem:[%s289 + $0x188] sm:$0xff]
        %v441 = vld [vmem:[%s289 + $0x190] sm:$0xff]
        %v442 = vld [vmem:[%s289 + $0x198] sm:$0xff]
        %v443 = vld [vmem:[%s289 + $0x1a0] sm:$0xff]
        %v444 = vld [vmem:[%s289 + $0x1a8] sm:$0xff]
        %v445 = vld [vmem:[%s289 + $0x1b0] sm:$0xff]
        %v446 = vld [vmem:[%s289 + $0x1b8] sm:$0xff]
        %v447 = vld [vmem:[%s289 + $0x1c0] sm:$0xff]
        %v448 = vld [vmem:[%s289 + $0x1c8] sm:$0xff]
        %v449 = vld [vmem:[%s289 + $0x1d0] sm:$0xff]
        %v450 = vld [vmem:[%s289 + $0x1d8] sm:$0xff]
        %v451 = vld [vmem:[%s289 + $0x1e0] sm:$0xff]
        %v452 = vld [vmem:[%s289 + $0x1e8] sm:$0xff]
        %v453 = vld [vmem:[%s289 + $0x1f0] sm:$0xff]
        %v454 = vld [vmem:[%s289 + $0x1f8] sm:$0xff]
        %v487 = vunpack.c.l.b16 %v359
        %v488 = vunpack.c.h.b16 %v359
        %v489 = vunpack.c.l.b16 %v360
        %v490 = vunpack.c.h.b16 %v360
        %v491 = vunpack.c.l.b16 %v361
        %v492 = vunpack.c.h.b16 %v361
        %v493 = vunpack.c.l.b16 %v362
        %v494 = vunpack.c.h.b16 %v362
        %v495 = vunpack.c.l.b16 %v363
        %v496 = vunpack.c.h.b16 %v363
        %v497 = vunpack.c.l.b16 %v364
        %v498 = vunpack.c.h.b16 %v364
        %v499 = vunpack.c.l.b16 %v365
        %v500 = vunpack.c.h.b16 %v365
        %v501 = vunpack.c.l.b16 %v366
        %v502 = vunpack.c.h.b16 %v366
        %v503 = vunpack.c.l.b16 %v367
        %v504 = vunpack.c.h.b16 %v367
        %v505 = vunpack.c.l.b16 %v368
        %v506 = vunpack.c.h.b16 %v368
        %v507 = vunpack.c.l.b16 %v369
        %v508 = vunpack.c.h.b16 %v369
        %v509 = vunpack.c.l.b16 %v370
        %v510 = vunpack.c.h.b16 %v370
        %v511 = vunpack.c.l.b16 %v371
        %v512 = vunpack.c.h.b16 %v371
        %v513 = vunpack.c.l.b16 %v372
        %v514 = vunpack.c.h.b16 %v372
        %v515 = vunpack.c.l.b16 %v373
        %v516 = vunpack.c.h.b16 %v373
        %v517 = vunpack.c.l.b16 %v374
        %v518 = vunpack.c.h.b16 %v374
        %v519 = vunpack.c.l.b16 %v375
        %v520 = vunpack.c.h.b16 %v375
        %v521 = vunpack.c.l.b16 %v376
        %v522 = vunpack.c.h.b16 %v376
        %v523 = vunpack.c.l.b16 %v377
        %v524 = vunpack.c.h.b16 %v377
        %v525 = vunpack.c.l.b16 %v378
        %v526 = vunpack.c.h.b16 %v378
        %v527 = vunpack.c.l.b16 %v379
        %v528 = vunpack.c.h.b16 %v379
        %v529 = vunpack.c.l.b16 %v380
        %v530 = vunpack.c.h.b16 %v380
        %v531 = vunpack.c.l.b16 %v381
        %v532 = vunpack.c.h.b16 %v381
        %v533 = vunpack.c.l.b16 %v382
        %v534 = vunpack.c.h.b16 %v382
        %v535 = vunpack.c.l.b16 %v383
        %v536 = vunpack.c.h.b16 %v383
        %v537 = vunpack.c.l.b16 %v384
        %v538 = vunpack.c.h.b16 %v384
        %v539 = vunpack.c.l.b16 %v385
        %v540 = vunpack.c.h.b16 %v385
        %v541 = vunpack.c.l.b16 %v386
        %v542 = vunpack.c.h.b16 %v386
        %v543 = vunpack.c.l.b16 %v387
        %v544 = vunpack.c.h.b16 %v387
        %v545 = vunpack.c.l.b16 %v388
        %v546 = vunpack.c.h.b16 %v388
        %v547 = vunpack.c.l.b16 %v389
        %v548 = vunpack.c.h.b16 %v389
        %v549 = vunpack.c.l.b16 %v390
        %v550 = vunpack.c.h.b16 %v390
        %v551 = vpack.c.b16 %v491, %v487
        %v552 = vpack.c.b16 %v492, %v488
        %v553 = vpack.c.b16 %v493, %v489
        %v554 = vpack.c.b16 %v494, %v490
        %v555 = vpack.c.b16 %v499, %v495
        %v556 = vpack.c.b16 %v500, %v496
        %v557 = vpack.c.b16 %v501, %v497
        %v558 = vpack.c.b16 %v502, %v498
        %v559 = vpack.c.b16 %v507, %v503
        %v560 = vpack.c.b16 %v508, %v504
        %v561 = vpack.c.b16 %v509, %v505
        %v562 = vpack.c.b16 %v510, %v506
        %v563 = vpack.c.b16 %v515, %v511
        %v564 = vpack.c.b16 %v516, %v512
        %v565 = vpack.c.b16 %v517, %v513
        %v566 = vpack.c.b16 %v518, %v514
        %v567 = vpack.c.b16 %v523, %v519
        %v568 = vpack.c.b16 %v524, %v520
        %v569 = vpack.c.b16 %v525, %v521
        %v570 = vpack.c.b16 %v526, %v522
        %v571 = vpack.c.b16 %v531, %v527
        %v572 = vpack.c.b16 %v532, %v528
        %v573 = vpack.c.b16 %v533, %v529
        %v574 = vpack.c.b16 %v534, %v530
        %v575 = vpack.c.b16 %v539, %v535
        %v576 = vpack.c.b16 %v540, %v536
        %v577 = vpack.c.b16 %v541, %v537
        %v578 = vpack.c.b16 %v542, %v538
        %v579 = vpack.c.b16 %v547, %v543
        %v580 = vpack.c.b16 %v548, %v544
        %v581 = vpack.c.b16 %v549, %v545
        %v582 = vpack.c.b16 %v550, %v546
        %v679 = vunpack.c.l.b16 %v391
        %v680 = vunpack.c.h.b16 %v391
        %v681 = vunpack.c.l.b16 %v392
        %v682 = vunpack.c.h.b16 %v392
        %v683 = vunpack.c.l.b16 %v393
        %v684 = vunpack.c.h.b16 %v393
        %v685 = vunpack.c.l.b16 %v394
        %v686 = vunpack.c.h.b16 %v394
        %v687 = vunpack.c.l.b16 %v395
        %v688 = vunpack.c.h.b16 %v395
        %v689 = vunpack.c.l.b16 %v396
        %v690 = vunpack.c.h.b16 %v396
        %v691 = vunpack.c.l.b16 %v397
        %v692 = vunpack.c.h.b16 %v397
        %v693 = vunpack.c.l.b16 %v398
        %v694 = vunpack.c.h.b16 %v398
        %v695 = vunpack.c.l.b16 %v399
        %v696 = vunpack.c.h.b16 %v399
        %v697 = vunpack.c.l.b16 %v400
        %v698 = vunpack.c.h.b16 %v400
        %v699 = vunpack.c.l.b16 %v401
        %v700 = vunpack.c.h.b16 %v401
        %v701 = vunpack.c.l.b16 %v402
        %v702 = vunpack.c.h.b16 %v402
        %v703 = vunpack.c.l.b16 %v403
        %v704 = vunpack.c.h.b16 %v403
        %v705 = vunpack.c.l.b16 %v404
        %v706 = vunpack.c.h.b16 %v404
        %v707 = vunpack.c.l.b16 %v405
        %v708 = vunpack.c.h.b16 %v405
        %v709 = vunpack.c.l.b16 %v406
        %v710 = vunpack.c.h.b16 %v406
        %v711 = vunpack.c.l.b16 %v407
        %v712 = vunpack.c.h.b16 %v407
        %v713 = vunpack.c.l.b16 %v408
        %v714 = vunpack.c.h.b16 %v408
        %v715 = vunpack.c.l.b16 %v409
        %v716 = vunpack.c.h.b16 %v409
        %v717 = vunpack.c.l.b16 %v410
        %v718 = vunpack.c.h.b16 %v410
        %v719 = vunpack.c.l.b16 %v411
        %v720 = vunpack.c.h.b16 %v411
        %v721 = vunpack.c.l.b16 %v412
        %v722 = vunpack.c.h.b16 %v412
        %v723 = vunpack.c.l.b16 %v413
        %v724 = vunpack.c.h.b16 %v413
        %v725 = vunpack.c.l.b16 %v414
        %v726 = vunpack.c.h.b16 %v414
        %v727 = vunpack.c.l.b16 %v415
        %v728 = vunpack.c.h.b16 %v415
        %v729 = vunpack.c.l.b16 %v416
        %v730 = vunpack.c.h.b16 %v416
        %v731 = vunpack.c.l.b16 %v417
        %v732 = vunpack.c.h.b16 %v417
        %v733 = vunpack.c.l.b16 %v418
        %v734 = vunpack.c.h.b16 %v418
        %v735 = vunpack.c.l.b16 %v419
        %v736 = vunpack.c.h.b16 %v419
        %v737 = vunpack.c.l.b16 %v420
        %v738 = vunpack.c.h.b16 %v420
        %v739 = vunpack.c.l.b16 %v421
        %v740 = vunpack.c.h.b16 %v421
        %v741 = vunpack.c.l.b16 %v422
        %v742 = vunpack.c.h.b16 %v422
        %v743 = vunpack.c.l.b16 %v423
        %v744 = vunpack.c.h.b16 %v423
        %v745 = vunpack.c.l.b16 %v424
        %v746 = vunpack.c.h.b16 %v424
        %v747 = vunpack.c.l.b16 %v425
        %v748 = vunpack.c.h.b16 %v425
        %v749 = vunpack.c.l.b16 %v426
        %v750 = vunpack.c.h.b16 %v426
        %v751 = vunpack.c.l.b16 %v427
        %v752 = vunpack.c.h.b16 %v427
        %v753 = vunpack.c.l.b16 %v428
        %v754 = vunpack.c.h.b16 %v428
        %v755 = vunpack.c.l.b16 %v429
        %v756 = vunpack.c.h.b16 %v429
        %v757 = vunpack.c.l.b16 %v430
        %v758 = vunpack.c.h.b16 %v430
        %v759 = vunpack.c.l.b16 %v431
        %v760 = vunpack.c.h.b16 %v431
        %v761 = vunpack.c.l.b16 %v432
        %v762 = vunpack.c.h.b16 %v432
        %v763 = vunpack.c.l.b16 %v433
        %v764 = vunpack.c.h.b16 %v433
        %v765 = vunpack.c.l.b16 %v434
        %v766 = vunpack.c.h.b16 %v434
        %v767 = vunpack.c.l.b16 %v435
        %v768 = vunpack.c.h.b16 %v435
        %v769 = vunpack.c.l.b16 %v436
        %v770 = vunpack.c.h.b16 %v436
        %v771 = vunpack.c.l.b16 %v437
        %v772 = vunpack.c.h.b16 %v437
        %v773 = vunpack.c.l.b16 %v438
        %v774 = vunpack.c.h.b16 %v438
        %v775 = vunpack.c.l.b16 %v439
        %v776 = vunpack.c.h.b16 %v439
        %v777 = vunpack.c.l.b16 %v440
        %v778 = vunpack.c.h.b16 %v440
        %v779 = vunpack.c.l.b16 %v441
        %v780 = vunpack.c.h.b16 %v441
        %v781 = vunpack.c.l.b16 %v442
        %v782 = vunpack.c.h.b16 %v442
        %v783 = vunpack.c.l.b16 %v443
        %v784 = vunpack.c.h.b16 %v443
        %v785 = vunpack.c.l.b16 %v444
        %v786 = vunpack.c.h.b16 %v444
        %v787 = vunpack.c.l.b16 %v445
        %v788 = vunpack.c.h.b16 %v445
        %v789 = vunpack.c.l.b16 %v446
        %v790 = vunpack.c.h.b16 %v446
        %v791 = vunpack.c.l.b16 %v447
        %v792 = vunpack.c.h.b16 %v447
        %v793 = vunpack.c.l.b16 %v448
        %v794 = vunpack.c.h.b16 %v448
        %v795 = vunpack.c.l.b16 %v449
        %v796 = vunpack.c.h.b16 %v449
        %v797 = vunpack.c.l.b16 %v450
        %v798 = vunpack.c.h.b16 %v450
        %v799 = vunpack.c.l.b16 %v451
        %v800 = vunpack.c.h.b16 %v451
        %v801 = vunpack.c.l.b16 %v452
        %v802 = vunpack.c.h.b16 %v452
        %v803 = vunpack.c.l.b16 %v453
        %v804 = vunpack.c.h.b16 %v453
        %v805 = vunpack.c.l.b16 %v454
        %v806 = vunpack.c.h.b16 %v454
        %v807 = vpack.c.b16 %v681, %v679
        %v808 = vpack.c.b16 %v682, %v680
        %v809 = vpack.c.b16 %v685, %v683
        %v810 = vpack.c.b16 %v686, %v684
        %v811 = vpack.c.b16 %v689, %v687
        %v812 = vpack.c.b16 %v690, %v688
        %v813 = vpack.c.b16 %v693, %v691
        %v814 = vpack.c.b16 %v694, %v692
        %v815 = vpack.c.b16 %v697, %v695
        %v816 = vpack.c.b16 %v698, %v696
        %v817 = vpack.c.b16 %v701, %v699
        %v818 = vpack.c.b16 %v702, %v700
        %v819 = vpack.c.b16 %v705, %v703
        %v820 = vpack.c.b16 %v706, %v704
        %v821 = vpack.c.b16 %v709, %v707
        %v822 = vpack.c.b16 %v710, %v708
        %v823 = vpack.c.b16 %v713, %v711
        %v824 = vpack.c.b16 %v714, %v712
        %v825 = vpack.c.b16 %v717, %v715
        %v826 = vpack.c.b16 %v718, %v716
        %v827 = vpack.c.b16 %v721, %v719
        %v828 = vpack.c.b16 %v722, %v720
        %v829 = vpack.c.b16 %v725, %v723
        %v830 = vpack.c.b16 %v726, %v724
        %v831 = vpack.c.b16 %v729, %v727
        %v832 = vpack.c.b16 %v730, %v728
        %v833 = vpack.c.b16 %v733, %v731
        %v834 = vpack.c.b16 %v734, %v732
        %v835 = vpack.c.b16 %v737, %v735
        %v836 = vpack.c.b16 %v738, %v736
        %v837 = vpack.c.b16 %v741, %v739
        %v838 = vpack.c.b16 %v742, %v740
        %v839 = vpack.c.b16 %v745, %v743
        %v840 = vpack.c.b16 %v746, %v744
        %v841 = vpack.c.b16 %v749, %v747
        %v842 = vpack.c.b16 %v750, %v748
        %v843 = vpack.c.b16 %v753, %v751
        %v844 = vpack.c.b16 %v754, %v752
        %v845 = vpack.c.b16 %v757, %v755
        %v846 = vpack.c.b16 %v758, %v756
        %v847 = vpack.c.b16 %v761, %v759
        %v848 = vpack.c.b16 %v762, %v760
        %v849 = vpack.c.b16 %v765, %v763
        %v850 = vpack.c.b16 %v766, %v764
        %v851 = vpack.c.b16 %v769, %v767
        %v852 = vpack.c.b16 %v770, %v768
        %v853 = vpack.c.b16 %v773, %v771
        %v854 = vpack.c.b16 %v774, %v772
        %v855 = vpack.c.b16 %v777, %v775
        %v856 = vpack.c.b16 %v778, %v776
        %v857 = vpack.c.b16 %v781, %v779
        %v858 = vpack.c.b16 %v782, %v780
        %v859 = vpack.c.b16 %v785, %v783
        %v860 = vpack.c.b16 %v786, %v784
        %v861 = vpack.c.b16 %v789, %v787
        %v862 = vpack.c.b16 %v790, %v788
        %v863 = vpack.c.b16 %v793, %v791
        %v864 = vpack.c.b16 %v794, %v792
        %v865 = vpack.c.b16 %v797, %v795
        %v866 = vpack.c.b16 %v798, %v796
        %v867 = vpack.c.b16 %v801, %v799
        %v868 = vpack.c.b16 %v802, %v800
        %v869 = vpack.c.b16 %v805, %v803
        %v870 = vpack.c.b16 %v806, %v804
        %935 = vmatprep.subr.bf16.mxu0 %v808
        %936 = vmatpush1.bf16.msra.mxu0 %v807
        %937 = vmatprep.subr.bf16.mxu0 %v810
        %938 = vmatpush1.bf16.msra.mxu0 %v809
        %939 = vmatprep.subr.bf16.mxu0 %v812
        %940 = vmatpush1.bf16.msra.mxu0 %v811
        %941 = vmatprep.subr.bf16.mxu0 %v814
        %942 = vmatpush1.bf16.msra.mxu0 %v813
        %943 = vmatprep.subr.bf16.mxu0 %v816
        %944 = vmatpush1.bf16.msra.mxu0 %v815
        %945 = vmatprep.subr.bf16.mxu0 %v818
        %946 = vmatpush1.bf16.msra.mxu0 %v817
        %947 = vmatprep.subr.bf16.mxu0 %v820
        %948 = vmatpush1.bf16.msra.mxu0 %v819
        %949 = vmatprep.subr.bf16.mxu0 %v822
        %950 = vmatpush1.bf16.msra.mxu0 %v821
        %951 = vmatprep.subr.bf16.mxu0 %v824
        %952 = vmatpush1.bf16.msra.mxu0 %v823
        %953 = vmatprep.subr.bf16.mxu0 %v826
        %954 = vmatpush1.bf16.msra.mxu0 %v825
        %955 = vmatprep.subr.bf16.mxu0 %v828
        %956 = vmatpush1.bf16.msra.mxu0 %v827
        %957 = vmatprep.subr.bf16.mxu0 %v830
        %958 = vmatpush1.bf16.msra.mxu0 %v829
        %959 = vmatprep.subr.bf16.mxu0 %v832
        %960 = vmatpush1.bf16.msra.mxu0 %v831
        %961 = vmatprep.subr.bf16.mxu0 %v834
        %962 = vmatpush1.bf16.msra.mxu0 %v833
        %963 = vmatprep.subr.bf16.mxu0 %v836
        %964 = vmatpush1.bf16.msra.mxu0 %v835
        %965 = vmatprep.subr.bf16.mxu0 %v838
        %966 = vmatpush1.bf16.msra.mxu0 %v837
        %967 = vmatprep.mubr.bf16.mxu0 %v552
        %968 = vmatmul.mubr.bf16.gmra.mrb[0].mxu0 %v551
        %v969 = vpop.f32.mrb[0].mxu0
        %v970 = vadd.f32 0.0, %v969
        %v971 = vpop.f32.mrb[0].mxu0
        %v972 = vadd.f32 0.0, %v971
        %v973 = vpop.f32.mrb[0].mxu0
        %v974 = vadd.f32 0.0, %v973
        %v975 = vpop.f32.mrb[0].mxu0
        %v976 = vadd.f32 0.0, %v975
        %977 = vmatprep.mubr.bf16.mxu0 %v556
        %978 = vmatmul.mubr.bf16.gmra.mrb[0].mxu0 %v555
        %v979 = vpop.f32.mrb[0].mxu0
        %v980 = vadd.f32 0.0, %v979
        %v981 = vpop.f32.mrb[0].mxu0
        %v982 = vadd.f32 0.0, %v981
        %v983 = vpop.f32.mrb[0].mxu0
        %v984 = vadd.f32 0.0, %v983
        %v985 = vpop.f32.mrb[0].mxu0
        %v986 = vadd.f32 0.0, %v985
        %987 = vmatprep.mubr.bf16.mxu0 %v560
        %988 = vmatmul.mubr.bf16.gmra.mrb[0].mxu0 %v559
        %v989 = vpop.f32.mrb[0].mxu0
        %v990 = vadd.f32 0.0, %v989
        %v991 = vpop.f32.mrb[0].mxu0
        %v992 = vadd.f32 0.0, %v991
        %v993 = vpop.f32.mrb[0].mxu0
        %v994 = vadd.f32 0.0, %v993
        %v995 = vpop.f32.mrb[0].mxu0
        %v996 = vadd.f32 0.0, %v995
        %997 = vmatprep.mubr.bf16.mxu0 %v564
        %998 = vmatmul.mubr.bf16.gmra.mrb[0].mxu0 %v563
        %v999 = vpop.f32.mrb[0].mxu0
        %v1000 = vadd.f32 0.0, %v999
        %v1001 = vpop.f32.mrb[0].mxu0
        %v1002 = vadd.f32 0.0, %v1001
        %v1003 = vpop.f32.mrb[0].mxu0
        %v1004 = vadd.f32 0.0, %v1003
        %v1005 = vpop.f32.mrb[0].mxu0
        %v1006 = vadd.f32 0.0, %v1005
        %1007 = vmatprep.mubr.bf16.mxu0 %v568
        %1008 = vmatmul.mubr.bf16.gmra.mrb[0].mxu0 %v567
        %v1009 = vpop.f32.mrb[0].mxu0
        %v1010 = vadd.f32 0.0, %v1009
        %v1011 = vpop.f32.mrb[0].mxu0
        %v1012 = vadd.f32 0.0, %v1011
        %v1013 = vpop.f32.mrb[0].mxu0
        %v1014 = vadd.f32 0.0, %v1013
        %v1015 = vpop.f32.mrb[0].mxu0
        %v1016 = vadd.f32 0.0, %v1015
        %1017 = vmatprep.mubr.bf16.mxu0 %v572
        %1018 = vmatmul.mubr.bf16.gmra.mrb[0].mxu0 %v571
        %v1019 = vpop.f32.mrb[0].mxu0
        %v1020 = vadd.f32 0.0, %v1019
        %v1021 = vpop.f32.mrb[0].mxu0
        %v1022 = vadd.f32 0.0, %v1021
        %v1023 = vpop.f32.mrb[0].mxu0
        %v1024 = vadd.f32 0.0, %v1023
        %v1025 = vpop.f32.mrb[0].mxu0
        %v1026 = vadd.f32 0.0, %v1025
        %1027 = vmatprep.mubr.bf16.mxu0 %v576
        %1028 = vmatmul.mubr.bf16.gmra.mrb[0].mxu0 %v575
        %v1029 = vpop.f32.mrb[0].mxu0
        %v1030 = vadd.f32 0.0, %v1029
        %v1031 = vpop.f32.mrb[0].mxu0
        %v1032 = vadd.f32 0.0, %v1031
        %v1033 = vpop.f32.mrb[0].mxu0
        %v1034 = vadd.f32 0.0, %v1033
        %v1035 = vpop.f32.mrb[0].mxu0
        %v1036 = vadd.f32 0.0, %v1035
        %1037 = vmatprep.mubr.bf16.mxu0 %v580
        %1038 = vmatmul.mubr.bf16.gmra.mrb[0].mxu0 %v579
        %v1039 = vpop.f32.mrb[0].mxu0
        %v1040 = vadd.f32 0.0, %v1039
        %v1041 = vpop.f32.mrb[0].mxu0
        %v1042 = vadd.f32 0.0, %v1041
        %v1043 = vpop.f32.mrb[0].mxu0
        %v1044 = vadd.f32 0.0, %v1043
        %v1045 = vpop.f32.mrb[0].mxu0
        %v1046 = vadd.f32 0.0, %v1045
        %1047 = vdwg.mxu0
        %1048 = vmatprep.subr.bf16.mxu0 %v840
        %1049 = vmatpush1.bf16.msra.mxu0 %v839
        %1050 = vmatprep.subr.bf16.mxu0 %v842
        %1051 = vmatpush1.bf16.msra.mxu0 %v841
        %1052 = vmatprep.subr.bf16.mxu0 %v844
        %1053 = vmatpush1.bf16.msra.mxu0 %v843
        %1054 = vmatprep.subr.bf16.mxu0 %v846
        %1055 = vmatpush1.bf16.msra.mxu0 %v845
        %1056 = vmatprep.subr.bf16.mxu0 %v848
        %1057 = vmatpush1.bf16.msra.mxu0 %v847
        %1058 = vmatprep.subr.bf16.mxu0 %v850
        %1059 = vmatpush1.bf16.msra.mxu0 %v849
        %1060 = vmatprep.subr.bf16.mxu0 %v852
        %1061 = vmatpush1.bf16.msra.mxu0 %v851
        %1062 = vmatprep.subr.bf16.mxu0 %v854
        %1063 = vmatpush1.bf16.msra.mxu0 %v853
        %1064 = vmatprep.subr.bf16.mxu0 %v856
        %1065 = vmatpush1.bf16.msra.mxu0 %v855
        %1066 = vmatprep.subr.bf16.mxu0 %v858
        %1067 = vmatpush1.bf16.msra.mxu0 %v857
        %1068 = vmatprep.subr.bf16.mxu0 %v860
        %1069 = vmatpush1.bf16.msra.mxu0 %v859
        %1070 = vmatprep.subr.bf16.mxu0 %v862
        %1071 = vmatpush1.bf16.msra.mxu0 %v861
        %1072 = vmatprep.subr.bf16.mxu0 %v864
        %1073 = vmatpush1.bf16.msra.mxu0 %v863
        %1074 = vmatprep.subr.bf16.mxu0 %v866
        %1075 = vmatpush1.bf16.msra.mxu0 %v865
        %1076 = vmatprep.subr.bf16.mxu0 %v868
        %1077 = vmatpush1.bf16.msra.mxu0 %v867
        %1078 = vmatprep.subr.bf16.mxu0 %v870
        %1079 = vmatpush1.bf16.msra.mxu0 %v869
        %1080 = vmatprep.mubr.bf16.mxu0 %v554
        %1081 = vmatmul.mubr.bf16.gmra.mrb[0].mxu0 %v553
        %v1082 = vpop.f32.mrb[0].mxu0
        %v1083 = vadd.f32 %v970, %v1082
        %v1084 = vpop.f32.mrb[0].mxu0
        %v1085 = vadd.f32 %v972, %v1084
        %v1086 = vpop.f32.mrb[0].mxu0
        %v1087 = vadd.f32 %v974, %v1086
        %v1088 = vpop.f32.mrb[0].mxu0
        %v1089 = vadd.f32 %v976, %v1088
        %1090 = vmatprep.mubr.bf16.mxu0 %v558
        %1091 = vmatmul.mubr.bf16.gmra.mrb[0].mxu0 %v557
        %v1092 = vpop.f32.mrb[0].mxu0
        %v1093 = vadd.f32 %v980, %v1092
        %v1094 = vpop.f32.mrb[0].mxu0
        %v1095 = vadd.f32 %v982, %v1094
        %v1096 = vpop.f32.mrb[0].mxu0
        %v1097 = vadd.f32 %v984, %v1096
        %v1098 = vpop.f32.mrb[0].mxu0
        %v1099 = vadd.f32 %v986, %v1098
        %1100 = vmatprep.mubr.bf16.mxu0 %v562
        %1101 = vmatmul.mubr.bf16.gmra.mrb[0].mxu0 %v561
        %v1102 = vpop.f32.mrb[0].mxu0
        %v1103 = vadd.f32 %v990, %v1102
        %v1104 = vpop.f32.mrb[0].mxu0
        %v1105 = vadd.f32 %v992, %v1104
        %v1106 = vpop.f32.mrb[0].mxu0
        %v1107 = vadd.f32 %v994, %v1106
        %v1108 = vpop.f32.mrb[0].mxu0
        %v1109 = vadd.f32 %v996, %v1108
        %1110 = vmatprep.mubr.bf16.mxu0 %v566
        %1111 = vmatmul.mubr.bf16.gmra.mrb[0].mxu0 %v565
        %v1112 = vpop.f32.mrb[0].mxu0
        %v1113 = vadd.f32 %v1000, %v1112
        %v1114 = vpop.f32.mrb[0].mxu0
        %v1115 = vadd.f32 %v1002, %v1114
        %v1116 = vpop.f32.mrb[0].mxu0
        %v1117 = vadd.f32 %v1004, %v1116
        %v1118 = vpop.f32.mrb[0].mxu0
        %v1119 = vadd.f32 %v1006, %v1118
        %1120 = vmatprep.mubr.bf16.mxu0 %v570
        %1121 = vmatmul.mubr.bf16.gmra.mrb[0].mxu0 %v569
        %v1122 = vpop.f32.mrb[0].mxu0
        %v1123 = vadd.f32 %v1010, %v1122
        %v1124 = vpop.f32.mrb[0].mxu0
        %v1125 = vadd.f32 %v1012, %v1124
        %v1126 = vpop.f32.mrb[0].mxu0
        %v1127 = vadd.f32 %v1014, %v1126
        %v1128 = vpop.f32.mrb[0].mxu0
        %v1129 = vadd.f32 %v1016, %v1128
        %1130 = vmatprep.mubr.bf16.mxu0 %v574
        %1131 = vmatmul.mubr.bf16.gmra.mrb[0].mxu0 %v573
        %v1132 = vpop.f32.mrb[0].mxu0
        %v1133 = vadd.f32 %v1020, %v1132
        %v1134 = vpop.f32.mrb[0].mxu0
        %v1135 = vadd.f32 %v1022, %v1134
        %v1136 = vpop.f32.mrb[0].mxu0
        %v1137 = vadd.f32 %v1024, %v1136
        %v1138 = vpop.f32.mrb[0].mxu0
        %v1139 = vadd.f32 %v1026, %v1138
        %1140 = vmatprep.mubr.bf16.mxu0 %v578
        %1141 = vmatmul.mubr.bf16.gmra.mrb[0].mxu0 %v577
        %v1142 = vpop.f32.mrb[0].mxu0
        %v1143 = vadd.f32 %v1030, %v1142
        %v1144 = vpop.f32.mrb[0].mxu0
        %v1145 = vadd.f32 %v1032, %v1144
        %v1146 = vpop.f32.mrb[0].mxu0
        %v1147 = vadd.f32 %v1034, %v1146
        %v1148 = vpop.f32.mrb[0].mxu0
        %v1149 = vadd.f32 %v1036, %v1148
        %1150 = vmatprep.mubr.bf16.mxu0 %v582
        %1151 = vmatmul.mubr.bf16.gmra.mrb[0].mxu0 %v581
        %v1152 = vpop.f32.mrb[0].mxu0
        %v1153 = vadd.f32 %v1040, %v1152
        %v1154 = vpop.f32.mrb[0].mxu0
        %v1155 = vadd.f32 %v1042, %v1154
        %v1156 = vpop.f32.mrb[0].mxu0
        %v1157 = vadd.f32 %v1044, %v1156
        %v1158 = vpop.f32.mrb[0].mxu0
        %v1159 = vadd.f32 %v1046, %v1158
        %1160 = vdwg.mxu0
        %v1161 = vadd.f32 %v327, %v1083
        %v1162 = vadd.f32 %v328, %v1085
        %v1163 = vadd.f32 %v329, %v1087
        %v1164 = vadd.f32 %v330, %v1089
        %v1165 = vadd.f32 %v331, %v1093
        %v1166 = vadd.f32 %v332, %v1095
        %v1167 = vadd.f32 %v333, %v1097
        %v1168 = vadd.f32 %v334, %v1099
        %v1169 = vadd.f32 %v335, %v1103
        %v1170 = vadd.f32 %v336, %v1105
        %v1171 = vadd.f32 %v337, %v1107
        %v1172 = vadd.f32 %v338, %v1109
        %v1173 = vadd.f32 %v339, %v1113
        %v1174 = vadd.f32 %v340, %v1115
        %v1175 = vadd.f32 %v341, %v1117
        %v1176 = vadd.f32 %v342, %v1119
        %v1177 = vadd.f32 %v343, %v1123
        %v1178 = vadd.f32 %v344, %v1125
        %v1179 = vadd.f32 %v345, %v1127
        %v1180 = vadd.f32 %v346, %v1129
        %v1181 = vadd.f32 %v347, %v1133
        %v1182 = vadd.f32 %v348, %v1135
        %v1183 = vadd.f32 %v349, %v1137
        %v1184 = vadd.f32 %v350, %v1139
        %v1185 = vadd.f32 %v351, %v1143
        %v1186 = vadd.f32 %v352, %v1145
        %v1187 = vadd.f32 %v353, %v1147
        %v1188 = vadd.f32 %v354, %v1149
        %v1189 = vadd.f32 %v355, %v1153
        %v1190 = vadd.f32 %v356, %v1155
        %v1191 = vadd.f32 %v357, %v1157
        %v1192 = vadd.f32 %v358, %v1159
        %1193 = vst [vmem:[#allocation2] sm:$0xff] %v1161
        %1194 = vst [vmem:[#allocation2 + $0x8] sm:$0xff] %v1162
        %1195 = vst [vmem:[#allocation2 + $0x10] sm:$0xff] %v1163
        %1196 = vst [vmem:[#allocation2 + $0x18] sm:$0xff] %v1164
        %1197 = vst [vmem:[#allocation2 + $0x20] sm:$0xff] %v1165
        %1198 = vst [vmem:[#allocation2 + $0x28] sm:$0xff] %v1166
        %1199 = vst [vmem:[#allocation2 + $0x30] sm:$0xff] %v1167
        %1200 = vst [vmem:[#allocation2 + $0x38] sm:$0xff] %v1168
        %1201 = vst [vmem:[#allocation2 + $0x40] sm:$0xff] %v1169
        %1202 = vst [vmem:[#allocation2 + $0x48] sm:$0xff] %v1170
        %1203 = vst [vmem:[#allocation2 + $0x50] sm:$0xff] %v1171
        %1204 = vst [vmem:[#allocation2 + $0x58] sm:$0xff] %v1172
        %1205 = vst [vmem:[#allocation2 + $0x60] sm:$0xff] %v1173
        %1206 = vst [vmem:[#allocation2 + $0x68] sm:$0xff] %v1174
        %1207 = vst [vmem:[#allocation2 + $0x70] sm:$0xff] %v1175
        %1208 = vst [vmem:[#allocation2 + $0x78] sm:$0xff] %v1176
        %1209 = vst [vmem:[#allocation2 + $0x80] sm:$0xff] %v1177
        %1210 = vst [vmem:[#allocation2 + $0x88] sm:$0xff] %v1178
        %1211 = vst [vmem:[#allocation2 + $0x90] sm:$0xff] %v1179
        %1212 = vst [vmem:[#allocation2 + $0x98] sm:$0xff] %v1180
        %1213 = vst [vmem:[#allocation2 + $0xa0] sm:$0xff] %v1181
        %1214 = vst [vmem:[#allocation2 + $0xa8] sm:$0xff] %v1182
        %1215 = vst [vmem:[#allocation2 + $0xb0] sm:$0xff] %v1183
        %1216 = vst [vmem:[#allocation2 + $0xb8] sm:$0xff] %v1184
        %1217 = vst [vmem:[#allocation2 + $0xc0] sm:$0xff] %v1185
        %1218 = vst [vmem:[#allocation2 + $0xc8] sm:$0xff] %v1186
        %1219 = vst [vmem:[#allocation2 + $0xd0] sm:$0xff] %v1187
        %1220 = vst [vmem:[#allocation2 + $0xd8] sm:$0xff] %v1188
        %1221 = vst [vmem:[#allocation2 + $0xe0] sm:$0xff] %v1189
        %1222 = vst [vmem:[#allocation2 + $0xe8] sm:$0xff] %v1190
        %1223 = vst [vmem:[#allocation2 + $0xf0] sm:$0xff] %v1191
        %1224 = vst [vmem:[#allocation2 + $0xf8] sm:$0xff] %v1192
        %p1225 = scmp.eq.s32.totalorder %s15, 3
        // Predicated region
        $region64: #{discriminator_forward.7} parent=54 // pred_check
          %p1226 = pneg %p1225
        $region65: #{discriminator_forward.7} parent=54 // pred_check_branch
          %1228 = sbr.rel (%p1226) target = $region67
        $region66: #{discriminator_forward.7} parent=54 // pred_region
          %v1229 = vld [vmem:[#allocation2] sm:$0xff]
          %v1230 = vld [vmem:[#allocation2 + $0x8] sm:$0xff]
          %v1231 = vld [vmem:[#allocation2 + $0x10] sm:$0xff]
          %v1232 = vld [vmem:[#allocation2 + $0x18] sm:$0xff]
          %v1233 = vld [vmem:[#allocation2 + $0x20] sm:$0xff]
          %v1234 = vld [vmem:[#allocation2 + $0x28] sm:$0xff]
          %v1235 = vld [vmem:[#allocation2 + $0x30] sm:$0xff]
          %v1236 = vld [vmem:[#allocation2 + $0x38] sm:$0xff]
          %v1237 = vld [vmem:[#allocation2 + $0x40] sm:$0xff]
          %v1238 = vld [vmem:[#allocation2 + $0x48] sm:$0xff]
          %v1239 = vld [vmem:[#allocation2 + $0x50] sm:$0xff]
          %v1240 = vld [vmem:[#allocation2 + $0x58] sm:$0xff]
          %v1241 = vld [vmem:[#allocation2 + $0x60] sm:$0xff]
          %v1242 = vld [vmem:[#allocation2 + $0x68] sm:$0xff]
          %v1243 = vld [vmem:[#allocation2 + $0x70] sm:$0xff]
          %v1244 = vld [vmem:[#allocation2 + $0x78] sm:$0xff]
          %v1245 = vld [vmem:[#allocation2 + $0x80] sm:$0xff]
          %v1246 = vld [vmem:[#allocation2 + $0x88] sm:$0xff]
          %v1247 = vld [vmem:[#allocation2 + $0x90] sm:$0xff]
          %v1248 = vld [vmem:[#allocation2 + $0x98] sm:$0xff]
          %v1249 = vld [vmem:[#allocation2 + $0xa0] sm:$0xff]
          %v1250 = vld [vmem:[#allocation2 + $0xa8] sm:$0xff]
          %v1251 = vld [vmem:[#allocation2 + $0xb0] sm:$0xff]
          %v1252 = vld [vmem:[#allocation2 + $0xb8] sm:$0xff]
          %v1253 = vld [vmem:[#allocation2 + $0xc0] sm:$0xff]
          %v1254 = vld [vmem:[#allocation2 + $0xc8] sm:$0xff]
          %v1255 = vld [vmem:[#allocation2 + $0xd0] sm:$0xff]
          %v1256 = vld [vmem:[#allocation2 + $0xd8] sm:$0xff]
          %v1257 = vld [vmem:[#allocation2 + $0xe0] sm:$0xff]
          %v1258 = vld [vmem:[#allocation2 + $0xe8] sm:$0xff]
          %v1259 = vld [vmem:[#allocation2 + $0xf0] sm:$0xff]
          %v1260 = vld [vmem:[#allocation2 + $0xf8] sm:$0xff]
          %v1261 = vadd.f32 %v1229, %v1231
          %v1262 = vadd.f32 %v1261, %v1233
          %v1263 = vadd.f32 %v1262, %v1235
          %v1264 = vadd.f32 %v1263, %v1237
          %v1265 = vadd.f32 %v1264, %v1239
          %v1266 = vadd.f32 %v1265, %v1241
          %v1267 = vadd.f32 %v1266, %v1243
          %v1268 = vadd.f32 %v1267, %v1245
          %v1269 = vadd.f32 %v1268, %v1247
          %v1270 = vadd.f32 %v1269, %v1249
          %v1271 = vadd.f32 %v1270, %v1251
          %v1272 = vadd.f32 %v1271, %v1253
          %v1273 = vadd.f32 %v1272, %v1255
          %v1274 = vadd.f32 %v1273, %v1257
          %v1275 = vadd.f32 %v1274, %v1259
          %v1276 = vrot.slane %v1275, 4
          %v1277 = vadd.f32 %v1275, %v1276
          %v1278 = vrot.slane %v1277, 2
          %v1279 = vadd.f32 %v1277, %v1278
          %v1280 = vrot.slane %v1279, 1
          %v1281 = vadd.f32 %v1279, %v1280
          %v1282 = vadd.f32 %v1230, %v1232
          %v1283 = vadd.f32 %v1282, %v1234
          %v1284 = vadd.f32 %v1283, %v1236
          %v1285 = vadd.f32 %v1284, %v1238
          %v1286 = vadd.f32 %v1285, %v1240
          %v1287 = vadd.f32 %v1286, %v1242
          %v1288 = vadd.f32 %v1287, %v1244
          %v1289 = vadd.f32 %v1288, %v1246
          %v1290 = vadd.f32 %v1289, %v1248
          %v1291 = vadd.f32 %v1290, %v1250
          %v1292 = vadd.f32 %v1291, %v1252
          %v1293 = vadd.f32 %v1292, %v1254
          %v1294 = vadd.f32 %v1293, %v1256
          %v1295 = vadd.f32 %v1294, %v1258
          %v1296 = vadd.f32 %v1295, %v1260
          %v1297 = vrot.slane %v1296, 4
          %v1298 = vadd.f32 %v1296, %v1297
          %v1299 = vrot.slane %v1298, 2
          %v1300 = vadd.f32 %v1298, %v1299
          %v1301 = vrot.slane %v1300, 1
          %v1302 = vadd.f32 %v1300, %v1301
          %v1303 = vrcp.pop 128.0
          %v1304 = vmul.f32 %v1281, %v1303
          %v1305 = vmul.f32 %v1302, %v1303
          %v1306 = vsub.f32 %v1229, %v1304
          %v1307 = vsub.f32 %v1230, %v1305
          %v1308 = vsub.f32 %v1231, %v1304
          %v1309 = vsub.f32 %v1232, %v1305
          %v1310 = vsub.f32 %v1233, %v1304
          %v1311 = vsub.f32 %v1234, %v1305
          %v1312 = vsub.f32 %v1235, %v1304
          %v1313 = vsub.f32 %v1236, %v1305
          %v1314 = vsub.f32 %v1237, %v1304
          %v1315 = vsub.f32 %v1238, %v1305
          %v1316 = vsub.f32 %v1239, %v1304
          %v1317 = vsub.f32 %v1240, %v1305
          %v1318 = vsub.f32 %v1241, %v1304
          %v1319 = vsub.f32 %v1242, %v1305
          %v1320 = vsub.f32 %v1243, %v1304
          %v1321 = vsub.f32 %v1244, %v1305
          %v1322 = vsub.f32 %v1245, %v1304
          %v1323 = vsub.f32 %v1246, %v1305
          %v1324 = vsub.f32 %v1247, %v1304
          %v1325 = vsub.f32 %v1248, %v1305
          %v1326 = vsub.f32 %v1249, %v1304
          %v1327 = vsub.f32 %v1250, %v1305
          %v1328 = vsub.f32 %v1251, %v1304
          %v1329 = vsub.f32 %v1252, %v1305
          %v1330 = vsub.f32 %v1253, %v1304
          %v1331 = vsub.f32 %v1254, %v1305
          %v1332 = vsub.f32 %v1255, %v1304
          %v1333 = vsub.f32 %v1256, %v1305
          %v1334 = vsub.f32 %v1257, %v1304
          %v1335 = vsub.f32 %v1258, %v1305
          %v1336 = vsub.f32 %v1259, %v1304
          %v1337 = vsub.f32 %v1260, %v1305
          %v1338 = vmul.f32 %v1306, %v1306
          %v1339 = vmul.f32 %v1307, %v1307
          %v1340 = vmul.f32 %v1308, %v1308
          %v1341 = vmul.f32 %v1309, %v1309
          %v1342 = vmul.f32 %v1310, %v1310
          %v1343 = vmul.f32 %v1311, %v1311
          %v1344 = vmul.f32 %v1312, %v1312
          %v1345 = vmul.f32 %v1313, %v1313
          %v1346 = vmul.f32 %v1314, %v1314
          %v1347 = vmul.f32 %v1315, %v1315
          %v1348 = vmul.f32 %v1316, %v1316
          %v1349 = vmul.f32 %v1317, %v1317
          %v1350 = vmul.f32 %v1318, %v1318
          %v1351 = vmul.f32 %v1319, %v1319
          %v1352 = vmul.f32 %v1320, %v1320
          %v1353 = vmul.f32 %v1321, %v1321
          %v1354 = vmul.f32 %v1322, %v1322
          %v1355 = vmul.f32 %v1323, %v1323
          %v1356 = vmul.f32 %v1324, %v1324
          %v1357 = vmul.f32 %v1325, %v1325
          %v1358 = vmul.f32 %v1326, %v1326
          %v1359 = vmul.f32 %v1327, %v1327
          %v1360 = vmul.f32 %v1328, %v1328
          %v1361 = vmul.f32 %v1329, %v1329
          %v1362 = vmul.f32 %v1330, %v1330
          %v1363 = vmul.f32 %v1331, %v1331
          %v1364 = vmul.f32 %v1332, %v1332
          %v1365 = vmul.f32 %v1333, %v1333
          %v1366 = vmul.f32 %v1334, %v1334
          %v1367 = vmul.f32 %v1335, %v1335
          %v1368 = vmul.f32 %v1336, %v1336
          %v1369 = vmul.f32 %v1337, %v1337
          %v1370 = vadd.f32 %v1338, %v1340
          %v1371 = vadd.f32 %v1370, %v1342
          %v1372 = vadd.f32 %v1371, %v1344
          %v1373 = vadd.f32 %v1372, %v1346
          %v1374 = vadd.f32 %v1373, %v1348
          %v1375 = vadd.f32 %v1374, %v1350
          %v1376 = vadd.f32 %v1375, %v1352
          %v1377 = vadd.f32 %v1376, %v1354
          %v1378 = vadd.f32 %v1377, %v1356
          %v1379 = vadd.f32 %v1378, %v1358
          %v1380 = vadd.f32 %v1379, %v1360
          %v1381 = vadd.f32 %v1380, %v1362
          %v1382 = vadd.f32 %v1381, %v1364
          %v1383 = vadd.f32 %v1382, %v1366
          %v1384 = vadd.f32 %v1383, %v1368
          %v1385 = vrot.slane %v1384, 4
          %v1386 = vadd.f32 %v1384, %v1385
          %v1387 = vrot.slane %v1386, 2
          %v1388 = vadd.f32 %v1386, %v1387
          %v1389 = vrot.slane %v1388, 1
          %v1390 = vadd.f32 %v1388, %v1389
          %v1391 = vadd.f32 %v1339, %v1341
          %v1392 = vadd.f32 %v1391, %v1343
          %v1393 = vadd.f32 %v1392, %v1345
          %v1394 = vadd.f32 %v1393, %v1347
          %v1395 = vadd.f32 %v1394, %v1349
          %v1396 = vadd.f32 %v1395, %v1351
          %v1397 = vadd.f32 %v1396, %v1353
          %v1398 = vadd.f32 %v1397, %v1355
          %v1399 = vadd.f32 %v1398, %v1357
          %v1400 = vadd.f32 %v1399, %v1359
          %v1401 = vadd.f32 %v1400, %v1361
          %v1402 = vadd.f32 %v1401, %v1363
          %v1403 = vadd.f32 %v1402, %v1365
          %v1404 = vadd.f32 %v1403, %v1367
          %v1405 = vadd.f32 %v1404, %v1369
          %v1406 = vrot.slane %v1405, 4
          %v1407 = vadd.f32 %v1405, %v1406
          %v1408 = vrot.slane %v1407, 2
          %v1409 = vadd.f32 %v1407, %v1408
          %v1410 = vrot.slane %v1409, 1
          %v1411 = vadd.f32 %v1409, %v1410
          %v1412 = vmul.f32 %v1390, %v1303
          %v1413 = vmul.f32 %v1411, %v1303
          %v1414 = vadd.f32 %v1412, 1e-05
          %v1415 = vadd.f32 %v1413, 1e-05
          %v1416 = vrsqrt.pop %v1414
          %v1417 = vrsqrt.pop %v1415
          %v1418 = vmul.f32 %v1306, %v1416
          %v1419 = vmul.f32 %v1307, %v1417
          %v1420 = vmul.f32 %v1308, %v1416
          %v1421 = vmul.f32 %v1309, %v1417
          %v1422 = vmul.f32 %v1310, %v1416
          %v1423 = vmul.f32 %v1311, %v1417
          %v1424 = vmul.f32 %v1312, %v1416
          %v1425 = vmul.f32 %v1313, %v1417
          %v1426 = vmul.f32 %v1314, %v1416
          %v1427 = vmul.f32 %v1315, %v1417
          %v1428 = vmul.f32 %v1316, %v1416
          %v1429 = vmul.f32 %v1317, %v1417
          %v1430 = vmul.f32 %v1318, %v1416
          %v1431 = vmul.f32 %v1319, %v1417
          %v1432 = vmul.f32 %v1320, %v1416
          %v1433 = vmul.f32 %v1321, %v1417
          %v1434 = vmul.f32 %v1322, %v1416
          %v1435 = vmul.f32 %v1323, %v1417
          %v1436 = vmul.f32 %v1324, %v1416
          %v1437 = vmul.f32 %v1325, %v1417
          %v1438 = vmul.f32 %v1326, %v1416
          %v1439 = vmul.f32 %v1327, %v1417
          %v1440 = vmul.f32 %v1328, %v1416
          %v1441 = vmul.f32 %v1329, %v1417
          %v1442 = vmul.f32 %v1330, %v1416
          %v1443 = vmul.f32 %v1331, %v1417
          %v1444 = vmul.f32 %v1332, %v1416
          %v1445 = vmul.f32 %v1333, %v1417
          %v1446 = vmul.f32 %v1334, %v1416
          %v1447 = vmul.f32 %v1335, %v1417
          %v1448 = vmul.f32 %v1336, %v1416
          %v1449 = vmul.f32 %v1337, %v1417
          %v1450 = vld [vmem:[%s2] sm:$0x3]
          %v1452 = vlaneseq
          %v1453 = vshrl.u32 %v1452, 7
          %v1454 = vsub.s32 0, %v1453
          %v1455 = vrot.slane %v1450, %v1454
          %v1456 = vlaneseq
          %v1457 = vshrl.u32 %v1456, 7
          %v1458 = vsub.s32 1, %v1457
          %v1459 = vrot.slane %v1450, %v1458
          %v1462 = vmul.f32 %v1418, %v1455
          %v1463 = vmul.f32 %v1419, %v1459
          %v1464 = vmul.f32 %v1420, %v1455
          %v1465 = vmul.f32 %v1421, %v1459
          %v1466 = vmul.f32 %v1422, %v1455
          %v1467 = vmul.f32 %v1423, %v1459
          %v1468 = vmul.f32 %v1424, %v1455
          %v1469 = vmul.f32 %v1425, %v1459
          %v1470 = vmul.f32 %v1426, %v1455
          %v1471 = vmul.f32 %v1427, %v1459
          %v1472 = vmul.f32 %v1428, %v1455
          %v1473 = vmul.f32 %v1429, %v1459
          %v1474 = vmul.f32 %v1430, %v1455
          %v1475 = vmul.f32 %v1431, %v1459
          %v1476 = vmul.f32 %v1432, %v1455
          %v1477 = vmul.f32 %v1433, %v1459
          %v1478 = vmul.f32 %v1434, %v1455
          %v1479 = vmul.f32 %v1435, %v1459
          %v1480 = vmul.f32 %v1436, %v1455
          %v1481 = vmul.f32 %v1437, %v1459
          %v1482 = vmul.f32 %v1438, %v1455
          %v1483 = vmul.f32 %v1439, %v1459
          %v1484 = vmul.f32 %v1440, %v1455
          %v1485 = vmul.f32 %v1441, %v1459
          %v1486 = vmul.f32 %v1442, %v1455
          %v1487 = vmul.f32 %v1443, %v1459
          %v1488 = vmul.f32 %v1444, %v1455
          %v1489 = vmul.f32 %v1445, %v1459
          %v1490 = vmul.f32 %v1446, %v1455
          %v1491 = vmul.f32 %v1447, %v1459
          %v1492 = vmul.f32 %v1448, %v1455
          %v1493 = vmul.f32 %v1449, %v1459
          %v1494 = vld [vmem:[%s3] sm:$0x3]
          %v1496 = vlaneseq
          %v1497 = vshrl.u32 %v1496, 7
          %v1498 = vsub.s32 0, %v1497
          %v1499 = vrot.slane %v1494, %v1498
          %v1500 = vlaneseq
          %v1501 = vshrl.u32 %v1500, 7
          %v1502 = vsub.s32 1, %v1501
          %v1503 = vrot.slane %v1494, %v1502
          %v1506 = vadd.f32 %v1462, %v1499
          %v1507 = vadd.f32 %v1463, %v1503
          %v1508 = vadd.f32 %v1464, %v1499
          %v1509 = vadd.f32 %v1465, %v1503
          %v1510 = vadd.f32 %v1466, %v1499
          %v1511 = vadd.f32 %v1467, %v1503
          %v1512 = vadd.f32 %v1468, %v1499
          %v1513 = vadd.f32 %v1469, %v1503
          %v1514 = vadd.f32 %v1470, %v1499
          %v1515 = vadd.f32 %v1471, %v1503
          %v1516 = vadd.f32 %v1472, %v1499
          %v1517 = vadd.f32 %v1473, %v1503
          %v1518 = vadd.f32 %v1474, %v1499
          %v1519 = vadd.f32 %v1475, %v1503
          %v1520 = vadd.f32 %v1476, %v1499
          %v1521 = vadd.f32 %v1477, %v1503
          %v1522 = vadd.f32 %v1478, %v1499
          %v1523 = vadd.f32 %v1479, %v1503
          %v1524 = vadd.f32 %v1480, %v1499
          %v1525 = vadd.f32 %v1481, %v1503
          %v1526 = vadd.f32 %v1482, %v1499
          %v1527 = vadd.f32 %v1483, %v1503
          %v1528 = vadd.f32 %v1484, %v1499
          %v1529 = vadd.f32 %v1485, %v1503
          %v1530 = vadd.f32 %v1486, %v1499
          %v1531 = vadd.f32 %v1487, %v1503
          %v1532 = vadd.f32 %v1488, %v1499
          %v1533 = vadd.f32 %v1489, %v1503
          %v1534 = vadd.f32 %v1490, %v1499
          %v1535 = vadd.f32 %v1491, %v1503
          %v1536 = vadd.f32 %v1492, %v1499
          %v1537 = vadd.f32 %v1493, %v1503
          %vm1538 = vcmp.ge.f32.partialorder %v1506, 0.0
          %vm1539 = vcmp.ge.f32.partialorder %v1507, 0.0
          %vm1540 = vcmp.ge.f32.partialorder %v1508, 0.0
          %vm1541 = vcmp.ge.f32.partialorder %v1509, 0.0
          %vm1542 = vcmp.ge.f32.partialorder %v1510, 0.0
          %vm1543 = vcmp.ge.f32.partialorder %v1511, 0.0
          %vm1544 = vcmp.ge.f32.partialorder %v1512, 0.0
          %vm1545 = vcmp.ge.f32.partialorder %v1513, 0.0
          %vm1546 = vcmp.ge.f32.partialorder %v1514, 0.0
          %vm1547 = vcmp.ge.f32.partialorder %v1515, 0.0
          %vm1548 = vcmp.ge.f32.partialorder %v1516, 0.0
          %vm1549 = vcmp.ge.f32.partialorder %v1517, 0.0
          %vm1550 = vcmp.ge.f32.partialorder %v1518, 0.0
          %vm1551 = vcmp.ge.f32.partialorder %v1519, 0.0
          %vm1552 = vcmp.ge.f32.partialorder %v1520, 0.0
          %vm1553 = vcmp.ge.f32.partialorder %v1521, 0.0
          %vm1554 = vcmp.ge.f32.partialorder %v1522, 0.0
          %vm1555 = vcmp.ge.f32.partialorder %v1523, 0.0
          %vm1556 = vcmp.ge.f32.partialorder %v1524, 0.0
          %vm1557 = vcmp.ge.f32.partialorder %v1525, 0.0
          %vm1558 = vcmp.ge.f32.partialorder %v1526, 0.0
          %vm1559 = vcmp.ge.f32.partialorder %v1527, 0.0
          %vm1560 = vcmp.ge.f32.partialorder %v1528, 0.0
          %vm1561 = vcmp.ge.f32.partialorder %v1529, 0.0
          %vm1562 = vcmp.ge.f32.partialorder %v1530, 0.0
          %vm1563 = vcmp.ge.f32.partialorder %v1531, 0.0
          %vm1564 = vcmp.ge.f32.partialorder %v1532, 0.0
          %vm1565 = vcmp.ge.f32.partialorder %v1533, 0.0
          %vm1566 = vcmp.ge.f32.partialorder %v1534, 0.0
          %vm1567 = vcmp.ge.f32.partialorder %v1535, 0.0
          %vm1568 = vcmp.ge.f32.partialorder %v1536, 0.0
          %vm1569 = vcmp.ge.f32.partialorder %v1537, 0.0
          %v1570 = vmul.f32 %v1506, 0.2
          %v1571 = vmul.f32 %v1507, 0.2
          %v1572 = vmul.f32 %v1508, 0.2
          %v1573 = vmul.f32 %v1509, 0.2
          %v1574 = vmul.f32 %v1510, 0.2
          %v1575 = vmul.f32 %v1511, 0.2
          %v1576 = vmul.f32 %v1512, 0.2
          %v1577 = vmul.f32 %v1513, 0.2
          %v1578 = vmul.f32 %v1514, 0.2
          %v1579 = vmul.f32 %v1515, 0.2
          %v1580 = vmul.f32 %v1516, 0.2
          %v1581 = vmul.f32 %v1517, 0.2
          %v1582 = vmul.f32 %v1518, 0.2
          %v1583 = vmul.f32 %v1519, 0.2
          %v1584 = vmul.f32 %v1520, 0.2
          %v1585 = vmul.f32 %v1521, 0.2
          %v1586 = vmul.f32 %v1522, 0.2
          %v1587 = vmul.f32 %v1523, 0.2
          %v1588 = vmul.f32 %v1524, 0.2
          %v1589 = vmul.f32 %v1525, 0.2
          %v1590 = vmul.f32 %v1526, 0.2
          %v1591 = vmul.f32 %v1527, 0.2
          %v1592 = vmul.f32 %v1528, 0.2
          %v1593 = vmul.f32 %v1529, 0.2
          %v1594 = vmul.f32 %v1530, 0.2
          %v1595 = vmul.f32 %v1531, 0.2
          %v1596 = vmul.f32 %v1532, 0.2
          %v1597 = vmul.f32 %v1533, 0.2
          %v1598 = vmul.f32 %v1534, 0.2
          %v1599 = vmul.f32 %v1535, 0.2
          %v1600 = vmul.f32 %v1536, 0.2
          %v1601 = vmul.f32 %v1537, 0.2
          %v1602 = vsel %vm1538, %v1506, %v1570
          %v1603 = vsel %vm1539, %v1507, %v1571
          %v1604 = vsel %vm1540, %v1508, %v1572
          %v1605 = vsel %vm1541, %v1509, %v1573
          %v1606 = vsel %vm1542, %v1510, %v1574
          %v1607 = vsel %vm1543, %v1511, %v1575
          %v1608 = vsel %vm1544, %v1512, %v1576
          %v1609 = vsel %vm1545, %v1513, %v1577
          %v1610 = vsel %vm1546, %v1514, %v1578
          %v1611 = vsel %vm1547, %v1515, %v1579
          %v1612 = vsel %vm1548, %v1516, %v1580
          %v1613 = vsel %vm1549, %v1517, %v1581
          %v1614 = vsel %vm1550, %v1518, %v1582
          %v1615 = vsel %vm1551, %v1519, %v1583
          %v1616 = vsel %vm1552, %v1520, %v1584
          %v1617 = vsel %vm1553, %v1521, %v1585
          %v1618 = vsel %vm1554, %v1522, %v1586
          %v1619 = vsel %vm1555, %v1523, %v1587
          %v1620 = vsel %vm1556, %v1524, %v1588
          %v1621 = vsel %vm1557, %v1525, %v1589
          %v1622 = vsel %vm1558, %v1526, %v1590
          %v1623 = vsel %vm1559, %v1527, %v1591
          %v1624 = vsel %vm1560, %v1528, %v1592
          %v1625 = vsel %vm1561, %v1529, %v1593
          %v1626 = vsel %vm1562, %v1530, %v1594
          %v1627 = vsel %vm1563, %v1531, %v1595
          %v1628 = vsel %vm1564, %v1532, %v1596
          %v1629 = vsel %vm1565, %v1533, %v1597
          %v1630 = vsel %vm1566, %v1534, %v1598
          %v1631 = vsel %vm1567, %v1535, %v1599
          %v1632 = vsel %vm1568, %v1536, %v1600
          %v1633 = vsel %vm1569, %v1537, %v1601
          %v1634 = vpack.c.bf16 %v1604, %v1602
          %v1635 = vpack.c.bf16 %v1605, %v1603
          %v1636 = vpack.c.bf16 %v1608, %v1606
          %v1637 = vpack.c.bf16 %v1609, %v1607
          %v1638 = vpack.c.bf16 %v1612, %v1610
          %v1639 = vpack.c.bf16 %v1613, %v1611
          %v1640 = vpack.c.bf16 %v1616, %v1614
          %v1641 = vpack.c.bf16 %v1617, %v1615
          %v1642 = vpack.c.bf16 %v1620, %v1618
          %v1643 = vpack.c.bf16 %v1621, %v1619
          %v1644 = vpack.c.bf16 %v1624, %v1622
          %v1645 = vpack.c.bf16 %v1625, %v1623
          %v1646 = vpack.c.bf16 %v1628, %v1626
          %v1647 = vpack.c.bf16 %v1629, %v1627
          %v1648 = vpack.c.bf16 %v1632, %v1630
          %v1649 = vpack.c.bf16 %v1633, %v1631
          %v1666 = vunpack.c.l.b16 %v1634
          %v1667 = vunpack.c.l.b16 %v1635
          %v1668 = vunpack.c.h.b16 %v1634
          %v1669 = vunpack.c.h.b16 %v1635
          %v1670 = vunpack.c.l.b16 %v1636
          %v1671 = vunpack.c.l.b16 %v1637
          %v1672 = vunpack.c.h.b16 %v1636
          %v1673 = vunpack.c.h.b16 %v1637
          %v1674 = vunpack.c.l.b16 %v1638
          %v1675 = vunpack.c.l.b16 %v1639
          %v1676 = vunpack.c.h.b16 %v1638
          %v1677 = vunpack.c.h.b16 %v1639
          %v1678 = vunpack.c.l.b16 %v1640
          %v1679 = vunpack.c.l.b16 %v1641
          %v1680 = vunpack.c.h.b16 %v1640
          %v1681 = vunpack.c.h.b16 %v1641
          %v1682 = vunpack.c.l.b16 %v1642
          %v1683 = vunpack.c.l.b16 %v1643
          %v1684 = vunpack.c.h.b16 %v1642
          %v1685 = vunpack.c.h.b16 %v1643
          %v1686 = vunpack.c.l.b16 %v1644
          %v1687 = vunpack.c.l.b16 %v1645
          %v1688 = vunpack.c.h.b16 %v1644
          %v1689 = vunpack.c.h.b16 %v1645
          %v1690 = vunpack.c.l.b16 %v1646
          %v1691 = vunpack.c.l.b16 %v1647
          %v1692 = vunpack.c.h.b16 %v1646
          %v1693 = vunpack.c.h.b16 %v1647
          %v1694 = vunpack.c.l.b16 %v1648
          %v1695 = vunpack.c.l.b16 %v1649
          %v1696 = vunpack.c.h.b16 %v1648
          %v1697 = vunpack.c.h.b16 %v1649
          %v1698 = vpack.c.b16 %v1667, %v1666
          %v1699 = vpack.c.b16 %v1669, %v1668
          %v1700 = vpack.c.b16 %v1671, %v1670
          %v1701 = vpack.c.b16 %v1673, %v1672
          %v1702 = vpack.c.b16 %v1675, %v1674
          %v1703 = vpack.c.b16 %v1677, %v1676
          %v1704 = vpack.c.b16 %v1679, %v1678
          %v1705 = vpack.c.b16 %v1681, %v1680
          %v1706 = vpack.c.b16 %v1683, %v1682
          %v1707 = vpack.c.b16 %v1685, %v1684
          %v1708 = vpack.c.b16 %v1687, %v1686
          %v1709 = vpack.c.b16 %v1689, %v1688
          %v1710 = vpack.c.b16 %v1691, %v1690
          %v1711 = vpack.c.b16 %v1693, %v1692
          %v1712 = vpack.c.b16 %v1695, %v1694
          %v1713 = vpack.c.b16 %v1697, %v1696
          %1730 = vst [vmem:[%s4] sm:$0xff] %v1698
          %1731 = vst [vmem:[%s4 + $0x8] sm:$0xff] %v1699
          %1732 = vst [vmem:[%s4 + $0x10] sm:$0xff] %v1700
          %1733 = vst [vmem:[%s4 + $0x18] sm:$0xff] %v1701
          %1734 = vst [vmem:[%s4 + $0x20] sm:$0xff] %v1702
          %1735 = vst [vmem:[%s4 + $0x28] sm:$0xff] %v1703
          %1736 = vst [vmem:[%s4 + $0x30] sm:$0xff] %v1704
          %1737 = vst [vmem:[%s4 + $0x38] sm:$0xff] %v1705
          %1738 = vst [vmem:[%s4 + $0x40] sm:$0xff] %v1706
          %1739 = vst [vmem:[%s4 + $0x48] sm:$0xff] %v1707
          %1740 = vst [vmem:[%s4 + $0x50] sm:$0xff] %v1708
          %1741 = vst [vmem:[%s4 + $0x58] sm:$0xff] %v1709
          %1742 = vst [vmem:[%s4 + $0x60] sm:$0xff] %v1710
          %1743 = vst [vmem:[%s4 + $0x68] sm:$0xff] %v1711
          %1744 = vst [vmem:[%s4 + $0x70] sm:$0xff] %v1712
          %1745 = vst [vmem:[%s4 + $0x78] sm:$0xff] %v1713
        $region67: #{discriminator_forward.7} parent=54 // pred_fallthru
          _
        // Predicated region
        $region68: #{discriminator_forward.7} parent=54 // pred_check
          %p1746 = pneg %p122
        $region69: #{discriminator_forward.7} parent=54 // pred_check_branch
          %1748 = sbr.rel (%p1746) target = $region71
        $region70: #{discriminator_forward.7} parent=54 // pred_region
          _
        $region71: #{discriminator_forward.7} parent=54 // pred_fallthru
          _
        // Predicated region
        $region72: #{discriminator_forward.7} parent=54 // pred_check
          %p1749 = pneg %p122
        $region73: #{discriminator_forward.7} parent=54 // pred_check_branch
          %1751 = sbr.rel (%p1749) target = $region75
        $region74: #{discriminator_forward.7} parent=54 // pred_region
          _
        $region75: #{discriminator_forward.7} parent=54 // pred_fallthru
          _
      $region55: #{discriminator_forward.7} parent=5 // pred_fallthru
        _
      %p1752 = scmp.le.s32.totalorder 2, %s10
      // Predicated region
      $region76: #{discriminator_forward.7} parent=5 // pred_check
        %p1753 = pneg %p1752
      $region77: #{discriminator_forward.7} parent=5 // pred_check_branch
        %1755 = sbr.rel (%p1753) target = $region79
      $region78: #{discriminator_forward.7} parent=5 // pred_region
        %s1756 = ssub.s32 %s10, 2
      $region79: #{discriminator_forward.7} parent=5 // pred_fallthru
        _
    $region6: #{discriminator_forward.7} parent=1 // loop_footer
      %s14 = sadd.s32 1, %s10
    $region7: #{discriminator_forward.7} parent=1 // loop_footer_branch
      %9 = sbr.rel target = $region3
    $region8: #{discriminator_forward.7} parent=1 // loop_exit
      _

// kernel: discriminator_forward.8
$region0: #{discriminator_forward.8}
  #allocation0 [shape = 'u32[]', space=smem, size = 0x4, offset = 0x4, fixed_abs, tag = 'smem constant byte address 0x4 - core index']
  #allocation1 [shape = 'u32[144,128]{1,0:T(1,128)}', space=vmem, size = 0x12000, scoped, tag = 'internal scratch']
  #allocation2 [shape = 'f32[32,512]{1,0:T(8,128)}', space=vmem, size = 0x10000, scoped, tag = 'scratch operand']
  %s0 = inlined_call_operand.vmem [shape: bf16[32,4096], index: 0, kind: input, shape index: {}]
  %s1 = inlined_call_operand.vmem [shape: bf16[4096,512], index: 1, kind: input, shape index: {}]
  %s2 = inlined_call_operand.vmem [shape: f32[1,512], index: 2, kind: input, shape index: {}]
  %s3 = inlined_call_operand.vmem [shape: f32[1,512], index: 3, kind: input, shape index: {}]
  %s4 = inlined_call_operand.vmem [shape: bf16[32,512], index: 4, kind: output, shape index: {}]
  %s5 = sld [smem:[#allocation0]]
  $region80: #{discriminator_forward.8} parent=0
    _
  %s7 = ssub.s32 1, %s5
  %s8 = scalar_select 0, %s7, %s5
  $region1: #{discriminator_forward.8} parent=0
    #allocation3 [shape = 'u8[65536]{0}', space=vmem, size = 0x10000, scoped, tag = 'input window, operand 0']
    loop: start=0, step=1, limit=10
    $region2: #{discriminator_forward.8} parent=1 // loop_pre_header
      _
    $region3: #{discriminator_forward.8} parent=1 // loop_header
      %s10 = sphi 0, %s14
      %p11 = scmp.ge.s32.totalorder %s10, 10
      %s20 = sphi 0, %s22
      %s23 = sphi 0, %s20
      %s24 = sphi 0, %s23
      %s40 = sphi 0, %s24
      %s46 = sphi 0, %s48
      %s49 = sphi 0, %s46
      %s50 = sphi 0, %s49
      %s66 = sphi 0, %s50
      %s70 = sphi 0, %s70
      %s72 = sphi 0, %s70
      %s73 = sphi 0, %s72
      %s87 = sphi 0, %s73
      %s91 = sphi 0, %s91
      %s93 = sphi 0, %s91
      %s94 = sphi 0, %s93
      %s108 = sphi 0, %s94
      %s112 = sphi 0, %s112
      %s114 = sphi 0, %s112
      %s115 = sphi 0, %s114
      %s129 = sphi 0, %s115
    $region4: #{discriminator_forward.8} parent=1 // loop_header_branch
      %13 = sbr.rel (%p11) target = $region8
    $region5: #{discriminator_forward.8} parent=1 // loop_body
      %s15 = ssub.s32 %s10, 1
      %s16 = ssub.s32 %s10, 2
      %s17 = sadd.s32 %s10, 1
      %s18 = ssub.s32 %s10, %s17
      %p19 = scmp.eq.s32.totalorder %s18, 0
      %s21 = sadd.s32 %s20, 1
      %s22 = scalar_select %p19, %s20, %s21
      %p25 = pneg %p19
      %p26 = scmp.eq.s32.totalorder %s10, 7
      %p27 = por %p25, %p26
      %p28 = scmp.ne.s32.totalorder %s20, %s23
      %p29 = scmp.eq.s32.totalorder %s10, 0
      %p30 = por %p28, %p29
      %p31 = scmp.ne.s32.totalorder %s20, %s23
      %p32 = scmp.eq.s32.totalorder %s15, 7
      %p33 = por %p31, %p32
      %p34 = scmp.ne.s32.totalorder %s23, %s24
      %p35 = scmp.eq.s32.totalorder %s15, 0
      %p36 = por %p34, %p35
      %p37 = scmp.ne.s32.totalorder %s23, %s24
      %p38 = scmp.eq.s32.totalorder %s16, 7
      %p39 = por %p37, %p38
      %p41 = scmp.ne.s32.totalorder %s24, %s40
      %p42 = scmp.eq.s32.totalorder %s16, 0
      %p43 = por %p41, %p42
      %s44 = ssub.s32 %s10, %s17
      %p45 = scmp.eq.s32.totalorder %s44, 0
      %s47 = sadd.s32 %s46, 1
      %s48 = scalar_select %p45, %s46, %s47
      %p51 = pneg %p45
      %p52 = scmp.eq.s32.totalorder %s10, 7
      %p53 = por %p51, %p52
      %p54 = scmp.ne.s32.totalorder %s46, %s49
      %p55 = scmp.eq.s32.totalorder %s10, 0
      %p56 = por %p54, %p55
      %p57 = scmp.ne.s32.totalorder %s46, %s49
      %p58 = scmp.eq.s32.totalorder %s15, 7
      %p59 = por %p57, %p58
      %p60 = scmp.ne.s32.totalorder %s49, %s50
      %p61 = scmp.eq.s32.totalorder %s15, 0
      %p62 = por %p60, %p61
      %p63 = scmp.ne.s32.totalorder %s49, %s50
      %p64 = scmp.eq.s32.totalorder %s16, 7
      %p65 = por %p63, %p64
      %p67 = scmp.ne.s32.totalorder %s50, %s66
      %p68 = scmp.eq.s32.totalorder %s16, 0
      %p69 = por %p67, %p68
      %s71 = sadd.s32 %s70, 1
      %p74 = scmp.eq.s32.totalorder %s10, 7
      %p75 = scmp.ne.s32.totalorder %s70, %s72
      %p76 = scmp.eq.s32.totalorder %s10, 0
      %p77 = por %p75, %p76
      %p78 = scmp.ne.s32.totalorder %s70, %s72
      %p79 = scmp.eq.s32.totalorder %s15, 7
      %p80 = por %p78, %p79
      %p81 = scmp.ne.s32.totalorder %s72, %s73
      %p82 = scmp.eq.s32.totalorder %s15, 0
      %p83 = por %p81, %p82
      %p84 = scmp.ne.s32.totalorder %s72, %s73
      %p85 = scmp.eq.s32.totalorder %s16, 7
      %p86 = por %p84, %p85
      %p88 = scmp.ne.s32.totalorder %s73, %s87
      %p89 = scmp.eq.s32.totalorder %s16, 0
      %p90 = por %p88, %p89
      %s92 = sadd.s32 %s91, 1
      %p95 = scmp.eq.s32.totalorder %s10, 7
      %p96 = scmp.ne.s32.totalorder %s91, %s93
      %p97 = scmp.eq.s32.totalorder %s10, 0
      %p98 = por %p96, %p97
      %p99 = scmp.ne.s32.totalorder %s91, %s93
      %p100 = scmp.eq.s32.totalorder %s15, 7
      %p101 = por %p99, %p100
      %p102 = scmp.ne.s32.totalorder %s93, %s94
      %p103 = scmp.eq.s32.totalorder %s15, 0
      %p104 = por %p102, %p103
      %p105 = scmp.ne.s32.totalorder %s93, %s94
      %p106 = scmp.eq.s32.totalorder %s16, 7
      %p107 = por %p105, %p106
      %p109 = scmp.ne.s32.totalorder %s94, %s108
      %p110 = scmp.eq.s32.totalorder %s16, 0
      %p111 = por %p109, %p110
      %s113 = sadd.s32 %s112, 1
      %p116 = scmp.eq.s32.totalorder %s10, 7
      %p117 = scmp.ne.s32.totalorder %s112, %s114
      %p118 = scmp.eq.s32.totalorder %s10, 0
      %p119 = por %p117, %p118
      %p120 = scmp.ne.s32.totalorder %s112, %s114
      %p121 = scmp.eq.s32.totalorder %s15, 7
      %p122 = por %p120, %p121
      %p123 = scmp.ne.s32.totalorder %s114, %s115
      %p124 = scmp.eq.s32.totalorder %s15, 0
      %p125 = por %p123, %p124
      %p126 = scmp.ne.s32.totalorder %s114, %s115
      %p127 = scmp.eq.s32.totalorder %s16, 7
      %p128 = por %p126, %p127
      %p130 = scmp.ne.s32.totalorder %s115, %s129
      %p131 = scmp.eq.s32.totalorder %s16, 0
      %p132 = por %p130, %p131
      %p133 = scmp.le.s32.totalorder 1, %s10
      %p134 = scmp.lt.s32.totalorder %s10, 9
      %p135 = pnand %p133, %p134
      %p136 = pneg %p135
      // Predicated region
      $region9: #{discriminator_forward.8} parent=5 // pred_check
        _
      $region10: #{discriminator_forward.8} parent=5 // pred_check_branch
        %138 = sbr.rel (%p135) target = $region12
      $region11: #{discriminator_forward.8} parent=5 // pred_region
        %s139 = ssub.s32 %s10, 1
        // Predicated region
        $region13: #{discriminator_forward.8} parent=11 // pred_check
          %p140 = pneg %p83
        $region14: #{discriminator_forward.8} parent=11 // pred_check_branch
          %142 = sbr.rel (%p140) target = $region16
        $region15: #{discriminator_forward.8} parent=11 // pred_region
          _
        $region16: #{discriminator_forward.8} parent=11 // pred_fallthru
          _
        // Predicated region
        $region17: #{discriminator_forward.8} parent=11 // pred_check
          %p143 = pneg %p104
        $region18: #{discriminator_forward.8} parent=11 // pred_check_branch
          %145 = sbr.rel (%p143) target = $region20
        $region19: #{discriminator_forward.8} parent=11 // pred_region
          _
        $region20: #{discriminator_forward.8} parent=11 // pred_fallthru
          _
      $region12: #{discriminator_forward.8} parent=5 // pred_fallthru
        _
      %p146 = scmp.lt.s32.totalorder %s10, 8
      // Predicated region
      $region21: #{discriminator_forward.8} parent=5 // pred_check
        %p147 = pneg %p146
      $region22: #{discriminator_forward.8} parent=5 // pred_check_branch
        %149 = sbr.rel (%p147) target = $region24
      $region23: #{discriminator_forward.8} parent=5 // pred_region
        // Predicated region
        $region25: #{discriminator_forward.8} parent=23 // pred_check
          %p150 = pneg %p30
        $region26: #{discriminator_forward.8} parent=23 // pred_check_branch
          %152 = sbr.rel (%p150) target = $region28
        $region27: #{discriminator_forward.8} parent=23 // pred_region
          %s153 = sand.u32 %s20, 1
          %s154 = sand.u32 %s20, 1
          %s155 = smul.addr %s154, 64
          %s156 = scalar_lea.vmem [#allocation3], %s155
          %s157 = smul.u32 4, %s10
          %s158 = smul.addr %s157, 4
          %s159 = scalar_lea.vmem %s0, %s158
          // Predicated region
          $region29: #{discriminator_forward.8} parent=27 // pred_check
            _
          $region30: #{discriminator_forward.8} parent=27 // pred_check_branch
            %161 = sbr.rel (0) target = $region32
          $region31: #{discriminator_forward.8} parent=27 // pred_region
            // Predicated region
            $region33: #{discriminator_forward.8} parent=31 // pred_check
              _
            $region34: #{discriminator_forward.8} parent=31 // pred_check_branch
              %163 = sbr.rel (0) target = $region36
            $region35: #{discriminator_forward.8} parent=31 // pred_region
              loop: start=0, step=1, limit=1
              $region37: #{discriminator_forward.8} parent=35 // loop_pre_header
                _
              $region38: #{discriminator_forward.8} parent=35 // loop_header
                %s165 = sphi 0, %s169
                %p166 = scmp.ge.s32.totalorder %s165, 1
                %s170 = sphi %s159, %s159
                %s171 = sphi %s156, %s156
              $region39: #{discriminator_forward.8} parent=35 // loop_header_branch
                %168 = sbr.rel (%p166) target = $region43
              $region40: #{discriminator_forward.8} parent=35 // loop_body
                %v172 = vld [vmem:[%s170] sm:$0xff]
                %173 = vst [vmem:[%s171] sm:$0xff] %v172
                %v174 = vld [vmem:[%s170 + $0x8] sm:$0xff]
                %175 = vst [vmem:[%s171 + $0x8] sm:$0xff] %v174
                %v176 = vld [vmem:[%s170 + $0x80] sm:$0xff]
                %177 = vst [vmem:[%s171 + $0x10] sm:$0xff] %v176
                %v178 = vld [vmem:[%s170 + $0x88] sm:$0xff]
                %179 = vst [vmem:[%s171 + $0x18] sm:$0xff] %v178
                %v180 = vld [vmem:[%s170 + $0x100] sm:$0xff]
                %181 = vst [vmem:[%s171 + $0x20] sm:$0xff] %v180
                %v182 = vld [vmem:[%s170 + $0x108] sm:$0xff]
                %183 = vst [vmem:[%s171 + $0x28] sm:$0xff] %v182
                %v184 = vld [vmem:[%s170 + $0x180] sm:$0xff]
                %185 = vst [vmem:[%s171 + $0x30] sm:$0xff] %v184
                %v186 = vld [vmem:[%s170 + $0x188] sm:$0xff]
                %187 = vst [vmem:[%s171 + $0x38] sm:$0xff] %v186
              $region41: #{discriminator_forward.8} parent=35 // loop_footer
                %s169 = sadd.s32 1, %s165
              $region42: #{discriminator_forward.8} parent=35 // loop_footer_branch
                %164 = sbr.rel target = $region38
              $region43: #{discriminator_forward.8} parent=35 // loop_exit
                _
            $region36: #{discriminator_forward.8} parent=31 // pred_fallthru
              _
            // Predicated region
            $region44: #{discriminator_forward.8} parent=31 // pred_check
              _
            $region45: #{discriminator_forward.8} parent=31 // pred_check_branch
              %189 = sbr.rel target = $region47
            $region46: #{discriminator_forward.8} parent=31 // pred_region
              _
            $region47: #{discriminator_forward.8} parent=31 // pred_fallthru
              _
          $region32: #{discriminator_forward.8} parent=27 // pred_fallthru
            _
          %190 = vnop
        $region28: #{discriminator_forward.8} parent=23 // pred_fallthru
          _
        // Predicated region
        $region48: #{discriminator_forward.8} parent=23 // pred_check
          %p191 = pneg %p56
        $region49: #{discriminator_forward.8} parent=23 // pred_check_branch
          %193 = sbr.rel (%p191) target = $region51
        $region50: #{discriminator_forward.8} parent=23 // pred_region
          %s194 = smul.u32 64, %s10
          %p195 = scmp.lt.s32.totalorder %s194, 511
          %s196 = scalar_select %p195, %s194, 511
          %s197 = smul.addr %s196, 4
          %s198 = smul.addr %s197, 4
          %s199 = scalar_lea.vmem %s1, %s198
          %s200 = smul.u32 64, %s10
        $region51: #{discriminator_forward.8} parent=23 // pred_fallthru
          _
      $region24: #{discriminator_forward.8} parent=5 // pred_fallthru
        _
      %p201 = scmp.le.s32.totalorder 1, %s10
      %p202 = scmp.lt.s32.totalorder %s10, 9
      %p203 = pnand %p201, %p202
      %p204 = pneg %p203
      // Predicated region
      $region52: #{discriminator_forward.8} parent=5 // pred_check
        _
      $region53: #{discriminator_forward.8} parent=5 // pred_check_branch
        %206 = sbr.rel (%p203) target = $region55
      $region54: #{discriminator_forward.8} parent=5 // pred_region
        %s207 = ssub.s32 %s10, 1
        %s208 = sand.u32 %s23, 1
        %s209 = sand.u32 %s23, 1
        %s210 = smul.addr %s209, 64
        %s211 = scalar_lea.vmem [#allocation3], %s210
        // Predicated region
        $region56: #{discriminator_forward.8} parent=54 // pred_check
          %p212 = pneg %p36
        $region57: #{discriminator_forward.8} parent=54 // pred_check_branch
          %214 = sbr.rel (%p212) target = $region59
        $region58: #{discriminator_forward.8} parent=54 // pred_region
          _
        $region59: #{discriminator_forward.8} parent=54 // pred_fallthru
          _
        %s215 = sand.u32 %s23, 1
        %s216 = sand.u32 %s23, 1
        %s217 = smul.addr %s216, 64
        %s218 = scalar_lea.vmem [#allocation3], %s217
        %p219 = pneg %p36
        %p220 = pneg %p33
        %s221 = smul.u32 64, %s15
        %p222 = scmp.lt.s32.totalorder %s221, 511
        %s223 = scalar_select %p222, %s221, 511
        %s224 = smul.addr %s223, 4
        %s225 = smul.addr %s224, 4
        %s226 = scalar_lea.vmem %s1, %s225
        %p227 = pneg %p62
        %p228 = pneg %p59
        %p229 = pneg %p83
        %p230 = pneg %p80
        %p231 = pneg %p104
        %p232 = pneg %p101
        %p233 = pneg %p125
        %p234 = pneg %p122
        %s235 = smul.u32 4, %s15
        %s236 = smul.u32 64, %s15
        %p237 = scmp.lt.s32.totalorder %s236, 511
        %s238 = scalar_select %p237, %s236, 511
        %s239 = smul.addr %s238, 4
        %s240 = smul.addr %s239, 4
        %s241 = scalar_lea.vmem %s1, %s240
        %s242 = smul.u32 64, %s15
        %p243 = scmp.eq.s32.totalorder %s15, 0
        // Predicated region
        $region60: #{discriminator_forward.8} parent=54 // pred_check
          %p244 = pneg %p243
        $region61: #{discriminator_forward.8} parent=54 // pred_check_branch
          %246 = sbr.rel (%p244) target = $region63
        $region62: #{discriminator_forward.8} parent=54 // pred_region
          %247 = vst [vmem:[#allocation2] sm:$0xff] 0.0
          %248 = vst [vmem:[#allocation2 + $0x8] sm:$0xff] 0.0
          %249 = vst [vmem:[#allocation2 + $0x10] sm:$0xff] 0.0
          %250 = vst [vmem:[#allocation2 + $0x18] sm:$0xff] 0.0
          %251 = vst [vmem:[#allocation2 + $0x20] sm:$0xff] 0.0
          %252 = vst [vmem:[#allocation2 + $0x28] sm:$0xff] 0.0
          %253 = vst [vmem:[#allocation2 + $0x30] sm:$0xff] 0.0
          %254 = vst [vmem:[#allocation2 + $0x38] sm:$0xff] 0.0
          %255 = vst [vmem:[#allocation2 + $0x40] sm:$0xff] 0.0
          %256 = vst [vmem:[#allocation2 + $0x48] sm:$0xff] 0.0
          %257 = vst [vmem:[#allocation2 + $0x50] sm:$0xff] 0.0
          %258 = vst [vmem:[#allocation2 + $0x58] sm:$0xff] 0.0
          %259 = vst [vmem:[#allocation2 + $0x60] sm:$0xff] 0.0
          %260 = vst [vmem:[#allocation2 + $0x68] sm:$0xff] 0.0
          %261 = vst [vmem:[#allocation2 + $0x70] sm:$0xff] 0.0
          %262 = vst [vmem:[#allocation2 + $0x78] sm:$0xff] 0.0
        $region63: #{discriminator_forward.8} parent=54 // pred_fallthru
          _
        %v263 = vld [vmem:[#allocation2] sm:$0xff]
        %v264 = vld [vmem:[#allocation2 + $0x8] sm:$0xff]
        %v265 = vld [vmem:[#allocation2 + $0x10] sm:$0xff]
        %v266 = vld [vmem:[#allocation2 + $0x18] sm:$0xff]
        %v267 = vld [vmem:[#allocation2 + $0x20] sm:$0xff]
        %v268 = vld [vmem:[#allocation2 + $0x28] sm:$0xff]
        %v269 = vld [vmem:[#allocation2 + $0x30] sm:$0xff]
        %v270 = vld [vmem:[#allocation2 + $0x38] sm:$0xff]
        %v271 = vld [vmem:[#allocation2 + $0x40] sm:$0xff]
        %v272 = vld [vmem:[#allocation2 + $0x48] sm:$0xff]
        %v273 = vld [vmem:[#allocation2 + $0x50] sm:$0xff]
        %v274 = vld [vmem:[#allocation2 + $0x58] sm:$0xff]
        %v275 = vld [vmem:[#allocation2 + $0x60] sm:$0xff]
        %v276 = vld [vmem:[#allocation2 + $0x68] sm:$0xff]
        %v277 = vld [vmem:[#allocation2 + $0x70] sm:$0xff]
        %v278 = vld [vmem:[#allocation2 + $0x78] sm:$0xff]
        %v279 = vld [vmem:[%s211] sm:$0xff]
        %v280 = vld [vmem:[%s211 + $0x8] sm:$0xff]
        %v281 = vld [vmem:[%s211 + $0x10] sm:$0xff]
        %v282 = vld [vmem:[%s211 + $0x18] sm:$0xff]
        %v283 = vld [vmem:[%s211 + $0x20] sm:$0xff]
        %v284 = vld [vmem:[%s211 + $0x28] sm:$0xff]
        %v285 = vld [vmem:[%s211 + $0x30] sm:$0xff]
        %v286 = vld [vmem:[%s211 + $0x38] sm:$0xff]
        %v287 = vld [vmem:[%s241] sm:$0xff]
        %v288 = vld [vmem:[%s241 + $0x8] sm:$0xff]
        %v289 = vld [vmem:[%s241 + $0x10] sm:$0xff]
        %v290 = vld [vmem:[%s241 + $0x18] sm:$0xff]
        %v291 = vld [vmem:[%s241 + $0x20] sm:$0xff]
        %v292 = vld [vmem:[%s241 + $0x28] sm:$0xff]
        %v293 = vld [vmem:[%s241 + $0x30] sm:$0xff]
        %v294 = vld [vmem:[%s241 + $0x38] sm:$0xff]
        %v295 = vld [vmem:[%s241 + $0x40] sm:$0xff]
        %v296 = vld [vmem:[%s241 + $0x48] sm:$0xff]
        %v297 = vld [vmem:[%s241 + $0x50] sm:$0xff]
        %v298 = vld [vmem:[%s241 + $0x58] sm:$0xff]
        %v299 = vld [vmem:[%s241 + $0x60] sm:$0xff]
        %v300 = vld [vmem:[%s241 + $0x68] sm:$0xff]
        %v301 = vld [vmem:[%s241 + $0x70] sm:$0xff]
        %v302 = vld [vmem:[%s241 + $0x78] sm:$0xff]
        %v303 = vld [vmem:[%s241 + $0x80] sm:$0xff]
        %v304 = vld [vmem:[%s241 + $0x88] sm:$0xff]
        %v305 = vld [vmem:[%s241 + $0x90] sm:$0xff]
        %v306 = vld [vmem:[%s241 + $0x98] sm:$0xff]
        %v307 = vld [vmem:[%s241 + $0xa0] sm:$0xff]
        %v308 = vld [vmem:[%s241 + $0xa8] sm:$0xff]
        %v309 = vld [vmem:[%s241 + $0xb0] sm:$0xff]
        %v310 = vld [vmem:[%s241 + $0xb8] sm:$0xff]
        %v311 = vld [vmem:[%s241 + $0xc0] sm:$0xff]
        %v312 = vld [vmem:[%s241 + $0xc8] sm:$0xff]
        %v313 = vld [vmem:[%s241 + $0xd0] sm:$0xff]
        %v314 = vld [vmem:[%s241 + $0xd8] sm:$0xff]
        %v315 = vld [vmem:[%s241 + $0xe0] sm:$0xff]
        %v316 = vld [vmem:[%s241 + $0xe8] sm:$0xff]
        %v317 = vld [vmem:[%s241 + $0xf0] sm:$0xff]
        %v318 = vld [vmem:[%s241 + $0xf8] sm:$0xff]
        %v319 = vld [vmem:[%s241 + $0x100] sm:$0xff]
        %v320 = vld [vmem:[%s241 + $0x108] sm:$0xff]
        %v321 = vld [vmem:[%s241 + $0x110] sm:$0xff]
        %v322 = vld [vmem:[%s241 + $0x118] sm:$0xff]
        %v323 = vld [vmem:[%s241 + $0x120] sm:$0xff]
        %v324 = vld [vmem:[%s241 + $0x128] sm:$0xff]
        %v325 = vld [vmem:[%s241 + $0x130] sm:$0xff]
        %v326 = vld [vmem:[%s241 + $0x138] sm:$0xff]
        %v327 = vld [vmem:[%s241 + $0x140] sm:$0xff]
        %v328 = vld [vmem:[%s241 + $0x148] sm:$0xff]
        %v329 = vld [vmem:[%s241 + $0x150] sm:$0xff]
        %v330 = vld [vmem:[%s241 + $0x158] sm:$0xff]
        %v331 = vld [vmem:[%s241 + $0x160] sm:$0xff]
        %v332 = vld [vmem:[%s241 + $0x168] sm:$0xff]
        %v333 = vld [vmem:[%s241 + $0x170] sm:$0xff]
        %v334 = vld [vmem:[%s241 + $0x178] sm:$0xff]
        %v335 = vld [vmem:[%s241 + $0x180] sm:$0xff]
        %v336 = vld [vmem:[%s241 + $0x188] sm:$0xff]
        %v337 = vld [vmem:[%s241 + $0x190] sm:$0xff]
        %v338 = vld [vmem:[%s241 + $0x198] sm:$0xff]
        %v339 = vld [vmem:[%s241 + $0x1a0] sm:$0xff]
        %v340 = vld [vmem:[%s241 + $0x1a8] sm:$0xff]
        %v341 = vld [vmem:[%s241 + $0x1b0] sm:$0xff]
        %v342 = vld [vmem:[%s241 + $0x1b8] sm:$0xff]
        %v343 = vld [vmem:[%s241 + $0x1c0] sm:$0xff]
        %v344 = vld [vmem:[%s241 + $0x1c8] sm:$0xff]
        %v345 = vld [vmem:[%s241 + $0x1d0] sm:$0xff]
        %v346 = vld [vmem:[%s241 + $0x1d8] sm:$0xff]
        %v347 = vld [vmem:[%s241 + $0x1e0] sm:$0xff]
        %v348 = vld [vmem:[%s241 + $0x1e8] sm:$0xff]
        %v349 = vld [vmem:[%s241 + $0x1f0] sm:$0xff]
        %v350 = vld [vmem:[%s241 + $0x1f8] sm:$0xff]
        %v351 = vld [vmem:[%s241 + $0x200] sm:$0xff]
        %v352 = vld [vmem:[%s241 + $0x208] sm:$0xff]
        %v353 = vld [vmem:[%s241 + $0x210] sm:$0xff]
        %v354 = vld [vmem:[%s241 + $0x218] sm:$0xff]
        %v355 = vld [vmem:[%s241 + $0x220] sm:$0xff]
        %v356 = vld [vmem:[%s241 + $0x228] sm:$0xff]
        %v357 = vld [vmem:[%s241 + $0x230] sm:$0xff]
        %v358 = vld [vmem:[%s241 + $0x238] sm:$0xff]
        %v359 = vld [vmem:[%s241 + $0x240] sm:$0xff]
        %v360 = vld [vmem:[%s241 + $0x248] sm:$0xff]
        %v361 = vld [vmem:[%s241 + $0x250] sm:$0xff]
        %v362 = vld [vmem:[%s241 + $0x258] sm:$0xff]
        %v363 = vld [vmem:[%s241 + $0x260] sm:$0xff]
        %v364 = vld [vmem:[%s241 + $0x268] sm:$0xff]
        %v365 = vld [vmem:[%s241 + $0x270] sm:$0xff]
        %v366 = vld [vmem:[%s241 + $0x278] sm:$0xff]
        %v367 = vld [vmem:[%s241 + $0x280] sm:$0xff]
        %v368 = vld [vmem:[%s241 + $0x288] sm:$0xff]
        %v369 = vld [vmem:[%s241 + $0x290] sm:$0xff]
        %v370 = vld [vmem:[%s241 + $0x298] sm:$0xff]
        %v371 = vld [vmem:[%s241 + $0x2a0] sm:$0xff]
        %v372 = vld [vmem:[%s241 + $0x2a8] sm:$0xff]
        %v373 = vld [vmem:[%s241 + $0x2b0] sm:$0xff]
        %v374 = vld [vmem:[%s241 + $0x2b8] sm:$0xff]
        %v375 = vld [vmem:[%s241 + $0x2c0] sm:$0xff]
        %v376 = vld [vmem:[%s241 + $0x2c8] sm:$0xff]
        %v377 = vld [vmem:[%s241 + $0x2d0] sm:$0xff]
        %v378 = vld [vmem:[%s241 + $0x2d8] sm:$0xff]
        %v379 = vld [vmem:[%s241 + $0x2e0] sm:$0xff]
        %v380 = vld [vmem:[%s241 + $0x2e8] sm:$0xff]
        %v381 = vld [vmem:[%s241 + $0x2f0] sm:$0xff]
        %v382 = vld [vmem:[%s241 + $0x2f8] sm:$0xff]
        %v383 = vld [vmem:[%s241 + $0x300] sm:$0xff]
        %v384 = vld [vmem:[%s241 + $0x308] sm:$0xff]
        %v385 = vld [vmem:[%s241 + $0x310] sm:$0xff]
        %v386 = vld [vmem:[%s241 + $0x318] sm:$0xff]
        %v387 = vld [vmem:[%s241 + $0x320] sm:$0xff]
        %v388 = vld [vmem:[%s241 + $0x328] sm:$0xff]
        %v389 = vld [vmem:[%s241 + $0x330] sm:$0xff]
        %v390 = vld [vmem:[%s241 + $0x338] sm:$0xff]
        %v391 = vld [vmem:[%s241 + $0x340] sm:$0xff]
        %v392 = vld [vmem:[%s241 + $0x348] sm:$0xff]
        %v393 = vld [vmem:[%s241 + $0x350] sm:$0xff]
        %v394 = vld [vmem:[%s241 + $0x358] sm:$0xff]
        %v395 = vld [vmem:[%s241 + $0x360] sm:$0xff]
        %v396 = vld [vmem:[%s241 + $0x368] sm:$0xff]
        %v397 = vld [vmem:[%s241 + $0x370] sm:$0xff]
        %v398 = vld [vmem:[%s241 + $0x378] sm:$0xff]
        %v399 = vld [vmem:[%s241 + $0x380] sm:$0xff]
        %v400 = vld [vmem:[%s241 + $0x388] sm:$0xff]
        %v401 = vld [vmem:[%s241 + $0x390] sm:$0xff]
        %v402 = vld [vmem:[%s241 + $0x398] sm:$0xff]
        %v403 = vld [vmem:[%s241 + $0x3a0] sm:$0xff]
        %v404 = vld [vmem:[%s241 + $0x3a8] sm:$0xff]
        %v405 = vld [vmem:[%s241 + $0x3b0] sm:$0xff]
        %v406 = vld [vmem:[%s241 + $0x3b8] sm:$0xff]
        %v407 = vld [vmem:[%s241 + $0x3c0] sm:$0xff]
        %v408 = vld [vmem:[%s241 + $0x3c8] sm:$0xff]
        %v409 = vld [vmem:[%s241 + $0x3d0] sm:$0xff]
        %v410 = vld [vmem:[%s241 + $0x3d8] sm:$0xff]
        %v411 = vld [vmem:[%s241 + $0x3e0] sm:$0xff]
        %v412 = vld [vmem:[%s241 + $0x3e8] sm:$0xff]
        %v413 = vld [vmem:[%s241 + $0x3f0] sm:$0xff]
        %v414 = vld [vmem:[%s241 + $0x3f8] sm:$0xff]
        %v423 = vunpack.c.l.b16 %v279
        %v424 = vunpack.c.h.b16 %v279
        %v425 = vunpack.c.l.b16 %v280
        %v426 = vunpack.c.h.b16 %v280
        %v427 = vunpack.c.l.b16 %v281
        %v428 = vunpack.c.h.b16 %v281
        %v429 = vunpack.c.l.b16 %v282
        %v430 = vunpack.c.h.b16 %v282
        %v431 = vunpack.c.l.b16 %v283
        %v432 = vunpack.c.h.b16 %v283
        %v433 = vunpack.c.l.b16 %v284
        %v434 = vunpack.c.h.b16 %v284
        %v435 = vunpack.c.l.b16 %v285
        %v436 = vunpack.c.h.b16 %v285
        %v437 = vunpack.c.l.b16 %v286
        %v438 = vunpack.c.h.b16 %v286
        %v439 = vpack.c.b16 %v427, %v423
        %v440 = vpack.c.b16 %v428, %v424
        %v441 = vpack.c.b16 %v429, %v425
        %v442 = vpack.c.b16 %v430, %v426
        %v443 = vpack.c.b16 %v435, %v431
        %v444 = vpack.c.b16 %v436, %v432
        %v445 = vpack.c.b16 %v437, %v433
        %v446 = vpack.c.b16 %v438, %v434
        %v583 = vunpack.c.l.b16 %v287
        %v584 = vunpack.c.h.b16 %v287
        %v585 = vunpack.c.l.b16 %v288
        %v586 = vunpack.c.h.b16 %v288
        %v587 = vunpack.c.l.b16 %v289
        %v588 = vunpack.c.h.b16 %v289
        %v589 = vunpack.c.l.b16 %v290
        %v590 = vunpack.c.h.b16 %v290
        %v591 = vunpack.c.l.b16 %v291
        %v592 = vunpack.c.h.b16 %v291
        %v593 = vunpack.c.l.b16 %v292
        %v594 = vunpack.c.h.b16 %v292
        %v595 = vunpack.c.l.b16 %v293
        %v596 = vunpack.c.h.b16 %v293
        %v597 = vunpack.c.l.b16 %v294
        %v598 = vunpack.c.h.b16 %v294
        %v599 = vunpack.c.l.b16 %v295
        %v600 = vunpack.c.h.b16 %v295
        %v601 = vunpack.c.l.b16 %v296
        %v602 = vunpack.c.h.b16 %v296
        %v603 = vunpack.c.l.b16 %v297
        %v604 = vunpack.c.h.b16 %v297
        %v605 = vunpack.c.l.b16 %v298
        %v606 = vunpack.c.h.b16 %v298
        %v607 = vunpack.c.l.b16 %v299
        %v608 = vunpack.c.h.b16 %v299
        %v609 = vunpack.c.l.b16 %v300
        %v610 = vunpack.c.h.b16 %v300
        %v611 = vunpack.c.l.b16 %v301
        %v612 = vunpack.c.h.b16 %v301
        %v613 = vunpack.c.l.b16 %v302
        %v614 = vunpack.c.h.b16 %v302
        %v615 = vunpack.c.l.b16 %v303
        %v616 = vunpack.c.h.b16 %v303
        %v617 = vunpack.c.l.b16 %v304
        %v618 = vunpack.c.h.b16 %v304
        %v619 = vunpack.c.l.b16 %v305
        %v620 = vunpack.c.h.b16 %v305
        %v621 = vunpack.c.l.b16 %v306
        %v622 = vunpack.c.h.b16 %v306
        %v623 = vunpack.c.l.b16 %v307
        %v624 = vunpack.c.h.b16 %v307
        %v625 = vunpack.c.l.b16 %v308
        %v626 = vunpack.c.h.b16 %v308
        %v627 = vunpack.c.l.b16 %v309
        %v628 = vunpack.c.h.b16 %v309
        %v629 = vunpack.c.l.b16 %v310
        %v630 = vunpack.c.h.b16 %v310
        %v631 = vunpack.c.l.b16 %v311
        %v632 = vunpack.c.h.b16 %v311
        %v633 = vunpack.c.l.b16 %v312
        %v634 = vunpack.c.h.b16 %v312
        %v635 = vunpack.c.l.b16 %v313
        %v636 = vunpack.c.h.b16 %v313
        %v637 = vunpack.c.l.b16 %v314
        %v638 = vunpack.c.h.b16 %v314
        %v639 = vunpack.c.l.b16 %v315
        %v640 = vunpack.c.h.b16 %v315
        %v641 = vunpack.c.l.b16 %v316
        %v642 = vunpack.c.h.b16 %v316
        %v643 = vunpack.c.l.b16 %v317
        %v644 = vunpack.c.h.b16 %v317
        %v645 = vunpack.c.l.b16 %v318
        %v646 = vunpack.c.h.b16 %v318
        %v647 = vunpack.c.l.b16 %v319
        %v648 = vunpack.c.h.b16 %v319
        %v649 = vunpack.c.l.b16 %v320
        %v650 = vunpack.c.h.b16 %v320
        %v651 = vunpack.c.l.b16 %v321
        %v652 = vunpack.c.h.b16 %v321
        %v653 = vunpack.c.l.b16 %v322
        %v654 = vunpack.c.h.b16 %v322
        %v655 = vunpack.c.l.b16 %v323
        %v656 = vunpack.c.h.b16 %v323
        %v657 = vunpack.c.l.b16 %v324
        %v658 = vunpack.c.h.b16 %v324
        %v659 = vunpack.c.l.b16 %v325
        %v660 = vunpack.c.h.b16 %v325
        %v661 = vunpack.c.l.b16 %v326
        %v662 = vunpack.c.h.b16 %v326
        %v663 = vunpack.c.l.b16 %v327
        %v664 = vunpack.c.h.b16 %v327
        %v665 = vunpack.c.l.b16 %v328
        %v666 = vunpack.c.h.b16 %v328
        %v667 = vunpack.c.l.b16 %v329
        %v668 = vunpack.c.h.b16 %v329
        %v669 = vunpack.c.l.b16 %v330
        %v670 = vunpack.c.h.b16 %v330
        %v671 = vunpack.c.l.b16 %v331
        %v672 = vunpack.c.h.b16 %v331
        %v673 = vunpack.c.l.b16 %v332
        %v674 = vunpack.c.h.b16 %v332
        %v675 = vunpack.c.l.b16 %v333
        %v676 = vunpack.c.h.b16 %v333
        %v677 = vunpack.c.l.b16 %v334
        %v678 = vunpack.c.h.b16 %v334
        %v679 = vunpack.c.l.b16 %v335
        %v680 = vunpack.c.h.b16 %v335
        %v681 = vunpack.c.l.b16 %v336
        %v682 = vunpack.c.h.b16 %v336
        %v683 = vunpack.c.l.b16 %v337
        %v684 = vunpack.c.h.b16 %v337
        %v685 = vunpack.c.l.b16 %v338
        %v686 = vunpack.c.h.b16 %v338
        %v687 = vunpack.c.l.b16 %v339
        %v688 = vunpack.c.h.b16 %v339
        %v689 = vunpack.c.l.b16 %v340
        %v690 = vunpack.c.h.b16 %v340
        %v691 = vunpack.c.l.b16 %v341
        %v692 = vunpack.c.h.b16 %v341
        %v693 = vunpack.c.l.b16 %v342
        %v694 = vunpack.c.h.b16 %v342
        %v695 = vunpack.c.l.b16 %v343
        %v696 = vunpack.c.h.b16 %v343
        %v697 = vunpack.c.l.b16 %v344
        %v698 = vunpack.c.h.b16 %v344
        %v699 = vunpack.c.l.b16 %v345
        %v700 = vunpack.c.h.b16 %v345
        %v701 = vunpack.c.l.b16 %v346
        %v702 = vunpack.c.h.b16 %v346
        %v703 = vunpack.c.l.b16 %v347
        %v704 = vunpack.c.h.b16 %v347
        %v705 = vunpack.c.l.b16 %v348
        %v706 = vunpack.c.h.b16 %v348
        %v707 = vunpack.c.l.b16 %v349
        %v708 = vunpack.c.h.b16 %v349
        %v709 = vunpack.c.l.b16 %v350
        %v710 = vunpack.c.h.b16 %v350
        %v711 = vunpack.c.l.b16 %v351
        %v712 = vunpack.c.h.b16 %v351
        %v713 = vunpack.c.l.b16 %v352
        %v714 = vunpack.c.h.b16 %v352
        %v715 = vunpack.c.l.b16 %v353
        %v716 = vunpack.c.h.b16 %v353
        %v717 = vunpack.c.l.b16 %v354
        %v718 = vunpack.c.h.b16 %v354
        %v719 = vunpack.c.l.b16 %v355
        %v720 = vunpack.c.h.b16 %v355
        %v721 = vunpack.c.l.b16 %v356
        %v722 = vunpack.c.h.b16 %v356
        %v723 = vunpack.c.l.b16 %v357
        %v724 = vunpack.c.h.b16 %v357
        %v725 = vunpack.c.l.b16 %v358
        %v726 = vunpack.c.h.b16 %v358
        %v727 = vunpack.c.l.b16 %v359
        %v728 = vunpack.c.h.b16 %v359
        %v729 = vunpack.c.l.b16 %v360
        %v730 = vunpack.c.h.b16 %v360
        %v731 = vunpack.c.l.b16 %v361
        %v732 = vunpack.c.h.b16 %v361
        %v733 = vunpack.c.l.b16 %v362
        %v734 = vunpack.c.h.b16 %v362
        %v735 = vunpack.c.l.b16 %v363
        %v736 = vunpack.c.h.b16 %v363
        %v737 = vunpack.c.l.b16 %v364
        %v738 = vunpack.c.h.b16 %v364
        %v739 = vunpack.c.l.b16 %v365
        %v740 = vunpack.c.h.b16 %v365
        %v741 = vunpack.c.l.b16 %v366
        %v742 = vunpack.c.h.b16 %v366
        %v743 = vunpack.c.l.b16 %v367
        %v744 = vunpack.c.h.b16 %v367
        %v745 = vunpack.c.l.b16 %v368
        %v746 = vunpack.c.h.b16 %v368
        %v747 = vunpack.c.l.b16 %v369
        %v748 = vunpack.c.h.b16 %v369
        %v749 = vunpack.c.l.b16 %v370
        %v750 = vunpack.c.h.b16 %v370
        %v751 = vunpack.c.l.b16 %v371
        %v752 = vunpack.c.h.b16 %v371
        %v753 = vunpack.c.l.b16 %v372
        %v754 = vunpack.c.h.b16 %v372
        %v755 = vunpack.c.l.b16 %v373
        %v756 = vunpack.c.h.b16 %v373
        %v757 = vunpack.c.l.b16 %v374
        %v758 = vunpack.c.h.b16 %v374
        %v759 = vunpack.c.l.b16 %v375
        %v760 = vunpack.c.h.b16 %v375
        %v761 = vunpack.c.l.b16 %v376
        %v762 = vunpack.c.h.b16 %v376
        %v763 = vunpack.c.l.b16 %v377
        %v764 = vunpack.c.h.b16 %v377
        %v765 = vunpack.c.l.b16 %v378
        %v766 = vunpack.c.h.b16 %v378
        %v767 = vunpack.c.l.b16 %v379
        %v768 = vunpack.c.h.b16 %v379
        %v769 = vunpack.c.l.b16 %v380
        %v770 = vunpack.c.h.b16 %v380
        %v771 = vunpack.c.l.b16 %v381
        %v772 = vunpack.c.h.b16 %v381
        %v773 = vunpack.c.l.b16 %v382
        %v774 = vunpack.c.h.b16 %v382
        %v775 = vunpack.c.l.b16 %v383
        %v776 = vunpack.c.h.b16 %v383
        %v777 = vunpack.c.l.b16 %v384
        %v778 = vunpack.c.h.b16 %v384
        %v779 = vunpack.c.l.b16 %v385
        %v780 = vunpack.c.h.b16 %v385
        %v781 = vunpack.c.l.b16 %v386
        %v782 = vunpack.c.h.b16 %v386
        %v783 = vunpack.c.l.b16 %v387
        %v784 = vunpack.c.h.b16 %v387
        %v785 = vunpack.c.l.b16 %v388
        %v786 = vunpack.c.h.b16 %v388
        %v787 = vunpack.c.l.b16 %v389
        %v788 = vunpack.c.h.b16 %v389
        %v789 = vunpack.c.l.b16 %v390
        %v790 = vunpack.c.h.b16 %v390
        %v791 = vunpack.c.l.b16 %v391
        %v792 = vunpack.c.h.b16 %v391
        %v793 = vunpack.c.l.b16 %v392
        %v794 = vunpack.c.h.b16 %v392
        %v795 = vunpack.c.l.b16 %v393
        %v796 = vunpack.c.h.b16 %v393
        %v797 = vunpack.c.l.b16 %v394
        %v798 = vunpack.c.h.b16 %v394
        %v799 = vunpack.c.l.b16 %v395
        %v800 = vunpack.c.h.b16 %v395
        %v801 = vunpack.c.l.b16 %v396
        %v802 = vunpack.c.h.b16 %v396
        %v803 = vunpack.c.l.b16 %v397
        %v804 = vunpack.c.h.b16 %v397
        %v805 = vunpack.c.l.b16 %v398
        %v806 = vunpack.c.h.b16 %v398
        %v807 = vunpack.c.l.b16 %v399
        %v808 = vunpack.c.h.b16 %v399
        %v809 = vunpack.c.l.b16 %v400
        %v810 = vunpack.c.h.b16 %v400
        %v811 = vunpack.c.l.b16 %v401
        %v812 = vunpack.c.h.b16 %v401
        %v813 = vunpack.c.l.b16 %v402
        %v814 = vunpack.c.h.b16 %v402
        %v815 = vunpack.c.l.b16 %v403
        %v816 = vunpack.c.h.b16 %v403
        %v817 = vunpack.c.l.b16 %v404
        %v818 = vunpack.c.h.b16 %v404
        %v819 = vunpack.c.l.b16 %v405
        %v820 = vunpack.c.h.b16 %v405
        %v821 = vunpack.c.l.b16 %v406
        %v822 = vunpack.c.h.b16 %v406
        %v823 = vunpack.c.l.b16 %v407
        %v824 = vunpack.c.h.b16 %v407
        %v825 = vunpack.c.l.b16 %v408
        %v826 = vunpack.c.h.b16 %v408
        %v827 = vunpack.c.l.b16 %v409
        %v828 = vunpack.c.h.b16 %v409
        %v829 = vunpack.c.l.b16 %v410
        %v830 = vunpack.c.h.b16 %v410
        %v831 = vunpack.c.l.b16 %v411
        %v832 = vunpack.c.h.b16 %v411
        %v833 = vunpack.c.l.b16 %v412
        %v834 = vunpack.c.h.b16 %v412
        %v835 = vunpack.c.l.b16 %v413
        %v836 = vunpack.c.h.b16 %v413
        %v837 = vunpack.c.l.b16 %v414
        %v838 = vunpack.c.h.b16 %v414
        %v839 = vpack.c.b16 %v587, %v583
        %v840 = vpack.c.b16 %v588, %v584
        %v841 = vpack.c.b16 %v589, %v585
        %v842 = vpack.c.b16 %v590, %v586
        %v843 = vpack.c.b16 %v595, %v591
        %v844 = vpack.c.b16 %v596, %v592
        %v845 = vpack.c.b16 %v597, %v593
        %v846 = vpack.c.b16 %v598, %v594
        %v847 = vpack.c.b16 %v603, %v599
        %v848 = vpack.c.b16 %v604, %v600
        %v849 = vpack.c.b16 %v605, %v601
        %v850 = vpack.c.b16 %v606, %v602
        %v851 = vpack.c.b16 %v611, %v607
        %v852 = vpack.c.b16 %v612, %v608
        %v853 = vpack.c.b16 %v613, %v609
        %v854 = vpack.c.b16 %v614, %v610
        %v855 = vpack.c.b16 %v619, %v615
        %v856 = vpack.c.b16 %v620, %v616
        %v857 = vpack.c.b16 %v621, %v617
        %v858 = vpack.c.b16 %v622, %v618
        %v859 = vpack.c.b16 %v627, %v623
        %v860 = vpack.c.b16 %v628, %v624
        %v861 = vpack.c.b16 %v629, %v625
        %v862 = vpack.c.b16 %v630, %v626
        %v863 = vpack.c.b16 %v635, %v631
        %v864 = vpack.c.b16 %v636, %v632
        %v865 = vpack.c.b16 %v637, %v633
        %v866 = vpack.c.b16 %v638, %v634
        %v867 = vpack.c.b16 %v643, %v639
        %v868 = vpack.c.b16 %v644, %v640
        %v869 = vpack.c.b16 %v645, %v641
        %v870 = vpack.c.b16 %v646, %v642
        %v871 = vpack.c.b16 %v651, %v647
        %v872 = vpack.c.b16 %v652, %v648
        %v873 = vpack.c.b16 %v653, %v649
        %v874 = vpack.c.b16 %v654, %v650
        %v875 = vpack.c.b16 %v659, %v655
        %v876 = vpack.c.b16 %v660, %v656
        %v877 = vpack.c.b16 %v661, %v657
        %v878 = vpack.c.b16 %v662, %v658
        %v879 = vpack.c.b16 %v667, %v663
        %v880 = vpack.c.b16 %v668, %v664
        %v881 = vpack.c.b16 %v669, %v665
        %v882 = vpack.c.b16 %v670, %v666
        %v883 = vpack.c.b16 %v675, %v671
        %v884 = vpack.c.b16 %v676, %v672
        %v885 = vpack.c.b16 %v677, %v673
        %v886 = vpack.c.b16 %v678, %v674
        %v887 = vpack.c.b16 %v683, %v679
        %v888 = vpack.c.b16 %v684, %v680
        %v889 = vpack.c.b16 %v685, %v681
        %v890 = vpack.c.b16 %v686, %v682
        %v891 = vpack.c.b16 %v691, %v687
        %v892 = vpack.c.b16 %v692, %v688
        %v893 = vpack.c.b16 %v693, %v689
        %v894 = vpack.c.b16 %v694, %v690
        %v895 = vpack.c.b16 %v699, %v695
        %v896 = vpack.c.b16 %v700, %v696
        %v897 = vpack.c.b16 %v701, %v697
        %v898 = vpack.c.b16 %v702, %v698
        %v899 = vpack.c.b16 %v707, %v703
        %v900 = vpack.c.b16 %v708, %v704
        %v901 = vpack.c.b16 %v709, %v705
        %v902 = vpack.c.b16 %v710, %v706
        %v903 = vpack.c.b16 %v715, %v711
        %v904 = vpack.c.b16 %v716, %v712
        %v905 = vpack.c.b16 %v717, %v713
        %v906 = vpack.c.b16 %v718, %v714
        %v907 = vpack.c.b16 %v723, %v719
        %v908 = vpack.c.b16 %v724, %v720
        %v909 = vpack.c.b16 %v725, %v721
        %v910 = vpack.c.b16 %v726, %v722
        %v911 = vpack.c.b16 %v731, %v727
        %v912 = vpack.c.b16 %v732, %v728
        %v913 = vpack.c.b16 %v733, %v729
        %v914 = vpack.c.b16 %v734, %v730
        %v915 = vpack.c.b16 %v739, %v735
        %v916 = vpack.c.b16 %v740, %v736
        %v917 = vpack.c.b16 %v741, %v737
        %v918 = vpack.c.b16 %v742, %v738
        %v919 = vpack.c.b16 %v747, %v743
        %v920 = vpack.c.b16 %v748, %v744
        %v921 = vpack.c.b16 %v749, %v745
        %v922 = vpack.c.b16 %v750, %v746
        %v923 = vpack.c.b16 %v755, %v751
        %v924 = vpack.c.b16 %v756, %v752
        %v925 = vpack.c.b16 %v757, %v753
        %v926 = vpack.c.b16 %v758, %v754
        %v927 = vpack.c.b16 %v763, %v759
        %v928 = vpack.c.b16 %v764, %v760
        %v929 = vpack.c.b16 %v765, %v761
        %v930 = vpack.c.b16 %v766, %v762
        %v931 = vpack.c.b16 %v771, %v767
        %v932 = vpack.c.b16 %v772, %v768
        %v933 = vpack.c.b16 %v773, %v769
        %v934 = vpack.c.b16 %v774, %v770
        %v935 = vpack.c.b16 %v779, %v775
        %v936 = vpack.c.b16 %v780, %v776
        %v937 = vpack.c.b16 %v781, %v777
        %v938 = vpack.c.b16 %v782, %v778
        %v939 = vpack.c.b16 %v787, %v783
        %v940 = vpack.c.b16 %v788, %v784
        %v941 = vpack.c.b16 %v789, %v785
        %v942 = vpack.c.b16 %v790, %v786
        %v943 = vpack.c.b16 %v795, %v791
        %v944 = vpack.c.b16 %v796, %v792
        %v945 = vpack.c.b16 %v797, %v793
        %v946 = vpack.c.b16 %v798, %v794
        %v947 = vpack.c.b16 %v803, %v799
        %v948 = vpack.c.b16 %v804, %v800
        %v949 = vpack.c.b16 %v805, %v801
        %v950 = vpack.c.b16 %v806, %v802
        %v951 = vpack.c.b16 %v811, %v807
        %v952 = vpack.c.b16 %v812, %v808
        %v953 = vpack.c.b16 %v813, %v809
        %v954 = vpack.c.b16 %v814, %v810
        %v955 = vpack.c.b16 %v819, %v815
        %v956 = vpack.c.b16 %v820, %v816
        %v957 = vpack.c.b16 %v821, %v817
        %v958 = vpack.c.b16 %v822, %v818
        %v959 = vpack.c.b16 %v827, %v823
        %v960 = vpack.c.b16 %v828, %v824
        %v961 = vpack.c.b16 %v829, %v825
        %v962 = vpack.c.b16 %v830, %v826
        %v963 = vpack.c.b16 %v835, %v831
        %v964 = vpack.c.b16 %v836, %v832
        %v965 = vpack.c.b16 %v837, %v833
        %v966 = vpack.c.b16 %v838, %v834
        %1095 = vmatprep.subr.bf16.mxu0 %v840
        %1096 = vmatpush1.bf16.msra.mxu0 %v839
        %1097 = vmatprep.subr.bf16.mxu0 %v844
        %1098 = vmatpush1.bf16.msra.mxu0 %v843
        %1099 = vmatprep.subr.bf16.mxu0 %v848
        %1100 = vmatpush1.bf16.msra.mxu0 %v847
        %1101 = vmatprep.subr.bf16.mxu0 %v852
        %1102 = vmatpush1.bf16.msra.mxu0 %v851
        %1103 = vmatprep.subr.bf16.mxu0 %v856
        %1104 = vmatpush1.bf16.msra.mxu0 %v855
        %1105 = vmatprep.subr.bf16.mxu0 %v860
        %1106 = vmatpush1.bf16.msra.mxu0 %v859
        %1107 = vmatprep.subr.bf16.mxu0 %v864
        %1108 = vmatpush1.bf16.msra.mxu0 %v863
        %1109 = vmatprep.subr.bf16.mxu0 %v868
        %1110 = vmatpush1.bf16.msra.mxu0 %v867
        %1111 = vmatprep.subr.bf16.mxu0 %v872
        %1112 = vmatpush1.bf16.msra.mxu0 %v871
        %1113 = vmatprep.subr.bf16.mxu0 %v876
        %1114 = vmatpush1.bf16.msra.mxu0 %v875
        %1115 = vmatprep.subr.bf16.mxu0 %v880
        %1116 = vmatpush1.bf16.msra.mxu0 %v879
        %1117 = vmatprep.subr.bf16.mxu0 %v884
        %1118 = vmatpush1.bf16.msra.mxu0 %v883
        %1119 = vmatprep.subr.bf16.mxu0 %v888
        %1120 = vmatpush1.bf16.msra.mxu0 %v887
        %1121 = vmatprep.subr.bf16.mxu0 %v892
        %1122 = vmatpush1.bf16.msra.mxu0 %v891
        %1123 = vmatprep.subr.bf16.mxu0 %v896
        %1124 = vmatpush1.bf16.msra.mxu0 %v895
        %1125 = vmatprep.subr.bf16.mxu0 %v900
        %1126 = vmatpush1.bf16.msra.mxu0 %v899
        %1127 = vmatprep.mubr.bf16.mxu0 %v440
        %1128 = vmatmul.mubr.bf16.gmra.mrb[0].mxu0 %v439
        %v1129 = vpop.f32.mrb[0].mxu0
        %v1130 = vadd.f32 0.0, %v1129
        %v1131 = vpop.f32.mrb[0].mxu0
        %v1132 = vadd.f32 0.0, %v1131
        %v1133 = vpop.f32.mrb[0].mxu0
        %v1134 = vadd.f32 0.0, %v1133
        %v1135 = vpop.f32.mrb[0].mxu0
        %v1136 = vadd.f32 0.0, %v1135
        %1137 = vmatprep.mubr.bf16.mxu0 %v444
        %1138 = vmatmul.mubr.bf16.gmra.mrb[0].mxu0 %v443
        %v1139 = vpop.f32.mrb[0].mxu0
        %v1140 = vadd.f32 0.0, %v1139
        %v1141 = vpop.f32.mrb[0].mxu0
        %v1142 = vadd.f32 0.0, %v1141
        %v1143 = vpop.f32.mrb[0].mxu0
        %v1144 = vadd.f32 0.0, %v1143
        %v1145 = vpop.f32.mrb[0].mxu0
        %v1146 = vadd.f32 0.0, %v1145
        %1147 = vdwg.mxu0
        %1148 = vmatprep.subr.bf16.mxu0 %v904
        %1149 = vmatpush1.bf16.msra.mxu0 %v903
        %1150 = vmatprep.subr.bf16.mxu0 %v908
        %1151 = vmatpush1.bf16.msra.mxu0 %v907
        %1152 = vmatprep.subr.bf16.mxu0 %v912
        %1153 = vmatpush1.bf16.msra.mxu0 %v911
        %1154 = vmatprep.subr.bf16.mxu0 %v916
        %1155 = vmatpush1.bf16.msra.mxu0 %v915
        %1156 = vmatprep.subr.bf16.mxu0 %v920
        %1157 = vmatpush1.bf16.msra.mxu0 %v919
        %1158 = vmatprep.subr.bf16.mxu0 %v924
        %1159 = vmatpush1.bf16.msra.mxu0 %v923
        %1160 = vmatprep.subr.bf16.mxu0 %v928
        %1161 = vmatpush1.bf16.msra.mxu0 %v927
        %1162 = vmatprep.subr.bf16.mxu0 %v932
        %1163 = vmatpush1.bf16.msra.mxu0 %v931
        %1164 = vmatprep.subr.bf16.mxu0 %v936
        %1165 = vmatpush1.bf16.msra.mxu0 %v935
        %1166 = vmatprep.subr.bf16.mxu0 %v940
        %1167 = vmatpush1.bf16.msra.mxu0 %v939
        %1168 = vmatprep.subr.bf16.mxu0 %v944
        %1169 = vmatpush1.bf16.msra.mxu0 %v943
        %1170 = vmatprep.subr.bf16.mxu0 %v948
        %1171 = vmatpush1.bf16.msra.mxu0 %v947
        %1172 = vmatprep.subr.bf16.mxu0 %v952
        %1173 = vmatpush1.bf16.msra.mxu0 %v951
        %1174 = vmatprep.subr.bf16.mxu0 %v956
        %1175 = vmatpush1.bf16.msra.mxu0 %v955
        %1176 = vmatprep.subr.bf16.mxu0 %v960
        %1177 = vmatpush1.bf16.msra.mxu0 %v959
        %1178 = vmatprep.subr.bf16.mxu0 %v964
        %1179 = vmatpush1.bf16.msra.mxu0 %v963
        %1180 = vmatprep.mubr.bf16.mxu0 %v442
        %1181 = vmatmul.mubr.bf16.gmra.mrb[0].mxu0 %v441
        %v1182 = vpop.f32.mrb[0].mxu0
        %v1183 = vadd.f32 %v1130, %v1182
        %v1184 = vpop.f32.mrb[0].mxu0
        %v1185 = vadd.f32 %v1132, %v1184
        %v1186 = vpop.f32.mrb[0].mxu0
        %v1187 = vadd.f32 %v1134, %v1186
        %v1188 = vpop.f32.mrb[0].mxu0
        %v1189 = vadd.f32 %v1136, %v1188
        %1190 = vmatprep.mubr.bf16.mxu0 %v446
        %1191 = vmatmul.mubr.bf16.gmra.mrb[0].mxu0 %v445
        %v1192 = vpop.f32.mrb[0].mxu0
        %v1193 = vadd.f32 %v1140, %v1192
        %v1194 = vpop.f32.mrb[0].mxu0
        %v1195 = vadd.f32 %v1142, %v1194
        %v1196 = vpop.f32.mrb[0].mxu0
        %v1197 = vadd.f32 %v1144, %v1196
        %v1198 = vpop.f32.mrb[0].mxu0
        %v1199 = vadd.f32 %v1146, %v1198
        %1200 = vdwg.mxu0
        %1201 = vmatprep.subr.bf16.mxu0 %v842
        %1202 = vmatpush1.bf16.msra.mxu0 %v841
        %1203 = vmatprep.subr.bf16.mxu0 %v846
        %1204 = vmatpush1.bf16.msra.mxu0 %v845
        %1205 = vmatprep.subr.bf16.mxu0 %v850
        %1206 = vmatpush1.bf16.msra.mxu0 %v849
        %1207 = vmatprep.subr.bf16.mxu0 %v854
        %1208 = vmatpush1.bf16.msra.mxu0 %v853
        %1209 = vmatprep.subr.bf16.mxu0 %v858
        %1210 = vmatpush1.bf16.msra.mxu0 %v857
        %1211 = vmatprep.subr.bf16.mxu0 %v862
        %1212 = vmatpush1.bf16.msra.mxu0 %v861
        %1213 = vmatprep.subr.bf16.mxu0 %v866
        %1214 = vmatpush1.bf16.msra.mxu0 %v865
        %1215 = vmatprep.subr.bf16.mxu0 %v870
        %1216 = vmatpush1.bf16.msra.mxu0 %v869
        %1217 = vmatprep.subr.bf16.mxu0 %v874
        %1218 = vmatpush1.bf16.msra.mxu0 %v873
        %1219 = vmatprep.subr.bf16.mxu0 %v878
        %1220 = vmatpush1.bf16.msra.mxu0 %v877
        %1221 = vmatprep.subr.bf16.mxu0 %v882
        %1222 = vmatpush1.bf16.msra.mxu0 %v881
        %1223 = vmatprep.subr.bf16.mxu0 %v886
        %1224 = vmatpush1.bf16.msra.mxu0 %v885
        %1225 = vmatprep.subr.bf16.mxu0 %v890
        %1226 = vmatpush1.bf16.msra.mxu0 %v889
        %1227 = vmatprep.subr.bf16.mxu0 %v894
        %1228 = vmatpush1.bf16.msra.mxu0 %v893
        %1229 = vmatprep.subr.bf16.mxu0 %v898
        %1230 = vmatpush1.bf16.msra.mxu0 %v897
        %1231 = vmatprep.subr.bf16.mxu0 %v902
        %1232 = vmatpush1.bf16.msra.mxu0 %v901
        %1233 = vmatprep.mubr.bf16.mxu0 %v440
        %1234 = vmatmul.mubr.bf16.gmra.mrb[0].mxu0 %v439
        %v1235 = vpop.f32.mrb[0].mxu0
        %v1236 = vadd.f32 0.0, %v1235
        %v1237 = vpop.f32.mrb[0].mxu0
        %v1238 = vadd.f32 0.0, %v1237
        %v1239 = vpop.f32.mrb[0].mxu0
        %v1240 = vadd.f32 0.0, %v1239
        %v1241 = vpop.f32.mrb[0].mxu0
        %v1242 = vadd.f32 0.0, %v1241
        %1243 = vmatprep.mubr.bf16.mxu0 %v444
        %1244 = vmatmul.mubr.bf16.gmra.mrb[0].mxu0 %v443
        %v1245 = vpop.f32.mrb[0].mxu0
        %v1246 = vadd.f32 0.0, %v1245
        %v1247 = vpop.f32.mrb[0].mxu0
        %v1248 = vadd.f32 0.0, %v1247
        %v1249 = vpop.f32.mrb[0].mxu0
        %v1250 = vadd.f32 0.0, %v1249
        %v1251 = vpop.f32.mrb[0].mxu0
        %v1252 = vadd.f32 0.0, %v1251
        %1253 = vdwg.mxu0
        %1254 = vmatprep.subr.bf16.mxu0 %v906
        %1255 = vmatpush1.bf16.msra.mxu0 %v905
        %1256 = vmatprep.subr.bf16.mxu0 %v910
        %1257 = vmatpush1.bf16.msra.mxu0 %v909
        %1258 = vmatprep.subr.bf16.mxu0 %v914
        %1259 = vmatpush1.bf16.msra.mxu0 %v913
        %1260 = vmatprep.subr.bf16.mxu0 %v918
        %1261 = vmatpush1.bf16.msra.mxu0 %v917
        %1262 = vmatprep.subr.bf16.mxu0 %v922
        %1263 = vmatpush1.bf16.msra.mxu0 %v921
        %1264 = vmatprep.subr.bf16.mxu0 %v926
        %1265 = vmatpush1.bf16.msra.mxu0 %v925
        %1266 = vmatprep.subr.bf16.mxu0 %v930
        %1267 = vmatpush1.bf16.msra.mxu0 %v929
        %1268 = vmatprep.subr.bf16.mxu0 %v934
        %1269 = vmatpush1.bf16.msra.mxu0 %v933
        %1270 = vmatprep.subr.bf16.mxu0 %v938
        %1271 = vmatpush1.bf16.msra.mxu0 %v937
        %1272 = vmatprep.subr.bf16.mxu0 %v942
        %1273 = vmatpush1.bf16.msra.mxu0 %v941
        %1274 = vmatprep.subr.bf16.mxu0 %v946
        %1275 = vmatpush1.bf16.msra.mxu0 %v945
        %1276 = vmatprep.subr.bf16.mxu0 %v950
        %1277 = vmatpush1.bf16.msra.mxu0 %v949
        %1278 = vmatprep.subr.bf16.mxu0 %v954
        %1279 = vmatpush1.bf16.msra.mxu0 %v953
        %1280 = vmatprep.subr.bf16.mxu0 %v958
        %1281 = vmatpush1.bf16.msra.mxu0 %v957
        %1282 = vmatprep.subr.bf16.mxu0 %v962
        %1283 = vmatpush1.bf16.msra.mxu0 %v961
        %1284 = vmatprep.subr.bf16.mxu0 %v966
        %1285 = vmatpush1.bf16.msra.mxu0 %v965
        %1286 = vmatprep.mubr.bf16.mxu0 %v442
        %1287 = vmatmul.mubr.bf16.gmra.mrb[0].mxu0 %v441
        %v1288 = vpop.f32.mrb[0].mxu0
        %v1289 = vadd.f32 %v1236, %v1288
        %v1290 = vpop.f32.mrb[0].mxu0
        %v1291 = vadd.f32 %v1238, %v1290
        %v1292 = vpop.f32.mrb[0].mxu0
        %v1293 = vadd.f32 %v1240, %v1292
        %v1294 = vpop.f32.mrb[0].mxu0
        %v1295 = vadd.f32 %v1242, %v1294
        %1296 = vmatprep.mubr.bf16.mxu0 %v446
        %1297 = vmatmul.mubr.bf16.gmra.mrb[0].mxu0 %v445
        %v1298 = vpop.f32.mrb[0].mxu0
        %v1299 = vadd.f32 %v1246, %v1298
        %v1300 = vpop.f32.mrb[0].mxu0
        %v1301 = vadd.f32 %v1248, %v1300
        %v1302 = vpop.f32.mrb[0].mxu0
        %v1303 = vadd.f32 %v1250, %v1302
        %v1304 = vpop.f32.mrb[0].mxu0
        %v1305 = vadd.f32 %v1252, %v1304
        %1306 = vdwg.mxu0
        %v1307 = vadd.f32 %v263, %v1183
        %v1308 = vadd.f32 %v264, %v1185
        %v1309 = vadd.f32 %v265, %v1289
        %v1310 = vadd.f32 %v266, %v1291
        %v1311 = vadd.f32 %v267, %v1187
        %v1312 = vadd.f32 %v268, %v1189
        %v1313 = vadd.f32 %v269, %v1293
        %v1314 = vadd.f32 %v270, %v1295
        %v1315 = vadd.f32 %v271, %v1193
        %v1316 = vadd.f32 %v272, %v1195
        %v1317 = vadd.f32 %v273, %v1299
        %v1318 = vadd.f32 %v274, %v1301
        %v1319 = vadd.f32 %v275, %v1197
        %v1320 = vadd.f32 %v276, %v1199
        %v1321 = vadd.f32 %v277, %v1303
        %v1322 = vadd.f32 %v278, %v1305
        %1323 = vst [vmem:[#allocation2] sm:$0xff] %v1307
        %1324 = vst [vmem:[#allocation2 + $0x8] sm:$0xff] %v1308
        %1325 = vst [vmem:[#allocation2 + $0x10] sm:$0xff] %v1309
        %1326 = vst [vmem:[#allocation2 + $0x18] sm:$0xff] %v1310
        %1327 = vst [vmem:[#allocation2 + $0x20] sm:$0xff] %v1311
        %1328 = vst [vmem:[#allocation2 + $0x28] sm:$0xff] %v1312
        %1329 = vst [vmem:[#allocation2 + $0x30] sm:$0xff] %v1313
        %1330 = vst [vmem:[#allocation2 + $0x38] sm:$0xff] %v1314
        %1331 = vst [vmem:[#allocation2 + $0x40] sm:$0xff] %v1315
        %1332 = vst [vmem:[#allocation2 + $0x48] sm:$0xff] %v1316
        %1333 = vst [vmem:[#allocation2 + $0x50] sm:$0xff] %v1317
        %1334 = vst [vmem:[#allocation2 + $0x58] sm:$0xff] %v1318
        %1335 = vst [vmem:[#allocation2 + $0x60] sm:$0xff] %v1319
        %1336 = vst [vmem:[#allocation2 + $0x68] sm:$0xff] %v1320
        %1337 = vst [vmem:[#allocation2 + $0x70] sm:$0xff] %v1321
        %1338 = vst [vmem:[#allocation2 + $0x78] sm:$0xff] %v1322
        %p1339 = scmp.eq.s32.totalorder %s15, 7
        // Predicated region
        $region64: #{discriminator_forward.8} parent=54 // pred_check
          %p1340 = pneg %p1339
        $region65: #{discriminator_forward.8} parent=54 // pred_check_branch
          %1342 = sbr.rel (%p1340) target = $region67
        $region66: #{discriminator_forward.8} parent=54 // pred_region
          %v1343 = vld [vmem:[#allocation2] sm:$0xff]
          %v1344 = vld [vmem:[#allocation2 + $0x8] sm:$0xff]
          %v1345 = vld [vmem:[#allocation2 + $0x10] sm:$0xff]
          %v1346 = vld [vmem:[#allocation2 + $0x18] sm:$0xff]
          %v1347 = vld [vmem:[#allocation2 + $0x20] sm:$0xff]
          %v1348 = vld [vmem:[#allocation2 + $0x28] sm:$0xff]
          %v1349 = vld [vmem:[#allocation2 + $0x30] sm:$0xff]
          %v1350 = vld [vmem:[#allocation2 + $0x38] sm:$0xff]
          %v1351 = vld [vmem:[#allocation2 + $0x40] sm:$0xff]
          %v1352 = vld [vmem:[#allocation2 + $0x48] sm:$0xff]
          %v1353 = vld [vmem:[#allocation2 + $0x50] sm:$0xff]
          %v1354 = vld [vmem:[#allocation2 + $0x58] sm:$0xff]
          %v1355 = vld [vmem:[#allocation2 + $0x60] sm:$0xff]
          %v1356 = vld [vmem:[#allocation2 + $0x68] sm:$0xff]
          %v1357 = vld [vmem:[#allocation2 + $0x70] sm:$0xff]
          %v1358 = vld [vmem:[#allocation2 + $0x78] sm:$0xff]
          %v1359 = vadd.f32 %v1343, %v1347
          %v1360 = vadd.f32 %v1359, %v1351
          %v1361 = vadd.f32 %v1360, %v1355
          %v1362 = vrot.slane %v1361, 4
          %v1363 = vadd.f32 %v1361, %v1362
          %v1364 = vrot.slane %v1363, 2
          %v1365 = vadd.f32 %v1363, %v1364
          %v1366 = vrot.slane %v1365, 1
          %v1367 = vadd.f32 %v1365, %v1366
          %v1368 = vadd.f32 %v1344, %v1348
          %v1369 = vadd.f32 %v1368, %v1352
          %v1370 = vadd.f32 %v1369, %v1356
          %v1371 = vrot.slane %v1370, 4
          %v1372 = vadd.f32 %v1370, %v1371
          %v1373 = vrot.slane %v1372, 2
          %v1374 = vadd.f32 %v1372, %v1373
          %v1375 = vrot.slane %v1374, 1
          %v1376 = vadd.f32 %v1374, %v1375
          %v1377 = vadd.f32 %v1345, %v1349
          %v1378 = vadd.f32 %v1377, %v1353
          %v1379 = vadd.f32 %v1378, %v1357
          %v1380 = vrot.slane %v1379, 4
          %v1381 = vadd.f32 %v1379, %v1380
          %v1382 = vrot.slane %v1381, 2
          %v1383 = vadd.f32 %v1381, %v1382
          %v1384 = vrot.slane %v1383, 1
          %v1385 = vadd.f32 %v1383, %v1384
          %v1386 = vadd.f32 %v1346, %v1350
          %v1387 = vadd.f32 %v1386, %v1354
          %v1388 = vadd.f32 %v1387, %v1358
          %v1389 = vrot.slane %v1388, 4
          %v1390 = vadd.f32 %v1388, %v1389
          %v1391 = vrot.slane %v1390, 2
          %v1392 = vadd.f32 %v1390, %v1391
          %v1393 = vrot.slane %v1392, 1
          %v1394 = vadd.f32 %v1392, %v1393
          %v1395 = vrcp.pop 32.0
          %v1396 = vmul.f32 %v1367, %v1395
          %v1397 = vmul.f32 %v1376, %v1395
          %v1398 = vmul.f32 %v1385, %v1395
          %v1399 = vmul.f32 %v1394, %v1395
          %v1400 = vsub.f32 %v1343, %v1396
          %v1401 = vsub.f32 %v1344, %v1397
          %v1402 = vsub.f32 %v1345, %v1398
          %v1403 = vsub.f32 %v1346, %v1399
          %v1404 = vsub.f32 %v1347, %v1396
          %v1405 = vsub.f32 %v1348, %v1397
          %v1406 = vsub.f32 %v1349, %v1398
          %v1407 = vsub.f32 %v1350, %v1399
          %v1408 = vsub.f32 %v1351, %v1396
          %v1409 = vsub.f32 %v1352, %v1397
          %v1410 = vsub.f32 %v1353, %v1398
          %v1411 = vsub.f32 %v1354, %v1399
          %v1412 = vsub.f32 %v1355, %v1396
          %v1413 = vsub.f32 %v1356, %v1397
          %v1414 = vsub.f32 %v1357, %v1398
          %v1415 = vsub.f32 %v1358, %v1399
          %v1416 = vmul.f32 %v1400, %v1400
          %v1417 = vmul.f32 %v1401, %v1401
          %v1418 = vmul.f32 %v1402, %v1402
          %v1419 = vmul.f32 %v1403, %v1403
          %v1420 = vmul.f32 %v1404, %v1404
          %v1421 = vmul.f32 %v1405, %v1405
          %v1422 = vmul.f32 %v1406, %v1406
          %v1423 = vmul.f32 %v1407, %v1407
          %v1424 = vmul.f32 %v1408, %v1408
          %v1425 = vmul.f32 %v1409, %v1409
          %v1426 = vmul.f32 %v1410, %v1410
          %v1427 = vmul.f32 %v1411, %v1411
          %v1428 = vmul.f32 %v1412, %v1412
          %v1429 = vmul.f32 %v1413, %v1413
          %v1430 = vmul.f32 %v1414, %v1414
          %v1431 = vmul.f32 %v1415, %v1415
          %v1432 = vadd.f32 %v1416, %v1420
          %v1433 = vadd.f32 %v1432, %v1424
          %v1434 = vadd.f32 %v1433, %v1428
          %v1435 = vrot.slane %v1434, 4
          %v1436 = vadd.f32 %v1434, %v1435
          %v1437 = vrot.slane %v1436, 2
          %v1438 = vadd.f32 %v1436, %v1437
          %v1439 = vrot.slane %v1438, 1
          %v1440 = vadd.f32 %v1438, %v1439
          %v1441 = vadd.f32 %v1417, %v1421
          %v1442 = vadd.f32 %v1441, %v1425
          %v1443 = vadd.f32 %v1442, %v1429
          %v1444 = vrot.slane %v1443, 4
          %v1445 = vadd.f32 %v1443, %v1444
          %v1446 = vrot.slane %v1445, 2
          %v1447 = vadd.f32 %v1445, %v1446
          %v1448 = vrot.slane %v1447, 1
          %v1449 = vadd.f32 %v1447, %v1448
          %v1450 = vadd.f32 %v1418, %v1422
          %v1451 = vadd.f32 %v1450, %v1426
          %v1452 = vadd.f32 %v1451, %v1430
          %v1453 = vrot.slane %v1452, 4
          %v1454 = vadd.f32 %v1452, %v1453
          %v1455 = vrot.slane %v1454, 2
          %v1456 = vadd.f32 %v1454, %v1455
          %v1457 = vrot.slane %v1456, 1
          %v1458 = vadd.f32 %v1456, %v1457
          %v1459 = vadd.f32 %v1419, %v1423
          %v1460 = vadd.f32 %v1459, %v1427
          %v1461 = vadd.f32 %v1460, %v1431
          %v1462 = vrot.slane %v1461, 4
          %v1463 = vadd.f32 %v1461, %v1462
          %v1464 = vrot.slane %v1463, 2
          %v1465 = vadd.f32 %v1463, %v1464
          %v1466 = vrot.slane %v1465, 1
          %v1467 = vadd.f32 %v1465, %v1466
          %v1468 = vmul.f32 %v1440, %v1395
          %v1469 = vmul.f32 %v1449, %v1395
          %v1470 = vmul.f32 %v1458, %v1395
          %v1471 = vmul.f32 %v1467, %v1395
          %v1472 = vadd.f32 %v1468, 1e-05
          %v1473 = vadd.f32 %v1469, 1e-05
          %v1474 = vadd.f32 %v1470, 1e-05
          %v1475 = vadd.f32 %v1471, 1e-05
          %v1476 = vrsqrt.pop %v1472
          %v1477 = vrsqrt.pop %v1473
          %v1478 = vrsqrt.pop %v1474
          %v1479 = vrsqrt.pop %v1475
          %v1480 = vmul.f32 %v1400, %v1476
          %v1481 = vmul.f32 %v1401, %v1477
          %v1482 = vmul.f32 %v1402, %v1478
          %v1483 = vmul.f32 %v1403, %v1479
          %v1484 = vmul.f32 %v1404, %v1476
          %v1485 = vmul.f32 %v1405, %v1477
          %v1486 = vmul.f32 %v1406, %v1478
          %v1487 = vmul.f32 %v1407, %v1479
          %v1488 = vmul.f32 %v1408, %v1476
          %v1489 = vmul.f32 %v1409, %v1477
          %v1490 = vmul.f32 %v1410, %v1478
          %v1491 = vmul.f32 %v1411, %v1479
          %v1492 = vmul.f32 %v1412, %v1476
          %v1493 = vmul.f32 %v1413, %v1477
          %v1494 = vmul.f32 %v1414, %v1478
          %v1495 = vmul.f32 %v1415, %v1479
          %v1496 = vld [vmem:[%s2] sm:$0xf]
          %v1498 = vlaneseq
          %v1499 = vshrl.u32 %v1498, 7
          %v1500 = vsub.s32 0, %v1499
          %v1501 = vrot.slane %v1496, %v1500
          %v1502 = vlaneseq
          %v1503 = vshrl.u32 %v1502, 7
          %v1504 = vsub.s32 1, %v1503
          %v1505 = vrot.slane %v1496, %v1504
          %v1506 = vlaneseq
          %v1507 = vshrl.u32 %v1506, 7
          %v1508 = vsub.s32 2, %v1507
          %v1509 = vrot.slane %v1496, %v1508
          %v1510 = vlaneseq
          %v1511 = vshrl.u32 %v1510, 7
          %v1512 = vsub.s32 3, %v1511
          %v1513 = vrot.slane %v1496, %v1512
          %v1518 = vmul.f32 %v1480, %v1501
          %v1519 = vmul.f32 %v1481, %v1505
          %v1520 = vmul.f32 %v1482, %v1509
          %v1521 = vmul.f32 %v1483, %v1513
          %v1522 = vmul.f32 %v1484, %v1501
          %v1523 = vmul.f32 %v1485, %v1505
          %v1524 = vmul.f32 %v1486, %v1509
          %v1525 = vmul.f32 %v1487, %v1513
          %v1526 = vmul.f32 %v1488, %v1501
          %v1527 = vmul.f32 %v1489, %v1505
          %v1528 = vmul.f32 %v1490, %v1509
          %v1529 = vmul.f32 %v1491, %v1513
          %v1530 = vmul.f32 %v1492, %v1501
          %v1531 = vmul.f32 %v1493, %v1505
          %v1532 = vmul.f32 %v1494, %v1509
          %v1533 = vmul.f32 %v1495, %v1513
          %v1534 = vld [vmem:[%s3] sm:$0xf]
          %v1536 = vlaneseq
          %v1537 = vshrl.u32 %v1536, 7
          %v1538 = vsub.s32 0, %v1537
          %v1539 = vrot.slane %v1534, %v1538
          %v1540 = vlaneseq
          %v1541 = vshrl.u32 %v1540, 7
          %v1542 = vsub.s32 1, %v1541
          %v1543 = vrot.slane %v1534, %v1542
          %v1544 = vlaneseq
          %v1545 = vshrl.u32 %v1544, 7
          %v1546 = vsub.s32 2, %v1545
          %v1547 = vrot.slane %v1534, %v1546
          %v1548 = vlaneseq
          %v1549 = vshrl.u32 %v1548, 7
          %v1550 = vsub.s32 3, %v1549
          %v1551 = vrot.slane %v1534, %v1550
          %v1556 = vadd.f32 %v1518, %v1539
          %v1557 = vadd.f32 %v1519, %v1543
          %v1558 = vadd.f32 %v1520, %v1547
          %v1559 = vadd.f32 %v1521, %v1551
          %v1560 = vadd.f32 %v1522, %v1539
          %v1561 = vadd.f32 %v1523, %v1543
          %v1562 = vadd.f32 %v1524, %v1547
          %v1563 = vadd.f32 %v1525, %v1551
          %v1564 = vadd.f32 %v1526, %v1539
          %v1565 = vadd.f32 %v1527, %v1543
          %v1566 = vadd.f32 %v1528, %v1547
          %v1567 = vadd.f32 %v1529, %v1551
          %v1568 = vadd.f32 %v1530, %v1539
          %v1569 = vadd.f32 %v1531, %v1543
          %v1570 = vadd.f32 %v1532, %v1547
          %v1571 = vadd.f32 %v1533, %v1551
          %vm1572 = vcmp.ge.f32.partialorder %v1556, 0.0
          %vm1573 = vcmp.ge.f32.partialorder %v1557, 0.0
          %vm1574 = vcmp.ge.f32.partialorder %v1558, 0.0
          %vm1575 = vcmp.ge.f32.partialorder %v1559, 0.0
          %vm1576 = vcmp.ge.f32.partialorder %v1560, 0.0
          %vm1577 = vcmp.ge.f32.partialorder %v1561, 0.0
          %vm1578 = vcmp.ge.f32.partialorder %v1562, 0.0
          %vm1579 = vcmp.ge.f32.partialorder %v1563, 0.0
          %vm1580 = vcmp.ge.f32.partialorder %v1564, 0.0
          %vm1581 = vcmp.ge.f32.partialorder %v1565, 0.0
          %vm1582 = vcmp.ge.f32.partialorder %v1566, 0.0
          %vm1583 = vcmp.ge.f32.partialorder %v1567, 0.0
          %vm1584 = vcmp.ge.f32.partialorder %v1568, 0.0
          %vm1585 = vcmp.ge.f32.partialorder %v1569, 0.0
          %vm1586 = vcmp.ge.f32.partialorder %v1570, 0.0
          %vm1587 = vcmp.ge.f32.partialorder %v1571, 0.0
          %v1588 = vmul.f32 %v1556, 0.2
          %v1589 = vmul.f32 %v1557, 0.2
          %v1590 = vmul.f32 %v1558, 0.2
          %v1591 = vmul.f32 %v1559, 0.2
          %v1592 = vmul.f32 %v1560, 0.2
          %v1593 = vmul.f32 %v1561, 0.2
          %v1594 = vmul.f32 %v1562, 0.2
          %v1595 = vmul.f32 %v1563, 0.2
          %v1596 = vmul.f32 %v1564, 0.2
          %v1597 = vmul.f32 %v1565, 0.2
          %v1598 = vmul.f32 %v1566, 0.2
          %v1599 = vmul.f32 %v1567, 0.2
          %v1600 = vmul.f32 %v1568, 0.2
          %v1601 = vmul.f32 %v1569, 0.2
          %v1602 = vmul.f32 %v1570, 0.2
          %v1603 = vmul.f32 %v1571, 0.2
          %v1604 = vsel %vm1572, %v1556, %v1588
          %v1605 = vsel %vm1573, %v1557, %v1589
          %v1606 = vsel %vm1574, %v1558, %v1590
          %v1607 = vsel %vm1575, %v1559, %v1591
          %v1608 = vsel %vm1576, %v1560, %v1592
          %v1609 = vsel %vm1577, %v1561, %v1593
          %v1610 = vsel %vm1578, %v1562, %v1594
          %v1611 = vsel %vm1579, %v1563, %v1595
          %v1612 = vsel %vm1580, %v1564, %v1596
          %v1613 = vsel %vm1581, %v1565, %v1597
          %v1614 = vsel %vm1582, %v1566, %v1598
          %v1615 = vsel %vm1583, %v1567, %v1599
          %v1616 = vsel %vm1584, %v1568, %v1600
          %v1617 = vsel %vm1585, %v1569, %v1601
          %v1618 = vsel %vm1586, %v1570, %v1602
          %v1619 = vsel %vm1587, %v1571, %v1603
          %v1620 = vpack.c.bf16 %v1608, %v1604
          %v1621 = vpack.c.bf16 %v1609, %v1605
          %v1622 = vpack.c.bf16 %v1610, %v1606
          %v1623 = vpack.c.bf16 %v1611, %v1607
          %v1624 = vpack.c.bf16 %v1616, %v1612
          %v1625 = vpack.c.bf16 %v1617, %v1613
          %v1626 = vpack.c.bf16 %v1618, %v1614
          %v1627 = vpack.c.bf16 %v1619, %v1615
          %v1636 = vunpack.c.l.b16 %v1620
          %v1637 = vunpack.c.l.b16 %v1621
          %v1638 = vunpack.c.l.b16 %v1622
          %v1639 = vunpack.c.l.b16 %v1623
          %v1640 = vunpack.c.h.b16 %v1620
          %v1641 = vunpack.c.h.b16 %v1621
          %v1642 = vunpack.c.h.b16 %v1622
          %v1643 = vunpack.c.h.b16 %v1623
          %v1644 = vunpack.c.l.b16 %v1624
          %v1645 = vunpack.c.l.b16 %v1625
          %v1646 = vunpack.c.l.b16 %v1626
          %v1647 = vunpack.c.l.b16 %v1627
          %v1648 = vunpack.c.h.b16 %v1624
          %v1649 = vunpack.c.h.b16 %v1625
          %v1650 = vunpack.c.h.b16 %v1626
          %v1651 = vunpack.c.h.b16 %v1627
          %v1652 = vpack.c.b16 %v1637, %v1636
          %v1653 = vpack.c.b16 %v1639, %v1638
          %v1654 = vpack.c.b16 %v1641, %v1640
          %v1655 = vpack.c.b16 %v1643, %v1642
          %v1656 = vpack.c.b16 %v1645, %v1644
          %v1657 = vpack.c.b16 %v1647, %v1646
          %v1658 = vpack.c.b16 %v1649, %v1648
          %v1659 = vpack.c.b16 %v1651, %v1650
          %1668 = vst [vmem:[%s4] sm:$0xff] %v1652
          %1669 = vst [vmem:[%s4 + $0x8] sm:$0xff] %v1653
          %1670 = vst [vmem:[%s4 + $0x10] sm:$0xff] %v1654
          %1671 = vst [vmem:[%s4 + $0x18] sm:$0xff] %v1655
          %1672 = vst [vmem:[%s4 + $0x20] sm:$0xff] %v1656
          %1673 = vst [vmem:[%s4 + $0x28] sm:$0xff] %v1657
          %1674 = vst [vmem:[%s4 + $0x30] sm:$0xff] %v1658
          %1675 = vst [vmem:[%s4 + $0x38] sm:$0xff] %v1659
        $region67: #{discriminator_forward.8} parent=54 // pred_fallthru
          _
        // Predicated region
        $region68: #{discriminator_forward.8} parent=54 // pred_check
          %p1676 = pneg %p122
        $region69: #{discriminator_forward.8} parent=54 // pred_check_branch
          %1678 = sbr.rel (%p1676) target = $region71
        $region70: #{discriminator_forward.8} parent=54 // pred_region
          _
        $region71: #{discriminator_forward.8} parent=54 // pred_fallthru
          _
        // Predicated region
        $region72: #{discriminator_forward.8} parent=54 // pred_check
          %p1679 = pneg %p122
        $region73: #{discriminator_forward.8} parent=54 // pred_check_branch
          %1681 = sbr.rel (%p1679) target = $region75
        $region74: #{discriminator_forward.8} parent=54 // pred_region
          _
        $region75: #{discriminator_forward.8} parent=54 // pred_fallthru
          _
      $region55: #{discriminator_forward.8} parent=5 // pred_fallthru
        _
      %p1682 = scmp.le.s32.totalorder 2, %s10
      // Predicated region
      $region76: #{discriminator_forward.8} parent=5 // pred_check
        %p1683 = pneg %p1682
      $region77: #{discriminator_forward.8} parent=5 // pred_check_branch
        %1685 = sbr.rel (%p1683) target = $region79
      $region78: #{discriminator_forward.8} parent=5 // pred_region
        %s1686 = ssub.s32 %s10, 2
      $region79: #{discriminator_forward.8} parent=5 // pred_fallthru
        _
    $region6: #{discriminator_forward.8} parent=1 // loop_footer
      %s14 = sadd.s32 1, %s10
    $region7: #{discriminator_forward.8} parent=1 // loop_footer_branch
      %9 = sbr.rel target = $region3
    $region8: #{discriminator_forward.8} parent=1 // loop_exit
      _

// kernel: discriminator_forward.9
$region0: #{discriminator_forward.9}
  #allocation0 [shape = 'u32[]', space=smem, size = 0x4, offset = 0x4, fixed_abs, tag = 'smem constant byte address 0x4 - core index']
  #allocation1 [shape = 'u32[144,128]{1,0:T(1,128)}', space=vmem, size = 0x12000, scoped, tag = 'internal scratch']
  %s0 = inlined_call_operand.vmem [shape: bf16[2,8192], index: 0, kind: input, shape index: {}]
  %s1 = inlined_call_operand.vmem [shape: bf16[1,8192], index: 1, kind: input, shape index: {}]
  %s2 = inlined_call_operand.vmem [shape: f32[2,1], index: 2, kind: output, shape index: {}]
  %s3 = sld [smem:[#allocation0]]
  $region18: #{discriminator_forward.9} parent=0
    _
  %s5 = ssub.s32 1, %s3
  %s6 = scalar_select 0, %s5, %s3
  // Predicated region
  $region2: #{discriminator_forward.9} parent=0 // pred_check
    _
  $region3: #{discriminator_forward.9} parent=0 // pred_check_branch
    %8 = sbr.rel (0) target = $region5
  $region4: #{discriminator_forward.9} parent=0 // pred_region
    _
  $region5: #{discriminator_forward.9} parent=0 // pred_fallthru
    _
  // Predicated region
  $region6: #{discriminator_forward.9} parent=0 // pred_check
    _
  $region7: #{discriminator_forward.9} parent=0 // pred_check_branch
    %10 = sbr.rel (0) target = $region9
  $region8: #{discriminator_forward.9} parent=0 // pred_region
    _
  $region9: #{discriminator_forward.9} parent=0 // pred_fallthru
    _
  %v11 = vld [vmem:[%s0] sm:$0xff]
  %v12 = vld [vmem:[%s0 + $0x8] sm:$0xff]
  %v13 = vld [vmem:[%s0 + $0x10] sm:$0xff]
  %v14 = vld [vmem:[%s0 + $0x18] sm:$0xff]
  %v15 = vld [vmem:[%s0 + $0x20] sm:$0xff]
  %v16 = vld [vmem:[%s0 + $0x28] sm:$0xff]
  %v17 = vld [vmem:[%s0 + $0x30] sm:$0xff]
  %v18 = vld [vmem:[%s0 + $0x38] sm:$0xff]
  %v19 = vunpack.c.l.bf16 %v11
  %v20 = vunpack.c.h.bf16 %v11
  %v21 = vunpack.c.l.bf16 %v12
  %v22 = vunpack.c.h.bf16 %v12
  %v23 = vunpack.c.l.bf16 %v13
  %v24 = vunpack.c.h.bf16 %v13
  %v25 = vunpack.c.l.bf16 %v14
  %v26 = vunpack.c.h.bf16 %v14
  %v27 = vunpack.c.l.bf16 %v15
  %v28 = vunpack.c.h.bf16 %v15
  %v29 = vunpack.c.l.bf16 %v16
  %v30 = vunpack.c.h.bf16 %v16
  %v31 = vunpack.c.l.bf16 %v17
  %v32 = vunpack.c.h.bf16 %v17
  %v33 = vunpack.c.l.bf16 %v18
  %v34 = vunpack.c.h.bf16 %v18
  %v35 = vld [vmem:[%s1] sm:$0xff]
  %v36 = vld [vmem:[%s1 + $0x8] sm:$0xff]
  %v37 = vld [vmem:[%s1 + $0x10] sm:$0xff]
  %v38 = vld [vmem:[%s1 + $0x18] sm:$0xff]
  %v39 = vld [vmem:[%s1 + $0x20] sm:$0xff]
  %v40 = vld [vmem:[%s1 + $0x28] sm:$0xff]
  %v41 = vld [vmem:[%s1 + $0x30] sm:$0xff]
  %v42 = vld [vmem:[%s1 + $0x38] sm:$0xff]
  %v43 = vunpack.c.l.bf16 %v35
  %v44 = vunpack.c.h.bf16 %v35
  %v45 = vunpack.c.l.bf16 %v36
  %v46 = vunpack.c.h.bf16 %v36
  %v47 = vunpack.c.l.bf16 %v37
  %v48 = vunpack.c.h.bf16 %v37
  %v49 = vunpack.c.l.bf16 %v38
  %v50 = vunpack.c.h.bf16 %v38
  %v51 = vunpack.c.l.bf16 %v39
  %v52 = vunpack.c.h.bf16 %v39
  %v53 = vunpack.c.l.bf16 %v40
  %v54 = vunpack.c.h.bf16 %v40
  %v55 = vunpack.c.l.bf16 %v41
  %v56 = vunpack.c.h.bf16 %v41
  %v57 = vunpack.c.l.bf16 %v42
  %v58 = vunpack.c.h.bf16 %v42
  %v75 = vlaneseq
  %v76 = vshrl.u32 %v75, 7
  %v77 = vsub.s32 0, %v76
  %v78 = vrot.slane %v43, %v77
  %v79 = vlaneseq
  %v80 = vshrl.u32 %v79, 7
  %v81 = vsub.s32 2, %v80
  %v82 = vrot.slane %v43, %v81
  %v83 = vlaneseq
  %v84 = vshrl.u32 %v83, 7
  %v85 = vsub.s32 4, %v84
  %v86 = vrot.slane %v43, %v85
  %v87 = vlaneseq
  %v88 = vshrl.u32 %v87, 7
  %v89 = vsub.s32 6, %v88
  %v90 = vrot.slane %v43, %v89
  %v91 = vlaneseq
  %v92 = vshrl.u32 %v91, 7
  %v93 = vsub.s32 0, %v92
  %v94 = vrot.slane %v44, %v93
  %v95 = vlaneseq
  %v96 = vshrl.u32 %v95, 7
  %v97 = vsub.s32 2, %v96
  %v98 = vrot.slane %v44, %v97
  %v99 = vlaneseq
  %v100 = vshrl.u32 %v99, 7
  %v101 = vsub.s32 4, %v100
  %v102 = vrot.slane %v44, %v101
  %v103 = vlaneseq
  %v104 = vshrl.u32 %v103, 7
  %v105 = vsub.s32 6, %v104
  %v106 = vrot.slane %v44, %v105
  %v107 = vlaneseq
  %v108 = vshrl.u32 %v107, 7
  %v109 = vsub.s32 0, %v108
  %v110 = vrot.slane %v45, %v109
  %v111 = vlaneseq
  %v112 = vshrl.u32 %v111, 7
  %v113 = vsub.s32 2, %v112
  %v114 = vrot.slane %v45, %v113
  %v115 = vlaneseq
  %v116 = vshrl.u32 %v115, 7
  %v117 = vsub.s32 4, %v116
  %v118 = vrot.slane %v45, %v117
  %v119 = vlaneseq
  %v120 = vshrl.u32 %v119, 7
  %v121 = vsub.s32 6, %v120
  %v122 = vrot.slane %v45, %v121
  %v123 = vlaneseq
  %v124 = vshrl.u32 %v123, 7
  %v125 = vsub.s32 0, %v124
  %v126 = vrot.slane %v46, %v125
  %v127 = vlaneseq
  %v128 = vshrl.u32 %v127, 7
  %v129 = vsub.s32 2, %v128
  %v130 = vrot.slane %v46, %v129
  %v131 = vlaneseq
  %v132 = vshrl.u32 %v131, 7
  %v133 = vsub.s32 4, %v132
  %v134 = vrot.slane %v46, %v133
  %v135 = vlaneseq
  %v136 = vshrl.u32 %v135, 7
  %v137 = vsub.s32 6, %v136
  %v138 = vrot.slane %v46, %v137
  %v139 = vlaneseq
  %v140 = vshrl.u32 %v139, 7
  %v141 = vsub.s32 0, %v140
  %v142 = vrot.slane %v47, %v141
  %v143 = vlaneseq
  %v144 = vshrl.u32 %v143, 7
  %v145 = vsub.s32 2, %v144
  %v146 = vrot.slane %v47, %v145
  %v147 = vlaneseq
  %v148 = vshrl.u32 %v147, 7
  %v149 = vsub.s32 4, %v148
  %v150 = vrot.slane %v47, %v149
  %v151 = vlaneseq
  %v152 = vshrl.u32 %v151, 7
  %v153 = vsub.s32 6, %v152
  %v154 = vrot.slane %v47, %v153
  %v155 = vlaneseq
  %v156 = vshrl.u32 %v155, 7
  %v157 = vsub.s32 0, %v156
  %v158 = vrot.slane %v48, %v157
  %v159 = vlaneseq
  %v160 = vshrl.u32 %v159, 7
  %v161 = vsub.s32 2, %v160
  %v162 = vrot.slane %v48, %v161
  %v163 = vlaneseq
  %v164 = vshrl.u32 %v163, 7
  %v165 = vsub.s32 4, %v164
  %v166 = vrot.slane %v48, %v165
  %v167 = vlaneseq
  %v168 = vshrl.u32 %v167, 7
  %v169 = vsub.s32 6, %v168
  %v170 = vrot.slane %v48, %v169
  %v171 = vlaneseq
  %v172 = vshrl.u32 %v171, 7
  %v173 = vsub.s32 0, %v172
  %v174 = vrot.slane %v49, %v173
  %v175 = vlaneseq
  %v176 = vshrl.u32 %v175, 7
  %v177 = vsub.s32 2, %v176
  %v178 = vrot.slane %v49, %v177
  %v179 = vlaneseq
  %v180 = vshrl.u32 %v179, 7
  %v181 = vsub.s32 4, %v180
  %v182 = vrot.slane %v49, %v181
  %v183 = vlaneseq
  %v184 = vshrl.u32 %v183, 7
  %v185 = vsub.s32 6, %v184
  %v186 = vrot.slane %v49, %v185
  %v187 = vlaneseq
  %v188 = vshrl.u32 %v187, 7
  %v189 = vsub.s32 0, %v188
  %v190 = vrot.slane %v50, %v189
  %v191 = vlaneseq
  %v192 = vshrl.u32 %v191, 7
  %v193 = vsub.s32 2, %v192
  %v194 = vrot.slane %v50, %v193
  %v195 = vlaneseq
  %v196 = vshrl.u32 %v195, 7
  %v197 = vsub.s32 4, %v196
  %v198 = vrot.slane %v50, %v197
  %v199 = vlaneseq
  %v200 = vshrl.u32 %v199, 7
  %v201 = vsub.s32 6, %v200
  %v202 = vrot.slane %v50, %v201
  %v203 = vlaneseq
  %v204 = vshrl.u32 %v203, 7
  %v205 = vsub.s32 0, %v204
  %v206 = vrot.slane %v51, %v205
  %v207 = vlaneseq
  %v208 = vshrl.u32 %v207, 7
  %v209 = vsub.s32 2, %v208
  %v210 = vrot.slane %v51, %v209
  %v211 = vlaneseq
  %v212 = vshrl.u32 %v211, 7
  %v213 = vsub.s32 4, %v212
  %v214 = vrot.slane %v51, %v213
  %v215 = vlaneseq
  %v216 = vshrl.u32 %v215, 7
  %v217 = vsub.s32 6, %v216
  %v218 = vrot.slane %v51, %v217
  %v219 = vlaneseq
  %v220 = vshrl.u32 %v219, 7
  %v221 = vsub.s32 0, %v220
  %v222 = vrot.slane %v52, %v221
  %v223 = vlaneseq
  %v224 = vshrl.u32 %v223, 7
  %v225 = vsub.s32 2, %v224
  %v226 = vrot.slane %v52, %v225
  %v227 = vlaneseq
  %v228 = vshrl.u32 %v227, 7
  %v229 = vsub.s32 4, %v228
  %v230 = vrot.slane %v52, %v229
  %v231 = vlaneseq
  %v232 = vshrl.u32 %v231, 7
  %v233 = vsub.s32 6, %v232
  %v234 = vrot.slane %v52, %v233
  %v235 = vlaneseq
  %v236 = vshrl.u32 %v235, 7
  %v237 = vsub.s32 0, %v236
  %v238 = vrot.slane %v53, %v237
  %v239 = vlaneseq
  %v240 = vshrl.u32 %v239, 7
  %v241 = vsub.s32 2, %v240
  %v242 = vrot.slane %v53, %v241
  %v243 = vlaneseq
  %v244 = vshrl.u32 %v243, 7
  %v245 = vsub.s32 4, %v244
  %v246 = vrot.slane %v53, %v245
  %v247 = vlaneseq
  %v248 = vshrl.u32 %v247, 7
  %v249 = vsub.s32 6, %v248
  %v250 = vrot.slane %v53, %v249
  %v251 = vlaneseq
  %v252 = vshrl.u32 %v251, 7
  %v253 = vsub.s32 0, %v252
  %v254 = vrot.slane %v54, %v253
  %v255 = vlaneseq
  %v256 = vshrl.u32 %v255, 7
  %v257 = vsub.s32 2, %v256
  %v258 = vrot.slane %v54, %v257
  %v259 = vlaneseq
  %v260 = vshrl.u32 %v259, 7
  %v261 = vsub.s32 4, %v260
  %v262 = vrot.slane %v54, %v261
  %v263 = vlaneseq
  %v264 = vshrl.u32 %v263, 7
  %v265 = vsub.s32 6, %v264
  %v266 = vrot.slane %v54, %v265
  %v267 = vlaneseq
  %v268 = vshrl.u32 %v267, 7
  %v269 = vsub.s32 0, %v268
  %v270 = vrot.slane %v55, %v269
  %v271 = vlaneseq
  %v272 = vshrl.u32 %v271, 7
  %v273 = vsub.s32 2, %v272
  %v274 = vrot.slane %v55, %v273
  %v275 = vlaneseq
  %v276 = vshrl.u32 %v275, 7
  %v277 = vsub.s32 4, %v276
  %v278 = vrot.slane %v55, %v277
  %v279 = vlaneseq
  %v280 = vshrl.u32 %v279, 7
  %v281 = vsub.s32 6, %v280
  %v282 = vrot.slane %v55, %v281
  %v283 = vlaneseq
  %v284 = vshrl.u32 %v283, 7
  %v285 = vsub.s32 0, %v284
  %v286 = vrot.slane %v56, %v285
  %v287 = vlaneseq
  %v288 = vshrl.u32 %v287, 7
  %v289 = vsub.s32 2, %v288
  %v290 = vrot.slane %v56, %v289
  %v291 = vlaneseq
  %v292 = vshrl.u32 %v291, 7
  %v293 = vsub.s32 4, %v292
  %v294 = vrot.slane %v56, %v293
  %v295 = vlaneseq
  %v296 = vshrl.u32 %v295, 7
  %v297 = vsub.s32 6, %v296
  %v298 = vrot.slane %v56, %v297
  %v299 = vlaneseq
  %v300 = vshrl.u32 %v299, 7
  %v301 = vsub.s32 0, %v300
  %v302 = vrot.slane %v57, %v301
  %v303 = vlaneseq
  %v304 = vshrl.u32 %v303, 7
  %v305 = vsub.s32 2, %v304
  %v306 = vrot.slane %v57, %v305
  %v307 = vlaneseq
  %v308 = vshrl.u32 %v307, 7
  %v309 = vsub.s32 4, %v308
  %v310 = vrot.slane %v57, %v309
  %v311 = vlaneseq
  %v312 = vshrl.u32 %v311, 7
  %v313 = vsub.s32 6, %v312
  %v314 = vrot.slane %v57, %v313
  %v315 = vlaneseq
  %v316 = vshrl.u32 %v315, 7
  %v317 = vsub.s32 0, %v316
  %v318 = vrot.slane %v58, %v317
  %v319 = vlaneseq
  %v320 = vshrl.u32 %v319, 7
  %v321 = vsub.s32 2, %v320
  %v322 = vrot.slane %v58, %v321
  %v323 = vlaneseq
  %v324 = vshrl.u32 %v323, 7
  %v325 = vsub.s32 4, %v324
  %v326 = vrot.slane %v58, %v325
  %v327 = vlaneseq
  %v328 = vshrl.u32 %v327, 7
  %v329 = vsub.s32 6, %v328
  %v330 = vrot.slane %v58, %v329
  %v395 = vlaneseq
  %v396 = vshrl.u32 %v395, 7
  %v397 = vsub.s32 0, %v396
  %v398 = vrot.slane %v78, %v397
  %v399 = vlaneseq
  %v400 = vshrl.u32 %v399, 7
  %v401 = vsub.s32 0, %v400
  %v402 = vrot.slane %v82, %v401
  %v403 = vlaneseq
  %v404 = vshrl.u32 %v403, 7
  %v405 = vsub.s32 0, %v404
  %v406 = vrot.slane %v86, %v405
  %v407 = vlaneseq
  %v408 = vshrl.u32 %v407, 7
  %v409 = vsub.s32 0, %v408
  %v410 = vrot.slane %v90, %v409
  %v411 = vlaneseq
  %v412 = vshrl.u32 %v411, 7
  %v413 = vsub.s32 0, %v412
  %v414 = vrot.slane %v94, %v413
  %v415 = vlaneseq
  %v416 = vshrl.u32 %v415, 7
  %v417 = vsub.s32 0, %v416
  %v418 = vrot.slane %v98, %v417
  %v419 = vlaneseq
  %v420 = vshrl.u32 %v419, 7
  %v421 = vsub.s32 0, %v420
  %v422 = vrot.slane %v102, %v421
  %v423 = vlaneseq
  %v424 = vshrl.u32 %v423, 7
  %v425 = vsub.s32 0, %v424
  %v426 = vrot.slane %v106, %v425
  %v427 = vlaneseq
  %v428 = vshrl.u32 %v427, 7
  %v429 = vsub.s32 0, %v428
  %v430 = vrot.slane %v110, %v429
  %v431 = vlaneseq
  %v432 = vshrl.u32 %v431, 7
  %v433 = vsub.s32 0, %v432
  %v434 = vrot.slane %v114, %v433
  %v435 = vlaneseq
  %v436 = vshrl.u32 %v435, 7
  %v437 = vsub.s32 0, %v436
  %v438 = vrot.slane %v118, %v437
  %v439 = vlaneseq
  %v440 = vshrl.u32 %v439, 7
  %v441 = vsub.s32 0, %v440
  %v442 = vrot.slane %v122, %v441
  %v443 = vlaneseq
  %v444 = vshrl.u32 %v443, 7
  %v445 = vsub.s32 0, %v444
  %v446 = vrot.slane %v126, %v445
  %v447 = vlaneseq
  %v448 = vshrl.u32 %v447, 7
  %v449 = vsub.s32 0, %v448
  %v450 = vrot.slane %v130, %v449
  %v451 = vlaneseq
  %v452 = vshrl.u32 %v451, 7
  %v453 = vsub.s32 0, %v452
  %v454 = vrot.slane %v134, %v453
  %v455 = vlaneseq
  %v456 = vshrl.u32 %v455, 7
  %v457 = vsub.s32 0, %v456
  %v458 = vrot.slane %v138, %v457
  %v459 = vlaneseq
  %v460 = vshrl.u32 %v459, 7
  %v461 = vsub.s32 0, %v460
  %v462 = vrot.slane %v142, %v461
  %v463 = vlaneseq
  %v464 = vshrl.u32 %v463, 7
  %v465 = vsub.s32 0, %v464
  %v466 = vrot.slane %v146, %v465
  %v467 = vlaneseq
  %v468 = vshrl.u32 %v467, 7
  %v469 = vsub.s32 0, %v468
  %v470 = vrot.slane %v150, %v469
  %v471 = vlaneseq
  %v472 = vshrl.u32 %v471, 7
  %v473 = vsub.s32 0, %v472
  %v474 = vrot.slane %v154, %v473
  %v475 = vlaneseq
  %v476 = vshrl.u32 %v475, 7
  %v477 = vsub.s32 0, %v476
  %v478 = vrot.slane %v158, %v477
  %v479 = vlaneseq
  %v480 = vshrl.u32 %v479, 7
  %v481 = vsub.s32 0, %v480
  %v482 = vrot.slane %v162, %v481
  %v483 = vlaneseq
  %v484 = vshrl.u32 %v483, 7
  %v485 = vsub.s32 0, %v484
  %v486 = vrot.slane %v166, %v485
  %v487 = vlaneseq
  %v488 = vshrl.u32 %v487, 7
  %v489 = vsub.s32 0, %v488
  %v490 = vrot.slane %v170, %v489
  %v491 = vlaneseq
  %v492 = vshrl.u32 %v491, 7
  %v493 = vsub.s32 0, %v492
  %v494 = vrot.slane %v174, %v493
  %v495 = vlaneseq
  %v496 = vshrl.u32 %v495, 7
  %v497 = vsub.s32 0, %v496
  %v498 = vrot.slane %v178, %v497
  %v499 = vlaneseq
  %v500 = vshrl.u32 %v499, 7
  %v501 = vsub.s32 0, %v500
  %v502 = vrot.slane %v182, %v501
  %v503 = vlaneseq
  %v504 = vshrl.u32 %v503, 7
  %v505 = vsub.s32 0, %v504
  %v506 = vrot.slane %v186, %v505
  %v507 = vlaneseq
  %v508 = vshrl.u32 %v507, 7
  %v509 = vsub.s32 0, %v508
  %v510 = vrot.slane %v190, %v509
  %v511 = vlaneseq
  %v512 = vshrl.u32 %v511, 7
  %v513 = vsub.s32 0, %v512
  %v514 = vrot.slane %v194, %v513
  %v515 = vlaneseq
  %v516 = vshrl.u32 %v515, 7
  %v517 = vsub.s32 0, %v516
  %v518 = vrot.slane %v198, %v517
  %v519 = vlaneseq
  %v520 = vshrl.u32 %v519, 7
  %v521 = vsub.s32 0, %v520
  %v522 = vrot.slane %v202, %v521
  %v523 = vlaneseq
  %v524 = vshrl.u32 %v523, 7
  %v525 = vsub.s32 0, %v524
  %v526 = vrot.slane %v206, %v525
  %v527 = vlaneseq
  %v528 = vshrl.u32 %v527, 7
  %v529 = vsub.s32 0, %v528
  %v530 = vrot.slane %v210, %v529
  %v531 = vlaneseq
  %v532 = vshrl.u32 %v531, 7
  %v533 = vsub.s32 0, %v532
  %v534 = vrot.slane %v214, %v533
  %v535 = vlaneseq
  %v536 = vshrl.u32 %v535, 7
  %v537 = vsub.s32 0, %v536
  %v538 = vrot.slane %v218, %v537
  %v539 = vlaneseq
  %v540 = vshrl.u32 %v539, 7
  %v541 = vsub.s32 0, %v540
  %v542 = vrot.slane %v222, %v541
  %v543 = vlaneseq
  %v544 = vshrl.u32 %v543, 7
  %v545 = vsub.s32 0, %v544
  %v546 = vrot.slane %v226, %v545
  %v547 = vlaneseq
  %v548 = vshrl.u32 %v547, 7
  %v549 = vsub.s32 0, %v548
  %v550 = vrot.slane %v230, %v549
  %v551 = vlaneseq
  %v552 = vshrl.u32 %v551, 7
  %v553 = vsub.s32 0, %v552
  %v554 = vrot.slane %v234, %v553
  %v555 = vlaneseq
  %v556 = vshrl.u32 %v555, 7
  %v557 = vsub.s32 0, %v556
  %v558 = vrot.slane %v238, %v557
  %v559 = vlaneseq
  %v560 = vshrl.u32 %v559, 7
  %v561 = vsub.s32 0, %v560
  %v562 = vrot.slane %v242, %v561
  %v563 = vlaneseq
  %v564 = vshrl.u32 %v563, 7
  %v565 = vsub.s32 0, %v564
  %v566 = vrot.slane %v246, %v565
  %v567 = vlaneseq
  %v568 = vshrl.u32 %v567, 7
  %v569 = vsub.s32 0, %v568
  %v570 = vrot.slane %v250, %v569
  %v571 = vlaneseq
  %v572 = vshrl.u32 %v571, 7
  %v573 = vsub.s32 0, %v572
  %v574 = vrot.slane %v254, %v573
  %v575 = vlaneseq
  %v576 = vshrl.u32 %v575, 7
  %v577 = vsub.s32 0, %v576
  %v578 = vrot.slane %v258, %v577
  %v579 = vlaneseq
  %v580 = vshrl.u32 %v579, 7
  %v581 = vsub.s32 0, %v580
  %v582 = vrot.slane %v262, %v581
  %v583 = vlaneseq
  %v584 = vshrl.u32 %v583, 7
  %v585 = vsub.s32 0, %v584
  %v586 = vrot.slane %v266, %v585
  %v587 = vlaneseq
  %v588 = vshrl.u32 %v587, 7
  %v589 = vsub.s32 0, %v588
  %v590 = vrot.slane %v270, %v589
  %v591 = vlaneseq
  %v592 = vshrl.u32 %v591, 7
  %v593 = vsub.s32 0, %v592
  %v594 = vrot.slane %v274, %v593
  %v595 = vlaneseq
  %v596 = vshrl.u32 %v595, 7
  %v597 = vsub.s32 0, %v596
  %v598 = vrot.slane %v278, %v597
  %v599 = vlaneseq
  %v600 = vshrl.u32 %v599, 7
  %v601 = vsub.s32 0, %v600
  %v602 = vrot.slane %v282, %v601
  %v603 = vlaneseq
  %v604 = vshrl.u32 %v603, 7
  %v605 = vsub.s32 0, %v604
  %v606 = vrot.slane %v286, %v605
  %v607 = vlaneseq
  %v608 = vshrl.u32 %v607, 7
  %v609 = vsub.s32 0, %v608
  %v610 = vrot.slane %v290, %v609
  %v611 = vlaneseq
  %v612 = vshrl.u32 %v611, 7
  %v613 = vsub.s32 0, %v612
  %v614 = vrot.slane %v294, %v613
  %v615 = vlaneseq
  %v616 = vshrl.u32 %v615, 7
  %v617 = vsub.s32 0, %v616
  %v618 = vrot.slane %v298, %v617
  %v619 = vlaneseq
  %v620 = vshrl.u32 %v619, 7
  %v621 = vsub.s32 0, %v620
  %v622 = vrot.slane %v302, %v621
  %v623 = vlaneseq
  %v624 = vshrl.u32 %v623, 7
  %v625 = vsub.s32 0, %v624
  %v626 = vrot.slane %v306, %v625
  %v627 = vlaneseq
  %v628 = vshrl.u32 %v627, 7
  %v629 = vsub.s32 0, %v628
  %v630 = vrot.slane %v310, %v629
  %v631 = vlaneseq
  %v632 = vshrl.u32 %v631, 7
  %v633 = vsub.s32 0, %v632
  %v634 = vrot.slane %v314, %v633
  %v635 = vlaneseq
  %v636 = vshrl.u32 %v635, 7
  %v637 = vsub.s32 0, %v636
  %v638 = vrot.slane %v318, %v637
  %v639 = vlaneseq
  %v640 = vshrl.u32 %v639, 7
  %v641 = vsub.s32 0, %v640
  %v642 = vrot.slane %v322, %v641
  %v643 = vlaneseq
  %v644 = vshrl.u32 %v643, 7
  %v645 = vsub.s32 0, %v644
  %v646 = vrot.slane %v326, %v645
  %v647 = vlaneseq
  %v648 = vshrl.u32 %v647, 7
  %v649 = vsub.s32 0, %v648
  %v650 = vrot.slane %v330, %v649
  %v715 = vcombine.low %v398, %v402
  %v716 = vcombine.low %v406, %v410
  %v718 = vunpack.c.l.s4 1983009808
  %v719 = vunpack.c.0.s8 %v718
  %v720 = vlaneseq
  %v721 = vshrl.u32 %v720, 7
  %v722 = vsub.s32 %v719, %v721
  %v723 = vrot.slane %v715, %v722
  %v725 = vunpack.c.l.s4 1983009808
  %v726 = vunpack.c.0.s8 %v725
  %v727 = vlaneseq
  %v728 = vshrl.u32 %v727, 7
  %v729 = vsub.s32 %v726, %v728
  %v730 = vrot.slane %v716, %v729
  %v731 = vcombine.low %v723, %v730
  %v732 = vcombine.low %v414, %v418
  %v733 = vcombine.low %v422, %v426
  %v735 = vunpack.c.l.s4 1983009808
  %v736 = vunpack.c.0.s8 %v735
  %v737 = vlaneseq
  %v738 = vshrl.u32 %v737, 7
  %v739 = vsub.s32 %v736, %v738
  %v740 = vrot.slane %v732, %v739
  %v742 = vunpack.c.l.s4 1983009808
  %v743 = vunpack.c.0.s8 %v742
  %v744 = vlaneseq
  %v745 = vshrl.u32 %v744, 7
  %v746 = vsub.s32 %v743, %v745
  %v747 = vrot.slane %v733, %v746
  %v748 = vcombine.low %v740, %v747
  %v749 = vcombine.low %v430, %v434
  %v750 = vcombine.low %v438, %v442
  %v752 = vunpack.c.l.s4 1983009808
  %v753 = vunpack.c.0.s8 %v752
  %v754 = vlaneseq
  %v755 = vshrl.u32 %v754, 7
  %v756 = vsub.s32 %v753, %v755
  %v757 = vrot.slane %v749, %v756
  %v759 = vunpack.c.l.s4 1983009808
  %v760 = vunpack.c.0.s8 %v759
  %v761 = vlaneseq
  %v762 = vshrl.u32 %v761, 7
  %v763 = vsub.s32 %v760, %v762
  %v764 = vrot.slane %v750, %v763
  %v765 = vcombine.low %v757, %v764
  %v766 = vcombine.low %v446, %v450
  %v767 = vcombine.low %v454, %v458
  %v769 = vunpack.c.l.s4 1983009808
  %v770 = vunpack.c.0.s8 %v769
  %v771 = vlaneseq
  %v772 = vshrl.u32 %v771, 7
  %v773 = vsub.s32 %v770, %v772
  %v774 = vrot.slane %v766, %v773
  %v776 = vunpack.c.l.s4 1983009808
  %v777 = vunpack.c.0.s8 %v776
  %v778 = vlaneseq
  %v779 = vshrl.u32 %v778, 7
  %v780 = vsub.s32 %v777, %v779
  %v781 = vrot.slane %v767, %v780
  %v782 = vcombine.low %v774, %v781
  %v783 = vcombine.low %v462, %v466
  %v784 = vcombine.low %v470, %v474
  %v786 = vunpack.c.l.s4 1983009808
  %v787 = vunpack.c.0.s8 %v786
  %v788 = vlaneseq
  %v789 = vshrl.u32 %v788, 7
  %v790 = vsub.s32 %v787, %v789
  %v791 = vrot.slane %v783, %v790
  %v793 = vunpack.c.l.s4 1983009808
  %v794 = vunpack.c.0.s8 %v793
  %v795 = vlaneseq
  %v796 = vshrl.u32 %v795, 7
  %v797 = vsub.s32 %v794, %v796
  %v798 = vrot.slane %v784, %v797
  %v799 = vcombine.low %v791, %v798
  %v800 = vcombine.low %v478, %v482
  %v801 = vcombine.low %v486, %v490
  %v803 = vunpack.c.l.s4 1983009808
  %v804 = vunpack.c.0.s8 %v803
  %v805 = vlaneseq
  %v806 = vshrl.u32 %v805, 7
  %v807 = vsub.s32 %v804, %v806
  %v808 = vrot.slane %v800, %v807
  %v810 = vunpack.c.l.s4 1983009808
  %v811 = vunpack.c.0.s8 %v810
  %v812 = vlaneseq
  %v813 = vshrl.u32 %v812, 7
  %v814 = vsub.s32 %v811, %v813
  %v815 = vrot.slane %v801, %v814
  %v816 = vcombine.low %v808, %v815
  %v817 = vcombine.low %v494, %v498
  %v818 = vcombine.low %v502, %v506
  %v820 = vunpack.c.l.s4 1983009808
  %v821 = vunpack.c.0.s8 %v820
  %v822 = vlaneseq
  %v823 = vshrl.u32 %v822, 7
  %v824 = vsub.s32 %v821, %v823
  %v825 = vrot.slane %v817, %v824
  %v827 = vunpack.c.l.s4 1983009808
  %v828 = vunpack.c.0.s8 %v827
  %v829 = vlaneseq
  %v830 = vshrl.u32 %v829, 7
  %v831 = vsub.s32 %v828, %v830
  %v832 = vrot.slane %v818, %v831
  %v833 = vcombine.low %v825, %v832
  %v834 = vcombine.low %v510, %v514
  %v835 = vcombine.low %v518, %v522
  %v837 = vunpack.c.l.s4 1983009808
  %v838 = vunpack.c.0.s8 %v837
  %v839 = vlaneseq
  %v840 = vshrl.u32 %v839, 7
  %v841 = vsub.s32 %v838, %v840
  %v842 = vrot.slane %v834, %v841
  %v844 = vunpack.c.l.s4 1983009808
  %v845 = vunpack.c.0.s8 %v844
  %v846 = vlaneseq
  %v847 = vshrl.u32 %v846, 7
  %v848 = vsub.s32 %v845, %v847
  %v849 = vrot.slane %v835, %v848
  %v850 = vcombine.low %v842, %v849
  %v851 = vcombine.low %v526, %v530
  %v852 = vcombine.low %v534, %v538
  %v854 = vunpack.c.l.s4 1983009808
  %v855 = vunpack.c.0.s8 %v854
  %v856 = vlaneseq
  %v857 = vshrl.u32 %v856, 7
  %v858 = vsub.s32 %v855, %v857
  %v859 = vrot.slane %v851, %v858
  %v861 = vunpack.c.l.s4 1983009808
  %v862 = vunpack.c.0.s8 %v861
  %v863 = vlaneseq
  %v864 = vshrl.u32 %v863, 7
  %v865 = vsub.s32 %v862, %v864
  %v866 = vrot.slane %v852, %v865
  %v867 = vcombine.low %v859, %v866
  %v868 = vcombine.low %v542, %v546
  %v869 = vcombine.low %v550, %v554
  %v871 = vunpack.c.l.s4 1983009808
  %v872 = vunpack.c.0.s8 %v871
  %v873 = vlaneseq
  %v874 = vshrl.u32 %v873, 7
  %v875 = vsub.s32 %v872, %v874
  %v876 = vrot.slane %v868, %v875
  %v878 = vunpack.c.l.s4 1983009808
  %v879 = vunpack.c.0.s8 %v878
  %v880 = vlaneseq
  %v881 = vshrl.u32 %v880, 7
  %v882 = vsub.s32 %v879, %v881
  %v883 = vrot.slane %v869, %v882
  %v884 = vcombine.low %v876, %v883
  %v885 = vcombine.low %v558, %v562
  %v886 = vcombine.low %v566, %v570
  %v888 = vunpack.c.l.s4 1983009808
  %v889 = vunpack.c.0.s8 %v888
  %v890 = vlaneseq
  %v891 = vshrl.u32 %v890, 7
  %v892 = vsub.s32 %v889, %v891
  %v893 = vrot.slane %v885, %v892
  %v895 = vunpack.c.l.s4 1983009808
  %v896 = vunpack.c.0.s8 %v895
  %v897 = vlaneseq
  %v898 = vshrl.u32 %v897, 7
  %v899 = vsub.s32 %v896, %v898
  %v900 = vrot.slane %v886, %v899
  %v901 = vcombine.low %v893, %v900
  %v902 = vcombine.low %v574, %v578
  %v903 = vcombine.low %v582, %v586
  %v905 = vunpack.c.l.s4 1983009808
  %v906 = vunpack.c.0.s8 %v905
  %v907 = vlaneseq
  %v908 = vshrl.u32 %v907, 7
  %v909 = vsub.s32 %v906, %v908
  %v910 = vrot.slane %v902, %v909
  %v912 = vunpack.c.l.s4 1983009808
  %v913 = vunpack.c.0.s8 %v912
  %v914 = vlaneseq
  %v915 = vshrl.u32 %v914, 7
  %v916 = vsub.s32 %v913, %v915
  %v917 = vrot.slane %v903, %v916
  %v918 = vcombine.low %v910, %v917
  %v919 = vcombine.low %v590, %v594
  %v920 = vcombine.low %v598, %v602
  %v922 = vunpack.c.l.s4 1983009808
  %v923 = vunpack.c.0.s8 %v922
  %v924 = vlaneseq
  %v925 = vshrl.u32 %v924, 7
  %v926 = vsub.s32 %v923, %v925
  %v927 = vrot.slane %v919, %v926
  %v929 = vunpack.c.l.s4 1983009808
  %v930 = vunpack.c.0.s8 %v929
  %v931 = vlaneseq
  %v932 = vshrl.u32 %v931, 7
  %v933 = vsub.s32 %v930, %v932
  %v934 = vrot.slane %v920, %v933
  %v935 = vcombine.low %v927, %v934
  %v936 = vcombine.low %v606, %v610
  %v937 = vcombine.low %v614, %v618
  %v939 = vunpack.c.l.s4 1983009808
  %v940 = vunpack.c.0.s8 %v939
  %v941 = vlaneseq
  %v942 = vshrl.u32 %v941, 7
  %v943 = vsub.s32 %v940, %v942
  %v944 = vrot.slane %v936, %v943
  %v946 = vunpack.c.l.s4 1983009808
  %v947 = vunpack.c.0.s8 %v946
  %v948 = vlaneseq
  %v949 = vshrl.u32 %v948, 7
  %v950 = vsub.s32 %v947, %v949
  %v951 = vrot.slane %v937, %v950
  %v952 = vcombine.low %v944, %v951
  %v953 = vcombine.low %v622, %v626
  %v954 = vcombine.low %v630, %v634
  %v956 = vunpack.c.l.s4 1983009808
  %v957 = vunpack.c.0.s8 %v956
  %v958 = vlaneseq
  %v959 = vshrl.u32 %v958, 7
  %v960 = vsub.s32 %v957, %v959
  %v961 = vrot.slane %v953, %v960
  %v963 = vunpack.c.l.s4 1983009808
  %v964 = vunpack.c.0.s8 %v963
  %v965 = vlaneseq
  %v966 = vshrl.u32 %v965, 7
  %v967 = vsub.s32 %v964, %v966
  %v968 = vrot.slane %v954, %v967
  %v969 = vcombine.low %v961, %v968
  %v970 = vcombine.low %v638, %v642
  %v971 = vcombine.low %v646, %v650
  %v973 = vunpack.c.l.s4 1983009808
  %v974 = vunpack.c.0.s8 %v973
  %v975 = vlaneseq
  %v976 = vshrl.u32 %v975, 7
  %v977 = vsub.s32 %v974, %v976
  %v978 = vrot.slane %v970, %v977
  %v980 = vunpack.c.l.s4 1983009808
  %v981 = vunpack.c.0.s8 %v980
  %v982 = vlaneseq
  %v983 = vshrl.u32 %v982, 7
  %v984 = vsub.s32 %v981, %v983
  %v985 = vrot.slane %v971, %v984
  %v986 = vcombine.low %v978, %v985
  %v1003 = vmul.f32 %v19, %v731
  %v1004 = vmul.f32 %v20, %v748
  %v1005 = vmul.f32 %v21, %v765
  %v1006 = vmul.f32 %v22, %v782
  %v1007 = vmul.f32 %v23, %v799
  %v1008 = vmul.f32 %v24, %v816
  %v1009 = vmul.f32 %v25, %v833
  %v1010 = vmul.f32 %v26, %v850
  %v1011 = vmul.f32 %v27, %v867
  %v1012 = vmul.f32 %v28, %v884
  %v1013 = vmul.f32 %v29, %v901
  %v1014 = vmul.f32 %v30, %v918
  %v1015 = vmul.f32 %v31, %v935
  %v1016 = vmul.f32 %v32, %v952
  %v1017 = vmul.f32 %v33, %v969
  %v1018 = vmul.f32 %v34, %v986
  %v1035 = vcombine.high %v1003, %v1003
  %v1037 = vunpack.c.l.s4 1983009808
  %v1038 = vunpack.c.0.s8 %v1037
  %v1039 = vlaneseq
  %v1040 = vshrl.u32 %v1039, 7
  %v1041 = vsub.s32 %v1038, %v1040
  %v1042 = vrot.slane %v1003, %v1041
  %v1044 = vunpack.c.l.s4 1983009808
  %v1045 = vunpack.c.0.s8 %v1044
  %v1046 = vlaneseq
  %v1047 = vshrl.u32 %v1046, 7
  %v1048 = vsub.s32 %v1045, %v1047
  %v1049 = vrot.slane %v1035, %v1048
  %v1050 = vcombine.high %v1042, %v1042
  %v1051 = vcombine.high %v1049, %v1049
  %v1052 = vcombine.high %v1004, %v1004
  %v1054 = vunpack.c.l.s4 1983009808
  %v1055 = vunpack.c.0.s8 %v1054
  %v1056 = vlaneseq
  %v1057 = vshrl.u32 %v1056, 7
  %v1058 = vsub.s32 %v1055, %v1057
  %v1059 = vrot.slane %v1004, %v1058
  %v1061 = vunpack.c.l.s4 1983009808
  %v1062 = vunpack.c.0.s8 %v1061
  %v1063 = vlaneseq
  %v1064 = vshrl.u32 %v1063, 7
  %v1065 = vsub.s32 %v1062, %v1064
  %v1066 = vrot.slane %v1052, %v1065
  %v1067 = vcombine.high %v1059, %v1059
  %v1068 = vcombine.high %v1066, %v1066
  %v1069 = vcombine.high %v1005, %v1005
  %v1071 = vunpack.c.l.s4 1983009808
  %v1072 = vunpack.c.0.s8 %v1071
  %v1073 = vlaneseq
  %v1074 = vshrl.u32 %v1073, 7
  %v1075 = vsub.s32 %v1072, %v1074
  %v1076 = vrot.slane %v1005, %v1075
  %v1078 = vunpack.c.l.s4 1983009808
  %v1079 = vunpack.c.0.s8 %v1078
  %v1080 = vlaneseq
  %v1081 = vshrl.u32 %v1080, 7
  %v1082 = vsub.s32 %v1079, %v1081
  %v1083 = vrot.slane %v1069, %v1082
  %v1084 = vcombine.high %v1076, %v1076
  %v1085 = vcombine.high %v1083, %v1083
  %v1086 = vcombine.high %v1006, %v1006
  %v1088 = vunpack.c.l.s4 1983009808
  %v1089 = vunpack.c.0.s8 %v1088
  %v1090 = vlaneseq
  %v1091 = vshrl.u32 %v1090, 7
  %v1092 = vsub.s32 %v1089, %v1091
  %v1093 = vrot.slane %v1006, %v1092
  %v1095 = vunpack.c.l.s4 1983009808
  %v1096 = vunpack.c.0.s8 %v1095
  %v1097 = vlaneseq
  %v1098 = vshrl.u32 %v1097, 7
  %v1099 = vsub.s32 %v1096, %v1098
  %v1100 = vrot.slane %v1086, %v1099
  %v1101 = vcombine.high %v1093, %v1093
  %v1102 = vcombine.high %v1100, %v1100
  %v1103 = vcombine.high %v1007, %v1007
  %v1105 = vunpack.c.l.s4 1983009808
  %v1106 = vunpack.c.0.s8 %v1105
  %v1107 = vlaneseq
  %v1108 = vshrl.u32 %v1107, 7
  %v1109 = vsub.s32 %v1106, %v1108
  %v1110 = vrot.slane %v1007, %v1109
  %v1112 = vunpack.c.l.s4 1983009808
  %v1113 = vunpack.c.0.s8 %v1112
  %v1114 = vlaneseq
  %v1115 = vshrl.u32 %v1114, 7
  %v1116 = vsub.s32 %v1113, %v1115
  %v1117 = vrot.slane %v1103, %v1116
  %v1118 = vcombine.high %v1110, %v1110
  %v1119 = vcombine.high %v1117, %v1117
  %v1120 = vcombine.high %v1008, %v1008
  %v1122 = vunpack.c.l.s4 1983009808
  %v1123 = vunpack.c.0.s8 %v1122
  %v1124 = vlaneseq
  %v1125 = vshrl.u32 %v1124, 7
  %v1126 = vsub.s32 %v1123, %v1125
  %v1127 = vrot.slane %v1008, %v1126
  %v1129 = vunpack.c.l.s4 1983009808
  %v1130 = vunpack.c.0.s8 %v1129
  %v1131 = vlaneseq
  %v1132 = vshrl.u32 %v1131, 7
  %v1133 = vsub.s32 %v1130, %v1132
  %v1134 = vrot.slane %v1120, %v1133
  %v1135 = vcombine.high %v1127, %v1127
  %v1136 = vcombine.high %v1134, %v1134
  %v1137 = vcombine.high %v1009, %v1009
  %v1139 = vunpack.c.l.s4 1983009808
  %v1140 = vunpack.c.0.s8 %v1139
  %v1141 = vlaneseq
  %v1142 = vshrl.u32 %v1141, 7
  %v1143 = vsub.s32 %v1140, %v1142
  %v1144 = vrot.slane %v1009, %v1143
  %v1146 = vunpack.c.l.s4 1983009808
  %v1147 = vunpack.c.0.s8 %v1146
  %v1148 = vlaneseq
  %v1149 = vshrl.u32 %v1148, 7
  %v1150 = vsub.s32 %v1147, %v1149
  %v1151 = vrot.slane %v1137, %v1150
  %v1152 = vcombine.high %v1144, %v1144
  %v1153 = vcombine.high %v1151, %v1151
  %v1154 = vcombine.high %v1010, %v1010
  %v1156 = vunpack.c.l.s4 1983009808
  %v1157 = vunpack.c.0.s8 %v1156
  %v1158 = vlaneseq
  %v1159 = vshrl.u32 %v1158, 7
  %v1160 = vsub.s32 %v1157, %v1159
  %v1161 = vrot.slane %v1010, %v1160
  %v1163 = vunpack.c.l.s4 1983009808
  %v1164 = vunpack.c.0.s8 %v1163
  %v1165 = vlaneseq
  %v1166 = vshrl.u32 %v1165, 7
  %v1167 = vsub.s32 %v1164, %v1166
  %v1168 = vrot.slane %v1154, %v1167
  %v1169 = vcombine.high %v1161, %v1161
  %v1170 = vcombine.high %v1168, %v1168
  %v1171 = vcombine.high %v1011, %v1011
  %v1173 = vunpack.c.l.s4 1983009808
  %v1174 = vunpack.c.0.s8 %v1173
  %v1175 = vlaneseq
  %v1176 = vshrl.u32 %v1175, 7
  %v1177 = vsub.s32 %v1174, %v1176
  %v1178 = vrot.slane %v1011, %v1177
  %v1180 = vunpack.c.l.s4 1983009808
  %v1181 = vunpack.c.0.s8 %v1180
  %v1182 = vlaneseq
  %v1183 = vshrl.u32 %v1182, 7
  %v1184 = vsub.s32 %v1181, %v1183
  %v1185 = vrot.slane %v1171, %v1184
  %v1186 = vcombine.high %v1178, %v1178
  %v1187 = vcombine.high %v1185, %v1185
  %v1188 = vcombine.high %v1012, %v1012
  %v1190 = vunpack.c.l.s4 1983009808
  %v1191 = vunpack.c.0.s8 %v1190
  %v1192 = vlaneseq
  %v1193 = vshrl.u32 %v1192, 7
  %v1194 = vsub.s32 %v1191, %v1193
  %v1195 = vrot.slane %v1012, %v1194
  %v1197 = vunpack.c.l.s4 1983009808
  %v1198 = vunpack.c.0.s8 %v1197
  %v1199 = vlaneseq
  %v1200 = vshrl.u32 %v1199, 7
  %v1201 = vsub.s32 %v1198, %v1200
  %v1202 = vrot.slane %v1188, %v1201
  %v1203 = vcombine.high %v1195, %v1195
  %v1204 = vcombine.high %v1202, %v1202
  %v1205 = vcombine.high %v1013, %v1013
  %v1207 = vunpack.c.l.s4 1983009808
  %v1208 = vunpack.c.0.s8 %v1207
  %v1209 = vlaneseq
  %v1210 = vshrl.u32 %v1209, 7
  %v1211 = vsub.s32 %v1208, %v1210
  %v1212 = vrot.slane %v1013, %v1211
  %v1214 = vunpack.c.l.s4 1983009808
  %v1215 = vunpack.c.0.s8 %v1214
  %v1216 = vlaneseq
  %v1217 = vshrl.u32 %v1216, 7
  %v1218 = vsub.s32 %v1215, %v1217
  %v1219 = vrot.slane %v1205, %v1218
  %v1220 = vcombine.high %v1212, %v1212
  %v1221 = vcombine.high %v1219, %v1219
  %v1222 = vcombine.high %v1014, %v1014
  %v1224 = vunpack.c.l.s4 1983009808
  %v1225 = vunpack.c.0.s8 %v1224
  %v1226 = vlaneseq
  %v1227 = vshrl.u32 %v1226, 7
  %v1228 = vsub.s32 %v1225, %v1227
  %v1229 = vrot.slane %v1014, %v1228
  %v1231 = vunpack.c.l.s4 1983009808
  %v1232 = vunpack.c.0.s8 %v1231
  %v1233 = vlaneseq
  %v1234 = vshrl.u32 %v1233, 7
  %v1235 = vsub.s32 %v1232, %v1234
  %v1236 = vrot.slane %v1222, %v1235
  %v1237 = vcombine.high %v1229, %v1229
  %v1238 = vcombine.high %v1236, %v1236
  %v1239 = vcombine.high %v1015, %v1015
  %v1241 = vunpack.c.l.s4 1983009808
  %v1242 = vunpack.c.0.s8 %v1241
  %v1243 = vlaneseq
  %v1244 = vshrl.u32 %v1243, 7
  %v1245 = vsub.s32 %v1242, %v1244
  %v1246 = vrot.slane %v1015, %v1245
  %v1248 = vunpack.c.l.s4 1983009808
  %v1249 = vunpack.c.0.s8 %v1248
  %v1250 = vlaneseq
  %v1251 = vshrl.u32 %v1250, 7
  %v1252 = vsub.s32 %v1249, %v1251
  %v1253 = vrot.slane %v1239, %v1252
  %v1254 = vcombine.high %v1246, %v1246
  %v1255 = vcombine.high %v1253, %v1253
  %v1256 = vcombine.high %v1016, %v1016
  %v1258 = vunpack.c.l.s4 1983009808
  %v1259 = vunpack.c.0.s8 %v1258
  %v1260 = vlaneseq
  %v1261 = vshrl.u32 %v1260, 7
  %v1262 = vsub.s32 %v1259, %v1261
  %v1263 = vrot.slane %v1016, %v1262
  %v1265 = vunpack.c.l.s4 1983009808
  %v1266 = vunpack.c.0.s8 %v1265
  %v1267 = vlaneseq
  %v1268 = vshrl.u32 %v1267, 7
  %v1269 = vsub.s32 %v1266, %v1268
  %v1270 = vrot.slane %v1256, %v1269
  %v1271 = vcombine.high %v1263, %v1263
  %v1272 = vcombine.high %v1270, %v1270
  %v1273 = vcombine.high %v1017, %v1017
  %v1275 = vunpack.c.l.s4 1983009808
  %v1276 = vunpack.c.0.s8 %v1275
  %v1277 = vlaneseq
  %v1278 = vshrl.u32 %v1277, 7
  %v1279 = vsub.s32 %v1276, %v1278
  %v1280 = vrot.slane %v1017, %v1279
  %v1282 = vunpack.c.l.s4 1983009808
  %v1283 = vunpack.c.0.s8 %v1282
  %v1284 = vlaneseq
  %v1285 = vshrl.u32 %v1284, 7
  %v1286 = vsub.s32 %v1283, %v1285
  %v1287 = vrot.slane %v1273, %v1286
  %v1288 = vcombine.high %v1280, %v1280
  %v1289 = vcombine.high %v1287, %v1287
  %v1290 = vcombine.high %v1018, %v1018
  %v1292 = vunpack.c.l.s4 1983009808
  %v1293 = vunpack.c.0.s8 %v1292
  %v1294 = vlaneseq
  %v1295 = vshrl.u32 %v1294, 7
  %v1296 = vsub.s32 %v1293, %v1295
  %v1297 = vrot.slane %v1018, %v1296
  %v1299 = vunpack.c.l.s4 1983009808
  %v1300 = vunpack.c.0.s8 %v1299
  %v1301 = vlaneseq
  %v1302 = vshrl.u32 %v1301, 7
  %v1303 = vsub.s32 %v1300, %v1302
  %v1304 = vrot.slane %v1290, %v1303
  %v1305 = vcombine.high %v1297, %v1297
  %v1306 = vcombine.high %v1304, %v1304
  %vm1371 = vcmask 1041408
  %v1372 = vsel %vm1371, %v1042, 0.0
  %v1373 = vsel %vm1371, %v1050, 0.0
  %v1374 = vadd.f32 %v1372, %v1373
  %v1375 = vsel %vm1371, %v1049, 0.0
  %v1376 = vadd.f32 %v1374, %v1375
  %v1377 = vsel %vm1371, %v1051, 0.0
  %v1378 = vadd.f32 %v1376, %v1377
  %v1379 = vsel %vm1371, %v1059, 0.0
  %v1380 = vadd.f32 %v1378, %v1379
  %v1381 = vsel %vm1371, %v1067, 0.0
  %v1382 = vadd.f32 %v1380, %v1381
  %v1383 = vsel %vm1371, %v1066, 0.0
  %v1384 = vadd.f32 %v1382, %v1383
  %v1385 = vsel %vm1371, %v1068, 0.0
  %v1386 = vadd.f32 %v1384, %v1385
  %v1387 = vsel %vm1371, %v1076, 0.0
  %v1388 = vadd.f32 %v1386, %v1387
  %v1389 = vsel %vm1371, %v1084, 0.0
  %v1390 = vadd.f32 %v1388, %v1389
  %v1391 = vsel %vm1371, %v1083, 0.0
  %v1392 = vadd.f32 %v1390, %v1391
  %v1393 = vsel %vm1371, %v1085, 0.0
  %v1394 = vadd.f32 %v1392, %v1393
  %v1395 = vsel %vm1371, %v1093, 0.0
  %v1396 = vadd.f32 %v1394, %v1395
  %v1397 = vsel %vm1371, %v1101, 0.0
  %v1398 = vadd.f32 %v1396, %v1397
  %v1399 = vsel %vm1371, %v1100, 0.0
  %v1400 = vadd.f32 %v1398, %v1399
  %v1401 = vsel %vm1371, %v1102, 0.0
  %v1402 = vadd.f32 %v1400, %v1401
  %v1403 = vsel %vm1371, %v1110, 0.0
  %v1404 = vadd.f32 %v1402, %v1403
  %v1405 = vsel %vm1371, %v1118, 0.0
  %v1406 = vadd.f32 %v1404, %v1405
  %v1407 = vsel %vm1371, %v1117, 0.0
  %v1408 = vadd.f32 %v1406, %v1407
  %v1409 = vsel %vm1371, %v1119, 0.0
  %v1410 = vadd.f32 %v1408, %v1409
  %v1411 = vsel %vm1371, %v1127, 0.0
  %v1412 = vadd.f32 %v1410, %v1411
  %v1413 = vsel %vm1371, %v1135, 0.0
  %v1414 = vadd.f32 %v1412, %v1413
  %v1415 = vsel %vm1371, %v1134, 0.0
  %v1416 = vadd.f32 %v1414, %v1415
  %v1417 = vsel %vm1371, %v1136, 0.0
  %v1418 = vadd.f32 %v1416, %v1417
  %v1419 = vsel %vm1371, %v1144, 0.0
  %v1420 = vadd.f32 %v1418, %v1419
  %v1421 = vsel %vm1371, %v1152, 0.0
  %v1422 = vadd.f32 %v1420, %v1421
  %v1423 = vsel %vm1371, %v1151, 0.0
  %v1424 = vadd.f32 %v1422, %v1423
  %v1425 = vsel %vm1371, %v1153, 0.0
  %v1426 = vadd.f32 %v1424, %v1425
  %v1427 = vsel %vm1371, %v1161, 0.0
  %v1428 = vadd.f32 %v1426, %v1427
  %v1429 = vsel %vm1371, %v1169, 0.0
  %v1430 = vadd.f32 %v1428, %v1429
  %v1431 = vsel %vm1371, %v1168, 0.0
  %v1432 = vadd.f32 %v1430, %v1431
  %v1433 = vsel %vm1371, %v1170, 0.0
  %v1434 = vadd.f32 %v1432, %v1433
  %v1435 = vsel %vm1371, %v1178, 0.0
  %v1436 = vadd.f32 %v1434, %v1435
  %v1437 = vsel %vm1371, %v1186, 0.0
  %v1438 = vadd.f32 %v1436, %v1437
  %v1439 = vsel %vm1371, %v1185, 0.0
  %v1440 = vadd.f32 %v1438, %v1439
  %v1441 = vsel %vm1371, %v1187, 0.0
  %v1442 = vadd.f32 %v1440, %v1441
  %v1443 = vsel %vm1371, %v1195, 0.0
  %v1444 = vadd.f32 %v1442, %v1443
  %v1445 = vsel %vm1371, %v1203, 0.0
  %v1446 = vadd.f32 %v1444, %v1445
  %v1447 = vsel %vm1371, %v1202, 0.0
  %v1448 = vadd.f32 %v1446, %v1447
  %v1449 = vsel %vm1371, %v1204, 0.0
  %v1450 = vadd.f32 %v1448, %v1449
  %v1451 = vsel %vm1371, %v1212, 0.0
  %v1452 = vadd.f32 %v1450, %v1451
  %v1453 = vsel %vm1371, %v1220, 0.0
  %v1454 = vadd.f32 %v1452, %v1453
  %v1455 = vsel %vm1371, %v1219, 0.0
  %v1456 = vadd.f32 %v1454, %v1455
  %v1457 = vsel %vm1371, %v1221, 0.0
  %v1458 = vadd.f32 %v1456, %v1457
  %v1459 = vsel %vm1371, %v1229, 0.0
  %v1460 = vadd.f32 %v1458, %v1459
  %v1461 = vsel %vm1371, %v1237, 0.0
  %v1462 = vadd.f32 %v1460, %v1461
  %v1463 = vsel %vm1371, %v1236, 0.0
  %v1464 = vadd.f32 %v1462, %v1463
  %v1465 = vsel %vm1371, %v1238, 0.0
  %v1466 = vadd.f32 %v1464, %v1465
  %v1467 = vsel %vm1371, %v1246, 0.0
  %v1468 = vadd.f32 %v1466, %v1467
  %v1469 = vsel %vm1371, %v1254, 0.0
  %v1470 = vadd.f32 %v1468, %v1469
  %v1471 = vsel %vm1371, %v1253, 0.0
  %v1472 = vadd.f32 %v1470, %v1471
  %v1473 = vsel %vm1371, %v1255, 0.0
  %v1474 = vadd.f32 %v1472, %v1473
  %v1475 = vsel %vm1371, %v1263, 0.0
  %v1476 = vadd.f32 %v1474, %v1475
  %v1477 = vsel %vm1371, %v1271, 0.0
  %v1478 = vadd.f32 %v1476, %v1477
  %v1479 = vsel %vm1371, %v1270, 0.0
  %v1480 = vadd.f32 %v1478, %v1479
  %v1481 = vsel %vm1371, %v1272, 0.0
  %v1482 = vadd.f32 %v1480, %v1481
  %v1483 = vsel %vm1371, %v1280, 0.0
  %v1484 = vadd.f32 %v1482, %v1483
  %v1485 = vsel %vm1371, %v1288, 0.0
  %v1486 = vadd.f32 %v1484, %v1485
  %v1487 = vsel %vm1371, %v1287, 0.0
  %v1488 = vadd.f32 %v1486, %v1487
  %v1489 = vsel %vm1371, %v1289, 0.0
  %v1490 = vadd.f32 %v1488, %v1489
  %v1491 = vsel %vm1371, %v1297, 0.0
  %v1492 = vadd.f32 %v1490, %v1491
  %v1493 = vsel %vm1371, %v1305, 0.0
  %v1494 = vadd.f32 %v1492, %v1493
  %v1495 = vsel %vm1371, %v1304, 0.0
  %v1496 = vadd.f32 %v1494, %v1495
  %v1497 = vsel %vm1371, %v1306, 0.0
  %v1498 = vadd.f32 %v1496, %v1497
  %1499 = vadd.xlane.f32.xlu0 %v1498
  %v1500 = vpop.xlane.xlu0 %1499
  %v1501 = vxor.u32 %v1500, 2147483648
  %v1502 = vmul.f32 %v1501, 1.442695
  %v1503 = vpow.pop %v1502
  %v1504 = vadd.f32 %v1503, 1.0
  %v1505 = vrcp.pop %v1504
  %v1506 = vmul.f32 1.0, %v1505
  %vm1507 = vcmask 1024
  %1508 = vst.msk [vmem:[%s2] sm:$0x3] %vm1507, %v1506
  // Predicated region
  $region10: #{discriminator_forward.9} parent=0 // pred_check
    _
  $region11: #{discriminator_forward.9} parent=0 // pred_check_branch
    %1510 = sbr.rel (0) target = $region13
  $region12: #{discriminator_forward.9} parent=0 // pred_region
    _
  $region13: #{discriminator_forward.9} parent=0 // pred_fallthru
    _
  // Predicated region
  $region14: #{discriminator_forward.9} parent=0 // pred_check
    _
  $region15: #{discriminator_forward.9} parent=0 // pred_check_branch
    %1512 = sbr.rel (0) target = $region17
  $region16: #{discriminator_forward.9} parent=0 // pred_region
    _
  $region17: #{discriminator_forward.9} parent=0 // pred_fallthru
    _

</llo_original>
